<compile_context>
chip_gen: v7x
topology: tpu7x:2x2x1
jax: 0.10.0
libtpu: 0.0.40
codegen_flags: <defaults>
</compile_context>

<pallas_src>
import jax
import jax.numpy as jnp
from jax import lax
from jax.experimental import pallas as pl
from jax.experimental.pallas import tpu as pltpu

# ----------------------------- configuration -------------------------------
NUM_LAYERS = 2
HIDDEN = 32
EMB = 32          # == HIDDEN so per-layer LSTM weights stack uniformly
VOCAB = 50
TGT_LEN = 6
SRC_LEN = 8
BATCH = 2
DTYPE = jnp.float32


# ------------------- fused Pallas kernel: LSTM + attention -------------------
def _decoder_kernel(emb_ref, h0_ref, c0_ref, wih_ref, whh_ref, b_ref, ctx_ref,
                    wa_ref, woutc_ref, wouth_ref,
                    out_ref, align_ref, hT_ref, cT_ref,
                    h_sc, c_sc):
    H = HIDDEN
    B = BATCH
    L = NUM_LAYERS
    S = SRC_LEN

    # ----- state init + loop-invariant hoists (weights, biases, context) -----
    h_sc[...] = h0_ref[...]
    c_sc[...] = c0_ref[...]

    wih = [wih_ref[l] for l in range(L)]                         # (H, 4H) each
    whh = [whh_ref[l] for l in range(L)]                         # (H, 4H) each
    bias = [jnp.broadcast_to(b_ref[l], (B, 4 * H)) for l in range(L)]  # (B, 4H)
    ctx = ctx_ref[...]                                           # (B, S, H)
    wa = wa_ref[...]                                             # (H, H)
    woutc = woutc_ref[...]                                       # (H, H)
    wouth = wouth_ref[...]                                       # (H, H)

    def step(t, carry):
        # ------------------- multi-layer LSTM for step t ---------------------
        x = emb_ref[t]                                           # (B, H)
        for l in range(L):
            h_prev = h_sc[l]                                     # (B, H)
            c_prev = c_sc[l]                                     # (B, H)
            gates = (jnp.dot(x, wih[l], preferred_element_type=jnp.float32)
                     + jnp.dot(h_prev, whh[l], preferred_element_type=jnp.float32)
                     + bias[l])                                  # (B, 4H)
            # host-side reordered gate layout: i | f | o | g
            sig = jax.nn.sigmoid(gates[:, :3 * H])               # one EUP slab
            g_t = jnp.tanh(gates[:, 3 * H:])                     # one EUP slab
            i_t = sig[:, 0 * H:1 * H]
            f_t = sig[:, 1 * H:2 * H]
            o_t = sig[:, 2 * H:3 * H]
            c_new = f_t * c_prev + i_t * g_t
            h_new = o_t * jnp.tanh(c_new)
            h_sc[l] = h_new
            c_sc[l] = c_new
            x = h_new                                            # inter-layer dropout = 0

        # ---- GlobalAttention("general") for step t (fills LSTM bubbles) -----
        hq = jnp.dot(x, wa, preferred_element_type=jnp.float32)  # (B, H)  batch-indep
        hq3 = hq.reshape(B, 1, H)
        scores = jnp.einsum('bqh,bsh->bqs', hq3, ctx,
                            preferred_element_type=jnp.float32)  # (B, 1, S)
        m = jnp.max(scores, axis=-1, keepdims=True)
        e = jnp.exp(scores - m)
        align3 = e * pl.reciprocal(jnp.sum(e, axis=-1, keepdims=True),
                                   approx=True)                  # (B, 1, S)
        cvec = jnp.einsum('bqs,bsh->bqh', align3, ctx,
                          preferred_element_type=jnp.float32).reshape(B, H)
        # linear_out (no bias for "general"): concat([c, h]) @ Wout
        #   == c @ Wout[:H] + h @ Wout[H:]  -> avoids the lane concat.
        attn_h = jnp.tanh(
            jnp.dot(cvec, woutc, preferred_element_type=jnp.float32)
            + jnp.dot(x, wouth, preferred_element_type=jnp.float32))     # (B, H)

        # full-slab stores (no singleton-middle-dim masked stores)
        out_ref[t] = attn_h.astype(out_ref.dtype)
        align_ref[t] = align3.reshape(B, S).astype(align_ref.dtype)
        return carry

    # T=6: full unroll is fine. TODO(synk): bounded unroll (2-4) for large T.
    lax.fori_loop(0, TGT_LEN, step, 0, unroll=True)

    hT_ref[...] = h_sc[...]
    cT_ref[...] = c_sc[...]


def run_decoder(emb, h0, c0, ctx_bsh, w_ih, w_hh, b, w_a, w_out_c, w_out_h):
    T, B, H = emb.shape
    S = ctx_bsh.shape[1]
    L = h0.shape[0]

    out_shapes = (
        jax.ShapeDtypeStruct((T, B, H), DTYPE),   # attn_h (outputs)
        jax.ShapeDtypeStruct((T, B, S), DTYPE),   # align
        jax.ShapeDtypeStruct((L, B, H), DTYPE),   # hT
        jax.ShapeDtypeStruct((L, B, H), DTYPE),   # cT
    )

    # advisory cost estimate for XLA scheduling around the custom call
    flops = (T * L * 2 * (2 * B * H * (4 * H))                   # 2 gate matmuls/layer
             + T * (3 * 2 * B * H * H + 2 * 2 * B * S * H))      # attention matmuls
    transcendentals = (T * L * B * 5 * H                         # gate sig/tanh + tanh(c)
                       + T * B * (S + H))                        # softmax exp + tanh
    bytes_accessed = 4 * int(emb.size + h0.size + c0.size + w_ih.size + w_hh.size
                             + b.size + ctx_bsh.size + w_a.size + w_out_c.size
                             + w_out_h.size
                             + T * B * H + T * B * S + 2 * L * B * H)

    vmem_specs = lambda n: [pl.BlockSpec(memory_space=pltpu.MemorySpace.VMEM)
                            for _ in range(n)]

    return pl.pallas_call(
        _decoder_kernel,
        out_shape=out_shapes,
        in_specs=vmem_specs(10),
        out_specs=tuple(vmem_specs(4)),
        scratch_shapes=[
            pltpu.VMEM((L, B, H), DTYPE),   # h state
            pltpu.VMEM((L, B, H), DTYPE),   # c state
        ],
        compiler_params=pltpu.CompilerParams(
            # entire working set is VMEM-resident; explicit limit keeps this
            # design honest on v7x's smaller (64 MiB) VMEM.
            vmem_limit_bytes=16 * 1024 * 1024,
        ),
        cost_estimate=pl.CostEstimate(flops=flops,
                                      transcendentals=transcendentals,
                                      bytes_accessed=bytes_accessed),
    )(emb, h0, c0, w_ih, w_hh, b, ctx_bsh, w_a, w_out_c, w_out_h)


# ------------------------------- parameters ---------------------------------
def init_params(key):
    ks = jax.random.split(key, 6)
    scale = 0.1
    params = {
        "embedding": scale * jax.random.normal(ks[0], (VOCAB, EMB), DTYPE),
        # standard PyTorch LSTM gate order along 4H: i, f, g, o
        "w_ih": scale * jax.random.normal(ks[1], (NUM_LAYERS, HIDDEN, 4 * HIDDEN), DTYPE),
        "w_hh": scale * jax.random.normal(ks[2], (NUM_LAYERS, HIDDEN, 4 * HIDDEN), DTYPE),
        # combined bias (b_ih + b_hh), shaped for 2-D broadcast in-kernel
        "b": scale * jax.random.normal(ks[3], (NUM_LAYERS, 1, 4 * HIDDEN), DTYPE),
        "w_a": scale * jax.random.normal(ks[4], (HIDDEN, HIDDEN), DTYPE),
        "w_out": scale * jax.random.normal(ks[5], (2 * HIDDEN, HIDDEN), DTYPE),
    }
    return params


def _reorder_gates_last_dim(w):
    """Reorder gate columns (last dim, size 4H) from (i,f,g,o) to (i,f,o,g)."""
    H = w.shape[-1] // 4
    return jnp.concatenate([w[..., :2 * H], w[..., 3 * H:], w[..., 2 * H:3 * H]],
                           axis=-1)


def prepare_kernel_params(params):
    """One-time weight prep (NOT per forward call): gate reorder + w_out split."""
    return {
        "embedding": params["embedding"],
        "w_ih_k": _reorder_gates_last_dim(params["w_ih"]),    # (L, H, 4H) i,f,o,g
        "w_hh_k": _reorder_gates_last_dim(params["w_hh"]),    # (L, H, 4H) i,f,o,g
        "b_k": _reorder_gates_last_dim(params["b"]),          # (L, 1, 4H) i,f,o,g
        "w_a": params["w_a"],                                 # (H, H)
        "w_out_c": params["w_out"][:HIDDEN],                  # (H, H)
        "w_out_h": params["w_out"][HIDDEN:],                  # (H, H)
    }


# ------------------------ decoder forward (wrapper) --------------------------
def decoder_forward(tokens, context, state, kparams):
    """tokens: (T, B, 1) int32; context: (S, B, H); state: dict with
    'hidden' = (h0, c0) each (L, B, H) and 'input_feed' (1, B, H)."""
    h0, c0 = state["hidden"]
    emb = kparams["embedding"][tokens[..., 0]]            # (T, B, E)  glue gather
    ctx_bsh = jnp.transpose(context, (1, 0, 2))           # (B, S, H)  glue transpose

    outputs, align, hT, cT = run_decoder(emb, h0, c0, ctx_bsh,
                                         kparams["w_ih_k"], kparams["w_hh_k"],
                                         kparams["b_k"], kparams["w_a"],
                                         kparams["w_out_c"], kparams["w_out_h"])

    final_output = outputs[-1]                            # (B, H)  Dropout(p=0) == id
    new_state = {
        "hidden": (hT, cT),
        "input_feed": final_output[None],                 # (1, B, H)
        "coverage": None,                                 # coverage_attn=False
    }
    attns = {"std": align}
    # TODO(synk): context_gate / copy_attn / coverage branches not instantiated
    # (constructor args None/False), so they are intentionally omitted.
    return outputs, new_state, attns


# ----------------------------- pure-JAX reference ----------------------------
def reference_forward(tokens, context, state, params):
    h0, c0 = state["hidden"]
    emb = params["embedding"][tokens[..., 0]]
    T = emb.shape[0]
    h = h0
    c = c0
    outs = []
    for t in range(T):
        x = emb[t]
        new_h, new_c = [], []
        for l in range(NUM_LAYERS):
            gates = x @ params["w_ih"][l] + h[l] @ params["w_hh"][l] + params["b"][l]
            i = jax.nn.sigmoid(gates[:, 0 * HIDDEN:1 * HIDDEN])
            f = jax.nn.sigmoid(gates[:, 1 * HIDDEN:2 * HIDDEN])
            g = jnp.tanh(gates[:, 2 * HIDDEN:3 * HIDDEN])
            o = jax.nn.sigmoid(gates[:, 3 * HIDDEN:4 * HIDDEN])
            cn = f * c[l] + i * g
            hn = o * jnp.tanh(cn)
            new_h.append(hn)
            new_c.append(cn)
            x = hn
        h = jnp.stack(new_h)
        c = jnp.stack(new_c)
        outs.append(x)
    rnn_out = jnp.stack(outs)                                  # (T, B, H)
    hq = jnp.einsum("tbh,hk->tbk", rnn_out, params["w_a"])
    scores = jnp.einsum("tbk,sbk->tbs", hq, context)
    align = jax.nn.softmax(scores, axis=-1)
    cvec = jnp.einsum("tbs,sbh->tbh", align, context)
    concat = jnp.concatenate([cvec, rnn_out], axis=-1)
    attn_h = jnp.tanh(jnp.einsum("tbd,dh->tbh", concat, params["w_out"]))
    return attn_h, (h, c), align


# ---------------------------------- main -------------------------------------
if __name__ == "__main__":
    key = jax.random.PRNGKey(0)
    k_tok, k_ctx, k_h, k_c, k_par = jax.random.split(key, 5)

    params = init_params(k_par)
    kparams = prepare_kernel_params(params)   # once, not per forward call

    tokens = jax.random.randint(k_tok, (TGT_LEN, BATCH, 1), 0, VOCAB, jnp.int32)
    context = 0.5 * jax.random.normal(k_ctx, (SRC_LEN, BATCH, HIDDEN), DTYPE)
    enc_h = 0.5 * jax.random.normal(k_h, (NUM_LAYERS, BATCH, HIDDEN), DTYPE)
    enc_c = 0.5 * jax.random.normal(k_c, (NUM_LAYERS, BATCH, HIDDEN), DTYPE)

    # init_decoder_state: bidirectional_encoder=False -> _fix_enc_hidden = identity
    state = {
        "hidden": (enc_h, enc_c),
        "input_feed": jnp.zeros((1, BATCH, HIDDEN), DTYPE),
        "coverage": None,
    }

    outputs, new_state, attns = decoder_forward(tokens, context, state, kparams)
    outputs = jax.block_until_ready(outputs)
    jax.block_until_ready(new_state["hidden"])
    jax.block_until_ready(attns["std"])

    # correctness check against pure-JAX reference
    ref_out, (ref_h, ref_c), ref_align = reference_forward(tokens, context, state, params)
    assert outputs.shape == (TGT_LEN, BATCH, HIDDEN)
    assert attns["std"].shape == (TGT_LEN, BATCH, SRC_LEN)
    assert new_state["input_feed"].shape == (1, BATCH, HIDDEN)
    # hidden states are exact-path (no approx ops): tight tolerance
    assert jnp.allclose(new_state["hidden"][0], ref_h, atol=1e-5, rtol=1e-5)
    assert jnp.allclose(new_state["hidden"][1], ref_c, atol=1e-5, rtol=1e-5)
    # attention path uses pl.reciprocal(approx=True): relaxed tolerance
    assert jnp.allclose(outputs, ref_out, atol=3e-3, rtol=3e-3)
    assert jnp.allclose(attns["std"], ref_align, atol=3e-3, rtol=3e-3)

    print("KERNEL_OK")
</pallas_src>

<mosaic_0001>
module attributes {stable_mosaic.version = 11 : i64} {
  func.func @_decoder_kernel(%arg0: memref<6x2x32xf32, #tpu.memory_space<vmem>>, %arg1: memref<2x2x32xf32, #tpu.memory_space<vmem>>, %arg2: memref<2x2x32xf32, #tpu.memory_space<vmem>>, %arg3: memref<2x32x128xf32, #tpu.memory_space<vmem>>, %arg4: memref<2x32x128xf32, #tpu.memory_space<vmem>>, %arg5: memref<2x1x128xf32, #tpu.memory_space<vmem>>, %arg6: memref<2x8x32xf32, #tpu.memory_space<vmem>>, %arg7: memref<32x32xf32, #tpu.memory_space<vmem>>, %arg8: memref<32x32xf32, #tpu.memory_space<vmem>>, %arg9: memref<32x32xf32, #tpu.memory_space<vmem>>, %arg10: memref<6x2x32xf32, #tpu.memory_space<vmem>>, %arg11: memref<6x2x8xf32, #tpu.memory_space<vmem>>, %arg12: memref<2x2x32xf32, #tpu.memory_space<vmem>>, %arg13: memref<2x2x32xf32, #tpu.memory_space<vmem>>, %arg14: memref<2x2x32xf32, #tpu.memory_space<vmem>>, %arg15: memref<2x2x32xf32, #tpu.memory_space<vmem>>) attributes {dimension_semantics = [], scalar_prefetch = 0 : i64, scratch_operands = 2 : i64, tpu.core_type = #tpu.core_type<tc>} {
    %c0 = arith.constant 0 : index
    %c0_0 = arith.constant 0 : index
    %c0_1 = arith.constant 0 : index
    %0 = vector.load %arg1[%c0, %c0_0, %c0_1] : memref<2x2x32xf32, #tpu.memory_space<vmem>>, vector<2x2x32xf32>
    %c0_2 = arith.constant 0 : index
    %c0_3 = arith.constant 0 : index
    %c0_4 = arith.constant 0 : index
    %1 = vector.load %arg14[%c0_2, %c0_3, %c0_4] : memref<2x2x32xf32, #tpu.memory_space<vmem>>, vector<2x2x32xf32>
    tpu.vector_store %arg14[%c0_2, %c0_3, %c0_4], %0 {strides = array<i32>} : memref<2x2x32xf32, #tpu.memory_space<vmem>>, vector<2x2x32xf32>,
    %c0_5 = arith.constant 0 : index
    %c0_6 = arith.constant 0 : index
    %c0_7 = arith.constant 0 : index
    %2 = vector.load %arg2[%c0_5, %c0_6, %c0_7] : memref<2x2x32xf32, #tpu.memory_space<vmem>>, vector<2x2x32xf32>
    %c0_8 = arith.constant 0 : index
    %c0_9 = arith.constant 0 : index
    %c0_10 = arith.constant 0 : index
    %3 = vector.load %arg15[%c0_8, %c0_9, %c0_10] : memref<2x2x32xf32, #tpu.memory_space<vmem>>, vector<2x2x32xf32>
    tpu.vector_store %arg15[%c0_8, %c0_9, %c0_10], %2 {strides = array<i32>} : memref<2x2x32xf32, #tpu.memory_space<vmem>>, vector<2x2x32xf32>,
    %c0_11 = arith.constant 0 : index
    %c0_12 = arith.constant 0 : index
    %c0_13 = arith.constant 0 : index
    %4 = vector.load %arg3[%c0_11, %c0_12, %c0_13] : memref<2x32x128xf32, #tpu.memory_space<vmem>>, vector<1x32x128xf32>
    %5 = vector.shape_cast %4 : vector<1x32x128xf32> to vector<32x128xf32>
    %c1 = arith.constant 1 : index
    %c0_14 = arith.constant 0 : index
    %c0_15 = arith.constant 0 : index
    %6 = vector.load %arg3[%c1, %c0_14, %c0_15] : memref<2x32x128xf32, #tpu.memory_space<vmem>>, vector<1x32x128xf32>
    %7 = vector.shape_cast %6 : vector<1x32x128xf32> to vector<32x128xf32>
    %c0_16 = arith.constant 0 : index
    %c0_17 = arith.constant 0 : index
    %c0_18 = arith.constant 0 : index
    %8 = vector.load %arg4[%c0_16, %c0_17, %c0_18] : memref<2x32x128xf32, #tpu.memory_space<vmem>>, vector<1x32x128xf32>
    %9 = vector.shape_cast %8 : vector<1x32x128xf32> to vector<32x128xf32>
    %c1_19 = arith.constant 1 : index
    %c0_20 = arith.constant 0 : index
    %c0_21 = arith.constant 0 : index
    %10 = vector.load %arg4[%c1_19, %c0_20, %c0_21] : memref<2x32x128xf32, #tpu.memory_space<vmem>>, vector<1x32x128xf32>
    %11 = vector.shape_cast %10 : vector<1x32x128xf32> to vector<32x128xf32>
    %c0_22 = arith.constant 0 : index
    %c0_23 = arith.constant 0 : index
    %c0_24 = arith.constant 0 : index
    %12 = vector.load %arg5[%c0_22, %c0_23, %c0_24] : memref<2x1x128xf32, #tpu.memory_space<vmem>>, vector<1x1x128xf32>
    %13 = vector.shape_cast %12 : vector<1x1x128xf32> to vector<1x128xf32>
    %14 = vector.shape_cast %13 : vector<1x128xf32> to vector<1x128xf32>
    %15 = vector.broadcast %14 : vector<1x128xf32> to vector<2x128xf32>
    %c1_25 = arith.constant 1 : index
    %c0_26 = arith.constant 0 : index
    %c0_27 = arith.constant 0 : index
    %16 = vector.load %arg5[%c1_25, %c0_26, %c0_27] : memref<2x1x128xf32, #tpu.memory_space<vmem>>, vector<1x1x128xf32>
    %17 = vector.shape_cast %16 : vector<1x1x128xf32> to vector<1x128xf32>
    %18 = vector.shape_cast %17 : vector<1x128xf32> to vector<1x128xf32>
    %19 = vector.broadcast %18 : vector<1x128xf32> to vector<2x128xf32>
    %c0_28 = arith.constant 0 : index
    %c0_29 = arith.constant 0 : index
    %c0_30 = arith.constant 0 : index
    %20 = vector.load %arg6[%c0_28, %c0_29, %c0_30] : memref<2x8x32xf32, #tpu.memory_space<vmem>>, vector<2x8x32xf32>
    %c0_31 = arith.constant 0 : index
    %c0_32 = arith.constant 0 : index
    %21 = vector.load %arg7[%c0_31, %c0_32] : memref<32x32xf32, #tpu.memory_space<vmem>>, vector<32x32xf32>
    %c0_33 = arith.constant 0 : index
    %c0_34 = arith.constant 0 : index
    %22 = vector.load %arg8[%c0_33, %c0_34] : memref<32x32xf32, #tpu.memory_space<vmem>>, vector<32x32xf32>
    %c0_35 = arith.constant 0 : index
    %c0_36 = arith.constant 0 : index
    %23 = vector.load %arg9[%c0_35, %c0_36] : memref<32x32xf32, #tpu.memory_space<vmem>>, vector<32x32xf32>
    %c0_i32 = arith.constant 0 : i32
    %24 = arith.index_cast %c0_i32 : i32 to index
    %c0_37 = arith.constant 0 : index
    %c0_38 = arith.constant 0 : index
    %25 = vector.load %arg0[%24, %c0_37, %c0_38] : memref<6x2x32xf32, #tpu.memory_space<vmem>>, vector<1x2x32xf32>
    %26 = vector.shape_cast %25 : vector<1x2x32xf32> to vector<2x32xf32>
    %c0_39 = arith.constant 0 : index
    %c0_40 = arith.constant 0 : index
    %c0_41 = arith.constant 0 : index
    %27 = vector.load %arg14[%c0_39, %c0_40, %c0_41] : memref<2x2x32xf32, #tpu.memory_space<vmem>>, vector<1x2x32xf32>
    %28 = vector.shape_cast %27 : vector<1x2x32xf32> to vector<2x32xf32>
    %c0_42 = arith.constant 0 : index
    %c0_43 = arith.constant 0 : index
    %c0_44 = arith.constant 0 : index
    %29 = vector.load %arg15[%c0_42, %c0_43, %c0_44] : memref<2x2x32xf32, #tpu.memory_space<vmem>>, vector<1x2x32xf32>
    %30 = vector.shape_cast %29 : vector<1x2x32xf32> to vector<2x32xf32>
    %cst = arith.constant dense<0.000000e+00> : vector<2x128xf32>
    %31 = tpu.matmul %26, %5, %cst {dimension_numbers = #tpu.dot_dimension_numbers<[1], [0], [0], [1], [0, 0, 1, 1], [], []>} : vector<2x32xf32>, vector<32x128xf32>, vector<2x128xf32> -> vector<2x128xf32>
    %cst_45 = arith.constant dense<0.000000e+00> : vector<2x128xf32>
    %32 = tpu.matmul %28, %9, %cst_45 {dimension_numbers = #tpu.dot_dimension_numbers<[1], [0], [0], [1], [0, 0, 1, 1], [], []>} : vector<2x32xf32>, vector<32x128xf32>, vector<2x128xf32> -> vector<2x128xf32>
    %33 = arith.addf %31, %32 : vector<2x128xf32>
    %34 = arith.addf %33, %15 : vector<2x128xf32>
    %35 = vector.extract_strided_slice %34 {offsets = [0, 0], sizes = [2, 96], strides = [1, 1]} : vector<2x128xf32> to vector<2x96xf32>
    %36 = arith.negf %35 : vector<2x96xf32>
    %37 = math.exp %36 : vector<2x96xf32>
    %cst_46 = arith.constant 1.000000e+00 : f32
    %38 = vector.broadcast %cst_46 : f32 to vector<2x96xf32>
    %39 = arith.addf %38, %37 : vector<2x96xf32>
    %40 = arith.divf %38, %39 : vector<2x96xf32>
    %41 = vector.extract_strided_slice %34 {offsets = [0, 96], sizes = [2, 32], strides = [1, 1]} : vector<2x128xf32> to vector<2x32xf32>
    %42 = math.tanh %41 : vector<2x32xf32>
    %43 = vector.extract_strided_slice %40 {offsets = [0, 0], sizes = [2, 32], strides = [1, 1]} : vector<2x96xf32> to vector<2x32xf32>
    %44 = vector.extract_strided_slice %40 {offsets = [0, 32], sizes = [2, 32], strides = [1, 1]} : vector<2x96xf32> to vector<2x32xf32>
    %45 = vector.extract_strided_slice %40 {offsets = [0, 64], sizes = [2, 32], strides = [1, 1]} : vector<2x96xf32> to vector<2x32xf32>
    %46 = arith.mulf %44, %30 : vector<2x32xf32>
    %47 = arith.mulf %43, %42 : vector<2x32xf32>
    %48 = arith.addf %46, %47 : vector<2x32xf32>
    %49 = math.tanh %48 : vector<2x32xf32>
    %50 = arith.mulf %45, %49 : vector<2x32xf32>
    %c0_47 = arith.constant 0 : index
    %c0_48 = arith.constant 0 : index
    %c0_49 = arith.constant 0 : index
    %51 = vector.load %arg14[%c0_47, %c0_48, %c0_49] : memref<2x2x32xf32, #tpu.memory_space<vmem>>, vector<1x2x32xf32>
    %52 = vector.shape_cast %51 : vector<1x2x32xf32> to vector<2x32xf32>
    %53 = vector.shape_cast %50 : vector<2x32xf32> to vector<1x2x32xf32>
    tpu.vector_store %arg14[%c0_47, %c0_48, %c0_49], %53 {strides = array<i32>} : memref<2x2x32xf32, #tpu.memory_space<vmem>>, vector<1x2x32xf32>,
    %c0_50 = arith.constant 0 : index
    %c0_51 = arith.constant 0 : index
    %c0_52 = arith.constant 0 : index
    %54 = vector.load %arg15[%c0_50, %c0_51, %c0_52] : memref<2x2x32xf32, #tpu.memory_space<vmem>>, vector<1x2x32xf32>
    %55 = vector.shape_cast %54 : vector<1x2x32xf32> to vector<2x32xf32>
    %56 = vector.shape_cast %48 : vector<2x32xf32> to vector<1x2x32xf32>
    tpu.vector_store %arg15[%c0_50, %c0_51, %c0_52], %56 {strides = array<i32>} : memref<2x2x32xf32, #tpu.memory_space<vmem>>, vector<1x2x32xf32>,
    %c1_53 = arith.constant 1 : index
    %c0_54 = arith.constant 0 : index
    %c0_55 = arith.constant 0 : index
    %57 = vector.load %arg14[%c1_53, %c0_54, %c0_55] : memref<2x2x32xf32, #tpu.memory_space<vmem>>, vector<1x2x32xf32>
    %58 = vector.shape_cast %57 : vector<1x2x32xf32> to vector<2x32xf32>
    %c1_56 = arith.constant 1 : index
    %c0_57 = arith.constant 0 : index
    %c0_58 = arith.constant 0 : index
    %59 = vector.load %arg15[%c1_56, %c0_57, %c0_58] : memref<2x2x32xf32, #tpu.memory_space<vmem>>, vector<1x2x32xf32>
    %60 = vector.shape_cast %59 : vector<1x2x32xf32> to vector<2x32xf32>
    %cst_59 = arith.constant dense<0.000000e+00> : vector<2x128xf32>
    %61 = tpu.matmul %50, %7, %cst_59 {dimension_numbers = #tpu.dot_dimension_numbers<[1], [0], [0], [1], [0, 0, 1, 1], [], []>} : vector<2x32xf32>, vector<32x128xf32>, vector<2x128xf32> -> vector<2x128xf32>
    %cst_60 = arith.constant dense<0.000000e+00> : vector<2x128xf32>
    %62 = tpu.matmul %58, %11, %cst_60 {dimension_numbers = #tpu.dot_dimension_numbers<[1], [0], [0], [1], [0, 0, 1, 1], [], []>} : vector<2x32xf32>, vector<32x128xf32>, vector<2x128xf32> -> vector<2x128xf32>
    %63 = arith.addf %61, %62 : vector<2x128xf32>
    %64 = arith.addf %63, %19 : vector<2x128xf32>
    %65 = vector.extract_strided_slice %64 {offsets = [0, 0], sizes = [2, 96], strides = [1, 1]} : vector<2x128xf32> to vector<2x96xf32>
    %66 = arith.negf %65 : vector<2x96xf32>
    %67 = math.exp %66 : vector<2x96xf32>
    %cst_61 = arith.constant 1.000000e+00 : f32
    %68 = vector.broadcast %cst_61 : f32 to vector<2x96xf32>
    %69 = arith.addf %68, %67 : vector<2x96xf32>
    %70 = arith.divf %68, %69 : vector<2x96xf32>
    %71 = vector.extract_strided_slice %64 {offsets = [0, 96], sizes = [2, 32], strides = [1, 1]} : vector<2x128xf32> to vector<2x32xf32>
    %72 = math.tanh %71 : vector<2x32xf32>
    %73 = vector.extract_strided_slice %70 {offsets = [0, 0], sizes = [2, 32], strides = [1, 1]} : vector<2x96xf32> to vector<2x32xf32>
    %74 = vector.extract_strided_slice %70 {offsets = [0, 32], sizes = [2, 32], strides = [1, 1]} : vector<2x96xf32> to vector<2x32xf32>
    %75 = vector.extract_strided_slice %70 {offsets = [0, 64], sizes = [2, 32], strides = [1, 1]} : vector<2x96xf32> to vector<2x32xf32>
    %76 = arith.mulf %74, %60 : vector<2x32xf32>
    %77 = arith.mulf %73, %72 : vector<2x32xf32>
    %78 = arith.addf %76, %77 : vector<2x32xf32>
    %79 = math.tanh %78 : vector<2x32xf32>
    %80 = arith.mulf %75, %79 : vector<2x32xf32>
    %c1_62 = arith.constant 1 : index
    %c0_63 = arith.constant 0 : index
    %c0_64 = arith.constant 0 : index
    %81 = vector.load %arg14[%c1_62, %c0_63, %c0_64] : memref<2x2x32xf32, #tpu.memory_space<vmem>>, vector<1x2x32xf32>
    %82 = vector.shape_cast %81 : vector<1x2x32xf32> to vector<2x32xf32>
    %83 = vector.shape_cast %80 : vector<2x32xf32> to vector<1x2x32xf32>
    tpu.vector_store %arg14[%c1_62, %c0_63, %c0_64], %83 {strides = array<i32>} : memref<2x2x32xf32, #tpu.memory_space<vmem>>, vector<1x2x32xf32>,
    %c1_65 = arith.constant 1 : index
    %c0_66 = arith.constant 0 : index
    %c0_67 = arith.constant 0 : index
    %84 = vector.load %arg15[%c1_65, %c0_66, %c0_67] : memref<2x2x32xf32, #tpu.memory_space<vmem>>, vector<1x2x32xf32>
    %85 = vector.shape_cast %84 : vector<1x2x32xf32> to vector<2x32xf32>
    %86 = vector.shape_cast %78 : vector<2x32xf32> to vector<1x2x32xf32>
    tpu.vector_store %arg15[%c1_65, %c0_66, %c0_67], %86 {strides = array<i32>} : memref<2x2x32xf32, #tpu.memory_space<vmem>>, vector<1x2x32xf32>,
    %cst_68 = arith.constant dense<0.000000e+00> : vector<2x32xf32>
    %87 = tpu.matmul %80, %21, %cst_68 {dimension_numbers = #tpu.dot_dimension_numbers<[1], [0], [0], [1], [0, 0, 1, 1], [], []>} : vector<2x32xf32>, vector<32x32xf32>, vector<2x32xf32> -> vector<2x32xf32>
    %88 = vector.shape_cast %87 : vector<2x32xf32> to vector<2x1x32xf32>
    "tpu.trace_start"() <{level = 10 : i32, message = "bqh,bsh->bqs"}> : () -> ()
    %cst_69 = arith.constant dense<0.000000e+00> : vector<2x1x8xf32>
    %89 = tpu.matmul %88, %20, %cst_69 {dimension_numbers = #tpu.dot_dimension_numbers<[2], [2], [1], [1], [0, 0, 0, 1, 1, 1], [0], [0]>} : vector<2x1x32xf32>, vector<2x8x32xf32>, vector<2x1x8xf32> -> vector<2x1x8xf32>
    "tpu.trace_stop"() : () -> ()
    %cst_70 = arith.constant dense<0xFF800000> : vector<2x1xf32>
    %90 = vector.multi_reduction <maximumf>, %89, %cst_70 [2] : vector<2x1x8xf32> to vector<2x1xf32>
    %91 = vector.shape_cast %90 : vector<2x1xf32> to vector<2x1x1xf32>
    %92 = vector.broadcast %91 : vector<2x1x1xf32> to vector<2x1x8xf32>
    %93 = arith.subf %89, %92 : vector<2x1x8xf32>
    %94 = math.exp %93 : vector<2x1x8xf32>
    %cst_71 = arith.constant dense<0.000000e+00> : vector<2x1xf32>
    %95 = vector.multi_reduction <add>, %94, %cst_71 [2] : vector<2x1x8xf32> to vector<2x1xf32>
    %96 = vector.shape_cast %95 : vector<2x1xf32> to vector<2x1x1xf32>
    %97 = tpu.reciprocal %96 {approx = true} : vector<2x1x1xf32> -> vector<2x1x1xf32>
    %98 = vector.broadcast %97 : vector<2x1x1xf32> to vector<2x1x8xf32>
    %99 = arith.mulf %94, %98 : vector<2x1x8xf32>
    "tpu.trace_start"() <{level = 10 : i32, message = "bqs,bsh->bqh"}> : () -> ()
    %cst_72 = arith.constant dense<0.000000e+00> : vector<2x1x32xf32>
    %100 = tpu.matmul %99, %20, %cst_72 {dimension_numbers = #tpu.dot_dimension_numbers<[2], [1], [1], [2], [0, 0, 0, 1, 1, 2], [0], [0]>} : vector<2x1x8xf32>, vector<2x8x32xf32>, vector<2x1x32xf32> -> vector<2x1x32xf32>
    "tpu.trace_stop"() : () -> ()
    %101 = vector.shape_cast %100 : vector<2x1x32xf32> to vector<2x32xf32>
    %cst_73 = arith.constant dense<0.000000e+00> : vector<2x32xf32>
    %102 = tpu.matmul %101, %22, %cst_73 {dimension_numbers = #tpu.dot_dimension_numbers<[1], [0], [0], [1], [0, 0, 1, 1], [], []>} : vector<2x32xf32>, vector<32x32xf32>, vector<2x32xf32> -> vector<2x32xf32>
    %cst_74 = arith.constant dense<0.000000e+00> : vector<2x32xf32>
    %103 = tpu.matmul %80, %23, %cst_74 {dimension_numbers = #tpu.dot_dimension_numbers<[1], [0], [0], [1], [0, 0, 1, 1], [], []>} : vector<2x32xf32>, vector<32x32xf32>, vector<2x32xf32> -> vector<2x32xf32>
    %104 = arith.addf %102, %103 : vector<2x32xf32>
    %105 = math.tanh %104 : vector<2x32xf32>
    %106 = arith.index_cast %c0_i32 : i32 to index
    %c0_75 = arith.constant 0 : index
    %c0_76 = arith.constant 0 : index
    %107 = vector.load %arg10[%106, %c0_75, %c0_76] : memref<6x2x32xf32, #tpu.memory_space<vmem>>, vector<1x2x32xf32>
    %108 = vector.shape_cast %107 : vector<1x2x32xf32> to vector<2x32xf32>
    %109 = vector.shape_cast %105 : vector<2x32xf32> to vector<1x2x32xf32>
    tpu.vector_store %arg10[%106, %c0_75, %c0_76], %109 {strides = array<i32>} : memref<6x2x32xf32, #tpu.memory_space<vmem>>, vector<1x2x32xf32>,
    %110 = vector.shape_cast %99 : vector<2x1x8xf32> to vector<2x8xf32>
    %111 = arith.index_cast %c0_i32 : i32 to index
    %c0_77 = arith.constant 0 : index
    %c0_78 = arith.constant 0 : index
    %112 = vector.load %arg11[%111, %c0_77, %c0_78] : memref<6x2x8xf32, #tpu.memory_space<vmem>>, vector<1x2x8xf32>
    %113 = vector.shape_cast %112 : vector<1x2x8xf32> to vector<2x8xf32>
    %114 = vector.shape_cast %110 : vector<2x8xf32> to vector<1x2x8xf32>
    tpu.vector_store %arg11[%111, %c0_77, %c0_78], %114 {strides = array<i32>} : memref<6x2x8xf32, #tpu.memory_space<vmem>>, vector<1x2x8xf32>,
    %c1_i32 = arith.constant 1 : i32
    %115 = arith.index_cast %c1_i32 : i32 to index
    %c0_79 = arith.constant 0 : index
    %c0_80 = arith.constant 0 : index
    %116 = vector.load %arg0[%115, %c0_79, %c0_80] : memref<6x2x32xf32, #tpu.memory_space<vmem>>, vector<1x2x32xf32>
    %117 = vector.shape_cast %116 : vector<1x2x32xf32> to vector<2x32xf32>
    %c0_81 = arith.constant 0 : index
    %c0_82 = arith.constant 0 : index
    %c0_83 = arith.constant 0 : index
    %118 = vector.load %arg14[%c0_81, %c0_82, %c0_83] : memref<2x2x32xf32, #tpu.memory_space<vmem>>, vector<1x2x32xf32>
    %119 = vector.shape_cast %118 : vector<1x2x32xf32> to vector<2x32xf32>
    %c0_84 = arith.constant 0 : index
    %c0_85 = arith.constant 0 : index
    %c0_86 = arith.constant 0 : index
    %120 = vector.load %arg15[%c0_84, %c0_85, %c0_86] : memref<2x2x32xf32, #tpu.memory_space<vmem>>, vector<1x2x32xf32>
    %121 = vector.shape_cast %120 : vector<1x2x32xf32> to vector<2x32xf32>
    %cst_87 = arith.constant dense<0.000000e+00> : vector<2x128xf32>
    %122 = tpu.matmul %117, %5, %cst_87 {dimension_numbers = #tpu.dot_dimension_numbers<[1], [0], [0], [1], [0, 0, 1, 1], [], []>} : vector<2x32xf32>, vector<32x128xf32>, vector<2x128xf32> -> vector<2x128xf32>
    %cst_88 = arith.constant dense<0.000000e+00> : vector<2x128xf32>
    %123 = tpu.matmul %119, %9, %cst_88 {dimension_numbers = #tpu.dot_dimension_numbers<[1], [0], [0], [1], [0, 0, 1, 1], [], []>} : vector<2x32xf32>, vector<32x128xf32>, vector<2x128xf32> -> vector<2x128xf32>
    %124 = arith.addf %122, %123 : vector<2x128xf32>
    %125 = arith.addf %124, %15 : vector<2x128xf32>
    %126 = vector.extract_strided_slice %125 {offsets = [0, 0], sizes = [2, 96], strides = [1, 1]} : vector<2x128xf32> to vector<2x96xf32>
    %127 = arith.negf %126 : vector<2x96xf32>
    %128 = math.exp %127 : vector<2x96xf32>
    %cst_89 = arith.constant 1.000000e+00 : f32
    %129 = vector.broadcast %cst_89 : f32 to vector<2x96xf32>
    %130 = arith.addf %129, %128 : vector<2x96xf32>
    %131 = arith.divf %129, %130 : vector<2x96xf32>
    %132 = vector.extract_strided_slice %125 {offsets = [0, 96], sizes = [2, 32], strides = [1, 1]} : vector<2x128xf32> to vector<2x32xf32>
    %133 = math.tanh %132 : vector<2x32xf32>
    %134 = vector.extract_strided_slice %131 {offsets = [0, 0], sizes = [2, 32], strides = [1, 1]} : vector<2x96xf32> to vector<2x32xf32>
    %135 = vector.extract_strided_slice %131 {offsets = [0, 32], sizes = [2, 32], strides = [1, 1]} : vector<2x96xf32> to vector<2x32xf32>
    %136 = vector.extract_strided_slice %131 {offsets = [0, 64], sizes = [2, 32], strides = [1, 1]} : vector<2x96xf32> to vector<2x32xf32>
    %137 = arith.mulf %135, %121 : vector<2x32xf32>
    %138 = arith.mulf %134, %133 : vector<2x32xf32>
    %139 = arith.addf %137, %138 : vector<2x32xf32>
    %140 = math.tanh %139 : vector<2x32xf32>
    %141 = arith.mulf %136, %140 : vector<2x32xf32>
    %c0_90 = arith.constant 0 : index
    %c0_91 = arith.constant 0 : index
    %c0_92 = arith.constant 0 : index
    %142 = vector.load %arg14[%c0_90, %c0_91, %c0_92] : memref<2x2x32xf32, #tpu.memory_space<vmem>>, vector<1x2x32xf32>
    %143 = vector.shape_cast %142 : vector<1x2x32xf32> to vector<2x32xf32>
    %144 = vector.shape_cast %141 : vector<2x32xf32> to vector<1x2x32xf32>
    tpu.vector_store %arg14[%c0_90, %c0_91, %c0_92], %144 {strides = array<i32>} : memref<2x2x32xf32, #tpu.memory_space<vmem>>, vector<1x2x32xf32>,
    %c0_93 = arith.constant 0 : index
    %c0_94 = arith.constant 0 : index
    %c0_95 = arith.constant 0 : index
    %145 = vector.load %arg15[%c0_93, %c0_94, %c0_95] : memref<2x2x32xf32, #tpu.memory_space<vmem>>, vector<1x2x32xf32>
    %146 = vector.shape_cast %145 : vector<1x2x32xf32> to vector<2x32xf32>
    %147 = vector.shape_cast %139 : vector<2x32xf32> to vector<1x2x32xf32>
    tpu.vector_store %arg15[%c0_93, %c0_94, %c0_95], %147 {strides = array<i32>} : memref<2x2x32xf32, #tpu.memory_space<vmem>>, vector<1x2x32xf32>,
    %c1_96 = arith.constant 1 : index
    %c0_97 = arith.constant 0 : index
    %c0_98 = arith.constant 0 : index
    %148 = vector.load %arg14[%c1_96, %c0_97, %c0_98] : memref<2x2x32xf32, #tpu.memory_space<vmem>>, vector<1x2x32xf32>
    %149 = vector.shape_cast %148 : vector<1x2x32xf32> to vector<2x32xf32>
    %c1_99 = arith.constant 1 : index
    %c0_100 = arith.constant 0 : index
    %c0_101 = arith.constant 0 : index
    %150 = vector.load %arg15[%c1_99, %c0_100, %c0_101] : memref<2x2x32xf32, #tpu.memory_space<vmem>>, vector<1x2x32xf32>
    %151 = vector.shape_cast %150 : vector<1x2x32xf32> to vector<2x32xf32>
    %cst_102 = arith.constant dense<0.000000e+00> : vector<2x128xf32>
    %152 = tpu.matmul %141, %7, %cst_102 {dimension_numbers = #tpu.dot_dimension_numbers<[1], [0], [0], [1], [0, 0, 1, 1], [], []>} : vector<2x32xf32>, vector<32x128xf32>, vector<2x128xf32> -> vector<2x128xf32>
    %cst_103 = arith.constant dense<0.000000e+00> : vector<2x128xf32>
    %153 = tpu.matmul %149, %11, %cst_103 {dimension_numbers = #tpu.dot_dimension_numbers<[1], [0], [0], [1], [0, 0, 1, 1], [], []>} : vector<2x32xf32>, vector<32x128xf32>, vector<2x128xf32> -> vector<2x128xf32>
    %154 = arith.addf %152, %153 : vector<2x128xf32>
    %155 = arith.addf %154, %19 : vector<2x128xf32>
    %156 = vector.extract_strided_slice %155 {offsets = [0, 0], sizes = [2, 96], strides = [1, 1]} : vector<2x128xf32> to vector<2x96xf32>
    %157 = arith.negf %156 : vector<2x96xf32>
    %158 = math.exp %157 : vector<2x96xf32>
    %cst_104 = arith.constant 1.000000e+00 : f32
    %159 = vector.broadcast %cst_104 : f32 to vector<2x96xf32>
    %160 = arith.addf %159, %158 : vector<2x96xf32>
    %161 = arith.divf %159, %160 : vector<2x96xf32>
    %162 = vector.extract_strided_slice %155 {offsets = [0, 96], sizes = [2, 32], strides = [1, 1]} : vector<2x128xf32> to vector<2x32xf32>
    %163 = math.tanh %162 : vector<2x32xf32>
    %164 = vector.extract_strided_slice %161 {offsets = [0, 0], sizes = [2, 32], strides = [1, 1]} : vector<2x96xf32> to vector<2x32xf32>
    %165 = vector.extract_strided_slice %161 {offsets = [0, 32], sizes = [2, 32], strides = [1, 1]} : vector<2x96xf32> to vector<2x32xf32>
    %166 = vector.extract_strided_slice %161 {offsets = [0, 64], sizes = [2, 32], strides = [1, 1]} : vector<2x96xf32> to vector<2x32xf32>
    %167 = arith.mulf %165, %151 : vector<2x32xf32>
    %168 = arith.mulf %164, %163 : vector<2x32xf32>
    %169 = arith.addf %167, %168 : vector<2x32xf32>
    %170 = math.tanh %169 : vector<2x32xf32>
    %171 = arith.mulf %166, %170 : vector<2x32xf32>
    %c1_105 = arith.constant 1 : index
    %c0_106 = arith.constant 0 : index
    %c0_107 = arith.constant 0 : index
    %172 = vector.load %arg14[%c1_105, %c0_106, %c0_107] : memref<2x2x32xf32, #tpu.memory_space<vmem>>, vector<1x2x32xf32>
    %173 = vector.shape_cast %172 : vector<1x2x32xf32> to vector<2x32xf32>
    %174 = vector.shape_cast %171 : vector<2x32xf32> to vector<1x2x32xf32>
    tpu.vector_store %arg14[%c1_105, %c0_106, %c0_107], %174 {strides = array<i32>} : memref<2x2x32xf32, #tpu.memory_space<vmem>>, vector<1x2x32xf32>,
    %c1_108 = arith.constant 1 : index
    %c0_109 = arith.constant 0 : index
    %c0_110 = arith.constant 0 : index
    %175 = vector.load %arg15[%c1_108, %c0_109, %c0_110] : memref<2x2x32xf32, #tpu.memory_space<vmem>>, vector<1x2x32xf32>
    %176 = vector.shape_cast %175 : vector<1x2x32xf32> to vector<2x32xf32>
    %177 = vector.shape_cast %169 : vector<2x32xf32> to vector<1x2x32xf32>
    tpu.vector_store %arg15[%c1_108, %c0_109, %c0_110], %177 {strides = array<i32>} : memref<2x2x32xf32, #tpu.memory_space<vmem>>, vector<1x2x32xf32>,
    %cst_111 = arith.constant dense<0.000000e+00> : vector<2x32xf32>
    %178 = tpu.matmul %171, %21, %cst_111 {dimension_numbers = #tpu.dot_dimension_numbers<[1], [0], [0], [1], [0, 0, 1, 1], [], []>} : vector<2x32xf32>, vector<32x32xf32>, vector<2x32xf32> -> vector<2x32xf32>
    %179 = vector.shape_cast %178 : vector<2x32xf32> to vector<2x1x32xf32>
    "tpu.trace_start"() <{level = 10 : i32, message = "bqh,bsh->bqs"}> : () -> ()
    %cst_112 = arith.constant dense<0.000000e+00> : vector<2x1x8xf32>
    %180 = tpu.matmul %179, %20, %cst_112 {dimension_numbers = #tpu.dot_dimension_numbers<[2], [2], [1], [1], [0, 0, 0, 1, 1, 1], [0], [0]>} : vector<2x1x32xf32>, vector<2x8x32xf32>, vector<2x1x8xf32> -> vector<2x1x8xf32>
    "tpu.trace_stop"() : () -> ()
    %cst_113 = arith.constant dense<0xFF800000> : vector<2x1xf32>
    %181 = vector.multi_reduction <maximumf>, %180, %cst_113 [2] : vector<2x1x8xf32> to vector<2x1xf32>
    %182 = vector.shape_cast %181 : vector<2x1xf32> to vector<2x1x1xf32>
    %183 = vector.broadcast %182 : vector<2x1x1xf32> to vector<2x1x8xf32>
    %184 = arith.subf %180, %183 : vector<2x1x8xf32>
    %185 = math.exp %184 : vector<2x1x8xf32>
    %cst_114 = arith.constant dense<0.000000e+00> : vector<2x1xf32>
    %186 = vector.multi_reduction <add>, %185, %cst_114 [2] : vector<2x1x8xf32> to vector<2x1xf32>
    %187 = vector.shape_cast %186 : vector<2x1xf32> to vector<2x1x1xf32>
    %188 = tpu.reciprocal %187 {approx = true} : vector<2x1x1xf32> -> vector<2x1x1xf32>
    %189 = vector.broadcast %188 : vector<2x1x1xf32> to vector<2x1x8xf32>
    %190 = arith.mulf %185, %189 : vector<2x1x8xf32>
    "tpu.trace_start"() <{level = 10 : i32, message = "bqs,bsh->bqh"}> : () -> ()
    %cst_115 = arith.constant dense<0.000000e+00> : vector<2x1x32xf32>
    %191 = tpu.matmul %190, %20, %cst_115 {dimension_numbers = #tpu.dot_dimension_numbers<[2], [1], [1], [2], [0, 0, 0, 1, 1, 2], [0], [0]>} : vector<2x1x8xf32>, vector<2x8x32xf32>, vector<2x1x32xf32> -> vector<2x1x32xf32>
    "tpu.trace_stop"() : () -> ()
    %192 = vector.shape_cast %191 : vector<2x1x32xf32> to vector<2x32xf32>
    %cst_116 = arith.constant dense<0.000000e+00> : vector<2x32xf32>
    %193 = tpu.matmul %192, %22, %cst_116 {dimension_numbers = #tpu.dot_dimension_numbers<[1], [0], [0], [1], [0, 0, 1, 1], [], []>} : vector<2x32xf32>, vector<32x32xf32>, vector<2x32xf32> -> vector<2x32xf32>
    %cst_117 = arith.constant dense<0.000000e+00> : vector<2x32xf32>
    %194 = tpu.matmul %171, %23, %cst_117 {dimension_numbers = #tpu.dot_dimension_numbers<[1], [0], [0], [1], [0, 0, 1, 1], [], []>} : vector<2x32xf32>, vector<32x32xf32>, vector<2x32xf32> -> vector<2x32xf32>
    %195 = arith.addf %193, %194 : vector<2x32xf32>
    %196 = math.tanh %195 : vector<2x32xf32>
    %197 = arith.index_cast %c1_i32 : i32 to index
    %c0_118 = arith.constant 0 : index
    %c0_119 = arith.constant 0 : index
    %198 = vector.load %arg10[%197, %c0_118, %c0_119] : memref<6x2x32xf32, #tpu.memory_space<vmem>>, vector<1x2x32xf32>
    %199 = vector.shape_cast %198 : vector<1x2x32xf32> to vector<2x32xf32>
    %200 = vector.shape_cast %196 : vector<2x32xf32> to vector<1x2x32xf32>
    tpu.vector_store %arg10[%197, %c0_118, %c0_119], %200 {strides = array<i32>} : memref<6x2x32xf32, #tpu.memory_space<vmem>>, vector<1x2x32xf32>,
    %201 = vector.shape_cast %190 : vector<2x1x8xf32> to vector<2x8xf32>
    %202 = arith.index_cast %c1_i32 : i32 to index
    %c0_120 = arith.constant 0 : index
    %c0_121 = arith.constant 0 : index
    %203 = vector.load %arg11[%202, %c0_120, %c0_121] : memref<6x2x8xf32, #tpu.memory_space<vmem>>, vector<1x2x8xf32>
    %204 = vector.shape_cast %203 : vector<1x2x8xf32> to vector<2x8xf32>
    %205 = vector.shape_cast %201 : vector<2x8xf32> to vector<1x2x8xf32>
    tpu.vector_store %arg11[%202, %c0_120, %c0_121], %205 {strides = array<i32>} : memref<6x2x8xf32, #tpu.memory_space<vmem>>, vector<1x2x8xf32>,
    %c2_i32 = arith.constant 2 : i32
    %206 = arith.index_cast %c2_i32 : i32 to index
    %c0_122 = arith.constant 0 : index
    %c0_123 = arith.constant 0 : index
    %207 = vector.load %arg0[%206, %c0_122, %c0_123] : memref<6x2x32xf32, #tpu.memory_space<vmem>>, vector<1x2x32xf32>
    %208 = vector.shape_cast %207 : vector<1x2x32xf32> to vector<2x32xf32>
    %c0_124 = arith.constant 0 : index
    %c0_125 = arith.constant 0 : index
    %c0_126 = arith.constant 0 : index
    %209 = vector.load %arg14[%c0_124, %c0_125, %c0_126] : memref<2x2x32xf32, #tpu.memory_space<vmem>>, vector<1x2x32xf32>
    %210 = vector.shape_cast %209 : vector<1x2x32xf32> to vector<2x32xf32>
    %c0_127 = arith.constant 0 : index
    %c0_128 = arith.constant 0 : index
    %c0_129 = arith.constant 0 : index
    %211 = vector.load %arg15[%c0_127, %c0_128, %c0_129] : memref<2x2x32xf32, #tpu.memory_space<vmem>>, vector<1x2x32xf32>
    %212 = vector.shape_cast %211 : vector<1x2x32xf32> to vector<2x32xf32>
    %cst_130 = arith.constant dense<0.000000e+00> : vector<2x128xf32>
    %213 = tpu.matmul %208, %5, %cst_130 {dimension_numbers = #tpu.dot_dimension_numbers<[1], [0], [0], [1], [0, 0, 1, 1], [], []>} : vector<2x32xf32>, vector<32x128xf32>, vector<2x128xf32> -> vector<2x128xf32>
    %cst_131 = arith.constant dense<0.000000e+00> : vector<2x128xf32>
    %214 = tpu.matmul %210, %9, %cst_131 {dimension_numbers = #tpu.dot_dimension_numbers<[1], [0], [0], [1], [0, 0, 1, 1], [], []>} : vector<2x32xf32>, vector<32x128xf32>, vector<2x128xf32> -> vector<2x128xf32>
    %215 = arith.addf %213, %214 : vector<2x128xf32>
    %216 = arith.addf %215, %15 : vector<2x128xf32>
    %217 = vector.extract_strided_slice %216 {offsets = [0, 0], sizes = [2, 96], strides = [1, 1]} : vector<2x128xf32> to vector<2x96xf32>
    %218 = arith.negf %217 : vector<2x96xf32>
    %219 = math.exp %218 : vector<2x96xf32>
    %cst_132 = arith.constant 1.000000e+00 : f32
    %220 = vector.broadcast %cst_132 : f32 to vector<2x96xf32>
    %221 = arith.addf %220, %219 : vector<2x96xf32>
    %222 = arith.divf %220, %221 : vector<2x96xf32>
    %223 = vector.extract_strided_slice %216 {offsets = [0, 96], sizes = [2, 32], strides = [1, 1]} : vector<2x128xf32> to vector<2x32xf32>
    %224 = math.tanh %223 : vector<2x32xf32>
    %225 = vector.extract_strided_slice %222 {offsets = [0, 0], sizes = [2, 32], strides = [1, 1]} : vector<2x96xf32> to vector<2x32xf32>
    %226 = vector.extract_strided_slice %222 {offsets = [0, 32], sizes = [2, 32], strides = [1, 1]} : vector<2x96xf32> to vector<2x32xf32>
    %227 = vector.extract_strided_slice %222 {offsets = [0, 64], sizes = [2, 32], strides = [1, 1]} : vector<2x96xf32> to vector<2x32xf32>
    %228 = arith.mulf %226, %212 : vector<2x32xf32>
    %229 = arith.mulf %225, %224 : vector<2x32xf32>
    %230 = arith.addf %228, %229 : vector<2x32xf32>
    %231 = math.tanh %230 : vector<2x32xf32>
    %232 = arith.mulf %227, %231 : vector<2x32xf32>
    %c0_133 = arith.constant 0 : index
    %c0_134 = arith.constant 0 : index
    %c0_135 = arith.constant 0 : index
    %233 = vector.load %arg14[%c0_133, %c0_134, %c0_135] : memref<2x2x32xf32, #tpu.memory_space<vmem>>, vector<1x2x32xf32>
    %234 = vector.shape_cast %233 : vector<1x2x32xf32> to vector<2x32xf32>
    %235 = vector.shape_cast %232 : vector<2x32xf32> to vector<1x2x32xf32>
    tpu.vector_store %arg14[%c0_133, %c0_134, %c0_135], %235 {strides = array<i32>} : memref<2x2x32xf32, #tpu.memory_space<vmem>>, vector<1x2x32xf32>,
    %c0_136 = arith.constant 0 : index
    %c0_137 = arith.constant 0 : index
    %c0_138 = arith.constant 0 : index
    %236 = vector.load %arg15[%c0_136, %c0_137, %c0_138] : memref<2x2x32xf32, #tpu.memory_space<vmem>>, vector<1x2x32xf32>
    %237 = vector.shape_cast %236 : vector<1x2x32xf32> to vector<2x32xf32>
    %238 = vector.shape_cast %230 : vector<2x32xf32> to vector<1x2x32xf32>
    tpu.vector_store %arg15[%c0_136, %c0_137, %c0_138], %238 {strides = array<i32>} : memref<2x2x32xf32, #tpu.memory_space<vmem>>, vector<1x2x32xf32>,
    %c1_139 = arith.constant 1 : index
    %c0_140 = arith.constant 0 : index
    %c0_141 = arith.constant 0 : index
    %239 = vector.load %arg14[%c1_139, %c0_140, %c0_141] : memref<2x2x32xf32, #tpu.memory_space<vmem>>, vector<1x2x32xf32>
    %240 = vector.shape_cast %239 : vector<1x2x32xf32> to vector<2x32xf32>
    %c1_142 = arith.constant 1 : index
    %c0_143 = arith.constant 0 : index
    %c0_144 = arith.constant 0 : index
    %241 = vector.load %arg15[%c1_142, %c0_143, %c0_144] : memref<2x2x32xf32, #tpu.memory_space<vmem>>, vector<1x2x32xf32>
    %242 = vector.shape_cast %241 : vector<1x2x32xf32> to vector<2x32xf32>
    %cst_145 = arith.constant dense<0.000000e+00> : vector<2x128xf32>
    %243 = tpu.matmul %232, %7, %cst_145 {dimension_numbers = #tpu.dot_dimension_numbers<[1], [0], [0], [1], [0, 0, 1, 1], [], []>} : vector<2x32xf32>, vector<32x128xf32>, vector<2x128xf32> -> vector<2x128xf32>
    %cst_146 = arith.constant dense<0.000000e+00> : vector<2x128xf32>
    %244 = tpu.matmul %240, %11, %cst_146 {dimension_numbers = #tpu.dot_dimension_numbers<[1], [0], [0], [1], [0, 0, 1, 1], [], []>} : vector<2x32xf32>, vector<32x128xf32>, vector<2x128xf32> -> vector<2x128xf32>
    %245 = arith.addf %243, %244 : vector<2x128xf32>
    %246 = arith.addf %245, %19 : vector<2x128xf32>
    %247 = vector.extract_strided_slice %246 {offsets = [0, 0], sizes = [2, 96], strides = [1, 1]} : vector<2x128xf32> to vector<2x96xf32>
    %248 = arith.negf %247 : vector<2x96xf32>
    %249 = math.exp %248 : vector<2x96xf32>
    %cst_147 = arith.constant 1.000000e+00 : f32
    %250 = vector.broadcast %cst_147 : f32 to vector<2x96xf32>
    %251 = arith.addf %250, %249 : vector<2x96xf32>
    %252 = arith.divf %250, %251 : vector<2x96xf32>
    %253 = vector.extract_strided_slice %246 {offsets = [0, 96], sizes = [2, 32], strides = [1, 1]} : vector<2x128xf32> to vector<2x32xf32>
    %254 = math.tanh %253 : vector<2x32xf32>
    %255 = vector.extract_strided_slice %252 {offsets = [0, 0], sizes = [2, 32], strides = [1, 1]} : vector<2x96xf32> to vector<2x32xf32>
    %256 = vector.extract_strided_slice %252 {offsets = [0, 32], sizes = [2, 32], strides = [1, 1]} : vector<2x96xf32> to vector<2x32xf32>
    %257 = vector.extract_strided_slice %252 {offsets = [0, 64], sizes = [2, 32], strides = [1, 1]} : vector<2x96xf32> to vector<2x32xf32>
    %258 = arith.mulf %256, %242 : vector<2x32xf32>
    %259 = arith.mulf %255, %254 : vector<2x32xf32>
    %260 = arith.addf %258, %259 : vector<2x32xf32>
    %261 = math.tanh %260 : vector<2x32xf32>
    %262 = arith.mulf %257, %261 : vector<2x32xf32>
    %c1_148 = arith.constant 1 : index
    %c0_149 = arith.constant 0 : index
    %c0_150 = arith.constant 0 : index
    %263 = vector.load %arg14[%c1_148, %c0_149, %c0_150] : memref<2x2x32xf32, #tpu.memory_space<vmem>>, vector<1x2x32xf32>
    %264 = vector.shape_cast %263 : vector<1x2x32xf32> to vector<2x32xf32>
    %265 = vector.shape_cast %262 : vector<2x32xf32> to vector<1x2x32xf32>
    tpu.vector_store %arg14[%c1_148, %c0_149, %c0_150], %265 {strides = array<i32>} : memref<2x2x32xf32, #tpu.memory_space<vmem>>, vector<1x2x32xf32>,
    %c1_151 = arith.constant 1 : index
    %c0_152 = arith.constant 0 : index
    %c0_153 = arith.constant 0 : index
    %266 = vector.load %arg15[%c1_151, %c0_152, %c0_153] : memref<2x2x32xf32, #tpu.memory_space<vmem>>, vector<1x2x32xf32>
    %267 = vector.shape_cast %266 : vector<1x2x32xf32> to vector<2x32xf32>
    %268 = vector.shape_cast %260 : vector<2x32xf32> to vector<1x2x32xf32>
    tpu.vector_store %arg15[%c1_151, %c0_152, %c0_153], %268 {strides = array<i32>} : memref<2x2x32xf32, #tpu.memory_space<vmem>>, vector<1x2x32xf32>,
    %cst_154 = arith.constant dense<0.000000e+00> : vector<2x32xf32>
    %269 = tpu.matmul %262, %21, %cst_154 {dimension_numbers = #tpu.dot_dimension_numbers<[1], [0], [0], [1], [0, 0, 1, 1], [], []>} : vector<2x32xf32>, vector<32x32xf32>, vector<2x32xf32> -> vector<2x32xf32>
    %270 = vector.shape_cast %269 : vector<2x32xf32> to vector<2x1x32xf32>
    "tpu.trace_start"() <{level = 10 : i32, message = "bqh,bsh->bqs"}> : () -> ()
    %cst_155 = arith.constant dense<0.000000e+00> : vector<2x1x8xf32>
    %271 = tpu.matmul %270, %20, %cst_155 {dimension_numbers = #tpu.dot_dimension_numbers<[2], [2], [1], [1], [0, 0, 0, 1, 1, 1], [0], [0]>} : vector<2x1x32xf32>, vector<2x8x32xf32>, vector<2x1x8xf32> -> vector<2x1x8xf32>
    "tpu.trace_stop"() : () -> ()
    %cst_156 = arith.constant dense<0xFF800000> : vector<2x1xf32>
    %272 = vector.multi_reduction <maximumf>, %271, %cst_156 [2] : vector<2x1x8xf32> to vector<2x1xf32>
    %273 = vector.shape_cast %272 : vector<2x1xf32> to vector<2x1x1xf32>
    %274 = vector.broadcast %273 : vector<2x1x1xf32> to vector<2x1x8xf32>
    %275 = arith.subf %271, %274 : vector<2x1x8xf32>
    %276 = math.exp %275 : vector<2x1x8xf32>
    %cst_157 = arith.constant dense<0.000000e+00> : vector<2x1xf32>
    %277 = vector.multi_reduction <add>, %276, %cst_157 [2] : vector<2x1x8xf32> to vector<2x1xf32>
    %278 = vector.shape_cast %277 : vector<2x1xf32> to vector<2x1x1xf32>
    %279 = tpu.reciprocal %278 {approx = true} : vector<2x1x1xf32> -> vector<2x1x1xf32>
    %280 = vector.broadcast %279 : vector<2x1x1xf32> to vector<2x1x8xf32>
    %281 = arith.mulf %276, %280 : vector<2x1x8xf32>
    "tpu.trace_start"() <{level = 10 : i32, message = "bqs,bsh->bqh"}> : () -> ()
    %cst_158 = arith.constant dense<0.000000e+00> : vector<2x1x32xf32>
    %282 = tpu.matmul %281, %20, %cst_158 {dimension_numbers = #tpu.dot_dimension_numbers<[2], [1], [1], [2], [0, 0, 0, 1, 1, 2], [0], [0]>} : vector<2x1x8xf32>, vector<2x8x32xf32>, vector<2x1x32xf32> -> vector<2x1x32xf32>
    "tpu.trace_stop"() : () -> ()
    %283 = vector.shape_cast %282 : vector<2x1x32xf32> to vector<2x32xf32>
    %cst_159 = arith.constant dense<0.000000e+00> : vector<2x32xf32>
    %284 = tpu.matmul %283, %22, %cst_159 {dimension_numbers = #tpu.dot_dimension_numbers<[1], [0], [0], [1], [0, 0, 1, 1], [], []>} : vector<2x32xf32>, vector<32x32xf32>, vector<2x32xf32> -> vector<2x32xf32>
    %cst_160 = arith.constant dense<0.000000e+00> : vector<2x32xf32>
    %285 = tpu.matmul %262, %23, %cst_160 {dimension_numbers = #tpu.dot_dimension_numbers<[1], [0], [0], [1], [0, 0, 1, 1], [], []>} : vector<2x32xf32>, vector<32x32xf32>, vector<2x32xf32> -> vector<2x32xf32>
    %286 = arith.addf %284, %285 : vector<2x32xf32>
    %287 = math.tanh %286 : vector<2x32xf32>
    %288 = arith.index_cast %c2_i32 : i32 to index
    %c0_161 = arith.constant 0 : index
    %c0_162 = arith.constant 0 : index
    %289 = vector.load %arg10[%288, %c0_161, %c0_162] : memref<6x2x32xf32, #tpu.memory_space<vmem>>, vector<1x2x32xf32>
    %290 = vector.shape_cast %289 : vector<1x2x32xf32> to vector<2x32xf32>
    %291 = vector.shape_cast %287 : vector<2x32xf32> to vector<1x2x32xf32>
    tpu.vector_store %arg10[%288, %c0_161, %c0_162], %291 {strides = array<i32>} : memref<6x2x32xf32, #tpu.memory_space<vmem>>, vector<1x2x32xf32>,
    %292 = vector.shape_cast %281 : vector<2x1x8xf32> to vector<2x8xf32>
    %293 = arith.index_cast %c2_i32 : i32 to index
    %c0_163 = arith.constant 0 : index
    %c0_164 = arith.constant 0 : index
    %294 = vector.load %arg11[%293, %c0_163, %c0_164] : memref<6x2x8xf32, #tpu.memory_space<vmem>>, vector<1x2x8xf32>
    %295 = vector.shape_cast %294 : vector<1x2x8xf32> to vector<2x8xf32>
    %296 = vector.shape_cast %292 : vector<2x8xf32> to vector<1x2x8xf32>
    tpu.vector_store %arg11[%293, %c0_163, %c0_164], %296 {strides = array<i32>} : memref<6x2x8xf32, #tpu.memory_space<vmem>>, vector<1x2x8xf32>,
    %c3_i32 = arith.constant 3 : i32
    %297 = arith.index_cast %c3_i32 : i32 to index
    %c0_165 = arith.constant 0 : index
    %c0_166 = arith.constant 0 : index
    %298 = vector.load %arg0[%297, %c0_165, %c0_166] : memref<6x2x32xf32, #tpu.memory_space<vmem>>, vector<1x2x32xf32>
    %299 = vector.shape_cast %298 : vector<1x2x32xf32> to vector<2x32xf32>
    %c0_167 = arith.constant 0 : index
    %c0_168 = arith.constant 0 : index
    %c0_169 = arith.constant 0 : index
    %300 = vector.load %arg14[%c0_167, %c0_168, %c0_169] : memref<2x2x32xf32, #tpu.memory_space<vmem>>, vector<1x2x32xf32>
    %301 = vector.shape_cast %300 : vector<1x2x32xf32> to vector<2x32xf32>
    %c0_170 = arith.constant 0 : index
    %c0_171 = arith.constant 0 : index
    %c0_172 = arith.constant 0 : index
    %302 = vector.load %arg15[%c0_170, %c0_171, %c0_172] : memref<2x2x32xf32, #tpu.memory_space<vmem>>, vector<1x2x32xf32>
    %303 = vector.shape_cast %302 : vector<1x2x32xf32> to vector<2x32xf32>
    %cst_173 = arith.constant dense<0.000000e+00> : vector<2x128xf32>
    %304 = tpu.matmul %299, %5, %cst_173 {dimension_numbers = #tpu.dot_dimension_numbers<[1], [0], [0], [1], [0, 0, 1, 1], [], []>} : vector<2x32xf32>, vector<32x128xf32>, vector<2x128xf32> -> vector<2x128xf32>
    %cst_174 = arith.constant dense<0.000000e+00> : vector<2x128xf32>
    %305 = tpu.matmul %301, %9, %cst_174 {dimension_numbers = #tpu.dot_dimension_numbers<[1], [0], [0], [1], [0, 0, 1, 1], [], []>} : vector<2x32xf32>, vector<32x128xf32>, vector<2x128xf32> -> vector<2x128xf32>
    %306 = arith.addf %304, %305 : vector<2x128xf32>
    %307 = arith.addf %306, %15 : vector<2x128xf32>
    %308 = vector.extract_strided_slice %307 {offsets = [0, 0], sizes = [2, 96], strides = [1, 1]} : vector<2x128xf32> to vector<2x96xf32>
    %309 = arith.negf %308 : vector<2x96xf32>
    %310 = math.exp %309 : vector<2x96xf32>
    %cst_175 = arith.constant 1.000000e+00 : f32
    %311 = vector.broadcast %cst_175 : f32 to vector<2x96xf32>
    %312 = arith.addf %311, %310 : vector<2x96xf32>
    %313 = arith.divf %311, %312 : vector<2x96xf32>
    %314 = vector.extract_strided_slice %307 {offsets = [0, 96], sizes = [2, 32], strides = [1, 1]} : vector<2x128xf32> to vector<2x32xf32>
    %315 = math.tanh %314 : vector<2x32xf32>
    %316 = vector.extract_strided_slice %313 {offsets = [0, 0], sizes = [2, 32], strides = [1, 1]} : vector<2x96xf32> to vector<2x32xf32>
    %317 = vector.extract_strided_slice %313 {offsets = [0, 32], sizes = [2, 32], strides = [1, 1]} : vector<2x96xf32> to vector<2x32xf32>
    %318 = vector.extract_strided_slice %313 {offsets = [0, 64], sizes = [2, 32], strides = [1, 1]} : vector<2x96xf32> to vector<2x32xf32>
    %319 = arith.mulf %317, %303 : vector<2x32xf32>
    %320 = arith.mulf %316, %315 : vector<2x32xf32>
    %321 = arith.addf %319, %320 : vector<2x32xf32>
    %322 = math.tanh %321 : vector<2x32xf32>
    %323 = arith.mulf %318, %322 : vector<2x32xf32>
    %c0_176 = arith.constant 0 : index
    %c0_177 = arith.constant 0 : index
    %c0_178 = arith.constant 0 : index
    %324 = vector.load %arg14[%c0_176, %c0_177, %c0_178] : memref<2x2x32xf32, #tpu.memory_space<vmem>>, vector<1x2x32xf32>
    %325 = vector.shape_cast %324 : vector<1x2x32xf32> to vector<2x32xf32>
    %326 = vector.shape_cast %323 : vector<2x32xf32> to vector<1x2x32xf32>
    tpu.vector_store %arg14[%c0_176, %c0_177, %c0_178], %326 {strides = array<i32>} : memref<2x2x32xf32, #tpu.memory_space<vmem>>, vector<1x2x32xf32>,
    %c0_179 = arith.constant 0 : index
    %c0_180 = arith.constant 0 : index
    %c0_181 = arith.constant 0 : index
    %327 = vector.load %arg15[%c0_179, %c0_180, %c0_181] : memref<2x2x32xf32, #tpu.memory_space<vmem>>, vector<1x2x32xf32>
    %328 = vector.shape_cast %327 : vector<1x2x32xf32> to vector<2x32xf32>
    %329 = vector.shape_cast %321 : vector<2x32xf32> to vector<1x2x32xf32>
    tpu.vector_store %arg15[%c0_179, %c0_180, %c0_181], %329 {strides = array<i32>} : memref<2x2x32xf32, #tpu.memory_space<vmem>>, vector<1x2x32xf32>,
    %c1_182 = arith.constant 1 : index
    %c0_183 = arith.constant 0 : index
    %c0_184 = arith.constant 0 : index
    %330 = vector.load %arg14[%c1_182, %c0_183, %c0_184] : memref<2x2x32xf32, #tpu.memory_space<vmem>>, vector<1x2x32xf32>
    %331 = vector.shape_cast %330 : vector<1x2x32xf32> to vector<2x32xf32>
    %c1_185 = arith.constant 1 : index
    %c0_186 = arith.constant 0 : index
    %c0_187 = arith.constant 0 : index
    %332 = vector.load %arg15[%c1_185, %c0_186, %c0_187] : memref<2x2x32xf32, #tpu.memory_space<vmem>>, vector<1x2x32xf32>
    %333 = vector.shape_cast %332 : vector<1x2x32xf32> to vector<2x32xf32>
    %cst_188 = arith.constant dense<0.000000e+00> : vector<2x128xf32>
    %334 = tpu.matmul %323, %7, %cst_188 {dimension_numbers = #tpu.dot_dimension_numbers<[1], [0], [0], [1], [0, 0, 1, 1], [], []>} : vector<2x32xf32>, vector<32x128xf32>, vector<2x128xf32> -> vector<2x128xf32>
    %cst_189 = arith.constant dense<0.000000e+00> : vector<2x128xf32>
    %335 = tpu.matmul %331, %11, %cst_189 {dimension_numbers = #tpu.dot_dimension_numbers<[1], [0], [0], [1], [0, 0, 1, 1], [], []>} : vector<2x32xf32>, vector<32x128xf32>, vector<2x128xf32> -> vector<2x128xf32>
    %336 = arith.addf %334, %335 : vector<2x128xf32>
    %337 = arith.addf %336, %19 : vector<2x128xf32>
    %338 = vector.extract_strided_slice %337 {offsets = [0, 0], sizes = [2, 96], strides = [1, 1]} : vector<2x128xf32> to vector<2x96xf32>
    %339 = arith.negf %338 : vector<2x96xf32>
    %340 = math.exp %339 : vector<2x96xf32>
    %cst_190 = arith.constant 1.000000e+00 : f32
    %341 = vector.broadcast %cst_190 : f32 to vector<2x96xf32>
    %342 = arith.addf %341, %340 : vector<2x96xf32>
    %343 = arith.divf %341, %342 : vector<2x96xf32>
    %344 = vector.extract_strided_slice %337 {offsets = [0, 96], sizes = [2, 32], strides = [1, 1]} : vector<2x128xf32> to vector<2x32xf32>
    %345 = math.tanh %344 : vector<2x32xf32>
    %346 = vector.extract_strided_slice %343 {offsets = [0, 0], sizes = [2, 32], strides = [1, 1]} : vector<2x96xf32> to vector<2x32xf32>
    %347 = vector.extract_strided_slice %343 {offsets = [0, 32], sizes = [2, 32], strides = [1, 1]} : vector<2x96xf32> to vector<2x32xf32>
    %348 = vector.extract_strided_slice %343 {offsets = [0, 64], sizes = [2, 32], strides = [1, 1]} : vector<2x96xf32> to vector<2x32xf32>
    %349 = arith.mulf %347, %333 : vector<2x32xf32>
    %350 = arith.mulf %346, %345 : vector<2x32xf32>
    %351 = arith.addf %349, %350 : vector<2x32xf32>
    %352 = math.tanh %351 : vector<2x32xf32>
    %353 = arith.mulf %348, %352 : vector<2x32xf32>
    %c1_191 = arith.constant 1 : index
    %c0_192 = arith.constant 0 : index
    %c0_193 = arith.constant 0 : index
    %354 = vector.load %arg14[%c1_191, %c0_192, %c0_193] : memref<2x2x32xf32, #tpu.memory_space<vmem>>, vector<1x2x32xf32>
    %355 = vector.shape_cast %354 : vector<1x2x32xf32> to vector<2x32xf32>
    %356 = vector.shape_cast %353 : vector<2x32xf32> to vector<1x2x32xf32>
    tpu.vector_store %arg14[%c1_191, %c0_192, %c0_193], %356 {strides = array<i32>} : memref<2x2x32xf32, #tpu.memory_space<vmem>>, vector<1x2x32xf32>,
    %c1_194 = arith.constant 1 : index
    %c0_195 = arith.constant 0 : index
    %c0_196 = arith.constant 0 : index
    %357 = vector.load %arg15[%c1_194, %c0_195, %c0_196] : memref<2x2x32xf32, #tpu.memory_space<vmem>>, vector<1x2x32xf32>
    %358 = vector.shape_cast %357 : vector<1x2x32xf32> to vector<2x32xf32>
    %359 = vector.shape_cast %351 : vector<2x32xf32> to vector<1x2x32xf32>
    tpu.vector_store %arg15[%c1_194, %c0_195, %c0_196], %359 {strides = array<i32>} : memref<2x2x32xf32, #tpu.memory_space<vmem>>, vector<1x2x32xf32>,
    %cst_197 = arith.constant dense<0.000000e+00> : vector<2x32xf32>
    %360 = tpu.matmul %353, %21, %cst_197 {dimension_numbers = #tpu.dot_dimension_numbers<[1], [0], [0], [1], [0, 0, 1, 1], [], []>} : vector<2x32xf32>, vector<32x32xf32>, vector<2x32xf32> -> vector<2x32xf32>
    %361 = vector.shape_cast %360 : vector<2x32xf32> to vector<2x1x32xf32>
    "tpu.trace_start"() <{level = 10 : i32, message = "bqh,bsh->bqs"}> : () -> ()
    %cst_198 = arith.constant dense<0.000000e+00> : vector<2x1x8xf32>
    %362 = tpu.matmul %361, %20, %cst_198 {dimension_numbers = #tpu.dot_dimension_numbers<[2], [2], [1], [1], [0, 0, 0, 1, 1, 1], [0], [0]>} : vector<2x1x32xf32>, vector<2x8x32xf32>, vector<2x1x8xf32> -> vector<2x1x8xf32>
    "tpu.trace_stop"() : () -> ()
    %cst_199 = arith.constant dense<0xFF800000> : vector<2x1xf32>
    %363 = vector.multi_reduction <maximumf>, %362, %cst_199 [2] : vector<2x1x8xf32> to vector<2x1xf32>
    %364 = vector.shape_cast %363 : vector<2x1xf32> to vector<2x1x1xf32>
    %365 = vector.broadcast %364 : vector<2x1x1xf32> to vector<2x1x8xf32>
    %366 = arith.subf %362, %365 : vector<2x1x8xf32>
    %367 = math.exp %366 : vector<2x1x8xf32>
    %cst_200 = arith.constant dense<0.000000e+00> : vector<2x1xf32>
    %368 = vector.multi_reduction <add>, %367, %cst_200 [2] : vector<2x1x8xf32> to vector<2x1xf32>
    %369 = vector.shape_cast %368 : vector<2x1xf32> to vector<2x1x1xf32>
    %370 = tpu.reciprocal %369 {approx = true} : vector<2x1x1xf32> -> vector<2x1x1xf32>
    %371 = vector.broadcast %370 : vector<2x1x1xf32> to vector<2x1x8xf32>
    %372 = arith.mulf %367, %371 : vector<2x1x8xf32>
    "tpu.trace_start"() <{level = 10 : i32, message = "bqs,bsh->bqh"}> : () -> ()
    %cst_201 = arith.constant dense<0.000000e+00> : vector<2x1x32xf32>
    %373 = tpu.matmul %372, %20, %cst_201 {dimension_numbers = #tpu.dot_dimension_numbers<[2], [1], [1], [2], [0, 0, 0, 1, 1, 2], [0], [0]>} : vector<2x1x8xf32>, vector<2x8x32xf32>, vector<2x1x32xf32> -> vector<2x1x32xf32>
    "tpu.trace_stop"() : () -> ()
    %374 = vector.shape_cast %373 : vector<2x1x32xf32> to vector<2x32xf32>
    %cst_202 = arith.constant dense<0.000000e+00> : vector<2x32xf32>
    %375 = tpu.matmul %374, %22, %cst_202 {dimension_numbers = #tpu.dot_dimension_numbers<[1], [0], [0], [1], [0, 0, 1, 1], [], []>} : vector<2x32xf32>, vector<32x32xf32>, vector<2x32xf32> -> vector<2x32xf32>
    %cst_203 = arith.constant dense<0.000000e+00> : vector<2x32xf32>
    %376 = tpu.matmul %353, %23, %cst_203 {dimension_numbers = #tpu.dot_dimension_numbers<[1], [0], [0], [1], [0, 0, 1, 1], [], []>} : vector<2x32xf32>, vector<32x32xf32>, vector<2x32xf32> -> vector<2x32xf32>
    %377 = arith.addf %375, %376 : vector<2x32xf32>
    %378 = math.tanh %377 : vector<2x32xf32>
    %379 = arith.index_cast %c3_i32 : i32 to index
    %c0_204 = arith.constant 0 : index
    %c0_205 = arith.constant 0 : index
    %380 = vector.load %arg10[%379, %c0_204, %c0_205] : memref<6x2x32xf32, #tpu.memory_space<vmem>>, vector<1x2x32xf32>
    %381 = vector.shape_cast %380 : vector<1x2x32xf32> to vector<2x32xf32>
    %382 = vector.shape_cast %378 : vector<2x32xf32> to vector<1x2x32xf32>
    tpu.vector_store %arg10[%379, %c0_204, %c0_205], %382 {strides = array<i32>} : memref<6x2x32xf32, #tpu.memory_space<vmem>>, vector<1x2x32xf32>,
    %383 = vector.shape_cast %372 : vector<2x1x8xf32> to vector<2x8xf32>
    %384 = arith.index_cast %c3_i32 : i32 to index
    %c0_206 = arith.constant 0 : index
    %c0_207 = arith.constant 0 : index
    %385 = vector.load %arg11[%384, %c0_206, %c0_207] : memref<6x2x8xf32, #tpu.memory_space<vmem>>, vector<1x2x8xf32>
    %386 = vector.shape_cast %385 : vector<1x2x8xf32> to vector<2x8xf32>
    %387 = vector.shape_cast %383 : vector<2x8xf32> to vector<1x2x8xf32>
    tpu.vector_store %arg11[%384, %c0_206, %c0_207], %387 {strides = array<i32>} : memref<6x2x8xf32, #tpu.memory_space<vmem>>, vector<1x2x8xf32>,
    %c4_i32 = arith.constant 4 : i32
    %388 = arith.index_cast %c4_i32 : i32 to index
    %c0_208 = arith.constant 0 : index
    %c0_209 = arith.constant 0 : index
    %389 = vector.load %arg0[%388, %c0_208, %c0_209] : memref<6x2x32xf32, #tpu.memory_space<vmem>>, vector<1x2x32xf32>
    %390 = vector.shape_cast %389 : vector<1x2x32xf32> to vector<2x32xf32>
    %c0_210 = arith.constant 0 : index
    %c0_211 = arith.constant 0 : index
    %c0_212 = arith.constant 0 : index
    %391 = vector.load %arg14[%c0_210, %c0_211, %c0_212] : memref<2x2x32xf32, #tpu.memory_space<vmem>>, vector<1x2x32xf32>
    %392 = vector.shape_cast %391 : vector<1x2x32xf32> to vector<2x32xf32>
    %c0_213 = arith.constant 0 : index
    %c0_214 = arith.constant 0 : index
    %c0_215 = arith.constant 0 : index
    %393 = vector.load %arg15[%c0_213, %c0_214, %c0_215] : memref<2x2x32xf32, #tpu.memory_space<vmem>>, vector<1x2x32xf32>
    %394 = vector.shape_cast %393 : vector<1x2x32xf32> to vector<2x32xf32>
    %cst_216 = arith.constant dense<0.000000e+00> : vector<2x128xf32>
    %395 = tpu.matmul %390, %5, %cst_216 {dimension_numbers = #tpu.dot_dimension_numbers<[1], [0], [0], [1], [0, 0, 1, 1], [], []>} : vector<2x32xf32>, vector<32x128xf32>, vector<2x128xf32> -> vector<2x128xf32>
    %cst_217 = arith.constant dense<0.000000e+00> : vector<2x128xf32>
    %396 = tpu.matmul %392, %9, %cst_217 {dimension_numbers = #tpu.dot_dimension_numbers<[1], [0], [0], [1], [0, 0, 1, 1], [], []>} : vector<2x32xf32>, vector<32x128xf32>, vector<2x128xf32> -> vector<2x128xf32>
    %397 = arith.addf %395, %396 : vector<2x128xf32>
    %398 = arith.addf %397, %15 : vector<2x128xf32>
    %399 = vector.extract_strided_slice %398 {offsets = [0, 0], sizes = [2, 96], strides = [1, 1]} : vector<2x128xf32> to vector<2x96xf32>
    %400 = arith.negf %399 : vector<2x96xf32>
    %401 = math.exp %400 : vector<2x96xf32>
    %cst_218 = arith.constant 1.000000e+00 : f32
    %402 = vector.broadcast %cst_218 : f32 to vector<2x96xf32>
    %403 = arith.addf %402, %401 : vector<2x96xf32>
    %404 = arith.divf %402, %403 : vector<2x96xf32>
    %405 = vector.extract_strided_slice %398 {offsets = [0, 96], sizes = [2, 32], strides = [1, 1]} : vector<2x128xf32> to vector<2x32xf32>
    %406 = math.tanh %405 : vector<2x32xf32>
    %407 = vector.extract_strided_slice %404 {offsets = [0, 0], sizes = [2, 32], strides = [1, 1]} : vector<2x96xf32> to vector<2x32xf32>
    %408 = vector.extract_strided_slice %404 {offsets = [0, 32], sizes = [2, 32], strides = [1, 1]} : vector<2x96xf32> to vector<2x32xf32>
    %409 = vector.extract_strided_slice %404 {offsets = [0, 64], sizes = [2, 32], strides = [1, 1]} : vector<2x96xf32> to vector<2x32xf32>
    %410 = arith.mulf %408, %394 : vector<2x32xf32>
    %411 = arith.mulf %407, %406 : vector<2x32xf32>
    %412 = arith.addf %410, %411 : vector<2x32xf32>
    %413 = math.tanh %412 : vector<2x32xf32>
    %414 = arith.mulf %409, %413 : vector<2x32xf32>
    %c0_219 = arith.constant 0 : index
    %c0_220 = arith.constant 0 : index
    %c0_221 = arith.constant 0 : index
    %415 = vector.load %arg14[%c0_219, %c0_220, %c0_221] : memref<2x2x32xf32, #tpu.memory_space<vmem>>, vector<1x2x32xf32>
    %416 = vector.shape_cast %415 : vector<1x2x32xf32> to vector<2x32xf32>
    %417 = vector.shape_cast %414 : vector<2x32xf32> to vector<1x2x32xf32>
    tpu.vector_store %arg14[%c0_219, %c0_220, %c0_221], %417 {strides = array<i32>} : memref<2x2x32xf32, #tpu.memory_space<vmem>>, vector<1x2x32xf32>,
    %c0_222 = arith.constant 0 : index
    %c0_223 = arith.constant 0 : index
    %c0_224 = arith.constant 0 : index
    %418 = vector.load %arg15[%c0_222, %c0_223, %c0_224] : memref<2x2x32xf32, #tpu.memory_space<vmem>>, vector<1x2x32xf32>
    %419 = vector.shape_cast %418 : vector<1x2x32xf32> to vector<2x32xf32>
    %420 = vector.shape_cast %412 : vector<2x32xf32> to vector<1x2x32xf32>
    tpu.vector_store %arg15[%c0_222, %c0_223, %c0_224], %420 {strides = array<i32>} : memref<2x2x32xf32, #tpu.memory_space<vmem>>, vector<1x2x32xf32>,
    %c1_225 = arith.constant 1 : index
    %c0_226 = arith.constant 0 : index
    %c0_227 = arith.constant 0 : index
    %421 = vector.load %arg14[%c1_225, %c0_226, %c0_227] : memref<2x2x32xf32, #tpu.memory_space<vmem>>, vector<1x2x32xf32>
    %422 = vector.shape_cast %421 : vector<1x2x32xf32> to vector<2x32xf32>
    %c1_228 = arith.constant 1 : index
    %c0_229 = arith.constant 0 : index
    %c0_230 = arith.constant 0 : index
    %423 = vector.load %arg15[%c1_228, %c0_229, %c0_230] : memref<2x2x32xf32, #tpu.memory_space<vmem>>, vector<1x2x32xf32>
    %424 = vector.shape_cast %423 : vector<1x2x32xf32> to vector<2x32xf32>
    %cst_231 = arith.constant dense<0.000000e+00> : vector<2x128xf32>
    %425 = tpu.matmul %414, %7, %cst_231 {dimension_numbers = #tpu.dot_dimension_numbers<[1], [0], [0], [1], [0, 0, 1, 1], [], []>} : vector<2x32xf32>, vector<32x128xf32>, vector<2x128xf32> -> vector<2x128xf32>
    %cst_232 = arith.constant dense<0.000000e+00> : vector<2x128xf32>
    %426 = tpu.matmul %422, %11, %cst_232 {dimension_numbers = #tpu.dot_dimension_numbers<[1], [0], [0], [1], [0, 0, 1, 1], [], []>} : vector<2x32xf32>, vector<32x128xf32>, vector<2x128xf32> -> vector<2x128xf32>
    %427 = arith.addf %425, %426 : vector<2x128xf32>
    %428 = arith.addf %427, %19 : vector<2x128xf32>
    %429 = vector.extract_strided_slice %428 {offsets = [0, 0], sizes = [2, 96], strides = [1, 1]} : vector<2x128xf32> to vector<2x96xf32>
    %430 = arith.negf %429 : vector<2x96xf32>
    %431 = math.exp %430 : vector<2x96xf32>
    %cst_233 = arith.constant 1.000000e+00 : f32
    %432 = vector.broadcast %cst_233 : f32 to vector<2x96xf32>
    %433 = arith.addf %432, %431 : vector<2x96xf32>
    %434 = arith.divf %432, %433 : vector<2x96xf32>
    %435 = vector.extract_strided_slice %428 {offsets = [0, 96], sizes = [2, 32], strides = [1, 1]} : vector<2x128xf32> to vector<2x32xf32>
    %436 = math.tanh %435 : vector<2x32xf32>
    %437 = vector.extract_strided_slice %434 {offsets = [0, 0], sizes = [2, 32], strides = [1, 1]} : vector<2x96xf32> to vector<2x32xf32>
    %438 = vector.extract_strided_slice %434 {offsets = [0, 32], sizes = [2, 32], strides = [1, 1]} : vector<2x96xf32> to vector<2x32xf32>
    %439 = vector.extract_strided_slice %434 {offsets = [0, 64], sizes = [2, 32], strides = [1, 1]} : vector<2x96xf32> to vector<2x32xf32>
    %440 = arith.mulf %438, %424 : vector<2x32xf32>
    %441 = arith.mulf %437, %436 : vector<2x32xf32>
    %442 = arith.addf %440, %441 : vector<2x32xf32>
    %443 = math.tanh %442 : vector<2x32xf32>
    %444 = arith.mulf %439, %443 : vector<2x32xf32>
    %c1_234 = arith.constant 1 : index
    %c0_235 = arith.constant 0 : index
    %c0_236 = arith.constant 0 : index
    %445 = vector.load %arg14[%c1_234, %c0_235, %c0_236] : memref<2x2x32xf32, #tpu.memory_space<vmem>>, vector<1x2x32xf32>
    %446 = vector.shape_cast %445 : vector<1x2x32xf32> to vector<2x32xf32>
    %447 = vector.shape_cast %444 : vector<2x32xf32> to vector<1x2x32xf32>
    tpu.vector_store %arg14[%c1_234, %c0_235, %c0_236], %447 {strides = array<i32>} : memref<2x2x32xf32, #tpu.memory_space<vmem>>, vector<1x2x32xf32>,
    %c1_237 = arith.constant 1 : index
    %c0_238 = arith.constant 0 : index
    %c0_239 = arith.constant 0 : index
    %448 = vector.load %arg15[%c1_237, %c0_238, %c0_239] : memref<2x2x32xf32, #tpu.memory_space<vmem>>, vector<1x2x32xf32>
    %449 = vector.shape_cast %448 : vector<1x2x32xf32> to vector<2x32xf32>
    %450 = vector.shape_cast %442 : vector<2x32xf32> to vector<1x2x32xf32>
    tpu.vector_store %arg15[%c1_237, %c0_238, %c0_239], %450 {strides = array<i32>} : memref<2x2x32xf32, #tpu.memory_space<vmem>>, vector<1x2x32xf32>,
    %cst_240 = arith.constant dense<0.000000e+00> : vector<2x32xf32>
    %451 = tpu.matmul %444, %21, %cst_240 {dimension_numbers = #tpu.dot_dimension_numbers<[1], [0], [0], [1], [0, 0, 1, 1], [], []>} : vector<2x32xf32>, vector<32x32xf32>, vector<2x32xf32> -> vector<2x32xf32>
    %452 = vector.shape_cast %451 : vector<2x32xf32> to vector<2x1x32xf32>
    "tpu.trace_start"() <{level = 10 : i32, message = "bqh,bsh->bqs"}> : () -> ()
    %cst_241 = arith.constant dense<0.000000e+00> : vector<2x1x8xf32>
    %453 = tpu.matmul %452, %20, %cst_241 {dimension_numbers = #tpu.dot_dimension_numbers<[2], [2], [1], [1], [0, 0, 0, 1, 1, 1], [0], [0]>} : vector<2x1x32xf32>, vector<2x8x32xf32>, vector<2x1x8xf32> -> vector<2x1x8xf32>
    "tpu.trace_stop"() : () -> ()
    %cst_242 = arith.constant dense<0xFF800000> : vector<2x1xf32>
    %454 = vector.multi_reduction <maximumf>, %453, %cst_242 [2] : vector<2x1x8xf32> to vector<2x1xf32>
    %455 = vector.shape_cast %454 : vector<2x1xf32> to vector<2x1x1xf32>
    %456 = vector.broadcast %455 : vector<2x1x1xf32> to vector<2x1x8xf32>
    %457 = arith.subf %453, %456 : vector<2x1x8xf32>
    %458 = math.exp %457 : vector<2x1x8xf32>
    %cst_243 = arith.constant dense<0.000000e+00> : vector<2x1xf32>
    %459 = vector.multi_reduction <add>, %458, %cst_243 [2] : vector<2x1x8xf32> to vector<2x1xf32>
    %460 = vector.shape_cast %459 : vector<2x1xf32> to vector<2x1x1xf32>
    %461 = tpu.reciprocal %460 {approx = true} : vector<2x1x1xf32> -> vector<2x1x1xf32>
    %462 = vector.broadcast %461 : vector<2x1x1xf32> to vector<2x1x8xf32>
    %463 = arith.mulf %458, %462 : vector<2x1x8xf32>
    "tpu.trace_start"() <{level = 10 : i32, message = "bqs,bsh->bqh"}> : () -> ()
    %cst_244 = arith.constant dense<0.000000e+00> : vector<2x1x32xf32>
    %464 = tpu.matmul %463, %20, %cst_244 {dimension_numbers = #tpu.dot_dimension_numbers<[2], [1], [1], [2], [0, 0, 0, 1, 1, 2], [0], [0]>} : vector<2x1x8xf32>, vector<2x8x32xf32>, vector<2x1x32xf32> -> vector<2x1x32xf32>
    "tpu.trace_stop"() : () -> ()
    %465 = vector.shape_cast %464 : vector<2x1x32xf32> to vector<2x32xf32>
    %cst_245 = arith.constant dense<0.000000e+00> : vector<2x32xf32>
    %466 = tpu.matmul %465, %22, %cst_245 {dimension_numbers = #tpu.dot_dimension_numbers<[1], [0], [0], [1], [0, 0, 1, 1], [], []>} : vector<2x32xf32>, vector<32x32xf32>, vector<2x32xf32> -> vector<2x32xf32>
    %cst_246 = arith.constant dense<0.000000e+00> : vector<2x32xf32>
    %467 = tpu.matmul %444, %23, %cst_246 {dimension_numbers = #tpu.dot_dimension_numbers<[1], [0], [0], [1], [0, 0, 1, 1], [], []>} : vector<2x32xf32>, vector<32x32xf32>, vector<2x32xf32> -> vector<2x32xf32>
    %468 = arith.addf %466, %467 : vector<2x32xf32>
    %469 = math.tanh %468 : vector<2x32xf32>
    %470 = arith.index_cast %c4_i32 : i32 to index
    %c0_247 = arith.constant 0 : index
    %c0_248 = arith.constant 0 : index
    %471 = vector.load %arg10[%470, %c0_247, %c0_248] : memref<6x2x32xf32, #tpu.memory_space<vmem>>, vector<1x2x32xf32>
    %472 = vector.shape_cast %471 : vector<1x2x32xf32> to vector<2x32xf32>
    %473 = vector.shape_cast %469 : vector<2x32xf32> to vector<1x2x32xf32>
    tpu.vector_store %arg10[%470, %c0_247, %c0_248], %473 {strides = array<i32>} : memref<6x2x32xf32, #tpu.memory_space<vmem>>, vector<1x2x32xf32>,
    %474 = vector.shape_cast %463 : vector<2x1x8xf32> to vector<2x8xf32>
    %475 = arith.index_cast %c4_i32 : i32 to index
    %c0_249 = arith.constant 0 : index
    %c0_250 = arith.constant 0 : index
    %476 = vector.load %arg11[%475, %c0_249, %c0_250] : memref<6x2x8xf32, #tpu.memory_space<vmem>>, vector<1x2x8xf32>
    %477 = vector.shape_cast %476 : vector<1x2x8xf32> to vector<2x8xf32>
    %478 = vector.shape_cast %474 : vector<2x8xf32> to vector<1x2x8xf32>
    tpu.vector_store %arg11[%475, %c0_249, %c0_250], %478 {strides = array<i32>} : memref<6x2x8xf32, #tpu.memory_space<vmem>>, vector<1x2x8xf32>,
    %c5_i32 = arith.constant 5 : i32
    %479 = arith.index_cast %c5_i32 : i32 to index
    %c0_251 = arith.constant 0 : index
    %c0_252 = arith.constant 0 : index
    %480 = vector.load %arg0[%479, %c0_251, %c0_252] : memref<6x2x32xf32, #tpu.memory_space<vmem>>, vector<1x2x32xf32>
    %481 = vector.shape_cast %480 : vector<1x2x32xf32> to vector<2x32xf32>
    %c0_253 = arith.constant 0 : index
    %c0_254 = arith.constant 0 : index
    %c0_255 = arith.constant 0 : index
    %482 = vector.load %arg14[%c0_253, %c0_254, %c0_255] : memref<2x2x32xf32, #tpu.memory_space<vmem>>, vector<1x2x32xf32>
    %483 = vector.shape_cast %482 : vector<1x2x32xf32> to vector<2x32xf32>
    %c0_256 = arith.constant 0 : index
    %c0_257 = arith.constant 0 : index
    %c0_258 = arith.constant 0 : index
    %484 = vector.load %arg15[%c0_256, %c0_257, %c0_258] : memref<2x2x32xf32, #tpu.memory_space<vmem>>, vector<1x2x32xf32>
    %485 = vector.shape_cast %484 : vector<1x2x32xf32> to vector<2x32xf32>
    %cst_259 = arith.constant dense<0.000000e+00> : vector<2x128xf32>
    %486 = tpu.matmul %481, %5, %cst_259 {dimension_numbers = #tpu.dot_dimension_numbers<[1], [0], [0], [1], [0, 0, 1, 1], [], []>} : vector<2x32xf32>, vector<32x128xf32>, vector<2x128xf32> -> vector<2x128xf32>
    %cst_260 = arith.constant dense<0.000000e+00> : vector<2x128xf32>
    %487 = tpu.matmul %483, %9, %cst_260 {dimension_numbers = #tpu.dot_dimension_numbers<[1], [0], [0], [1], [0, 0, 1, 1], [], []>} : vector<2x32xf32>, vector<32x128xf32>, vector<2x128xf32> -> vector<2x128xf32>
    %488 = arith.addf %486, %487 : vector<2x128xf32>
    %489 = arith.addf %488, %15 : vector<2x128xf32>
    %490 = vector.extract_strided_slice %489 {offsets = [0, 0], sizes = [2, 96], strides = [1, 1]} : vector<2x128xf32> to vector<2x96xf32>
    %491 = arith.negf %490 : vector<2x96xf32>
    %492 = math.exp %491 : vector<2x96xf32>
    %cst_261 = arith.constant 1.000000e+00 : f32
    %493 = vector.broadcast %cst_261 : f32 to vector<2x96xf32>
    %494 = arith.addf %493, %492 : vector<2x96xf32>
    %495 = arith.divf %493, %494 : vector<2x96xf32>
    %496 = vector.extract_strided_slice %489 {offsets = [0, 96], sizes = [2, 32], strides = [1, 1]} : vector<2x128xf32> to vector<2x32xf32>
    %497 = math.tanh %496 : vector<2x32xf32>
    %498 = vector.extract_strided_slice %495 {offsets = [0, 0], sizes = [2, 32], strides = [1, 1]} : vector<2x96xf32> to vector<2x32xf32>
    %499 = vector.extract_strided_slice %495 {offsets = [0, 32], sizes = [2, 32], strides = [1, 1]} : vector<2x96xf32> to vector<2x32xf32>
    %500 = vector.extract_strided_slice %495 {offsets = [0, 64], sizes = [2, 32], strides = [1, 1]} : vector<2x96xf32> to vector<2x32xf32>
    %501 = arith.mulf %499, %485 : vector<2x32xf32>
    %502 = arith.mulf %498, %497 : vector<2x32xf32>
    %503 = arith.addf %501, %502 : vector<2x32xf32>
    %504 = math.tanh %503 : vector<2x32xf32>
    %505 = arith.mulf %500, %504 : vector<2x32xf32>
    %c0_262 = arith.constant 0 : index
    %c0_263 = arith.constant 0 : index
    %c0_264 = arith.constant 0 : index
    %506 = vector.load %arg14[%c0_262, %c0_263, %c0_264] : memref<2x2x32xf32, #tpu.memory_space<vmem>>, vector<1x2x32xf32>
    %507 = vector.shape_cast %506 : vector<1x2x32xf32> to vector<2x32xf32>
    %508 = vector.shape_cast %505 : vector<2x32xf32> to vector<1x2x32xf32>
    tpu.vector_store %arg14[%c0_262, %c0_263, %c0_264], %508 {strides = array<i32>} : memref<2x2x32xf32, #tpu.memory_space<vmem>>, vector<1x2x32xf32>,
    %c0_265 = arith.constant 0 : index
    %c0_266 = arith.constant 0 : index
    %c0_267 = arith.constant 0 : index
    %509 = vector.load %arg15[%c0_265, %c0_266, %c0_267] : memref<2x2x32xf32, #tpu.memory_space<vmem>>, vector<1x2x32xf32>
    %510 = vector.shape_cast %509 : vector<1x2x32xf32> to vector<2x32xf32>
    %511 = vector.shape_cast %503 : vector<2x32xf32> to vector<1x2x32xf32>
    tpu.vector_store %arg15[%c0_265, %c0_266, %c0_267], %511 {strides = array<i32>} : memref<2x2x32xf32, #tpu.memory_space<vmem>>, vector<1x2x32xf32>,
    %c1_268 = arith.constant 1 : index
    %c0_269 = arith.constant 0 : index
    %c0_270 = arith.constant 0 : index
    %512 = vector.load %arg14[%c1_268, %c0_269, %c0_270] : memref<2x2x32xf32, #tpu.memory_space<vmem>>, vector<1x2x32xf32>
    %513 = vector.shape_cast %512 : vector<1x2x32xf32> to vector<2x32xf32>
    %c1_271 = arith.constant 1 : index
    %c0_272 = arith.constant 0 : index
    %c0_273 = arith.constant 0 : index
    %514 = vector.load %arg15[%c1_271, %c0_272, %c0_273] : memref<2x2x32xf32, #tpu.memory_space<vmem>>, vector<1x2x32xf32>
    %515 = vector.shape_cast %514 : vector<1x2x32xf32> to vector<2x32xf32>
    %cst_274 = arith.constant dense<0.000000e+00> : vector<2x128xf32>
    %516 = tpu.matmul %505, %7, %cst_274 {dimension_numbers = #tpu.dot_dimension_numbers<[1], [0], [0], [1], [0, 0, 1, 1], [], []>} : vector<2x32xf32>, vector<32x128xf32>, vector<2x128xf32> -> vector<2x128xf32>
    %cst_275 = arith.constant dense<0.000000e+00> : vector<2x128xf32>
    %517 = tpu.matmul %513, %11, %cst_275 {dimension_numbers = #tpu.dot_dimension_numbers<[1], [0], [0], [1], [0, 0, 1, 1], [], []>} : vector<2x32xf32>, vector<32x128xf32>, vector<2x128xf32> -> vector<2x128xf32>
    %518 = arith.addf %516, %517 : vector<2x128xf32>
    %519 = arith.addf %518, %19 : vector<2x128xf32>
    %520 = vector.extract_strided_slice %519 {offsets = [0, 0], sizes = [2, 96], strides = [1, 1]} : vector<2x128xf32> to vector<2x96xf32>
    %521 = arith.negf %520 : vector<2x96xf32>
    %522 = math.exp %521 : vector<2x96xf32>
    %cst_276 = arith.constant 1.000000e+00 : f32
    %523 = vector.broadcast %cst_276 : f32 to vector<2x96xf32>
    %524 = arith.addf %523, %522 : vector<2x96xf32>
    %525 = arith.divf %523, %524 : vector<2x96xf32>
    %526 = vector.extract_strided_slice %519 {offsets = [0, 96], sizes = [2, 32], strides = [1, 1]} : vector<2x128xf32> to vector<2x32xf32>
    %527 = math.tanh %526 : vector<2x32xf32>
    %528 = vector.extract_strided_slice %525 {offsets = [0, 0], sizes = [2, 32], strides = [1, 1]} : vector<2x96xf32> to vector<2x32xf32>
    %529 = vector.extract_strided_slice %525 {offsets = [0, 32], sizes = [2, 32], strides = [1, 1]} : vector<2x96xf32> to vector<2x32xf32>
    %530 = vector.extract_strided_slice %525 {offsets = [0, 64], sizes = [2, 32], strides = [1, 1]} : vector<2x96xf32> to vector<2x32xf32>
    %531 = arith.mulf %529, %515 : vector<2x32xf32>
    %532 = arith.mulf %528, %527 : vector<2x32xf32>
    %533 = arith.addf %531, %532 : vector<2x32xf32>
    %534 = math.tanh %533 : vector<2x32xf32>
    %535 = arith.mulf %530, %534 : vector<2x32xf32>
    %c1_277 = arith.constant 1 : index
    %c0_278 = arith.constant 0 : index
    %c0_279 = arith.constant 0 : index
    %536 = vector.load %arg14[%c1_277, %c0_278, %c0_279] : memref<2x2x32xf32, #tpu.memory_space<vmem>>, vector<1x2x32xf32>
    %537 = vector.shape_cast %536 : vector<1x2x32xf32> to vector<2x32xf32>
    %538 = vector.shape_cast %535 : vector<2x32xf32> to vector<1x2x32xf32>
    tpu.vector_store %arg14[%c1_277, %c0_278, %c0_279], %538 {strides = array<i32>} : memref<2x2x32xf32, #tpu.memory_space<vmem>>, vector<1x2x32xf32>,
    %c1_280 = arith.constant 1 : index
    %c0_281 = arith.constant 0 : index
    %c0_282 = arith.constant 0 : index
    %539 = vector.load %arg15[%c1_280, %c0_281, %c0_282] : memref<2x2x32xf32, #tpu.memory_space<vmem>>, vector<1x2x32xf32>
    %540 = vector.shape_cast %539 : vector<1x2x32xf32> to vector<2x32xf32>
    %541 = vector.shape_cast %533 : vector<2x32xf32> to vector<1x2x32xf32>
    tpu.vector_store %arg15[%c1_280, %c0_281, %c0_282], %541 {strides = array<i32>} : memref<2x2x32xf32, #tpu.memory_space<vmem>>, vector<1x2x32xf32>,
    %cst_283 = arith.constant dense<0.000000e+00> : vector<2x32xf32>
    %542 = tpu.matmul %535, %21, %cst_283 {dimension_numbers = #tpu.dot_dimension_numbers<[1], [0], [0], [1], [0, 0, 1, 1], [], []>} : vector<2x32xf32>, vector<32x32xf32>, vector<2x32xf32> -> vector<2x32xf32>
    %543 = vector.shape_cast %542 : vector<2x32xf32> to vector<2x1x32xf32>
    "tpu.trace_start"() <{level = 10 : i32, message = "bqh,bsh->bqs"}> : () -> ()
    %cst_284 = arith.constant dense<0.000000e+00> : vector<2x1x8xf32>
    %544 = tpu.matmul %543, %20, %cst_284 {dimension_numbers = #tpu.dot_dimension_numbers<[2], [2], [1], [1], [0, 0, 0, 1, 1, 1], [0], [0]>} : vector<2x1x32xf32>, vector<2x8x32xf32>, vector<2x1x8xf32> -> vector<2x1x8xf32>
    "tpu.trace_stop"() : () -> ()
    %cst_285 = arith.constant dense<0xFF800000> : vector<2x1xf32>
    %545 = vector.multi_reduction <maximumf>, %544, %cst_285 [2] : vector<2x1x8xf32> to vector<2x1xf32>
    %546 = vector.shape_cast %545 : vector<2x1xf32> to vector<2x1x1xf32>
    %547 = vector.broadcast %546 : vector<2x1x1xf32> to vector<2x1x8xf32>
    %548 = arith.subf %544, %547 : vector<2x1x8xf32>
    %549 = math.exp %548 : vector<2x1x8xf32>
    %cst_286 = arith.constant dense<0.000000e+00> : vector<2x1xf32>
    %550 = vector.multi_reduction <add>, %549, %cst_286 [2] : vector<2x1x8xf32> to vector<2x1xf32>
    %551 = vector.shape_cast %550 : vector<2x1xf32> to vector<2x1x1xf32>
    %552 = tpu.reciprocal %551 {approx = true} : vector<2x1x1xf32> -> vector<2x1x1xf32>
    %553 = vector.broadcast %552 : vector<2x1x1xf32> to vector<2x1x8xf32>
    %554 = arith.mulf %549, %553 : vector<2x1x8xf32>
    "tpu.trace_start"() <{level = 10 : i32, message = "bqs,bsh->bqh"}> : () -> ()
    %cst_287 = arith.constant dense<0.000000e+00> : vector<2x1x32xf32>
    %555 = tpu.matmul %554, %20, %cst_287 {dimension_numbers = #tpu.dot_dimension_numbers<[2], [1], [1], [2], [0, 0, 0, 1, 1, 2], [0], [0]>} : vector<2x1x8xf32>, vector<2x8x32xf32>, vector<2x1x32xf32> -> vector<2x1x32xf32>
    "tpu.trace_stop"() : () -> ()
    %556 = vector.shape_cast %555 : vector<2x1x32xf32> to vector<2x32xf32>
    %cst_288 = arith.constant dense<0.000000e+00> : vector<2x32xf32>
    %557 = tpu.matmul %556, %22, %cst_288 {dimension_numbers = #tpu.dot_dimension_numbers<[1], [0], [0], [1], [0, 0, 1, 1], [], []>} : vector<2x32xf32>, vector<32x32xf32>, vector<2x32xf32> -> vector<2x32xf32>
    %cst_289 = arith.constant dense<0.000000e+00> : vector<2x32xf32>
    %558 = tpu.matmul %535, %23, %cst_289 {dimension_numbers = #tpu.dot_dimension_numbers<[1], [0], [0], [1], [0, 0, 1, 1], [], []>} : vector<2x32xf32>, vector<32x32xf32>, vector<2x32xf32> -> vector<2x32xf32>
    %559 = arith.addf %557, %558 : vector<2x32xf32>
    %560 = math.tanh %559 : vector<2x32xf32>
    %561 = arith.index_cast %c5_i32 : i32 to index
    %c0_290 = arith.constant 0 : index
    %c0_291 = arith.constant 0 : index
    %562 = vector.load %arg10[%561, %c0_290, %c0_291] : memref<6x2x32xf32, #tpu.memory_space<vmem>>, vector<1x2x32xf32>
    %563 = vector.shape_cast %562 : vector<1x2x32xf32> to vector<2x32xf32>
    %564 = vector.shape_cast %560 : vector<2x32xf32> to vector<1x2x32xf32>
    tpu.vector_store %arg10[%561, %c0_290, %c0_291], %564 {strides = array<i32>} : memref<6x2x32xf32, #tpu.memory_space<vmem>>, vector<1x2x32xf32>,
    %565 = vector.shape_cast %554 : vector<2x1x8xf32> to vector<2x8xf32>
    %566 = arith.index_cast %c5_i32 : i32 to index
    %c0_292 = arith.constant 0 : index
    %c0_293 = arith.constant 0 : index
    %567 = vector.load %arg11[%566, %c0_292, %c0_293] : memref<6x2x8xf32, #tpu.memory_space<vmem>>, vector<1x2x8xf32>
    %568 = vector.shape_cast %567 : vector<1x2x8xf32> to vector<2x8xf32>
    %569 = vector.shape_cast %565 : vector<2x8xf32> to vector<1x2x8xf32>
    tpu.vector_store %arg11[%566, %c0_292, %c0_293], %569 {strides = array<i32>} : memref<6x2x8xf32, #tpu.memory_space<vmem>>, vector<1x2x8xf32>,
    %c6_i32 = arith.constant 6 : i32
    %c0_294 = arith.constant 0 : index
    %c0_295 = arith.constant 0 : index
    %c0_296 = arith.constant 0 : index
    %570 = vector.load %arg14[%c0_294, %c0_295, %c0_296] : memref<2x2x32xf32, #tpu.memory_space<vmem>>, vector<2x2x32xf32>
    %c0_297 = arith.constant 0 : index
    %c0_298 = arith.constant 0 : index
    %c0_299 = arith.constant 0 : index
    %571 = vector.load %arg12[%c0_297, %c0_298, %c0_299] : memref<2x2x32xf32, #tpu.memory_space<vmem>>, vector<2x2x32xf32>
    tpu.vector_store %arg12[%c0_297, %c0_298, %c0_299], %570 {strides = array<i32>} : memref<2x2x32xf32, #tpu.memory_space<vmem>>, vector<2x2x32xf32>,
    %c0_300 = arith.constant 0 : index
    %c0_301 = arith.constant 0 : index
    %c0_302 = arith.constant 0 : index
    %572 = vector.load %arg15[%c0_300, %c0_301, %c0_302] : memref<2x2x32xf32, #tpu.memory_space<vmem>>, vector<2x2x32xf32>
    %c0_303 = arith.constant 0 : index
    %c0_304 = arith.constant 0 : index
    %c0_305 = arith.constant 0 : index
    %573 = vector.load %arg13[%c0_303, %c0_304, %c0_305] : memref<2x2x32xf32, #tpu.memory_space<vmem>>, vector<2x2x32xf32>
    tpu.vector_store %arg13[%c0_303, %c0_304, %c0_305], %572 {strides = array<i32>} : memref<2x2x32xf32, #tpu.memory_space<vmem>>, vector<2x2x32xf32>,
    return
  }
}

</mosaic_0001>

<llo_original>
// kernel: tpu_custom_call.1
$region0: #{tpu_custom_call.1}
  #allocation0 [shape = 'u32[]', space=smem, size = 0x4, offset = 0x4, fixed_abs, tag = 'smem constant byte address 0x4 - core index']
  #allocation1 [shape = 'u32[144,128]{1,0:T(1,128)}', space=vmem, size = 0x12000, scoped, tag = 'internal scratch']
  #allocation2 [shape = 'f32[2,2,32]{2,1,0:T(2,128)}', space=vmem, size = 0x800, scoped, tag = 'scratch operand']
  #allocation3 [shape = 'f32[2,2,32]{2,1,0:T(2,128)}', space=vmem, size = 0x800, scoped, tag = 'scratch operand']
  %s0 = inlined_call_operand.hbm [shape: f32[6,2,32], index: 0, kind: input, shape index: {}]
  %s1 = inlined_call_operand.hbm [shape: f32[2,2,32], index: 1, kind: input, shape index: {}]
  %s2 = inlined_call_operand.hbm [shape: f32[2,2,32], index: 2, kind: input, shape index: {}]
  %s3 = inlined_call_operand.hbm [shape: f32[2,32,128], index: 3, kind: input, shape index: {}]
  %s4 = inlined_call_operand.hbm [shape: f32[2,32,128], index: 4, kind: input, shape index: {}]
  %s5 = inlined_call_operand.vmem [shape: f32[2,1,128], index: 5, kind: input, shape index: {}]
  %s6 = inlined_call_operand.hbm [shape: f32[2,8,32], index: 6, kind: input, shape index: {}]
  %s7 = inlined_call_operand.hbm [shape: f32[32,32], index: 7, kind: input, shape index: {}]
  %s8 = inlined_call_operand.hbm [shape: f32[32,32], index: 8, kind: input, shape index: {}]
  %s9 = inlined_call_operand.vmem [shape: f32[32,32], index: 9, kind: input, shape index: {}]
  %s10 = inlined_call_operand.hbm [shape: f32[6,2,32], index: 10, kind: output, shape index: {0}]
  %s11 = inlined_call_operand.hbm [shape: f32[6,2,8], index: 11, kind: output, shape index: {1}]
  %s12 = inlined_call_operand.hbm [shape: f32[2,2,32], index: 12, kind: output, shape index: {2}]
  %s13 = inlined_call_operand.hbm [shape: f32[2,2,32], index: 13, kind: output, shape index: {3}]
  %14 = xla_tuple %s10, %s11, %s12, %s13
  %s15 = sld [smem:[#allocation0]]
  $region106: #{tpu_custom_call.1} parent=0
    _
  %s17 = ssub.s32 1, %s15
  %s18 = scalar_select 0, %s17, %s15
  $region1: #{tpu_custom_call.1} parent=0
    #allocation4 [shape = 'u8[6144]{0}', space=vmem, size = 0x1800, scoped, tag = 'input window, operand 0, single buffered']
    #allocation5 [shape = 's32[1]{0}', space=sflag, size = 0x4, scoped, tag = 'scoped memory for tpu_custom_call.1']
    #allocation6 [shape = 's32[1]{0}', space=sflag, size = 0x4, scoped, tag = 'scoped memory for tpu_custom_call.1']
    #allocation7 [shape = 'u8[2048]{0}', space=vmem, size = 0x800, scoped, tag = 'input window, operand 1, single buffered']
    #allocation8 [shape = 's32[1]{0}', space=sflag, size = 0x4, scoped, tag = 'scoped memory for tpu_custom_call.1']
    #allocation9 [shape = 'u8[2048]{0}', space=vmem, size = 0x800, scoped, tag = 'input window, operand 2, single buffered']
    #allocation10 [shape = 'u8[32768]{0}', space=vmem, size = 0x8000, scoped, tag = 'input window, operand 3, single buffered']
    #allocation11 [shape = 's32[1]{0}', space=sflag, size = 0x4, scoped, tag = 'scoped memory for tpu_custom_call.1']
    #allocation12 [shape = 'u8[32768]{0}', space=vmem, size = 0x8000, scoped, tag = 'input window, operand 4, single buffered']
    #allocation13 [shape = 'u8[8192]{0}', space=vmem, size = 0x2000, scoped, tag = 'input window, operand 6, single buffered']
    #allocation14 [shape = 's32[1]{0}', space=sflag, size = 0x4, scoped, tag = 'scoped memory for tpu_custom_call.1']
    #allocation15 [shape = 'u8[16384]{0}', space=vmem, size = 0x4000, scoped, tag = 'input window, operand 7, single buffered']
    #allocation16 [shape = 'u8[16384]{0}', space=vmem, size = 0x4000, scoped, tag = 'input window, operand 8, single buffered']
    #allocation17 [shape = 's32[1]{0}', space=sflag, size = 0x4, scoped, tag = 'scoped memory for tpu_custom_call.1']
    #allocation18 [shape = 'u8[6144]{0}', space=vmem, size = 0x1800, scoped, tag = 'output window, operand 0, single buffered']
    #allocation19 [shape = 'u8[6144]{0}', space=vmem, size = 0x1800, scoped, tag = 'output window, operand 1, single buffered']
    #allocation20 [shape = 's32[1]{0}', space=sflag, size = 0x4, scoped, tag = 'scoped memory for tpu_custom_call.1']
    #allocation21 [shape = 'u8[2048]{0}', space=vmem, size = 0x800, scoped, tag = 'output window, operand 2, single buffered']
    #allocation22 [shape = 'u8[2048]{0}', space=vmem, size = 0x800, scoped, tag = 'output window, operand 3, single buffered']
    #allocation23 [shape = 's32[1]{0}', space=sflag, size = 0x4, scoped, tag = 'scoped memory for tpu_custom_call.1']
    %19 = vsyncpa [#allocation5], 0
    %20 = vsyncpa [#allocation8], 0
    %21 = vsyncpa [#allocation11], 0
    %22 = vsyncpa [#allocation14], 0
    %23 = vsyncpa [#allocation17], 0
    %24 = vsyncpa [#allocation6], 0
    %25 = vsyncpa [#allocation20], 0
    %26 = vsyncpa [#allocation23], 0
    // Predicated region
    $region2: #{tpu_custom_call.1} parent=1 // pred_check
      _
    $region3: #{tpu_custom_call.1} parent=1 // pred_check_branch
      %28 = sbr.rel (0) target = $region5
    $region4: #{tpu_custom_call.1} parent=1 // pred_region
      %s30 = ssub.s32 192, 192
      %31 = vsyncadd [#allocation5], %s30
      %s32 = sshll.u32 [#allocation4], 4
      %s33 = int_to_ptr.vmem [resolvable:$true] %s32
      %38 = dma.hbm_to_vmem [thread:$0]  %s0, 192, %s33, [#allocation5], 32, 32, 2
    $region5: #{tpu_custom_call.1} parent=1 // pred_fallthru
      _
    // Predicated region
    $region6: #{tpu_custom_call.1} parent=1 // pred_check
      _
    $region7: #{tpu_custom_call.1} parent=1 // pred_check_branch
      %40 = sbr.rel (0) target = $region9
    $region8: #{tpu_custom_call.1} parent=1 // pred_region
      %s42 = ssub.s32 64, 64
      %43 = vsyncadd [#allocation8], %s42
      %s44 = sshll.u32 [#allocation7], 4
      %s45 = int_to_ptr.vmem [resolvable:$true] %s44
      %50 = dma.hbm_to_vmem [thread:$0]  %s1, 64, %s45, [#allocation8], 32, 32, 2
    $region9: #{tpu_custom_call.1} parent=1 // pred_fallthru
      _
    // Predicated region
    $region10: #{tpu_custom_call.1} parent=1 // pred_check
      _
    $region11: #{tpu_custom_call.1} parent=1 // pred_check_branch
      %52 = sbr.rel (0) target = $region13
    $region12: #{tpu_custom_call.1} parent=1 // pred_region
      %s54 = ssub.s32 64, 64
      %55 = vsyncadd [#allocation8], %s54
      %s56 = sshll.u32 [#allocation9], 4
      %s57 = int_to_ptr.vmem [resolvable:$true] %s56
      %62 = dma.hbm_to_vmem [thread:$0]  %s2, 64, %s57, [#allocation8], 32, 32, 2
    $region13: #{tpu_custom_call.1} parent=1 // pred_fallthru
      _
    // Predicated region
    $region14: #{tpu_custom_call.1} parent=1 // pred_check
      _
    $region15: #{tpu_custom_call.1} parent=1 // pred_check_branch
      %64 = sbr.rel (0) target = $region17
    $region16: #{tpu_custom_call.1} parent=1 // pred_region
      %s66 = ssub.s32 1024, 1024
      %67 = vsyncadd [#allocation11], %s66
      %s68 = sshll.u32 [#allocation10], 4
      %s69 = int_to_ptr.vmem [resolvable:$true] %s68
      %74 = dma.hbm_to_vmem [thread:$0]  %s3, 1024, %s69, [#allocation11], 128, 128, 8
    $region17: #{tpu_custom_call.1} parent=1 // pred_fallthru
      _
    // Predicated region
    $region18: #{tpu_custom_call.1} parent=1 // pred_check
      _
    $region19: #{tpu_custom_call.1} parent=1 // pred_check_branch
      %76 = sbr.rel (0) target = $region21
    $region20: #{tpu_custom_call.1} parent=1 // pred_region
      %s78 = ssub.s32 1024, 1024
      %79 = vsyncadd [#allocation11], %s78
      %s80 = sshll.u32 [#allocation12], 4
      %s81 = int_to_ptr.vmem [resolvable:$true] %s80
      %86 = dma.hbm_to_vmem [thread:$0]  %s4, 1024, %s81, [#allocation11], 128, 128, 8
    $region21: #{tpu_custom_call.1} parent=1 // pred_fallthru
      _
    // Predicated region
    $region22: #{tpu_custom_call.1} parent=1 // pred_check
      _
    $region23: #{tpu_custom_call.1} parent=1 // pred_check_branch
      %88 = sbr.rel (0) target = $region25
    $region24: #{tpu_custom_call.1} parent=1 // pred_region
      _
    $region25: #{tpu_custom_call.1} parent=1 // pred_fallthru
      _
    // Predicated region
    $region26: #{tpu_custom_call.1} parent=1 // pred_check
      _
    $region27: #{tpu_custom_call.1} parent=1 // pred_check_branch
      %90 = sbr.rel (0) target = $region29
    $region28: #{tpu_custom_call.1} parent=1 // pred_region
      %s92 = ssub.s32 256, 256
      %93 = vsyncadd [#allocation14], %s92
      %s94 = sshll.u32 [#allocation13], 4
      %s95 = int_to_ptr.vmem [resolvable:$true] %s94
      %100 = dma.hbm_to_vmem [thread:$0]  %s6, 256, %s95, [#allocation14], 128, 128, 8
    $region29: #{tpu_custom_call.1} parent=1 // pred_fallthru
      _
    // Predicated region
    $region30: #{tpu_custom_call.1} parent=1 // pred_check
      _
    $region31: #{tpu_custom_call.1} parent=1 // pred_check_branch
      %102 = sbr.rel (0) target = $region33
    $region32: #{tpu_custom_call.1} parent=1 // pred_region
      %s104 = ssub.s32 512, 512
      %105 = vsyncadd [#allocation14], %s104
      %s106 = sshll.u32 [#allocation15], 4
      %s107 = int_to_ptr.vmem [resolvable:$true] %s106
      %112 = dma.hbm_to_vmem [thread:$0]  %s7, 512, %s107, [#allocation14], 128, 128, 8
    $region33: #{tpu_custom_call.1} parent=1 // pred_fallthru
      _
    // Predicated region
    $region34: #{tpu_custom_call.1} parent=1 // pred_check
      _
    $region35: #{tpu_custom_call.1} parent=1 // pred_check_branch
      %114 = sbr.rel (0) target = $region37
    $region36: #{tpu_custom_call.1} parent=1 // pred_region
      %s116 = ssub.s32 512, 512
      %117 = vsyncadd [#allocation17], %s116
      %s118 = sshll.u32 [#allocation16], 4
      %s119 = int_to_ptr.vmem [resolvable:$true] %s118
      %124 = dma.hbm_to_vmem [thread:$0]  %s8, 512, %s119, [#allocation17], 128, 128, 8
    $region37: #{tpu_custom_call.1} parent=1 // pred_fallthru
      _
    // Predicated region
    $region38: #{tpu_custom_call.1} parent=1 // pred_check
      _
    $region39: #{tpu_custom_call.1} parent=1 // pred_check_branch
      %126 = sbr.rel (0) target = $region41
    $region40: #{tpu_custom_call.1} parent=1 // pred_region
      _
    $region41: #{tpu_custom_call.1} parent=1 // pred_fallthru
      _
    // Predicated region
    $region42: #{tpu_custom_call.1} parent=1 // pred_check
      _
    $region43: #{tpu_custom_call.1} parent=1 // pred_check_branch
      %128 = sbr.rel (0) target = $region45
    $region44: #{tpu_custom_call.1} parent=1 // pred_region
      %129 = dma.done [#allocation5], 192
    $region45: #{tpu_custom_call.1} parent=1 // pred_fallthru
      _
    // Predicated region
    $region46: #{tpu_custom_call.1} parent=1 // pred_check
      _
    $region47: #{tpu_custom_call.1} parent=1 // pred_check_branch
      %131 = sbr.rel (0) target = $region49
    $region48: #{tpu_custom_call.1} parent=1 // pred_region
      %132 = dma.done [#allocation8], 64
    $region49: #{tpu_custom_call.1} parent=1 // pred_fallthru
      _
    // Predicated region
    $region50: #{tpu_custom_call.1} parent=1 // pred_check
      _
    $region51: #{tpu_custom_call.1} parent=1 // pred_check_branch
      %134 = sbr.rel (0) target = $region53
    $region52: #{tpu_custom_call.1} parent=1 // pred_region
      %135 = dma.done [#allocation8], 64
    $region53: #{tpu_custom_call.1} parent=1 // pred_fallthru
      _
    // Predicated region
    $region54: #{tpu_custom_call.1} parent=1 // pred_check
      _
    $region55: #{tpu_custom_call.1} parent=1 // pred_check_branch
      %137 = sbr.rel (0) target = $region57
    $region56: #{tpu_custom_call.1} parent=1 // pred_region
      %138 = dma.done [#allocation11], 1024
    $region57: #{tpu_custom_call.1} parent=1 // pred_fallthru
      _
    // Predicated region
    $region58: #{tpu_custom_call.1} parent=1 // pred_check
      _
    $region59: #{tpu_custom_call.1} parent=1 // pred_check_branch
      %140 = sbr.rel (0) target = $region61
    $region60: #{tpu_custom_call.1} parent=1 // pred_region
      %141 = dma.done [#allocation11], 1024
    $region61: #{tpu_custom_call.1} parent=1 // pred_fallthru
      _
    // Predicated region
    $region62: #{tpu_custom_call.1} parent=1 // pred_check
      _
    $region63: #{tpu_custom_call.1} parent=1 // pred_check_branch
      %143 = sbr.rel (0) target = $region65
    $region64: #{tpu_custom_call.1} parent=1 // pred_region
      %144 = dma.done [#allocation14], 256
    $region65: #{tpu_custom_call.1} parent=1 // pred_fallthru
      _
    // Predicated region
    $region66: #{tpu_custom_call.1} parent=1 // pred_check
      _
    $region67: #{tpu_custom_call.1} parent=1 // pred_check_branch
      %146 = sbr.rel (0) target = $region69
    $region68: #{tpu_custom_call.1} parent=1 // pred_region
      %147 = dma.done [#allocation14], 512
    $region69: #{tpu_custom_call.1} parent=1 // pred_fallthru
      _
    // Predicated region
    $region70: #{tpu_custom_call.1} parent=1 // pred_check
      _
    $region71: #{tpu_custom_call.1} parent=1 // pred_check_branch
      %149 = sbr.rel (0) target = $region73
    $region72: #{tpu_custom_call.1} parent=1 // pred_region
      %150 = dma.done [#allocation17], 512
    $region73: #{tpu_custom_call.1} parent=1 // pred_fallthru
      _
    %v151 = vld [vmem:[#allocation7] sm:$0x3]
    %v152 = vld [vmem:[#allocation7 + $0x2] sm:$0x3]
    %vm153 = vcmask 254976
    %154 = vst.msk [vmem:[#allocation2] sm:$0x3] %vm153, %v151
    %155 = vst.msk [vmem:[#allocation2 + $0x2] sm:$0x3] %vm153, %v152
    %v156 = vld [vmem:[#allocation9] sm:$0x3]
    %v157 = vld [vmem:[#allocation9 + $0x2] sm:$0x3]
    %158 = vst.msk [vmem:[#allocation3] sm:$0x3] %vm153, %v156
    %159 = vst.msk [vmem:[#allocation3 + $0x2] sm:$0x3] %vm153, %v157
    %v160 = vld [vmem:[#allocation10] sm:$0xff]
    %v161 = vld [vmem:[#allocation10 + $0x8] sm:$0xff]
    %v162 = vld [vmem:[#allocation10 + $0x10] sm:$0xff]
    %v163 = vld [vmem:[#allocation10 + $0x18] sm:$0xff]
    %s164 = scalar_lea.vmem [#allocation10], 32
    %v165 = vld [vmem:[%s164] sm:$0xff]
    %v166 = vld [vmem:[%s164 + $0x8] sm:$0xff]
    %v167 = vld [vmem:[%s164 + $0x10] sm:$0xff]
    %v168 = vld [vmem:[%s164 + $0x18] sm:$0xff]
    %v169 = vld [vmem:[#allocation12] sm:$0xff]
    %v170 = vld [vmem:[#allocation12 + $0x8] sm:$0xff]
    %v171 = vld [vmem:[#allocation12 + $0x10] sm:$0xff]
    %v172 = vld [vmem:[#allocation12 + $0x18] sm:$0xff]
    %s173 = scalar_lea.vmem [#allocation12], 32
    %v174 = vld [vmem:[%s173] sm:$0xff]
    %v175 = vld [vmem:[%s173 + $0x8] sm:$0xff]
    %v176 = vld [vmem:[%s173 + $0x10] sm:$0xff]
    %v177 = vld [vmem:[%s173 + $0x18] sm:$0xff]
    %v178 = vld [vmem:[%s5] sm:$0x1]
    %v180 = vlaneseq
    %v181 = vshrl.u32 %v180, 7
    %v182 = vsub.s32 0, %v181
    %v183 = vrot.slane %v178, %v182
    %s185 = scalar_lea.vmem %s5, 1
    %v186 = vld [vmem:[%s185] sm:$0x1]
    %v188 = vlaneseq
    %v189 = vshrl.u32 %v188, 7
    %v190 = vsub.s32 0, %v189
    %v191 = vrot.slane %v186, %v190
    %v193 = vld [vmem:[#allocation13] sm:$0xff]
    %v194 = vld [vmem:[#allocation13 + $0x8] sm:$0xff]
    %v195 = vld [vmem:[#allocation15] sm:$0xff]
    %v196 = vld [vmem:[#allocation15 + $0x8] sm:$0xff]
    %v197 = vld [vmem:[#allocation15 + $0x10] sm:$0xff]
    %v198 = vld [vmem:[#allocation15 + $0x18] sm:$0xff]
    %v199 = vld [vmem:[#allocation16] sm:$0xff]
    %v200 = vld [vmem:[#allocation16 + $0x8] sm:$0xff]
    %v201 = vld [vmem:[#allocation16 + $0x10] sm:$0xff]
    %v202 = vld [vmem:[#allocation16 + $0x18] sm:$0xff]
    %v203 = vld [vmem:[%s9] sm:$0xff]
    %v204 = vld [vmem:[%s9 + $0x8] sm:$0xff]
    %v205 = vld [vmem:[%s9 + $0x10] sm:$0xff]
    %v206 = vld [vmem:[%s9 + $0x18] sm:$0xff]
    %v207 = vld [vmem:[#allocation4] sm:$0x3]
    %v208 = vld [vmem:[#allocation2] sm:$0x3]
    %v209 = vld [vmem:[#allocation3] sm:$0x3]
    %vm210 = vcmask 261120
    %v212 = vsel %vm210, %v208, 0
    %214 = vmatprep.subr.mxu0 0.0
    %215 = vmatpush1.msra.mxu0 %v169
    %216 = vmatprep.subr.mxu0 0.0
    %217 = vmatpush1.msra.mxu0 %v170
    %218 = vmatprep.subr.mxu0 0.0
    %219 = vmatpush1.msra.mxu0 %v171
    %220 = vmatprep.subr.mxu0 0.0
    %221 = vmatpush1.msra.mxu0 %v172
    %222 = vmatprep.subr.mxu0 0.0
    %223 = vmatpush1.msra.mxu0 0.0
    %224 = vmatprep.subr.mxu0 0.0
    %225 = vmatpush1.msra.mxu0 0.0
    %226 = vmatprep.subr.mxu0 0.0
    %227 = vmatpush1.msra.mxu0 0.0
    %228 = vmatprep.subr.mxu0 0.0
    %229 = vmatpush1.msra.mxu0 0.0
    %230 = vmatprep.subr.mxu0 0.0
    %231 = vmatpush1.msra.mxu0 0.0
    %232 = vmatprep.subr.mxu0 0.0
    %233 = vmatpush1.msra.mxu0 0.0
    %234 = vmatprep.subr.mxu0 0.0
    %235 = vmatpush1.msra.mxu0 0.0
    %236 = vmatprep.subr.mxu0 0.0
    %237 = vmatpush1.msra.mxu0 0.0
    %238 = vmatprep.subr.mxu0 0.0
    %239 = vmatpush1.msra.mxu0 0.0
    %240 = vmatprep.subr.mxu0 0.0
    %241 = vmatpush1.msra.mxu0 0.0
    %242 = vmatprep.subr.mxu0 0.0
    %243 = vmatpush1.msra.mxu0 0.0
    %244 = vmatprep.subr.mxu0 0.0
    %245 = vmatpush1.msra.mxu0 0.0
    %246 = vmatprep.subr.mxu0 0.0
    %247 = vmatpush1.msra.mxu0 0.0
    %248 = vmatprep.subr.mxu0 0.0
    %249 = vmatpush1.msra.mxu0 0.0
    %250 = vmatprep.subr.mxu0 0.0
    %251 = vmatpush1.msra.mxu0 0.0
    %252 = vmatprep.subr.mxu0 0.0
    %253 = vmatpush1.msra.mxu0 0.0
    %254 = vmatprep.subr.mxu0 0.0
    %255 = vmatpush1.msra.mxu0 0.0
    %256 = vmatprep.subr.mxu0 0.0
    %257 = vmatpush1.msra.mxu0 0.0
    %258 = vmatprep.subr.mxu0 0.0
    %259 = vmatpush1.msra.mxu0 0.0
    %260 = vmatprep.subr.mxu0 0.0
    %261 = vmatpush1.msra.mxu0 0.0
    %262 = vmatprep.subr.mxu0 0.0
    %263 = vmatpush1.msra.mxu0 0.0
    %264 = vmatprep.subr.mxu0 0.0
    %265 = vmatpush1.msra.mxu0 0.0
    %266 = vmatprep.subr.mxu0 0.0
    %267 = vmatpush1.msra.mxu0 0.0
    %268 = vmatprep.subr.mxu0 0.0
    %269 = vmatpush1.msra.mxu0 0.0
    %270 = vmatprep.subr.mxu0 0.0
    %271 = vmatpush1.msra.mxu0 0.0
    %272 = vmatprep.subr.mxu0 0.0
    %273 = vmatpush1.msra.mxu0 0.0
    %274 = vmatprep.subr.mxu0 0.0
    %275 = vmatpush1.msra.mxu0 0.0
    %276 = vmatprep.subr.mxu0 0.0
    %277 = vmatpush1.msra.mxu0 0.0
    %278 = vmatprep.mubr.f32.mxu0 0.0
    %279 = vmatmul.mubr.f32.gmra.mrb[0].mxu0 %v212
    %v280 = vpop.f32.mrb[0].mxu0
    %v281 = vadd.f32 0.0, %v280
    %v282 = vpop.f32.mrb[0].mxu0
    %283 = vdwg.mxu0
    %v285 = vsel %vm210, %v207, 0
    %287 = vmatprep.subr.mxu0 0.0
    %288 = vmatpush1.msra.mxu0 %v160
    %289 = vmatprep.subr.mxu0 0.0
    %290 = vmatpush1.msra.mxu0 %v161
    %291 = vmatprep.subr.mxu0 0.0
    %292 = vmatpush1.msra.mxu0 %v162
    %293 = vmatprep.subr.mxu0 0.0
    %294 = vmatpush1.msra.mxu0 %v163
    %295 = vmatprep.subr.mxu0 0.0
    %296 = vmatpush1.msra.mxu0 0.0
    %297 = vmatprep.subr.mxu0 0.0
    %298 = vmatpush1.msra.mxu0 0.0
    %299 = vmatprep.subr.mxu0 0.0
    %300 = vmatpush1.msra.mxu0 0.0
    %301 = vmatprep.subr.mxu0 0.0
    %302 = vmatpush1.msra.mxu0 0.0
    %303 = vmatprep.subr.mxu0 0.0
    %304 = vmatpush1.msra.mxu0 0.0
    %305 = vmatprep.subr.mxu0 0.0
    %306 = vmatpush1.msra.mxu0 0.0
    %307 = vmatprep.subr.mxu0 0.0
    %308 = vmatpush1.msra.mxu0 0.0
    %309 = vmatprep.subr.mxu0 0.0
    %310 = vmatpush1.msra.mxu0 0.0
    %311 = vmatprep.subr.mxu0 0.0
    %312 = vmatpush1.msra.mxu0 0.0
    %313 = vmatprep.subr.mxu0 0.0
    %314 = vmatpush1.msra.mxu0 0.0
    %315 = vmatprep.subr.mxu0 0.0
    %316 = vmatpush1.msra.mxu0 0.0
    %317 = vmatprep.subr.mxu0 0.0
    %318 = vmatpush1.msra.mxu0 0.0
    %319 = vmatprep.subr.mxu0 0.0
    %320 = vmatpush1.msra.mxu0 0.0
    %321 = vmatprep.subr.mxu0 0.0
    %322 = vmatpush1.msra.mxu0 0.0
    %323 = vmatprep.subr.mxu0 0.0
    %324 = vmatpush1.msra.mxu0 0.0
    %325 = vmatprep.subr.mxu0 0.0
    %326 = vmatpush1.msra.mxu0 0.0
    %327 = vmatprep.subr.mxu0 0.0
    %328 = vmatpush1.msra.mxu0 0.0
    %329 = vmatprep.subr.mxu0 0.0
    %330 = vmatpush1.msra.mxu0 0.0
    %331 = vmatprep.subr.mxu0 0.0
    %332 = vmatpush1.msra.mxu0 0.0
    %333 = vmatprep.subr.mxu0 0.0
    %334 = vmatpush1.msra.mxu0 0.0
    %335 = vmatprep.subr.mxu0 0.0
    %336 = vmatpush1.msra.mxu0 0.0
    %337 = vmatprep.subr.mxu0 0.0
    %338 = vmatpush1.msra.mxu0 0.0
    %339 = vmatprep.subr.mxu0 0.0
    %340 = vmatpush1.msra.mxu0 0.0
    %341 = vmatprep.subr.mxu0 0.0
    %342 = vmatpush1.msra.mxu0 0.0
    %343 = vmatprep.subr.mxu0 0.0
    %344 = vmatpush1.msra.mxu0 0.0
    %345 = vmatprep.subr.mxu0 0.0
    %346 = vmatpush1.msra.mxu0 0.0
    %347 = vmatprep.subr.mxu0 0.0
    %348 = vmatpush1.msra.mxu0 0.0
    %349 = vmatprep.subr.mxu0 0.0
    %350 = vmatpush1.msra.mxu0 0.0
    %351 = vmatprep.mubr.f32.mxu0 0.0
    %352 = vmatmul.mubr.f32.gmra.mrb[0].mxu0 %v285
    %v353 = vpop.f32.mrb[0].mxu0
    %v354 = vadd.f32 %v281, %v353
    %v355 = vpop.f32.mrb[0].mxu0
    %356 = vdwg.mxu0
    %v357 = vadd.f32 %v354, %v183
    %v358 = vxor.u32 %v357, 2147483648
    %v359 = vmul.f32 %v358, 1.442695
    %v360 = vpow.pop %v359
    %v361 = vadd.f32 %v360, 1.0
    %v362 = vrcp.pop %v361
    %v363 = vmul.f32 1.0, %v362
    %v364 = vtanh.pop %v357
    %366 = vrot.lane.b32.xlu0 %v209, 32
    %v367 = vpop.permute.xlu0 %366
    %v369 = vmul.f32 %v363, %v367
    %371 = vrot.lane.b32.xlu0 %v364, 32
    %v372 = vpop.permute.xlu0 %371
    %v374 = vmul.f32 %v363, %v372
    %376 = vrot.lane.b32.xlu0 %v374, 32
    %v377 = vpop.permute.xlu0 %376
    %v379 = vadd.f32 %v369, %v377
    %v380 = vtanh.pop %v379
    %382 = vrot.lane.b32.xlu0 %v380, 32
    %v383 = vpop.permute.xlu0 %382
    %v385 = vmul.f32 %v363, %v383
    %387 = vrot.lane.b32.xlu0 %v385, 64
    %v388 = vpop.permute.xlu0 %387
    %390 = vst.msk [vmem:[#allocation2] sm:$0x3] %vm153, %v388
    %392 = vrot.lane.b32.xlu0 %v379, 96
    %v393 = vpop.permute.xlu0 %392
    %395 = vst.msk [vmem:[#allocation3] sm:$0x3] %vm153, %v393
    %s396 = scalar_lea.vmem [#allocation2], 2
    %v397 = vld [vmem:[%s396] sm:$0x3]
    %s398 = scalar_lea.vmem [#allocation3], 2
    %v399 = vld [vmem:[%s398] sm:$0x3]
    %v401 = vsel %vm210, %v397, 0
    %403 = vmatprep.subr.mxu0 0.0
    %404 = vmatpush1.msra.mxu0 %v174
    %405 = vmatprep.subr.mxu0 0.0
    %406 = vmatpush1.msra.mxu0 %v175
    %407 = vmatprep.subr.mxu0 0.0
    %408 = vmatpush1.msra.mxu0 %v176
    %409 = vmatprep.subr.mxu0 0.0
    %410 = vmatpush1.msra.mxu0 %v177
    %411 = vmatprep.subr.mxu0 0.0
    %412 = vmatpush1.msra.mxu0 0.0
    %413 = vmatprep.subr.mxu0 0.0
    %414 = vmatpush1.msra.mxu0 0.0
    %415 = vmatprep.subr.mxu0 0.0
    %416 = vmatpush1.msra.mxu0 0.0
    %417 = vmatprep.subr.mxu0 0.0
    %418 = vmatpush1.msra.mxu0 0.0
    %419 = vmatprep.subr.mxu0 0.0
    %420 = vmatpush1.msra.mxu0 0.0
    %421 = vmatprep.subr.mxu0 0.0
    %422 = vmatpush1.msra.mxu0 0.0
    %423 = vmatprep.subr.mxu0 0.0
    %424 = vmatpush1.msra.mxu0 0.0
    %425 = vmatprep.subr.mxu0 0.0
    %426 = vmatpush1.msra.mxu0 0.0
    %427 = vmatprep.subr.mxu0 0.0
    %428 = vmatpush1.msra.mxu0 0.0
    %429 = vmatprep.subr.mxu0 0.0
    %430 = vmatpush1.msra.mxu0 0.0
    %431 = vmatprep.subr.mxu0 0.0
    %432 = vmatpush1.msra.mxu0 0.0
    %433 = vmatprep.subr.mxu0 0.0
    %434 = vmatpush1.msra.mxu0 0.0
    %435 = vmatprep.subr.mxu0 0.0
    %436 = vmatpush1.msra.mxu0 0.0
    %437 = vmatprep.subr.mxu0 0.0
    %438 = vmatpush1.msra.mxu0 0.0
    %439 = vmatprep.subr.mxu0 0.0
    %440 = vmatpush1.msra.mxu0 0.0
    %441 = vmatprep.subr.mxu0 0.0
    %442 = vmatpush1.msra.mxu0 0.0
    %443 = vmatprep.subr.mxu0 0.0
    %444 = vmatpush1.msra.mxu0 0.0
    %445 = vmatprep.subr.mxu0 0.0
    %446 = vmatpush1.msra.mxu0 0.0
    %447 = vmatprep.subr.mxu0 0.0
    %448 = vmatpush1.msra.mxu0 0.0
    %449 = vmatprep.subr.mxu0 0.0
    %450 = vmatpush1.msra.mxu0 0.0
    %451 = vmatprep.subr.mxu0 0.0
    %452 = vmatpush1.msra.mxu0 0.0
    %453 = vmatprep.subr.mxu0 0.0
    %454 = vmatpush1.msra.mxu0 0.0
    %455 = vmatprep.subr.mxu0 0.0
    %456 = vmatpush1.msra.mxu0 0.0
    %457 = vmatprep.subr.mxu0 0.0
    %458 = vmatpush1.msra.mxu0 0.0
    %459 = vmatprep.subr.mxu0 0.0
    %460 = vmatpush1.msra.mxu0 0.0
    %461 = vmatprep.subr.mxu0 0.0
    %462 = vmatpush1.msra.mxu0 0.0
    %463 = vmatprep.subr.mxu0 0.0
    %464 = vmatpush1.msra.mxu0 0.0
    %465 = vmatprep.subr.mxu0 0.0
    %466 = vmatpush1.msra.mxu0 0.0
    %467 = vmatprep.mubr.f32.mxu0 0.0
    %468 = vmatmul.mubr.f32.gmra.mrb[0].mxu0 %v401
    %v469 = vpop.f32.mrb[0].mxu0
    %v470 = vadd.f32 0.0, %v469
    %v471 = vpop.f32.mrb[0].mxu0
    %472 = vdwg.mxu0
    %v473 = vsel %vm210, %v388, 0
    %475 = vmatprep.subr.mxu0 0.0
    %476 = vmatpush1.msra.mxu0 %v165
    %477 = vmatprep.subr.mxu0 0.0
    %478 = vmatpush1.msra.mxu0 %v166
    %479 = vmatprep.subr.mxu0 0.0
    %480 = vmatpush1.msra.mxu0 %v167
    %481 = vmatprep.subr.mxu0 0.0
    %482 = vmatpush1.msra.mxu0 %v168
    %483 = vmatprep.subr.mxu0 0.0
    %484 = vmatpush1.msra.mxu0 0.0
    %485 = vmatprep.subr.mxu0 0.0
    %486 = vmatpush1.msra.mxu0 0.0
    %487 = vmatprep.subr.mxu0 0.0
    %488 = vmatpush1.msra.mxu0 0.0
    %489 = vmatprep.subr.mxu0 0.0
    %490 = vmatpush1.msra.mxu0 0.0
    %491 = vmatprep.subr.mxu0 0.0
    %492 = vmatpush1.msra.mxu0 0.0
    %493 = vmatprep.subr.mxu0 0.0
    %494 = vmatpush1.msra.mxu0 0.0
    %495 = vmatprep.subr.mxu0 0.0
    %496 = vmatpush1.msra.mxu0 0.0
    %497 = vmatprep.subr.mxu0 0.0
    %498 = vmatpush1.msra.mxu0 0.0
    %499 = vmatprep.subr.mxu0 0.0
    %500 = vmatpush1.msra.mxu0 0.0
    %501 = vmatprep.subr.mxu0 0.0
    %502 = vmatpush1.msra.mxu0 0.0
    %503 = vmatprep.subr.mxu0 0.0
    %504 = vmatpush1.msra.mxu0 0.0
    %505 = vmatprep.subr.mxu0 0.0
    %506 = vmatpush1.msra.mxu0 0.0
    %507 = vmatprep.subr.mxu0 0.0
    %508 = vmatpush1.msra.mxu0 0.0
    %509 = vmatprep.subr.mxu0 0.0
    %510 = vmatpush1.msra.mxu0 0.0
    %511 = vmatprep.subr.mxu0 0.0
    %512 = vmatpush1.msra.mxu0 0.0
    %513 = vmatprep.subr.mxu0 0.0
    %514 = vmatpush1.msra.mxu0 0.0
    %515 = vmatprep.subr.mxu0 0.0
    %516 = vmatpush1.msra.mxu0 0.0
    %517 = vmatprep.subr.mxu0 0.0
    %518 = vmatpush1.msra.mxu0 0.0
    %519 = vmatprep.subr.mxu0 0.0
    %520 = vmatpush1.msra.mxu0 0.0
    %521 = vmatprep.subr.mxu0 0.0
    %522 = vmatpush1.msra.mxu0 0.0
    %523 = vmatprep.subr.mxu0 0.0
    %524 = vmatpush1.msra.mxu0 0.0
    %525 = vmatprep.subr.mxu0 0.0
    %526 = vmatpush1.msra.mxu0 0.0
    %527 = vmatprep.subr.mxu0 0.0
    %528 = vmatpush1.msra.mxu0 0.0
    %529 = vmatprep.subr.mxu0 0.0
    %530 = vmatpush1.msra.mxu0 0.0
    %531 = vmatprep.subr.mxu0 0.0
    %532 = vmatpush1.msra.mxu0 0.0
    %533 = vmatprep.subr.mxu0 0.0
    %534 = vmatpush1.msra.mxu0 0.0
    %535 = vmatprep.subr.mxu0 0.0
    %536 = vmatpush1.msra.mxu0 0.0
    %537 = vmatprep.subr.mxu0 0.0
    %538 = vmatpush1.msra.mxu0 0.0
    %539 = vmatprep.mubr.f32.mxu0 0.0
    %540 = vmatmul.mubr.f32.gmra.mrb[0].mxu0 %v473
    %v541 = vpop.f32.mrb[0].mxu0
    %v542 = vadd.f32 %v470, %v541
    %v543 = vpop.f32.mrb[0].mxu0
    %544 = vdwg.mxu0
    %v545 = vadd.f32 %v542, %v191
    %v546 = vxor.u32 %v545, 2147483648
    %v547 = vmul.f32 %v546, 1.442695
    %v548 = vpow.pop %v547
    %v549 = vadd.f32 %v548, 1.0
    %v550 = vrcp.pop %v549
    %v551 = vmul.f32 1.0, %v550
    %v552 = vtanh.pop %v545
    %554 = vrot.lane.b32.xlu0 %v399, 32
    %v555 = vpop.permute.xlu0 %554
    %v557 = vmul.f32 %v551, %v555
    %559 = vrot.lane.b32.xlu0 %v552, 32
    %v560 = vpop.permute.xlu0 %559
    %v562 = vmul.f32 %v551, %v560
    %564 = vrot.lane.b32.xlu0 %v562, 32
    %v565 = vpop.permute.xlu0 %564
    %v567 = vadd.f32 %v557, %v565
    %v568 = vtanh.pop %v567
    %570 = vrot.lane.b32.xlu0 %v568, 32
    %v571 = vpop.permute.xlu0 %570
    %v573 = vmul.f32 %v551, %v571
    %575 = vrot.lane.b32.xlu0 %v573, 64
    %v576 = vpop.permute.xlu0 %575
    %578 = vst.msk [vmem:[%s396] sm:$0x3] %vm153, %v576
    %580 = vrot.lane.b32.xlu0 %v567, 96
    %v581 = vpop.permute.xlu0 %580
    %583 = vst.msk [vmem:[%s398] sm:$0x3] %vm153, %v581
    %v584 = vsel %vm210, %v576, 0
    %586 = vmatprep.subr.mxu0 0.0
    %587 = vmatpush1.msra.mxu0 %v195
    %588 = vmatprep.subr.mxu0 0.0
    %589 = vmatpush1.msra.mxu0 %v196
    %590 = vmatprep.subr.mxu0 0.0
    %591 = vmatpush1.msra.mxu0 %v197
    %592 = vmatprep.subr.mxu0 0.0
    %593 = vmatpush1.msra.mxu0 %v198
    %594 = vmatprep.subr.mxu0 0.0
    %595 = vmatpush1.msra.mxu0 0.0
    %596 = vmatprep.subr.mxu0 0.0
    %597 = vmatpush1.msra.mxu0 0.0
    %598 = vmatprep.subr.mxu0 0.0
    %599 = vmatpush1.msra.mxu0 0.0
    %600 = vmatprep.subr.mxu0 0.0
    %601 = vmatpush1.msra.mxu0 0.0
    %602 = vmatprep.subr.mxu0 0.0
    %603 = vmatpush1.msra.mxu0 0.0
    %604 = vmatprep.subr.mxu0 0.0
    %605 = vmatpush1.msra.mxu0 0.0
    %606 = vmatprep.subr.mxu0 0.0
    %607 = vmatpush1.msra.mxu0 0.0
    %608 = vmatprep.subr.mxu0 0.0
    %609 = vmatpush1.msra.mxu0 0.0
    %610 = vmatprep.subr.mxu0 0.0
    %611 = vmatpush1.msra.mxu0 0.0
    %612 = vmatprep.subr.mxu0 0.0
    %613 = vmatpush1.msra.mxu0 0.0
    %614 = vmatprep.subr.mxu0 0.0
    %615 = vmatpush1.msra.mxu0 0.0
    %616 = vmatprep.subr.mxu0 0.0
    %617 = vmatpush1.msra.mxu0 0.0
    %618 = vmatprep.subr.mxu0 0.0
    %619 = vmatpush1.msra.mxu0 0.0
    %620 = vmatprep.subr.mxu0 0.0
    %621 = vmatpush1.msra.mxu0 0.0
    %622 = vmatprep.subr.mxu0 0.0
    %623 = vmatpush1.msra.mxu0 0.0
    %624 = vmatprep.subr.mxu0 0.0
    %625 = vmatpush1.msra.mxu0 0.0
    %626 = vmatprep.subr.mxu0 0.0
    %627 = vmatpush1.msra.mxu0 0.0
    %628 = vmatprep.subr.mxu0 0.0
    %629 = vmatpush1.msra.mxu0 0.0
    %630 = vmatprep.subr.mxu0 0.0
    %631 = vmatpush1.msra.mxu0 0.0
    %632 = vmatprep.subr.mxu0 0.0
    %633 = vmatpush1.msra.mxu0 0.0
    %634 = vmatprep.subr.mxu0 0.0
    %635 = vmatpush1.msra.mxu0 0.0
    %636 = vmatprep.subr.mxu0 0.0
    %637 = vmatpush1.msra.mxu0 0.0
    %638 = vmatprep.subr.mxu0 0.0
    %639 = vmatpush1.msra.mxu0 0.0
    %640 = vmatprep.subr.mxu0 0.0
    %641 = vmatpush1.msra.mxu0 0.0
    %642 = vmatprep.subr.mxu0 0.0
    %643 = vmatpush1.msra.mxu0 0.0
    %644 = vmatprep.subr.mxu0 0.0
    %645 = vmatpush1.msra.mxu0 0.0
    %646 = vmatprep.subr.mxu0 0.0
    %647 = vmatpush1.msra.mxu0 0.0
    %648 = vmatprep.subr.mxu0 0.0
    %649 = vmatpush1.msra.mxu0 0.0
    %650 = vmatprep.mubr.f32.mxu0 0.0
    %651 = vmatmul.mubr.f32.gmra.mrb[0].mxu0 %v584
    %v652 = vpop.f32.mrb[0].mxu0
    %v653 = vadd.f32 0.0, %v652
    %v654 = vpop.f32.mrb[0].mxu0
    %655 = vdwg.mxu0
    %v658 = vunpack.c.l.s4 1966171168
    %v659 = vunpack.c.0.s8 %v658
    %v660 = vlaneseq
    %v661 = vshrl.u32 %v660, 7
    %v662 = vsub.s32 %v659, %v661
    %v663 = vrot.slane %v653, %v662
    %v664 = vcombine.high %v663, %v663
    %v666 = vunpack.c.l.s4 1966171168
    %v667 = vunpack.c.0.s8 %v666
    %v668 = vlaneseq
    %v669 = vshrl.u32 %v668, 7
    %v670 = vsub.s32 %v667, %v669
    %v671 = vrot.slane %v663, %v670
    %v673 = vunpack.c.l.s4 1966171168
    %v674 = vunpack.c.0.s8 %v673
    %v675 = vlaneseq
    %v676 = vshrl.u32 %v675, 7
    %v677 = vsub.s32 %v674, %v676
    %v678 = vrot.slane %v664, %v677
    %v679 = vsel %vm210, %v671, 0
    %v682 = vsel %vm210, %v193, 0
    %684 = vmatprep.subr.mxu0 0.0
    %685 = vmatpush1.xpose.msra.mxu0 %v682
    %686 = vmatprep.subr.mxu0 0.0
    %687 = vmatpush1.xpose.msra.mxu0 0.0
    %688 = vmatprep.subr.mxu0 0.0
    %689 = vmatpush1.xpose.msra.mxu0 0.0
    %690 = vmatprep.subr.mxu0 0.0
    %691 = vmatpush1.xpose.msra.mxu0 0.0
    %692 = vmatprep.subr.mxu0 0.0
    %693 = vmatpush1.xpose.msra.mxu0 0.0
    %694 = vmatprep.subr.mxu0 0.0
    %695 = vmatpush1.xpose.msra.mxu0 0.0
    %696 = vmatprep.subr.mxu0 0.0
    %697 = vmatpush1.xpose.msra.mxu0 0.0
    %698 = vmatprep.subr.mxu0 0.0
    %699 = vmatpush1.xpose.msra.mxu0 0.0
    %700 = vmatprep.subr.mxu0 0.0
    %701 = vmatpush1.xpose.msra.mxu0 0.0
    %702 = vmatprep.subr.mxu0 0.0
    %703 = vmatpush1.xpose.msra.mxu0 0.0
    %704 = vmatprep.subr.mxu0 0.0
    %705 = vmatpush1.xpose.msra.mxu0 0.0
    %706 = vmatprep.subr.mxu0 0.0
    %707 = vmatpush1.xpose.msra.mxu0 0.0
    %708 = vmatprep.subr.mxu0 0.0
    %709 = vmatpush1.xpose.msra.mxu0 0.0
    %710 = vmatprep.subr.mxu0 0.0
    %711 = vmatpush1.xpose.msra.mxu0 0.0
    %712 = vmatprep.subr.mxu0 0.0
    %713 = vmatpush1.xpose.msra.mxu0 0.0
    %714 = vmatprep.subr.mxu0 0.0
    %715 = vmatpush1.xpose.msra.mxu0 0.0
    %716 = vmatprep.subr.mxu0 0.0
    %717 = vmatpush1.xpose.msra.mxu0 0.0
    %718 = vmatprep.subr.mxu0 0.0
    %719 = vmatpush1.xpose.msra.mxu0 0.0
    %720 = vmatprep.subr.mxu0 0.0
    %721 = vmatpush1.xpose.msra.mxu0 0.0
    %722 = vmatprep.subr.mxu0 0.0
    %723 = vmatpush1.xpose.msra.mxu0 0.0
    %724 = vmatprep.subr.mxu0 0.0
    %725 = vmatpush1.xpose.msra.mxu0 0.0
    %726 = vmatprep.subr.mxu0 0.0
    %727 = vmatpush1.xpose.msra.mxu0 0.0
    %728 = vmatprep.subr.mxu0 0.0
    %729 = vmatpush1.xpose.msra.mxu0 0.0
    %730 = vmatprep.subr.mxu0 0.0
    %731 = vmatpush1.xpose.msra.mxu0 0.0
    %732 = vmatprep.subr.mxu0 0.0
    %733 = vmatpush1.xpose.msra.mxu0 0.0
    %734 = vmatprep.subr.mxu0 0.0
    %735 = vmatpush1.xpose.msra.mxu0 0.0
    %736 = vmatprep.subr.mxu0 0.0
    %737 = vmatpush1.xpose.msra.mxu0 0.0
    %738 = vmatprep.subr.mxu0 0.0
    %739 = vmatpush1.xpose.msra.mxu0 0.0
    %740 = vmatprep.subr.mxu0 0.0
    %741 = vmatpush1.xpose.msra.mxu0 0.0
    %742 = vmatprep.subr.mxu0 0.0
    %743 = vmatpush1.xpose.msra.mxu0 0.0
    %744 = vmatprep.subr.mxu0 0.0
    %745 = vmatpush1.xpose.msra.mxu0 0.0
    %746 = vmatprep.subr.mxu0 0.0
    %747 = vmatpush1.xpose.msra.mxu0 0.0
    %748 = vmatprep.mubr.f32.mxu0 0.0
    %749 = vmatmul.mubr.f32.gmra.mrb[0].mxu0 %v679
    %v750 = vpop.f32.mrb[0].mxu0
    %v751 = vadd.f32 0.0, %v750
    %v752 = vpop.f32.mrb[0].mxu0
    %753 = vdwg.mxu0
    %v754 = vsel %vm210, %v678, 0
    %v757 = vsel %vm210, %v194, 0
    %759 = vmatprep.subr.mxu0 0.0
    %760 = vmatpush1.xpose.msra.mxu0 %v757
    %761 = vmatprep.subr.mxu0 0.0
    %762 = vmatpush1.xpose.msra.mxu0 0.0
    %763 = vmatprep.subr.mxu0 0.0
    %764 = vmatpush1.xpose.msra.mxu0 0.0
    %765 = vmatprep.subr.mxu0 0.0
    %766 = vmatpush1.xpose.msra.mxu0 0.0
    %767 = vmatprep.subr.mxu0 0.0
    %768 = vmatpush1.xpose.msra.mxu0 0.0
    %769 = vmatprep.subr.mxu0 0.0
    %770 = vmatpush1.xpose.msra.mxu0 0.0
    %771 = vmatprep.subr.mxu0 0.0
    %772 = vmatpush1.xpose.msra.mxu0 0.0
    %773 = vmatprep.subr.mxu0 0.0
    %774 = vmatpush1.xpose.msra.mxu0 0.0
    %775 = vmatprep.subr.mxu0 0.0
    %776 = vmatpush1.xpose.msra.mxu0 0.0
    %777 = vmatprep.subr.mxu0 0.0
    %778 = vmatpush1.xpose.msra.mxu0 0.0
    %779 = vmatprep.subr.mxu0 0.0
    %780 = vmatpush1.xpose.msra.mxu0 0.0
    %781 = vmatprep.subr.mxu0 0.0
    %782 = vmatpush1.xpose.msra.mxu0 0.0
    %783 = vmatprep.subr.mxu0 0.0
    %784 = vmatpush1.xpose.msra.mxu0 0.0
    %785 = vmatprep.subr.mxu0 0.0
    %786 = vmatpush1.xpose.msra.mxu0 0.0
    %787 = vmatprep.subr.mxu0 0.0
    %788 = vmatpush1.xpose.msra.mxu0 0.0
    %789 = vmatprep.subr.mxu0 0.0
    %790 = vmatpush1.xpose.msra.mxu0 0.0
    %791 = vmatprep.subr.mxu0 0.0
    %792 = vmatpush1.xpose.msra.mxu0 0.0
    %793 = vmatprep.subr.mxu0 0.0
    %794 = vmatpush1.xpose.msra.mxu0 0.0
    %795 = vmatprep.subr.mxu0 0.0
    %796 = vmatpush1.xpose.msra.mxu0 0.0
    %797 = vmatprep.subr.mxu0 0.0
    %798 = vmatpush1.xpose.msra.mxu0 0.0
    %799 = vmatprep.subr.mxu0 0.0
    %800 = vmatpush1.xpose.msra.mxu0 0.0
    %801 = vmatprep.subr.mxu0 0.0
    %802 = vmatpush1.xpose.msra.mxu0 0.0
    %803 = vmatprep.subr.mxu0 0.0
    %804 = vmatpush1.xpose.msra.mxu0 0.0
    %805 = vmatprep.subr.mxu0 0.0
    %806 = vmatpush1.xpose.msra.mxu0 0.0
    %807 = vmatprep.subr.mxu0 0.0
    %808 = vmatpush1.xpose.msra.mxu0 0.0
    %809 = vmatprep.subr.mxu0 0.0
    %810 = vmatpush1.xpose.msra.mxu0 0.0
    %811 = vmatprep.subr.mxu0 0.0
    %812 = vmatpush1.xpose.msra.mxu0 0.0
    %813 = vmatprep.subr.mxu0 0.0
    %814 = vmatpush1.xpose.msra.mxu0 0.0
    %815 = vmatprep.subr.mxu0 0.0
    %816 = vmatpush1.xpose.msra.mxu0 0.0
    %817 = vmatprep.subr.mxu0 0.0
    %818 = vmatpush1.xpose.msra.mxu0 0.0
    %819 = vmatprep.subr.mxu0 0.0
    %820 = vmatpush1.xpose.msra.mxu0 0.0
    %821 = vmatprep.subr.mxu0 0.0
    %822 = vmatpush1.xpose.msra.mxu0 0.0
    %823 = vmatprep.mubr.f32.mxu0 0.0
    %824 = vmatmul.mubr.f32.gmra.mrb[0].mxu0 %v754
    %v825 = vpop.f32.mrb[0].mxu0
    %v826 = vadd.f32 0.0, %v825
    %v827 = vpop.f32.mrb[0].mxu0
    %828 = vdwg.mxu0
    %vm829 = vcmask 57344
    %v830 = vsel %vm829, %v751, -inf
    %831 = vmax.xlane.f32.xlu0 %v830
    %v832 = vpop.xlane.xlu0 %831
    %v833 = vsel %vm829, %v826, -inf
    %834 = vmax.xlane.f32.xlu0 %v833
    %v835 = vpop.xlane.xlu0 %834
    %v836 = vsub.f32 %v751, %v832
    %v837 = vsub.f32 %v826, %v835
    %v838 = vmul.f32 %v836, 1.442695
    %v839 = vpow.pop %v838
    %v840 = vmul.f32 %v837, 1.442695
    %v841 = vpow.pop %v840
    %v842 = vsel %vm829, %v839, 0.0
    %843 = vadd.xlane.f32.xlu0 %v842
    %v844 = vpop.xlane.xlu0 %843
    %v845 = vsel %vm829, %v841, 0.0
    %846 = vadd.xlane.f32.xlu0 %v845
    %v847 = vpop.xlane.xlu0 %846
    %v848 = vrcp.pop %v844
    %v849 = vrcp.pop %v847
    %v850 = vmul.f32 %v839, %v848
    %v851 = vmul.f32 %v841, %v849
    %vm852 = vcmask 64512
    %v854 = vsel %vm852, %v850, 0
    %856 = vmatprep.subr.mxu0 0.0
    %857 = vmatpush1.msra.mxu0 %v193
    %858 = vmatprep.subr.mxu0 0.0
    %859 = vmatpush1.msra.mxu0 0.0
    %860 = vmatprep.subr.mxu0 0.0
    %861 = vmatpush1.msra.mxu0 0.0
    %862 = vmatprep.subr.mxu0 0.0
    %863 = vmatpush1.msra.mxu0 0.0
    %864 = vmatprep.subr.mxu0 0.0
    %865 = vmatpush1.msra.mxu0 0.0
    %866 = vmatprep.subr.mxu0 0.0
    %867 = vmatpush1.msra.mxu0 0.0
    %868 = vmatprep.subr.mxu0 0.0
    %869 = vmatpush1.msra.mxu0 0.0
    %870 = vmatprep.subr.mxu0 0.0
    %871 = vmatpush1.msra.mxu0 0.0
    %872 = vmatprep.subr.mxu0 0.0
    %873 = vmatpush1.msra.mxu0 0.0
    %874 = vmatprep.subr.mxu0 0.0
    %875 = vmatpush1.msra.mxu0 0.0
    %876 = vmatprep.subr.mxu0 0.0
    %877 = vmatpush1.msra.mxu0 0.0
    %878 = vmatprep.subr.mxu0 0.0
    %879 = vmatpush1.msra.mxu0 0.0
    %880 = vmatprep.subr.mxu0 0.0
    %881 = vmatpush1.msra.mxu0 0.0
    %882 = vmatprep.subr.mxu0 0.0
    %883 = vmatpush1.msra.mxu0 0.0
    %884 = vmatprep.subr.mxu0 0.0
    %885 = vmatpush1.msra.mxu0 0.0
    %886 = vmatprep.subr.mxu0 0.0
    %887 = vmatpush1.msra.mxu0 0.0
    %888 = vmatprep.subr.mxu0 0.0
    %889 = vmatpush1.msra.mxu0 0.0
    %890 = vmatprep.subr.mxu0 0.0
    %891 = vmatpush1.msra.mxu0 0.0
    %892 = vmatprep.subr.mxu0 0.0
    %893 = vmatpush1.msra.mxu0 0.0
    %894 = vmatprep.subr.mxu0 0.0
    %895 = vmatpush1.msra.mxu0 0.0
    %896 = vmatprep.subr.mxu0 0.0
    %897 = vmatpush1.msra.mxu0 0.0
    %898 = vmatprep.subr.mxu0 0.0
    %899 = vmatpush1.msra.mxu0 0.0
    %900 = vmatprep.subr.mxu0 0.0
    %901 = vmatpush1.msra.mxu0 0.0
    %902 = vmatprep.subr.mxu0 0.0
    %903 = vmatpush1.msra.mxu0 0.0
    %904 = vmatprep.subr.mxu0 0.0
    %905 = vmatpush1.msra.mxu0 0.0
    %906 = vmatprep.subr.mxu0 0.0
    %907 = vmatpush1.msra.mxu0 0.0
    %908 = vmatprep.subr.mxu0 0.0
    %909 = vmatpush1.msra.mxu0 0.0
    %910 = vmatprep.subr.mxu0 0.0
    %911 = vmatpush1.msra.mxu0 0.0
    %912 = vmatprep.subr.mxu0 0.0
    %913 = vmatpush1.msra.mxu0 0.0
    %914 = vmatprep.subr.mxu0 0.0
    %915 = vmatpush1.msra.mxu0 0.0
    %916 = vmatprep.subr.mxu0 0.0
    %917 = vmatpush1.msra.mxu0 0.0
    %918 = vmatprep.subr.mxu0 0.0
    %919 = vmatpush1.msra.mxu0 0.0
    %920 = vmatprep.mubr.f32.mxu0 0.0
    %921 = vmatmul.mubr.f32.gmra.mrb[0].mxu0 %v854
    %v922 = vpop.f32.mrb[0].mxu0
    %v923 = vadd.f32 0.0, %v922
    %v924 = vpop.f32.mrb[0].mxu0
    %925 = vdwg.mxu0
    %v927 = vsel %vm852, %v851, 0
    %929 = vmatprep.subr.mxu0 0.0
    %930 = vmatpush1.msra.mxu0 %v194
    %931 = vmatprep.subr.mxu0 0.0
    %932 = vmatpush1.msra.mxu0 0.0
    %933 = vmatprep.subr.mxu0 0.0
    %934 = vmatpush1.msra.mxu0 0.0
    %935 = vmatprep.subr.mxu0 0.0
    %936 = vmatpush1.msra.mxu0 0.0
    %937 = vmatprep.subr.mxu0 0.0
    %938 = vmatpush1.msra.mxu0 0.0
    %939 = vmatprep.subr.mxu0 0.0
    %940 = vmatpush1.msra.mxu0 0.0
    %941 = vmatprep.subr.mxu0 0.0
    %942 = vmatpush1.msra.mxu0 0.0
    %943 = vmatprep.subr.mxu0 0.0
    %944 = vmatpush1.msra.mxu0 0.0
    %945 = vmatprep.subr.mxu0 0.0
    %946 = vmatpush1.msra.mxu0 0.0
    %947 = vmatprep.subr.mxu0 0.0
    %948 = vmatpush1.msra.mxu0 0.0
    %949 = vmatprep.subr.mxu0 0.0
    %950 = vmatpush1.msra.mxu0 0.0
    %951 = vmatprep.subr.mxu0 0.0
    %952 = vmatpush1.msra.mxu0 0.0
    %953 = vmatprep.subr.mxu0 0.0
    %954 = vmatpush1.msra.mxu0 0.0
    %955 = vmatprep.subr.mxu0 0.0
    %956 = vmatpush1.msra.mxu0 0.0
    %957 = vmatprep.subr.mxu0 0.0
    %958 = vmatpush1.msra.mxu0 0.0
    %959 = vmatprep.subr.mxu0 0.0
    %960 = vmatpush1.msra.mxu0 0.0
    %961 = vmatprep.subr.mxu0 0.0
    %962 = vmatpush1.msra.mxu0 0.0
    %963 = vmatprep.subr.mxu0 0.0
    %964 = vmatpush1.msra.mxu0 0.0
    %965 = vmatprep.subr.mxu0 0.0
    %966 = vmatpush1.msra.mxu0 0.0
    %967 = vmatprep.subr.mxu0 0.0
    %968 = vmatpush1.msra.mxu0 0.0
    %969 = vmatprep.subr.mxu0 0.0
    %970 = vmatpush1.msra.mxu0 0.0
    %971 = vmatprep.subr.mxu0 0.0
    %972 = vmatpush1.msra.mxu0 0.0
    %973 = vmatprep.subr.mxu0 0.0
    %974 = vmatpush1.msra.mxu0 0.0
    %975 = vmatprep.subr.mxu0 0.0
    %976 = vmatpush1.msra.mxu0 0.0
    %977 = vmatprep.subr.mxu0 0.0
    %978 = vmatpush1.msra.mxu0 0.0
    %979 = vmatprep.subr.mxu0 0.0
    %980 = vmatpush1.msra.mxu0 0.0
    %981 = vmatprep.subr.mxu0 0.0
    %982 = vmatpush1.msra.mxu0 0.0
    %983 = vmatprep.subr.mxu0 0.0
    %984 = vmatpush1.msra.mxu0 0.0
    %985 = vmatprep.subr.mxu0 0.0
    %986 = vmatpush1.msra.mxu0 0.0
    %987 = vmatprep.subr.mxu0 0.0
    %988 = vmatpush1.msra.mxu0 0.0
    %989 = vmatprep.subr.mxu0 0.0
    %990 = vmatpush1.msra.mxu0 0.0
    %991 = vmatprep.subr.mxu0 0.0
    %992 = vmatpush1.msra.mxu0 0.0
    %993 = vmatprep.mubr.f32.mxu0 0.0
    %994 = vmatmul.mubr.f32.gmra.mrb[0].mxu0 %v927
    %v995 = vpop.f32.mrb[0].mxu0
    %v996 = vadd.f32 0.0, %v995
    %v997 = vpop.f32.mrb[0].mxu0
    %998 = vdwg.mxu0
    %999 = vmatprep.subr.mxu0 0.0
    %1000 = vmatpush1.msra.mxu0 %v203
    %1001 = vmatprep.subr.mxu0 0.0
    %1002 = vmatpush1.msra.mxu0 %v204
    %1003 = vmatprep.subr.mxu0 0.0
    %1004 = vmatpush1.msra.mxu0 %v205
    %1005 = vmatprep.subr.mxu0 0.0
    %1006 = vmatpush1.msra.mxu0 %v206
    %1007 = vmatprep.subr.mxu0 0.0
    %1008 = vmatpush1.msra.mxu0 0.0
    %1009 = vmatprep.subr.mxu0 0.0
    %1010 = vmatpush1.msra.mxu0 0.0
    %1011 = vmatprep.subr.mxu0 0.0
    %1012 = vmatpush1.msra.mxu0 0.0
    %1013 = vmatprep.subr.mxu0 0.0
    %1014 = vmatpush1.msra.mxu0 0.0
    %1015 = vmatprep.subr.mxu0 0.0
    %1016 = vmatpush1.msra.mxu0 0.0
    %1017 = vmatprep.subr.mxu0 0.0
    %1018 = vmatpush1.msra.mxu0 0.0
    %1019 = vmatprep.subr.mxu0 0.0
    %1020 = vmatpush1.msra.mxu0 0.0
    %1021 = vmatprep.subr.mxu0 0.0
    %1022 = vmatpush1.msra.mxu0 0.0
    %1023 = vmatprep.subr.mxu0 0.0
    %1024 = vmatpush1.msra.mxu0 0.0
    %1025 = vmatprep.subr.mxu0 0.0
    %1026 = vmatpush1.msra.mxu0 0.0
    %1027 = vmatprep.subr.mxu0 0.0
    %1028 = vmatpush1.msra.mxu0 0.0
    %1029 = vmatprep.subr.mxu0 0.0
    %1030 = vmatpush1.msra.mxu0 0.0
    %1031 = vmatprep.subr.mxu0 0.0
    %1032 = vmatpush1.msra.mxu0 0.0
    %1033 = vmatprep.subr.mxu0 0.0
    %1034 = vmatpush1.msra.mxu0 0.0
    %1035 = vmatprep.subr.mxu0 0.0
    %1036 = vmatpush1.msra.mxu0 0.0
    %1037 = vmatprep.subr.mxu0 0.0
    %1038 = vmatpush1.msra.mxu0 0.0
    %1039 = vmatprep.subr.mxu0 0.0
    %1040 = vmatpush1.msra.mxu0 0.0
    %1041 = vmatprep.subr.mxu0 0.0
    %1042 = vmatpush1.msra.mxu0 0.0
    %1043 = vmatprep.subr.mxu0 0.0
    %1044 = vmatpush1.msra.mxu0 0.0
    %1045 = vmatprep.subr.mxu0 0.0
    %1046 = vmatpush1.msra.mxu0 0.0
    %1047 = vmatprep.subr.mxu0 0.0
    %1048 = vmatpush1.msra.mxu0 0.0
    %1049 = vmatprep.subr.mxu0 0.0
    %1050 = vmatpush1.msra.mxu0 0.0
    %1051 = vmatprep.subr.mxu0 0.0
    %1052 = vmatpush1.msra.mxu0 0.0
    %1053 = vmatprep.subr.mxu0 0.0
    %1054 = vmatpush1.msra.mxu0 0.0
    %1055 = vmatprep.subr.mxu0 0.0
    %1056 = vmatpush1.msra.mxu0 0.0
    %1057 = vmatprep.subr.mxu0 0.0
    %1058 = vmatpush1.msra.mxu0 0.0
    %1059 = vmatprep.subr.mxu0 0.0
    %1060 = vmatpush1.msra.mxu0 0.0
    %1061 = vmatprep.subr.mxu0 0.0
    %1062 = vmatpush1.msra.mxu0 0.0
    %1063 = vmatprep.mubr.f32.mxu0 0.0
    %1064 = vmatmul.mubr.f32.gmra.mrb[0].mxu0 %v584
    %v1065 = vpop.f32.mrb[0].mxu0
    %v1066 = vadd.f32 0.0, %v1065
    %v1067 = vpop.f32.mrb[0].mxu0
    %1068 = vdwg.mxu0
    %v1071 = vrot.slane %v996, 7
    %vm1072 = vcmask 1041409
    %v1073 = vsel %vm1072, %v1071, %v923
    %v1074 = vsel %vm210, %v1073, 0
    %1076 = vmatprep.subr.mxu0 0.0
    %1077 = vmatpush1.msra.mxu0 %v199
    %1078 = vmatprep.subr.mxu0 0.0
    %1079 = vmatpush1.msra.mxu0 %v200
    %1080 = vmatprep.subr.mxu0 0.0
    %1081 = vmatpush1.msra.mxu0 %v201
    %1082 = vmatprep.subr.mxu0 0.0
    %1083 = vmatpush1.msra.mxu0 %v202
    %1084 = vmatprep.subr.mxu0 0.0
    %1085 = vmatpush1.msra.mxu0 0.0
    %1086 = vmatprep.subr.mxu0 0.0
    %1087 = vmatpush1.msra.mxu0 0.0
    %1088 = vmatprep.subr.mxu0 0.0
    %1089 = vmatpush1.msra.mxu0 0.0
    %1090 = vmatprep.subr.mxu0 0.0
    %1091 = vmatpush1.msra.mxu0 0.0
    %1092 = vmatprep.subr.mxu0 0.0
    %1093 = vmatpush1.msra.mxu0 0.0
    %1094 = vmatprep.subr.mxu0 0.0
    %1095 = vmatpush1.msra.mxu0 0.0
    %1096 = vmatprep.subr.mxu0 0.0
    %1097 = vmatpush1.msra.mxu0 0.0
    %1098 = vmatprep.subr.mxu0 0.0
    %1099 = vmatpush1.msra.mxu0 0.0
    %1100 = vmatprep.subr.mxu0 0.0
    %1101 = vmatpush1.msra.mxu0 0.0
    %1102 = vmatprep.subr.mxu0 0.0
    %1103 = vmatpush1.msra.mxu0 0.0
    %1104 = vmatprep.subr.mxu0 0.0
    %1105 = vmatpush1.msra.mxu0 0.0
    %1106 = vmatprep.subr.mxu0 0.0
    %1107 = vmatpush1.msra.mxu0 0.0
    %1108 = vmatprep.subr.mxu0 0.0
    %1109 = vmatpush1.msra.mxu0 0.0
    %1110 = vmatprep.subr.mxu0 0.0
    %1111 = vmatpush1.msra.mxu0 0.0
    %1112 = vmatprep.subr.mxu0 0.0
    %1113 = vmatpush1.msra.mxu0 0.0
    %1114 = vmatprep.subr.mxu0 0.0
    %1115 = vmatpush1.msra.mxu0 0.0
    %1116 = vmatprep.subr.mxu0 0.0
    %1117 = vmatpush1.msra.mxu0 0.0
    %1118 = vmatprep.subr.mxu0 0.0
    %1119 = vmatpush1.msra.mxu0 0.0
    %1120 = vmatprep.subr.mxu0 0.0
    %1121 = vmatpush1.msra.mxu0 0.0
    %1122 = vmatprep.subr.mxu0 0.0
    %1123 = vmatpush1.msra.mxu0 0.0
    %1124 = vmatprep.subr.mxu0 0.0
    %1125 = vmatpush1.msra.mxu0 0.0
    %1126 = vmatprep.subr.mxu0 0.0
    %1127 = vmatpush1.msra.mxu0 0.0
    %1128 = vmatprep.subr.mxu0 0.0
    %1129 = vmatpush1.msra.mxu0 0.0
    %1130 = vmatprep.subr.mxu0 0.0
    %1131 = vmatpush1.msra.mxu0 0.0
    %1132 = vmatprep.subr.mxu0 0.0
    %1133 = vmatpush1.msra.mxu0 0.0
    %1134 = vmatprep.subr.mxu0 0.0
    %1135 = vmatpush1.msra.mxu0 0.0
    %1136 = vmatprep.subr.mxu0 0.0
    %1137 = vmatpush1.msra.mxu0 0.0
    %1138 = vmatprep.subr.mxu0 0.0
    %1139 = vmatpush1.msra.mxu0 0.0
    %1140 = vmatprep.mubr.f32.mxu0 0.0
    %1141 = vmatmul.mubr.f32.gmra.mrb[0].mxu0 %v1074
    %v1142 = vpop.f32.mrb[0].mxu0
    %v1143 = vadd.f32 %v1066, %v1142
    %v1144 = vpop.f32.mrb[0].mxu0
    %1145 = vdwg.mxu0
    %v1146 = vtanh.pop %v1143
    %1147 = vst.msk [vmem:[#allocation18] sm:$0x3] %vm153, %v1146
    %v1148 = vrot.slane %v851, 7
    %v1149 = vsel %vm1072, %v1148, %v850
    %vm1151 = vcmask 58368
    %1152 = vst.msk [vmem:[#allocation19] sm:$0x3] %vm1151, %v1149
    %s1153 = scalar_lea.vmem [#allocation4], 2
    %v1154 = vld [vmem:[%s1153] sm:$0x3]
    %v1155 = vld [vmem:[#allocation2] sm:$0x3]
    %v1156 = vld [vmem:[#allocation3] sm:$0x3]
    %v1158 = vsel %vm210, %v1155, 0
    %1160 = vmatprep.subr.mxu0 0.0
    %1161 = vmatpush1.msra.mxu0 %v169
    %1162 = vmatprep.subr.mxu0 0.0
    %1163 = vmatpush1.msra.mxu0 %v170
    %1164 = vmatprep.subr.mxu0 0.0
    %1165 = vmatpush1.msra.mxu0 %v171
    %1166 = vmatprep.subr.mxu0 0.0
    %1167 = vmatpush1.msra.mxu0 %v172
    %1168 = vmatprep.subr.mxu0 0.0
    %1169 = vmatpush1.msra.mxu0 0.0
    %1170 = vmatprep.subr.mxu0 0.0
    %1171 = vmatpush1.msra.mxu0 0.0
    %1172 = vmatprep.subr.mxu0 0.0
    %1173 = vmatpush1.msra.mxu0 0.0
    %1174 = vmatprep.subr.mxu0 0.0
    %1175 = vmatpush1.msra.mxu0 0.0
    %1176 = vmatprep.subr.mxu0 0.0
    %1177 = vmatpush1.msra.mxu0 0.0
    %1178 = vmatprep.subr.mxu0 0.0
    %1179 = vmatpush1.msra.mxu0 0.0
    %1180 = vmatprep.subr.mxu0 0.0
    %1181 = vmatpush1.msra.mxu0 0.0
    %1182 = vmatprep.subr.mxu0 0.0
    %1183 = vmatpush1.msra.mxu0 0.0
    %1184 = vmatprep.subr.mxu0 0.0
    %1185 = vmatpush1.msra.mxu0 0.0
    %1186 = vmatprep.subr.mxu0 0.0
    %1187 = vmatpush1.msra.mxu0 0.0
    %1188 = vmatprep.subr.mxu0 0.0
    %1189 = vmatpush1.msra.mxu0 0.0
    %1190 = vmatprep.subr.mxu0 0.0
    %1191 = vmatpush1.msra.mxu0 0.0
    %1192 = vmatprep.subr.mxu0 0.0
    %1193 = vmatpush1.msra.mxu0 0.0
    %1194 = vmatprep.subr.mxu0 0.0
    %1195 = vmatpush1.msra.mxu0 0.0
    %1196 = vmatprep.subr.mxu0 0.0
    %1197 = vmatpush1.msra.mxu0 0.0
    %1198 = vmatprep.subr.mxu0 0.0
    %1199 = vmatpush1.msra.mxu0 0.0
    %1200 = vmatprep.subr.mxu0 0.0
    %1201 = vmatpush1.msra.mxu0 0.0
    %1202 = vmatprep.subr.mxu0 0.0
    %1203 = vmatpush1.msra.mxu0 0.0
    %1204 = vmatprep.subr.mxu0 0.0
    %1205 = vmatpush1.msra.mxu0 0.0
    %1206 = vmatprep.subr.mxu0 0.0
    %1207 = vmatpush1.msra.mxu0 0.0
    %1208 = vmatprep.subr.mxu0 0.0
    %1209 = vmatpush1.msra.mxu0 0.0
    %1210 = vmatprep.subr.mxu0 0.0
    %1211 = vmatpush1.msra.mxu0 0.0
    %1212 = vmatprep.subr.mxu0 0.0
    %1213 = vmatpush1.msra.mxu0 0.0
    %1214 = vmatprep.subr.mxu0 0.0
    %1215 = vmatpush1.msra.mxu0 0.0
    %1216 = vmatprep.subr.mxu0 0.0
    %1217 = vmatpush1.msra.mxu0 0.0
    %1218 = vmatprep.subr.mxu0 0.0
    %1219 = vmatpush1.msra.mxu0 0.0
    %1220 = vmatprep.subr.mxu0 0.0
    %1221 = vmatpush1.msra.mxu0 0.0
    %1222 = vmatprep.subr.mxu0 0.0
    %1223 = vmatpush1.msra.mxu0 0.0
    %1224 = vmatprep.mubr.f32.mxu0 0.0
    %1225 = vmatmul.mubr.f32.gmra.mrb[0].mxu0 %v1158
    %v1226 = vpop.f32.mrb[0].mxu0
    %v1227 = vadd.f32 0.0, %v1226
    %v1228 = vpop.f32.mrb[0].mxu0
    %1229 = vdwg.mxu0
    %v1231 = vsel %vm210, %v1154, 0
    %1233 = vmatprep.subr.mxu0 0.0
    %1234 = vmatpush1.msra.mxu0 %v160
    %1235 = vmatprep.subr.mxu0 0.0
    %1236 = vmatpush1.msra.mxu0 %v161
    %1237 = vmatprep.subr.mxu0 0.0
    %1238 = vmatpush1.msra.mxu0 %v162
    %1239 = vmatprep.subr.mxu0 0.0
    %1240 = vmatpush1.msra.mxu0 %v163
    %1241 = vmatprep.subr.mxu0 0.0
    %1242 = vmatpush1.msra.mxu0 0.0
    %1243 = vmatprep.subr.mxu0 0.0
    %1244 = vmatpush1.msra.mxu0 0.0
    %1245 = vmatprep.subr.mxu0 0.0
    %1246 = vmatpush1.msra.mxu0 0.0
    %1247 = vmatprep.subr.mxu0 0.0
    %1248 = vmatpush1.msra.mxu0 0.0
    %1249 = vmatprep.subr.mxu0 0.0
    %1250 = vmatpush1.msra.mxu0 0.0
    %1251 = vmatprep.subr.mxu0 0.0
    %1252 = vmatpush1.msra.mxu0 0.0
    %1253 = vmatprep.subr.mxu0 0.0
    %1254 = vmatpush1.msra.mxu0 0.0
    %1255 = vmatprep.subr.mxu0 0.0
    %1256 = vmatpush1.msra.mxu0 0.0
    %1257 = vmatprep.subr.mxu0 0.0
    %1258 = vmatpush1.msra.mxu0 0.0
    %1259 = vmatprep.subr.mxu0 0.0
    %1260 = vmatpush1.msra.mxu0 0.0
    %1261 = vmatprep.subr.mxu0 0.0
    %1262 = vmatpush1.msra.mxu0 0.0
    %1263 = vmatprep.subr.mxu0 0.0
    %1264 = vmatpush1.msra.mxu0 0.0
    %1265 = vmatprep.subr.mxu0 0.0
    %1266 = vmatpush1.msra.mxu0 0.0
    %1267 = vmatprep.subr.mxu0 0.0
    %1268 = vmatpush1.msra.mxu0 0.0
    %1269 = vmatprep.subr.mxu0 0.0
    %1270 = vmatpush1.msra.mxu0 0.0
    %1271 = vmatprep.subr.mxu0 0.0
    %1272 = vmatpush1.msra.mxu0 0.0
    %1273 = vmatprep.subr.mxu0 0.0
    %1274 = vmatpush1.msra.mxu0 0.0
    %1275 = vmatprep.subr.mxu0 0.0
    %1276 = vmatpush1.msra.mxu0 0.0
    %1277 = vmatprep.subr.mxu0 0.0
    %1278 = vmatpush1.msra.mxu0 0.0
    %1279 = vmatprep.subr.mxu0 0.0
    %1280 = vmatpush1.msra.mxu0 0.0
    %1281 = vmatprep.subr.mxu0 0.0
    %1282 = vmatpush1.msra.mxu0 0.0
    %1283 = vmatprep.subr.mxu0 0.0
    %1284 = vmatpush1.msra.mxu0 0.0
    %1285 = vmatprep.subr.mxu0 0.0
    %1286 = vmatpush1.msra.mxu0 0.0
    %1287 = vmatprep.subr.mxu0 0.0
    %1288 = vmatpush1.msra.mxu0 0.0
    %1289 = vmatprep.subr.mxu0 0.0
    %1290 = vmatpush1.msra.mxu0 0.0
    %1291 = vmatprep.subr.mxu0 0.0
    %1292 = vmatpush1.msra.mxu0 0.0
    %1293 = vmatprep.subr.mxu0 0.0
    %1294 = vmatpush1.msra.mxu0 0.0
    %1295 = vmatprep.subr.mxu0 0.0
    %1296 = vmatpush1.msra.mxu0 0.0
    %1297 = vmatprep.mubr.f32.mxu0 0.0
    %1298 = vmatmul.mubr.f32.gmra.mrb[0].mxu0 %v1231
    %v1299 = vpop.f32.mrb[0].mxu0
    %v1300 = vadd.f32 %v1227, %v1299
    %v1301 = vpop.f32.mrb[0].mxu0
    %1302 = vdwg.mxu0
    %v1303 = vadd.f32 %v1300, %v183
    %v1304 = vxor.u32 %v1303, 2147483648
    %v1305 = vmul.f32 %v1304, 1.442695
    %v1306 = vpow.pop %v1305
    %v1307 = vadd.f32 %v1306, 1.0
    %v1308 = vrcp.pop %v1307
    %v1309 = vmul.f32 1.0, %v1308
    %v1310 = vtanh.pop %v1303
    %1312 = vrot.lane.b32.xlu0 %v1156, 32
    %v1313 = vpop.permute.xlu0 %1312
    %v1315 = vmul.f32 %v1309, %v1313
    %1317 = vrot.lane.b32.xlu0 %v1310, 32
    %v1318 = vpop.permute.xlu0 %1317
    %v1320 = vmul.f32 %v1309, %v1318
    %1322 = vrot.lane.b32.xlu0 %v1320, 32
    %v1323 = vpop.permute.xlu0 %1322
    %v1325 = vadd.f32 %v1315, %v1323
    %v1326 = vtanh.pop %v1325
    %1328 = vrot.lane.b32.xlu0 %v1326, 32
    %v1329 = vpop.permute.xlu0 %1328
    %v1331 = vmul.f32 %v1309, %v1329
    %1333 = vrot.lane.b32.xlu0 %v1331, 64
    %v1334 = vpop.permute.xlu0 %1333
    %1336 = vst.msk [vmem:[#allocation2] sm:$0x3] %vm153, %v1334
    %1338 = vrot.lane.b32.xlu0 %v1325, 96
    %v1339 = vpop.permute.xlu0 %1338
    %1341 = vst.msk [vmem:[#allocation3] sm:$0x3] %vm153, %v1339
    %v1342 = vld [vmem:[%s396] sm:$0x3]
    %v1343 = vld [vmem:[%s398] sm:$0x3]
    %v1345 = vsel %vm210, %v1342, 0
    %1347 = vmatprep.subr.mxu0 0.0
    %1348 = vmatpush1.msra.mxu0 %v174
    %1349 = vmatprep.subr.mxu0 0.0
    %1350 = vmatpush1.msra.mxu0 %v175
    %1351 = vmatprep.subr.mxu0 0.0
    %1352 = vmatpush1.msra.mxu0 %v176
    %1353 = vmatprep.subr.mxu0 0.0
    %1354 = vmatpush1.msra.mxu0 %v177
    %1355 = vmatprep.subr.mxu0 0.0
    %1356 = vmatpush1.msra.mxu0 0.0
    %1357 = vmatprep.subr.mxu0 0.0
    %1358 = vmatpush1.msra.mxu0 0.0
    %1359 = vmatprep.subr.mxu0 0.0
    %1360 = vmatpush1.msra.mxu0 0.0
    %1361 = vmatprep.subr.mxu0 0.0
    %1362 = vmatpush1.msra.mxu0 0.0
    %1363 = vmatprep.subr.mxu0 0.0
    %1364 = vmatpush1.msra.mxu0 0.0
    %1365 = vmatprep.subr.mxu0 0.0
    %1366 = vmatpush1.msra.mxu0 0.0
    %1367 = vmatprep.subr.mxu0 0.0
    %1368 = vmatpush1.msra.mxu0 0.0
    %1369 = vmatprep.subr.mxu0 0.0
    %1370 = vmatpush1.msra.mxu0 0.0
    %1371 = vmatprep.subr.mxu0 0.0
    %1372 = vmatpush1.msra.mxu0 0.0
    %1373 = vmatprep.subr.mxu0 0.0
    %1374 = vmatpush1.msra.mxu0 0.0
    %1375 = vmatprep.subr.mxu0 0.0
    %1376 = vmatpush1.msra.mxu0 0.0
    %1377 = vmatprep.subr.mxu0 0.0
    %1378 = vmatpush1.msra.mxu0 0.0
    %1379 = vmatprep.subr.mxu0 0.0
    %1380 = vmatpush1.msra.mxu0 0.0
    %1381 = vmatprep.subr.mxu0 0.0
    %1382 = vmatpush1.msra.mxu0 0.0
    %1383 = vmatprep.subr.mxu0 0.0
    %1384 = vmatpush1.msra.mxu0 0.0
    %1385 = vmatprep.subr.mxu0 0.0
    %1386 = vmatpush1.msra.mxu0 0.0
    %1387 = vmatprep.subr.mxu0 0.0
    %1388 = vmatpush1.msra.mxu0 0.0
    %1389 = vmatprep.subr.mxu0 0.0
    %1390 = vmatpush1.msra.mxu0 0.0
    %1391 = vmatprep.subr.mxu0 0.0
    %1392 = vmatpush1.msra.mxu0 0.0
    %1393 = vmatprep.subr.mxu0 0.0
    %1394 = vmatpush1.msra.mxu0 0.0
    %1395 = vmatprep.subr.mxu0 0.0
    %1396 = vmatpush1.msra.mxu0 0.0
    %1397 = vmatprep.subr.mxu0 0.0
    %1398 = vmatpush1.msra.mxu0 0.0
    %1399 = vmatprep.subr.mxu0 0.0
    %1400 = vmatpush1.msra.mxu0 0.0
    %1401 = vmatprep.subr.mxu0 0.0
    %1402 = vmatpush1.msra.mxu0 0.0
    %1403 = vmatprep.subr.mxu0 0.0
    %1404 = vmatpush1.msra.mxu0 0.0
    %1405 = vmatprep.subr.mxu0 0.0
    %1406 = vmatpush1.msra.mxu0 0.0
    %1407 = vmatprep.subr.mxu0 0.0
    %1408 = vmatpush1.msra.mxu0 0.0
    %1409 = vmatprep.subr.mxu0 0.0
    %1410 = vmatpush1.msra.mxu0 0.0
    %1411 = vmatprep.mubr.f32.mxu0 0.0
    %1412 = vmatmul.mubr.f32.gmra.mrb[0].mxu0 %v1345
    %v1413 = vpop.f32.mrb[0].mxu0
    %v1414 = vadd.f32 0.0, %v1413
    %v1415 = vpop.f32.mrb[0].mxu0
    %1416 = vdwg.mxu0
    %v1417 = vsel %vm210, %v1334, 0
    %1419 = vmatprep.subr.mxu0 0.0
    %1420 = vmatpush1.msra.mxu0 %v165
    %1421 = vmatprep.subr.mxu0 0.0
    %1422 = vmatpush1.msra.mxu0 %v166
    %1423 = vmatprep.subr.mxu0 0.0
    %1424 = vmatpush1.msra.mxu0 %v167
    %1425 = vmatprep.subr.mxu0 0.0
    %1426 = vmatpush1.msra.mxu0 %v168
    %1427 = vmatprep.subr.mxu0 0.0
    %1428 = vmatpush1.msra.mxu0 0.0
    %1429 = vmatprep.subr.mxu0 0.0
    %1430 = vmatpush1.msra.mxu0 0.0
    %1431 = vmatprep.subr.mxu0 0.0
    %1432 = vmatpush1.msra.mxu0 0.0
    %1433 = vmatprep.subr.mxu0 0.0
    %1434 = vmatpush1.msra.mxu0 0.0
    %1435 = vmatprep.subr.mxu0 0.0
    %1436 = vmatpush1.msra.mxu0 0.0
    %1437 = vmatprep.subr.mxu0 0.0
    %1438 = vmatpush1.msra.mxu0 0.0
    %1439 = vmatprep.subr.mxu0 0.0
    %1440 = vmatpush1.msra.mxu0 0.0
    %1441 = vmatprep.subr.mxu0 0.0
    %1442 = vmatpush1.msra.mxu0 0.0
    %1443 = vmatprep.subr.mxu0 0.0
    %1444 = vmatpush1.msra.mxu0 0.0
    %1445 = vmatprep.subr.mxu0 0.0
    %1446 = vmatpush1.msra.mxu0 0.0
    %1447 = vmatprep.subr.mxu0 0.0
    %1448 = vmatpush1.msra.mxu0 0.0
    %1449 = vmatprep.subr.mxu0 0.0
    %1450 = vmatpush1.msra.mxu0 0.0
    %1451 = vmatprep.subr.mxu0 0.0
    %1452 = vmatpush1.msra.mxu0 0.0
    %1453 = vmatprep.subr.mxu0 0.0
    %1454 = vmatpush1.msra.mxu0 0.0
    %1455 = vmatprep.subr.mxu0 0.0
    %1456 = vmatpush1.msra.mxu0 0.0
    %1457 = vmatprep.subr.mxu0 0.0
    %1458 = vmatpush1.msra.mxu0 0.0
    %1459 = vmatprep.subr.mxu0 0.0
    %1460 = vmatpush1.msra.mxu0 0.0
    %1461 = vmatprep.subr.mxu0 0.0
    %1462 = vmatpush1.msra.mxu0 0.0
    %1463 = vmatprep.subr.mxu0 0.0
    %1464 = vmatpush1.msra.mxu0 0.0
    %1465 = vmatprep.subr.mxu0 0.0
    %1466 = vmatpush1.msra.mxu0 0.0
    %1467 = vmatprep.subr.mxu0 0.0
    %1468 = vmatpush1.msra.mxu0 0.0
    %1469 = vmatprep.subr.mxu0 0.0
    %1470 = vmatpush1.msra.mxu0 0.0
    %1471 = vmatprep.subr.mxu0 0.0
    %1472 = vmatpush1.msra.mxu0 0.0
    %1473 = vmatprep.subr.mxu0 0.0
    %1474 = vmatpush1.msra.mxu0 0.0
    %1475 = vmatprep.subr.mxu0 0.0
    %1476 = vmatpush1.msra.mxu0 0.0
    %1477 = vmatprep.subr.mxu0 0.0
    %1478 = vmatpush1.msra.mxu0 0.0
    %1479 = vmatprep.subr.mxu0 0.0
    %1480 = vmatpush1.msra.mxu0 0.0
    %1481 = vmatprep.subr.mxu0 0.0
    %1482 = vmatpush1.msra.mxu0 0.0
    %1483 = vmatprep.mubr.f32.mxu0 0.0
    %1484 = vmatmul.mubr.f32.gmra.mrb[0].mxu0 %v1417
    %v1485 = vpop.f32.mrb[0].mxu0
    %v1486 = vadd.f32 %v1414, %v1485
    %v1487 = vpop.f32.mrb[0].mxu0
    %1488 = vdwg.mxu0
    %v1489 = vadd.f32 %v1486, %v191
    %v1490 = vxor.u32 %v1489, 2147483648
    %v1491 = vmul.f32 %v1490, 1.442695
    %v1492 = vpow.pop %v1491
    %v1493 = vadd.f32 %v1492, 1.0
    %v1494 = vrcp.pop %v1493
    %v1495 = vmul.f32 1.0, %v1494
    %v1496 = vtanh.pop %v1489
    %1498 = vrot.lane.b32.xlu0 %v1343, 32
    %v1499 = vpop.permute.xlu0 %1498
    %v1501 = vmul.f32 %v1495, %v1499
    %1503 = vrot.lane.b32.xlu0 %v1496, 32
    %v1504 = vpop.permute.xlu0 %1503
    %v1506 = vmul.f32 %v1495, %v1504
    %1508 = vrot.lane.b32.xlu0 %v1506, 32
    %v1509 = vpop.permute.xlu0 %1508
    %v1511 = vadd.f32 %v1501, %v1509
    %v1512 = vtanh.pop %v1511
    %1514 = vrot.lane.b32.xlu0 %v1512, 32
    %v1515 = vpop.permute.xlu0 %1514
    %v1517 = vmul.f32 %v1495, %v1515
    %1519 = vrot.lane.b32.xlu0 %v1517, 64
    %v1520 = vpop.permute.xlu0 %1519
    %1522 = vst.msk [vmem:[%s396] sm:$0x3] %vm153, %v1520
    %1524 = vrot.lane.b32.xlu0 %v1511, 96
    %v1525 = vpop.permute.xlu0 %1524
    %1527 = vst.msk [vmem:[%s398] sm:$0x3] %vm153, %v1525
    %v1528 = vsel %vm210, %v1520, 0
    %1530 = vmatprep.subr.mxu0 0.0
    %1531 = vmatpush1.msra.mxu0 %v195
    %1532 = vmatprep.subr.mxu0 0.0
    %1533 = vmatpush1.msra.mxu0 %v196
    %1534 = vmatprep.subr.mxu0 0.0
    %1535 = vmatpush1.msra.mxu0 %v197
    %1536 = vmatprep.subr.mxu0 0.0
    %1537 = vmatpush1.msra.mxu0 %v198
    %1538 = vmatprep.subr.mxu0 0.0
    %1539 = vmatpush1.msra.mxu0 0.0
    %1540 = vmatprep.subr.mxu0 0.0
    %1541 = vmatpush1.msra.mxu0 0.0
    %1542 = vmatprep.subr.mxu0 0.0
    %1543 = vmatpush1.msra.mxu0 0.0
    %1544 = vmatprep.subr.mxu0 0.0
    %1545 = vmatpush1.msra.mxu0 0.0
    %1546 = vmatprep.subr.mxu0 0.0
    %1547 = vmatpush1.msra.mxu0 0.0
    %1548 = vmatprep.subr.mxu0 0.0
    %1549 = vmatpush1.msra.mxu0 0.0
    %1550 = vmatprep.subr.mxu0 0.0
    %1551 = vmatpush1.msra.mxu0 0.0
    %1552 = vmatprep.subr.mxu0 0.0
    %1553 = vmatpush1.msra.mxu0 0.0
    %1554 = vmatprep.subr.mxu0 0.0
    %1555 = vmatpush1.msra.mxu0 0.0
    %1556 = vmatprep.subr.mxu0 0.0
    %1557 = vmatpush1.msra.mxu0 0.0
    %1558 = vmatprep.subr.mxu0 0.0
    %1559 = vmatpush1.msra.mxu0 0.0
    %1560 = vmatprep.subr.mxu0 0.0
    %1561 = vmatpush1.msra.mxu0 0.0
    %1562 = vmatprep.subr.mxu0 0.0
    %1563 = vmatpush1.msra.mxu0 0.0
    %1564 = vmatprep.subr.mxu0 0.0
    %1565 = vmatpush1.msra.mxu0 0.0
    %1566 = vmatprep.subr.mxu0 0.0
    %1567 = vmatpush1.msra.mxu0 0.0
    %1568 = vmatprep.subr.mxu0 0.0
    %1569 = vmatpush1.msra.mxu0 0.0
    %1570 = vmatprep.subr.mxu0 0.0
    %1571 = vmatpush1.msra.mxu0 0.0
    %1572 = vmatprep.subr.mxu0 0.0
    %1573 = vmatpush1.msra.mxu0 0.0
    %1574 = vmatprep.subr.mxu0 0.0
    %1575 = vmatpush1.msra.mxu0 0.0
    %1576 = vmatprep.subr.mxu0 0.0
    %1577 = vmatpush1.msra.mxu0 0.0
    %1578 = vmatprep.subr.mxu0 0.0
    %1579 = vmatpush1.msra.mxu0 0.0
    %1580 = vmatprep.subr.mxu0 0.0
    %1581 = vmatpush1.msra.mxu0 0.0
    %1582 = vmatprep.subr.mxu0 0.0
    %1583 = vmatpush1.msra.mxu0 0.0
    %1584 = vmatprep.subr.mxu0 0.0
    %1585 = vmatpush1.msra.mxu0 0.0
    %1586 = vmatprep.subr.mxu0 0.0
    %1587 = vmatpush1.msra.mxu0 0.0
    %1588 = vmatprep.subr.mxu0 0.0
    %1589 = vmatpush1.msra.mxu0 0.0
    %1590 = vmatprep.subr.mxu0 0.0
    %1591 = vmatpush1.msra.mxu0 0.0
    %1592 = vmatprep.subr.mxu0 0.0
    %1593 = vmatpush1.msra.mxu0 0.0
    %1594 = vmatprep.mubr.f32.mxu0 0.0
    %1595 = vmatmul.mubr.f32.gmra.mrb[0].mxu0 %v1528
    %v1596 = vpop.f32.mrb[0].mxu0
    %v1597 = vadd.f32 0.0, %v1596
    %v1598 = vpop.f32.mrb[0].mxu0
    %1599 = vdwg.mxu0
    %v1602 = vunpack.c.l.s4 1966171168
    %v1603 = vunpack.c.0.s8 %v1602
    %v1604 = vlaneseq
    %v1605 = vshrl.u32 %v1604, 7
    %v1606 = vsub.s32 %v1603, %v1605
    %v1607 = vrot.slane %v1597, %v1606
    %v1608 = vcombine.high %v1607, %v1607
    %v1610 = vunpack.c.l.s4 1966171168
    %v1611 = vunpack.c.0.s8 %v1610
    %v1612 = vlaneseq
    %v1613 = vshrl.u32 %v1612, 7
    %v1614 = vsub.s32 %v1611, %v1613
    %v1615 = vrot.slane %v1607, %v1614
    %v1617 = vunpack.c.l.s4 1966171168
    %v1618 = vunpack.c.0.s8 %v1617
    %v1619 = vlaneseq
    %v1620 = vshrl.u32 %v1619, 7
    %v1621 = vsub.s32 %v1618, %v1620
    %v1622 = vrot.slane %v1608, %v1621
    %v1623 = vsel %vm210, %v1615, 0
    %1625 = vmatprep.subr.mxu0 0.0
    %1626 = vmatpush1.xpose.msra.mxu0 %v682
    %1627 = vmatprep.subr.mxu0 0.0
    %1628 = vmatpush1.xpose.msra.mxu0 0.0
    %1629 = vmatprep.subr.mxu0 0.0
    %1630 = vmatpush1.xpose.msra.mxu0 0.0
    %1631 = vmatprep.subr.mxu0 0.0
    %1632 = vmatpush1.xpose.msra.mxu0 0.0
    %1633 = vmatprep.subr.mxu0 0.0
    %1634 = vmatpush1.xpose.msra.mxu0 0.0
    %1635 = vmatprep.subr.mxu0 0.0
    %1636 = vmatpush1.xpose.msra.mxu0 0.0
    %1637 = vmatprep.subr.mxu0 0.0
    %1638 = vmatpush1.xpose.msra.mxu0 0.0
    %1639 = vmatprep.subr.mxu0 0.0
    %1640 = vmatpush1.xpose.msra.mxu0 0.0
    %1641 = vmatprep.subr.mxu0 0.0
    %1642 = vmatpush1.xpose.msra.mxu0 0.0
    %1643 = vmatprep.subr.mxu0 0.0
    %1644 = vmatpush1.xpose.msra.mxu0 0.0
    %1645 = vmatprep.subr.mxu0 0.0
    %1646 = vmatpush1.xpose.msra.mxu0 0.0
    %1647 = vmatprep.subr.mxu0 0.0
    %1648 = vmatpush1.xpose.msra.mxu0 0.0
    %1649 = vmatprep.subr.mxu0 0.0
    %1650 = vmatpush1.xpose.msra.mxu0 0.0
    %1651 = vmatprep.subr.mxu0 0.0
    %1652 = vmatpush1.xpose.msra.mxu0 0.0
    %1653 = vmatprep.subr.mxu0 0.0
    %1654 = vmatpush1.xpose.msra.mxu0 0.0
    %1655 = vmatprep.subr.mxu0 0.0
    %1656 = vmatpush1.xpose.msra.mxu0 0.0
    %1657 = vmatprep.subr.mxu0 0.0
    %1658 = vmatpush1.xpose.msra.mxu0 0.0
    %1659 = vmatprep.subr.mxu0 0.0
    %1660 = vmatpush1.xpose.msra.mxu0 0.0
    %1661 = vmatprep.subr.mxu0 0.0
    %1662 = vmatpush1.xpose.msra.mxu0 0.0
    %1663 = vmatprep.subr.mxu0 0.0
    %1664 = vmatpush1.xpose.msra.mxu0 0.0
    %1665 = vmatprep.subr.mxu0 0.0
    %1666 = vmatpush1.xpose.msra.mxu0 0.0
    %1667 = vmatprep.subr.mxu0 0.0
    %1668 = vmatpush1.xpose.msra.mxu0 0.0
    %1669 = vmatprep.subr.mxu0 0.0
    %1670 = vmatpush1.xpose.msra.mxu0 0.0
    %1671 = vmatprep.subr.mxu0 0.0
    %1672 = vmatpush1.xpose.msra.mxu0 0.0
    %1673 = vmatprep.subr.mxu0 0.0
    %1674 = vmatpush1.xpose.msra.mxu0 0.0
    %1675 = vmatprep.subr.mxu0 0.0
    %1676 = vmatpush1.xpose.msra.mxu0 0.0
    %1677 = vmatprep.subr.mxu0 0.0
    %1678 = vmatpush1.xpose.msra.mxu0 0.0
    %1679 = vmatprep.subr.mxu0 0.0
    %1680 = vmatpush1.xpose.msra.mxu0 0.0
    %1681 = vmatprep.subr.mxu0 0.0
    %1682 = vmatpush1.xpose.msra.mxu0 0.0
    %1683 = vmatprep.subr.mxu0 0.0
    %1684 = vmatpush1.xpose.msra.mxu0 0.0
    %1685 = vmatprep.subr.mxu0 0.0
    %1686 = vmatpush1.xpose.msra.mxu0 0.0
    %1687 = vmatprep.subr.mxu0 0.0
    %1688 = vmatpush1.xpose.msra.mxu0 0.0
    %1689 = vmatprep.mubr.f32.mxu0 0.0
    %1690 = vmatmul.mubr.f32.gmra.mrb[0].mxu0 %v1623
    %v1691 = vpop.f32.mrb[0].mxu0
    %v1692 = vadd.f32 0.0, %v1691
    %v1693 = vpop.f32.mrb[0].mxu0
    %1694 = vdwg.mxu0
    %v1695 = vsel %vm210, %v1622, 0
    %1697 = vmatprep.subr.mxu0 0.0
    %1698 = vmatpush1.xpose.msra.mxu0 %v757
    %1699 = vmatprep.subr.mxu0 0.0
    %1700 = vmatpush1.xpose.msra.mxu0 0.0
    %1701 = vmatprep.subr.mxu0 0.0
    %1702 = vmatpush1.xpose.msra.mxu0 0.0
    %1703 = vmatprep.subr.mxu0 0.0
    %1704 = vmatpush1.xpose.msra.mxu0 0.0
    %1705 = vmatprep.subr.mxu0 0.0
    %1706 = vmatpush1.xpose.msra.mxu0 0.0
    %1707 = vmatprep.subr.mxu0 0.0
    %1708 = vmatpush1.xpose.msra.mxu0 0.0
    %1709 = vmatprep.subr.mxu0 0.0
    %1710 = vmatpush1.xpose.msra.mxu0 0.0
    %1711 = vmatprep.subr.mxu0 0.0
    %1712 = vmatpush1.xpose.msra.mxu0 0.0
    %1713 = vmatprep.subr.mxu0 0.0
    %1714 = vmatpush1.xpose.msra.mxu0 0.0
    %1715 = vmatprep.subr.mxu0 0.0
    %1716 = vmatpush1.xpose.msra.mxu0 0.0
    %1717 = vmatprep.subr.mxu0 0.0
    %1718 = vmatpush1.xpose.msra.mxu0 0.0
    %1719 = vmatprep.subr.mxu0 0.0
    %1720 = vmatpush1.xpose.msra.mxu0 0.0
    %1721 = vmatprep.subr.mxu0 0.0
    %1722 = vmatpush1.xpose.msra.mxu0 0.0
    %1723 = vmatprep.subr.mxu0 0.0
    %1724 = vmatpush1.xpose.msra.mxu0 0.0
    %1725 = vmatprep.subr.mxu0 0.0
    %1726 = vmatpush1.xpose.msra.mxu0 0.0
    %1727 = vmatprep.subr.mxu0 0.0
    %1728 = vmatpush1.xpose.msra.mxu0 0.0
    %1729 = vmatprep.subr.mxu0 0.0
    %1730 = vmatpush1.xpose.msra.mxu0 0.0
    %1731 = vmatprep.subr.mxu0 0.0
    %1732 = vmatpush1.xpose.msra.mxu0 0.0
    %1733 = vmatprep.subr.mxu0 0.0
    %1734 = vmatpush1.xpose.msra.mxu0 0.0
    %1735 = vmatprep.subr.mxu0 0.0
    %1736 = vmatpush1.xpose.msra.mxu0 0.0
    %1737 = vmatprep.subr.mxu0 0.0
    %1738 = vmatpush1.xpose.msra.mxu0 0.0
    %1739 = vmatprep.subr.mxu0 0.0
    %1740 = vmatpush1.xpose.msra.mxu0 0.0
    %1741 = vmatprep.subr.mxu0 0.0
    %1742 = vmatpush1.xpose.msra.mxu0 0.0
    %1743 = vmatprep.subr.mxu0 0.0
    %1744 = vmatpush1.xpose.msra.mxu0 0.0
    %1745 = vmatprep.subr.mxu0 0.0
    %1746 = vmatpush1.xpose.msra.mxu0 0.0
    %1747 = vmatprep.subr.mxu0 0.0
    %1748 = vmatpush1.xpose.msra.mxu0 0.0
    %1749 = vmatprep.subr.mxu0 0.0
    %1750 = vmatpush1.xpose.msra.mxu0 0.0
    %1751 = vmatprep.subr.mxu0 0.0
    %1752 = vmatpush1.xpose.msra.mxu0 0.0
    %1753 = vmatprep.subr.mxu0 0.0
    %1754 = vmatpush1.xpose.msra.mxu0 0.0
    %1755 = vmatprep.subr.mxu0 0.0
    %1756 = vmatpush1.xpose.msra.mxu0 0.0
    %1757 = vmatprep.subr.mxu0 0.0
    %1758 = vmatpush1.xpose.msra.mxu0 0.0
    %1759 = vmatprep.subr.mxu0 0.0
    %1760 = vmatpush1.xpose.msra.mxu0 0.0
    %1761 = vmatprep.mubr.f32.mxu0 0.0
    %1762 = vmatmul.mubr.f32.gmra.mrb[0].mxu0 %v1695
    %v1763 = vpop.f32.mrb[0].mxu0
    %v1764 = vadd.f32 0.0, %v1763
    %v1765 = vpop.f32.mrb[0].mxu0
    %1766 = vdwg.mxu0
    %v1767 = vsel %vm829, %v1692, -inf
    %1768 = vmax.xlane.f32.xlu0 %v1767
    %v1769 = vpop.xlane.xlu0 %1768
    %v1770 = vsel %vm829, %v1764, -inf
    %1771 = vmax.xlane.f32.xlu0 %v1770
    %v1772 = vpop.xlane.xlu0 %1771
    %v1773 = vsub.f32 %v1692, %v1769
    %v1774 = vsub.f32 %v1764, %v1772
    %v1775 = vmul.f32 %v1773, 1.442695
    %v1776 = vpow.pop %v1775
    %v1777 = vmul.f32 %v1774, 1.442695
    %v1778 = vpow.pop %v1777
    %v1779 = vsel %vm829, %v1776, 0.0
    %1780 = vadd.xlane.f32.xlu0 %v1779
    %v1781 = vpop.xlane.xlu0 %1780
    %v1782 = vsel %vm829, %v1778, 0.0
    %1783 = vadd.xlane.f32.xlu0 %v1782
    %v1784 = vpop.xlane.xlu0 %1783
    %v1785 = vrcp.pop %v1781
    %v1786 = vrcp.pop %v1784
    %v1787 = vmul.f32 %v1776, %v1785
    %v1788 = vmul.f32 %v1778, %v1786
    %v1790 = vsel %vm852, %v1787, 0
    %1792 = vmatprep.subr.mxu0 0.0
    %1793 = vmatpush1.msra.mxu0 %v193
    %1794 = vmatprep.subr.mxu0 0.0
    %1795 = vmatpush1.msra.mxu0 0.0
    %1796 = vmatprep.subr.mxu0 0.0
    %1797 = vmatpush1.msra.mxu0 0.0
    %1798 = vmatprep.subr.mxu0 0.0
    %1799 = vmatpush1.msra.mxu0 0.0
    %1800 = vmatprep.subr.mxu0 0.0
    %1801 = vmatpush1.msra.mxu0 0.0
    %1802 = vmatprep.subr.mxu0 0.0
    %1803 = vmatpush1.msra.mxu0 0.0
    %1804 = vmatprep.subr.mxu0 0.0
    %1805 = vmatpush1.msra.mxu0 0.0
    %1806 = vmatprep.subr.mxu0 0.0
    %1807 = vmatpush1.msra.mxu0 0.0
    %1808 = vmatprep.subr.mxu0 0.0
    %1809 = vmatpush1.msra.mxu0 0.0
    %1810 = vmatprep.subr.mxu0 0.0
    %1811 = vmatpush1.msra.mxu0 0.0
    %1812 = vmatprep.subr.mxu0 0.0
    %1813 = vmatpush1.msra.mxu0 0.0
    %1814 = vmatprep.subr.mxu0 0.0
    %1815 = vmatpush1.msra.mxu0 0.0
    %1816 = vmatprep.subr.mxu0 0.0
    %1817 = vmatpush1.msra.mxu0 0.0
    %1818 = vmatprep.subr.mxu0 0.0
    %1819 = vmatpush1.msra.mxu0 0.0
    %1820 = vmatprep.subr.mxu0 0.0
    %1821 = vmatpush1.msra.mxu0 0.0
    %1822 = vmatprep.subr.mxu0 0.0
    %1823 = vmatpush1.msra.mxu0 0.0
    %1824 = vmatprep.subr.mxu0 0.0
    %1825 = vmatpush1.msra.mxu0 0.0
    %1826 = vmatprep.subr.mxu0 0.0
    %1827 = vmatpush1.msra.mxu0 0.0
    %1828 = vmatprep.subr.mxu0 0.0
    %1829 = vmatpush1.msra.mxu0 0.0
    %1830 = vmatprep.subr.mxu0 0.0
    %1831 = vmatpush1.msra.mxu0 0.0
    %1832 = vmatprep.subr.mxu0 0.0
    %1833 = vmatpush1.msra.mxu0 0.0
    %1834 = vmatprep.subr.mxu0 0.0
    %1835 = vmatpush1.msra.mxu0 0.0
    %1836 = vmatprep.subr.mxu0 0.0
    %1837 = vmatpush1.msra.mxu0 0.0
    %1838 = vmatprep.subr.mxu0 0.0
    %1839 = vmatpush1.msra.mxu0 0.0
    %1840 = vmatprep.subr.mxu0 0.0
    %1841 = vmatpush1.msra.mxu0 0.0
    %1842 = vmatprep.subr.mxu0 0.0
    %1843 = vmatpush1.msra.mxu0 0.0
    %1844 = vmatprep.subr.mxu0 0.0
    %1845 = vmatpush1.msra.mxu0 0.0
    %1846 = vmatprep.subr.mxu0 0.0
    %1847 = vmatpush1.msra.mxu0 0.0
    %1848 = vmatprep.subr.mxu0 0.0
    %1849 = vmatpush1.msra.mxu0 0.0
    %1850 = vmatprep.subr.mxu0 0.0
    %1851 = vmatpush1.msra.mxu0 0.0
    %1852 = vmatprep.subr.mxu0 0.0
    %1853 = vmatpush1.msra.mxu0 0.0
    %1854 = vmatprep.subr.mxu0 0.0
    %1855 = vmatpush1.msra.mxu0 0.0
    %1856 = vmatprep.mubr.f32.mxu0 0.0
    %1857 = vmatmul.mubr.f32.gmra.mrb[0].mxu0 %v1790
    %v1858 = vpop.f32.mrb[0].mxu0
    %v1859 = vadd.f32 0.0, %v1858
    %v1860 = vpop.f32.mrb[0].mxu0
    %1861 = vdwg.mxu0
    %v1863 = vsel %vm852, %v1788, 0
    %1865 = vmatprep.subr.mxu0 0.0
    %1866 = vmatpush1.msra.mxu0 %v194
    %1867 = vmatprep.subr.mxu0 0.0
    %1868 = vmatpush1.msra.mxu0 0.0
    %1869 = vmatprep.subr.mxu0 0.0
    %1870 = vmatpush1.msra.mxu0 0.0
    %1871 = vmatprep.subr.mxu0 0.0
    %1872 = vmatpush1.msra.mxu0 0.0
    %1873 = vmatprep.subr.mxu0 0.0
    %1874 = vmatpush1.msra.mxu0 0.0
    %1875 = vmatprep.subr.mxu0 0.0
    %1876 = vmatpush1.msra.mxu0 0.0
    %1877 = vmatprep.subr.mxu0 0.0
    %1878 = vmatpush1.msra.mxu0 0.0
    %1879 = vmatprep.subr.mxu0 0.0
    %1880 = vmatpush1.msra.mxu0 0.0
    %1881 = vmatprep.subr.mxu0 0.0
    %1882 = vmatpush1.msra.mxu0 0.0
    %1883 = vmatprep.subr.mxu0 0.0
    %1884 = vmatpush1.msra.mxu0 0.0
    %1885 = vmatprep.subr.mxu0 0.0
    %1886 = vmatpush1.msra.mxu0 0.0
    %1887 = vmatprep.subr.mxu0 0.0
    %1888 = vmatpush1.msra.mxu0 0.0
    %1889 = vmatprep.subr.mxu0 0.0
    %1890 = vmatpush1.msra.mxu0 0.0
    %1891 = vmatprep.subr.mxu0 0.0
    %1892 = vmatpush1.msra.mxu0 0.0
    %1893 = vmatprep.subr.mxu0 0.0
    %1894 = vmatpush1.msra.mxu0 0.0
    %1895 = vmatprep.subr.mxu0 0.0
    %1896 = vmatpush1.msra.mxu0 0.0
    %1897 = vmatprep.subr.mxu0 0.0
    %1898 = vmatpush1.msra.mxu0 0.0
    %1899 = vmatprep.subr.mxu0 0.0
    %1900 = vmatpush1.msra.mxu0 0.0
    %1901 = vmatprep.subr.mxu0 0.0
    %1902 = vmatpush1.msra.mxu0 0.0
    %1903 = vmatprep.subr.mxu0 0.0
    %1904 = vmatpush1.msra.mxu0 0.0
    %1905 = vmatprep.subr.mxu0 0.0
    %1906 = vmatpush1.msra.mxu0 0.0
    %1907 = vmatprep.subr.mxu0 0.0
    %1908 = vmatpush1.msra.mxu0 0.0
    %1909 = vmatprep.subr.mxu0 0.0
    %1910 = vmatpush1.msra.mxu0 0.0
    %1911 = vmatprep.subr.mxu0 0.0
    %1912 = vmatpush1.msra.mxu0 0.0
    %1913 = vmatprep.subr.mxu0 0.0
    %1914 = vmatpush1.msra.mxu0 0.0
    %1915 = vmatprep.subr.mxu0 0.0
    %1916 = vmatpush1.msra.mxu0 0.0
    %1917 = vmatprep.subr.mxu0 0.0
    %1918 = vmatpush1.msra.mxu0 0.0
    %1919 = vmatprep.subr.mxu0 0.0
    %1920 = vmatpush1.msra.mxu0 0.0
    %1921 = vmatprep.subr.mxu0 0.0
    %1922 = vmatpush1.msra.mxu0 0.0
    %1923 = vmatprep.subr.mxu0 0.0
    %1924 = vmatpush1.msra.mxu0 0.0
    %1925 = vmatprep.subr.mxu0 0.0
    %1926 = vmatpush1.msra.mxu0 0.0
    %1927 = vmatprep.subr.mxu0 0.0
    %1928 = vmatpush1.msra.mxu0 0.0
    %1929 = vmatprep.mubr.f32.mxu0 0.0
    %1930 = vmatmul.mubr.f32.gmra.mrb[0].mxu0 %v1863
    %v1931 = vpop.f32.mrb[0].mxu0
    %v1932 = vadd.f32 0.0, %v1931
    %v1933 = vpop.f32.mrb[0].mxu0
    %1934 = vdwg.mxu0
    %1935 = vmatprep.subr.mxu0 0.0
    %1936 = vmatpush1.msra.mxu0 %v203
    %1937 = vmatprep.subr.mxu0 0.0
    %1938 = vmatpush1.msra.mxu0 %v204
    %1939 = vmatprep.subr.mxu0 0.0
    %1940 = vmatpush1.msra.mxu0 %v205
    %1941 = vmatprep.subr.mxu0 0.0
    %1942 = vmatpush1.msra.mxu0 %v206
    %1943 = vmatprep.subr.mxu0 0.0
    %1944 = vmatpush1.msra.mxu0 0.0
    %1945 = vmatprep.subr.mxu0 0.0
    %1946 = vmatpush1.msra.mxu0 0.0
    %1947 = vmatprep.subr.mxu0 0.0
    %1948 = vmatpush1.msra.mxu0 0.0
    %1949 = vmatprep.subr.mxu0 0.0
    %1950 = vmatpush1.msra.mxu0 0.0
    %1951 = vmatprep.subr.mxu0 0.0
    %1952 = vmatpush1.msra.mxu0 0.0
    %1953 = vmatprep.subr.mxu0 0.0
    %1954 = vmatpush1.msra.mxu0 0.0
    %1955 = vmatprep.subr.mxu0 0.0
    %1956 = vmatpush1.msra.mxu0 0.0
    %1957 = vmatprep.subr.mxu0 0.0
    %1958 = vmatpush1.msra.mxu0 0.0
    %1959 = vmatprep.subr.mxu0 0.0
    %1960 = vmatpush1.msra.mxu0 0.0
    %1961 = vmatprep.subr.mxu0 0.0
    %1962 = vmatpush1.msra.mxu0 0.0
    %1963 = vmatprep.subr.mxu0 0.0
    %1964 = vmatpush1.msra.mxu0 0.0
    %1965 = vmatprep.subr.mxu0 0.0
    %1966 = vmatpush1.msra.mxu0 0.0
    %1967 = vmatprep.subr.mxu0 0.0
    %1968 = vmatpush1.msra.mxu0 0.0
    %1969 = vmatprep.subr.mxu0 0.0
    %1970 = vmatpush1.msra.mxu0 0.0
    %1971 = vmatprep.subr.mxu0 0.0
    %1972 = vmatpush1.msra.mxu0 0.0
    %1973 = vmatprep.subr.mxu0 0.0
    %1974 = vmatpush1.msra.mxu0 0.0
    %1975 = vmatprep.subr.mxu0 0.0
    %1976 = vmatpush1.msra.mxu0 0.0
    %1977 = vmatprep.subr.mxu0 0.0
    %1978 = vmatpush1.msra.mxu0 0.0
    %1979 = vmatprep.subr.mxu0 0.0
    %1980 = vmatpush1.msra.mxu0 0.0
    %1981 = vmatprep.subr.mxu0 0.0
    %1982 = vmatpush1.msra.mxu0 0.0
    %1983 = vmatprep.subr.mxu0 0.0
    %1984 = vmatpush1.msra.mxu0 0.0
    %1985 = vmatprep.subr.mxu0 0.0
    %1986 = vmatpush1.msra.mxu0 0.0
    %1987 = vmatprep.subr.mxu0 0.0
    %1988 = vmatpush1.msra.mxu0 0.0
    %1989 = vmatprep.subr.mxu0 0.0
    %1990 = vmatpush1.msra.mxu0 0.0
    %1991 = vmatprep.subr.mxu0 0.0
    %1992 = vmatpush1.msra.mxu0 0.0
    %1993 = vmatprep.subr.mxu0 0.0
    %1994 = vmatpush1.msra.mxu0 0.0
    %1995 = vmatprep.subr.mxu0 0.0
    %1996 = vmatpush1.msra.mxu0 0.0
    %1997 = vmatprep.subr.mxu0 0.0
    %1998 = vmatpush1.msra.mxu0 0.0
    %1999 = vmatprep.mubr.f32.mxu0 0.0
    %2000 = vmatmul.mubr.f32.gmra.mrb[0].mxu0 %v1528
    %v2001 = vpop.f32.mrb[0].mxu0
    %v2002 = vadd.f32 0.0, %v2001
    %v2003 = vpop.f32.mrb[0].mxu0
    %2004 = vdwg.mxu0
    %v2007 = vrot.slane %v1932, 7
    %v2008 = vsel %vm1072, %v2007, %v1859
    %v2009 = vsel %vm210, %v2008, 0
    %2011 = vmatprep.subr.mxu0 0.0
    %2012 = vmatpush1.msra.mxu0 %v199
    %2013 = vmatprep.subr.mxu0 0.0
    %2014 = vmatpush1.msra.mxu0 %v200
    %2015 = vmatprep.subr.mxu0 0.0
    %2016 = vmatpush1.msra.mxu0 %v201
    %2017 = vmatprep.subr.mxu0 0.0
    %2018 = vmatpush1.msra.mxu0 %v202
    %2019 = vmatprep.subr.mxu0 0.0
    %2020 = vmatpush1.msra.mxu0 0.0
    %2021 = vmatprep.subr.mxu0 0.0
    %2022 = vmatpush1.msra.mxu0 0.0
    %2023 = vmatprep.subr.mxu0 0.0
    %2024 = vmatpush1.msra.mxu0 0.0
    %2025 = vmatprep.subr.mxu0 0.0
    %2026 = vmatpush1.msra.mxu0 0.0
    %2027 = vmatprep.subr.mxu0 0.0
    %2028 = vmatpush1.msra.mxu0 0.0
    %2029 = vmatprep.subr.mxu0 0.0
    %2030 = vmatpush1.msra.mxu0 0.0
    %2031 = vmatprep.subr.mxu0 0.0
    %2032 = vmatpush1.msra.mxu0 0.0
    %2033 = vmatprep.subr.mxu0 0.0
    %2034 = vmatpush1.msra.mxu0 0.0
    %2035 = vmatprep.subr.mxu0 0.0
    %2036 = vmatpush1.msra.mxu0 0.0
    %2037 = vmatprep.subr.mxu0 0.0
    %2038 = vmatpush1.msra.mxu0 0.0
    %2039 = vmatprep.subr.mxu0 0.0
    %2040 = vmatpush1.msra.mxu0 0.0
    %2041 = vmatprep.subr.mxu0 0.0
    %2042 = vmatpush1.msra.mxu0 0.0
    %2043 = vmatprep.subr.mxu0 0.0
    %2044 = vmatpush1.msra.mxu0 0.0
    %2045 = vmatprep.subr.mxu0 0.0
    %2046 = vmatpush1.msra.mxu0 0.0
    %2047 = vmatprep.subr.mxu0 0.0
    %2048 = vmatpush1.msra.mxu0 0.0
    %2049 = vmatprep.subr.mxu0 0.0
    %2050 = vmatpush1.msra.mxu0 0.0
    %2051 = vmatprep.subr.mxu0 0.0
    %2052 = vmatpush1.msra.mxu0 0.0
    %2053 = vmatprep.subr.mxu0 0.0
    %2054 = vmatpush1.msra.mxu0 0.0
    %2055 = vmatprep.subr.mxu0 0.0
    %2056 = vmatpush1.msra.mxu0 0.0
    %2057 = vmatprep.subr.mxu0 0.0
    %2058 = vmatpush1.msra.mxu0 0.0
    %2059 = vmatprep.subr.mxu0 0.0
    %2060 = vmatpush1.msra.mxu0 0.0
    %2061 = vmatprep.subr.mxu0 0.0
    %2062 = vmatpush1.msra.mxu0 0.0
    %2063 = vmatprep.subr.mxu0 0.0
    %2064 = vmatpush1.msra.mxu0 0.0
    %2065 = vmatprep.subr.mxu0 0.0
    %2066 = vmatpush1.msra.mxu0 0.0
    %2067 = vmatprep.subr.mxu0 0.0
    %2068 = vmatpush1.msra.mxu0 0.0
    %2069 = vmatprep.subr.mxu0 0.0
    %2070 = vmatpush1.msra.mxu0 0.0
    %2071 = vmatprep.subr.mxu0 0.0
    %2072 = vmatpush1.msra.mxu0 0.0
    %2073 = vmatprep.subr.mxu0 0.0
    %2074 = vmatpush1.msra.mxu0 0.0
    %2075 = vmatprep.mubr.f32.mxu0 0.0
    %2076 = vmatmul.mubr.f32.gmra.mrb[0].mxu0 %v2009
    %v2077 = vpop.f32.mrb[0].mxu0
    %v2078 = vadd.f32 %v2002, %v2077
    %v2079 = vpop.f32.mrb[0].mxu0
    %2080 = vdwg.mxu0
    %v2081 = vtanh.pop %v2078
    %s2082 = scalar_lea.vmem [#allocation18], 2
    %2083 = vst.msk [vmem:[%s2082] sm:$0x3] %vm153, %v2081
    %v2084 = vrot.slane %v1788, 7
    %v2085 = vsel %vm1072, %v2084, %v1787
    %s2087 = scalar_lea.vmem [#allocation19], 2
    %2088 = vst.msk [vmem:[%s2087] sm:$0x3] %vm1151, %v2085
    %s2089 = scalar_lea.vmem [#allocation4], 4
    %v2090 = vld [vmem:[%s2089] sm:$0x3]
    %v2091 = vld [vmem:[#allocation2] sm:$0x3]
    %v2092 = vld [vmem:[#allocation3] sm:$0x3]
    %v2094 = vsel %vm210, %v2091, 0
    %2096 = vmatprep.subr.mxu0 0.0
    %2097 = vmatpush1.msra.mxu0 %v169
    %2098 = vmatprep.subr.mxu0 0.0
    %2099 = vmatpush1.msra.mxu0 %v170
    %2100 = vmatprep.subr.mxu0 0.0
    %2101 = vmatpush1.msra.mxu0 %v171
    %2102 = vmatprep.subr.mxu0 0.0
    %2103 = vmatpush1.msra.mxu0 %v172
    %2104 = vmatprep.subr.mxu0 0.0
    %2105 = vmatpush1.msra.mxu0 0.0
    %2106 = vmatprep.subr.mxu0 0.0
    %2107 = vmatpush1.msra.mxu0 0.0
    %2108 = vmatprep.subr.mxu0 0.0
    %2109 = vmatpush1.msra.mxu0 0.0
    %2110 = vmatprep.subr.mxu0 0.0
    %2111 = vmatpush1.msra.mxu0 0.0
    %2112 = vmatprep.subr.mxu0 0.0
    %2113 = vmatpush1.msra.mxu0 0.0
    %2114 = vmatprep.subr.mxu0 0.0
    %2115 = vmatpush1.msra.mxu0 0.0
    %2116 = vmatprep.subr.mxu0 0.0
    %2117 = vmatpush1.msra.mxu0 0.0
    %2118 = vmatprep.subr.mxu0 0.0
    %2119 = vmatpush1.msra.mxu0 0.0
    %2120 = vmatprep.subr.mxu0 0.0
    %2121 = vmatpush1.msra.mxu0 0.0
    %2122 = vmatprep.subr.mxu0 0.0
    %2123 = vmatpush1.msra.mxu0 0.0
    %2124 = vmatprep.subr.mxu0 0.0
    %2125 = vmatpush1.msra.mxu0 0.0
    %2126 = vmatprep.subr.mxu0 0.0
    %2127 = vmatpush1.msra.mxu0 0.0
    %2128 = vmatprep.subr.mxu0 0.0
    %2129 = vmatpush1.msra.mxu0 0.0
    %2130 = vmatprep.subr.mxu0 0.0
    %2131 = vmatpush1.msra.mxu0 0.0
    %2132 = vmatprep.subr.mxu0 0.0
    %2133 = vmatpush1.msra.mxu0 0.0
    %2134 = vmatprep.subr.mxu0 0.0
    %2135 = vmatpush1.msra.mxu0 0.0
    %2136 = vmatprep.subr.mxu0 0.0
    %2137 = vmatpush1.msra.mxu0 0.0
    %2138 = vmatprep.subr.mxu0 0.0
    %2139 = vmatpush1.msra.mxu0 0.0
    %2140 = vmatprep.subr.mxu0 0.0
    %2141 = vmatpush1.msra.mxu0 0.0
    %2142 = vmatprep.subr.mxu0 0.0
    %2143 = vmatpush1.msra.mxu0 0.0
    %2144 = vmatprep.subr.mxu0 0.0
    %2145 = vmatpush1.msra.mxu0 0.0
    %2146 = vmatprep.subr.mxu0 0.0
    %2147 = vmatpush1.msra.mxu0 0.0
    %2148 = vmatprep.subr.mxu0 0.0
    %2149 = vmatpush1.msra.mxu0 0.0
    %2150 = vmatprep.subr.mxu0 0.0
    %2151 = vmatpush1.msra.mxu0 0.0
    %2152 = vmatprep.subr.mxu0 0.0
    %2153 = vmatpush1.msra.mxu0 0.0
    %2154 = vmatprep.subr.mxu0 0.0
    %2155 = vmatpush1.msra.mxu0 0.0
    %2156 = vmatprep.subr.mxu0 0.0
    %2157 = vmatpush1.msra.mxu0 0.0
    %2158 = vmatprep.subr.mxu0 0.0
    %2159 = vmatpush1.msra.mxu0 0.0
    %2160 = vmatprep.mubr.f32.mxu0 0.0
    %2161 = vmatmul.mubr.f32.gmra.mrb[0].mxu0 %v2094
    %v2162 = vpop.f32.mrb[0].mxu0
    %v2163 = vadd.f32 0.0, %v2162
    %v2164 = vpop.f32.mrb[0].mxu0
    %2165 = vdwg.mxu0
    %v2167 = vsel %vm210, %v2090, 0
    %2169 = vmatprep.subr.mxu0 0.0
    %2170 = vmatpush1.msra.mxu0 %v160
    %2171 = vmatprep.subr.mxu0 0.0
    %2172 = vmatpush1.msra.mxu0 %v161
    %2173 = vmatprep.subr.mxu0 0.0
    %2174 = vmatpush1.msra.mxu0 %v162
    %2175 = vmatprep.subr.mxu0 0.0
    %2176 = vmatpush1.msra.mxu0 %v163
    %2177 = vmatprep.subr.mxu0 0.0
    %2178 = vmatpush1.msra.mxu0 0.0
    %2179 = vmatprep.subr.mxu0 0.0
    %2180 = vmatpush1.msra.mxu0 0.0
    %2181 = vmatprep.subr.mxu0 0.0
    %2182 = vmatpush1.msra.mxu0 0.0
    %2183 = vmatprep.subr.mxu0 0.0
    %2184 = vmatpush1.msra.mxu0 0.0
    %2185 = vmatprep.subr.mxu0 0.0
    %2186 = vmatpush1.msra.mxu0 0.0
    %2187 = vmatprep.subr.mxu0 0.0
    %2188 = vmatpush1.msra.mxu0 0.0
    %2189 = vmatprep.subr.mxu0 0.0
    %2190 = vmatpush1.msra.mxu0 0.0
    %2191 = vmatprep.subr.mxu0 0.0
    %2192 = vmatpush1.msra.mxu0 0.0
    %2193 = vmatprep.subr.mxu0 0.0
    %2194 = vmatpush1.msra.mxu0 0.0
    %2195 = vmatprep.subr.mxu0 0.0
    %2196 = vmatpush1.msra.mxu0 0.0
    %2197 = vmatprep.subr.mxu0 0.0
    %2198 = vmatpush1.msra.mxu0 0.0
    %2199 = vmatprep.subr.mxu0 0.0
    %2200 = vmatpush1.msra.mxu0 0.0
    %2201 = vmatprep.subr.mxu0 0.0
    %2202 = vmatpush1.msra.mxu0 0.0
    %2203 = vmatprep.subr.mxu0 0.0
    %2204 = vmatpush1.msra.mxu0 0.0
    %2205 = vmatprep.subr.mxu0 0.0
    %2206 = vmatpush1.msra.mxu0 0.0
    %2207 = vmatprep.subr.mxu0 0.0
    %2208 = vmatpush1.msra.mxu0 0.0
    %2209 = vmatprep.subr.mxu0 0.0
    %2210 = vmatpush1.msra.mxu0 0.0
    %2211 = vmatprep.subr.mxu0 0.0
    %2212 = vmatpush1.msra.mxu0 0.0
    %2213 = vmatprep.subr.mxu0 0.0
    %2214 = vmatpush1.msra.mxu0 0.0
    %2215 = vmatprep.subr.mxu0 0.0
    %2216 = vmatpush1.msra.mxu0 0.0
    %2217 = vmatprep.subr.mxu0 0.0
    %2218 = vmatpush1.msra.mxu0 0.0
    %2219 = vmatprep.subr.mxu0 0.0
    %2220 = vmatpush1.msra.mxu0 0.0
    %2221 = vmatprep.subr.mxu0 0.0
    %2222 = vmatpush1.msra.mxu0 0.0
    %2223 = vmatprep.subr.mxu0 0.0
    %2224 = vmatpush1.msra.mxu0 0.0
    %2225 = vmatprep.subr.mxu0 0.0
    %2226 = vmatpush1.msra.mxu0 0.0
    %2227 = vmatprep.subr.mxu0 0.0
    %2228 = vmatpush1.msra.mxu0 0.0
    %2229 = vmatprep.subr.mxu0 0.0
    %2230 = vmatpush1.msra.mxu0 0.0
    %2231 = vmatprep.subr.mxu0 0.0
    %2232 = vmatpush1.msra.mxu0 0.0
    %2233 = vmatprep.mubr.f32.mxu0 0.0
    %2234 = vmatmul.mubr.f32.gmra.mrb[0].mxu0 %v2167
    %v2235 = vpop.f32.mrb[0].mxu0
    %v2236 = vadd.f32 %v2163, %v2235
    %v2237 = vpop.f32.mrb[0].mxu0
    %2238 = vdwg.mxu0
    %v2239 = vadd.f32 %v2236, %v183
    %v2240 = vxor.u32 %v2239, 2147483648
    %v2241 = vmul.f32 %v2240, 1.442695
    %v2242 = vpow.pop %v2241
    %v2243 = vadd.f32 %v2242, 1.0
    %v2244 = vrcp.pop %v2243
    %v2245 = vmul.f32 1.0, %v2244
    %v2246 = vtanh.pop %v2239
    %2248 = vrot.lane.b32.xlu0 %v2092, 32
    %v2249 = vpop.permute.xlu0 %2248
    %v2251 = vmul.f32 %v2245, %v2249
    %2253 = vrot.lane.b32.xlu0 %v2246, 32
    %v2254 = vpop.permute.xlu0 %2253
    %v2256 = vmul.f32 %v2245, %v2254
    %2258 = vrot.lane.b32.xlu0 %v2256, 32
    %v2259 = vpop.permute.xlu0 %2258
    %v2261 = vadd.f32 %v2251, %v2259
    %v2262 = vtanh.pop %v2261
    %2264 = vrot.lane.b32.xlu0 %v2262, 32
    %v2265 = vpop.permute.xlu0 %2264
    %v2267 = vmul.f32 %v2245, %v2265
    %2269 = vrot.lane.b32.xlu0 %v2267, 64
    %v2270 = vpop.permute.xlu0 %2269
    %2272 = vst.msk [vmem:[#allocation2] sm:$0x3] %vm153, %v2270
    %2274 = vrot.lane.b32.xlu0 %v2261, 96
    %v2275 = vpop.permute.xlu0 %2274
    %2277 = vst.msk [vmem:[#allocation3] sm:$0x3] %vm153, %v2275
    %v2278 = vld [vmem:[%s396] sm:$0x3]
    %v2279 = vld [vmem:[%s398] sm:$0x3]
    %v2281 = vsel %vm210, %v2278, 0
    %2283 = vmatprep.subr.mxu0 0.0
    %2284 = vmatpush1.msra.mxu0 %v174
    %2285 = vmatprep.subr.mxu0 0.0
    %2286 = vmatpush1.msra.mxu0 %v175
    %2287 = vmatprep.subr.mxu0 0.0
    %2288 = vmatpush1.msra.mxu0 %v176
    %2289 = vmatprep.subr.mxu0 0.0
    %2290 = vmatpush1.msra.mxu0 %v177
    %2291 = vmatprep.subr.mxu0 0.0
    %2292 = vmatpush1.msra.mxu0 0.0
    %2293 = vmatprep.subr.mxu0 0.0
    %2294 = vmatpush1.msra.mxu0 0.0
    %2295 = vmatprep.subr.mxu0 0.0
    %2296 = vmatpush1.msra.mxu0 0.0
    %2297 = vmatprep.subr.mxu0 0.0
    %2298 = vmatpush1.msra.mxu0 0.0
    %2299 = vmatprep.subr.mxu0 0.0
    %2300 = vmatpush1.msra.mxu0 0.0
    %2301 = vmatprep.subr.mxu0 0.0
    %2302 = vmatpush1.msra.mxu0 0.0
    %2303 = vmatprep.subr.mxu0 0.0
    %2304 = vmatpush1.msra.mxu0 0.0
    %2305 = vmatprep.subr.mxu0 0.0
    %2306 = vmatpush1.msra.mxu0 0.0
    %2307 = vmatprep.subr.mxu0 0.0
    %2308 = vmatpush1.msra.mxu0 0.0
    %2309 = vmatprep.subr.mxu0 0.0
    %2310 = vmatpush1.msra.mxu0 0.0
    %2311 = vmatprep.subr.mxu0 0.0
    %2312 = vmatpush1.msra.mxu0 0.0
    %2313 = vmatprep.subr.mxu0 0.0
    %2314 = vmatpush1.msra.mxu0 0.0
    %2315 = vmatprep.subr.mxu0 0.0
    %2316 = vmatpush1.msra.mxu0 0.0
    %2317 = vmatprep.subr.mxu0 0.0
    %2318 = vmatpush1.msra.mxu0 0.0
    %2319 = vmatprep.subr.mxu0 0.0
    %2320 = vmatpush1.msra.mxu0 0.0
    %2321 = vmatprep.subr.mxu0 0.0
    %2322 = vmatpush1.msra.mxu0 0.0
    %2323 = vmatprep.subr.mxu0 0.0
    %2324 = vmatpush1.msra.mxu0 0.0
    %2325 = vmatprep.subr.mxu0 0.0
    %2326 = vmatpush1.msra.mxu0 0.0
    %2327 = vmatprep.subr.mxu0 0.0
    %2328 = vmatpush1.msra.mxu0 0.0
    %2329 = vmatprep.subr.mxu0 0.0
    %2330 = vmatpush1.msra.mxu0 0.0
    %2331 = vmatprep.subr.mxu0 0.0
    %2332 = vmatpush1.msra.mxu0 0.0
    %2333 = vmatprep.subr.mxu0 0.0
    %2334 = vmatpush1.msra.mxu0 0.0
    %2335 = vmatprep.subr.mxu0 0.0
    %2336 = vmatpush1.msra.mxu0 0.0
    %2337 = vmatprep.subr.mxu0 0.0
    %2338 = vmatpush1.msra.mxu0 0.0
    %2339 = vmatprep.subr.mxu0 0.0
    %2340 = vmatpush1.msra.mxu0 0.0
    %2341 = vmatprep.subr.mxu0 0.0
    %2342 = vmatpush1.msra.mxu0 0.0
    %2343 = vmatprep.subr.mxu0 0.0
    %2344 = vmatpush1.msra.mxu0 0.0
    %2345 = vmatprep.subr.mxu0 0.0
    %2346 = vmatpush1.msra.mxu0 0.0
    %2347 = vmatprep.mubr.f32.mxu0 0.0
    %2348 = vmatmul.mubr.f32.gmra.mrb[0].mxu0 %v2281
    %v2349 = vpop.f32.mrb[0].mxu0
    %v2350 = vadd.f32 0.0, %v2349
    %v2351 = vpop.f32.mrb[0].mxu0
    %2352 = vdwg.mxu0
    %v2353 = vsel %vm210, %v2270, 0
    %2355 = vmatprep.subr.mxu0 0.0
    %2356 = vmatpush1.msra.mxu0 %v165
    %2357 = vmatprep.subr.mxu0 0.0
    %2358 = vmatpush1.msra.mxu0 %v166
    %2359 = vmatprep.subr.mxu0 0.0
    %2360 = vmatpush1.msra.mxu0 %v167
    %2361 = vmatprep.subr.mxu0 0.0
    %2362 = vmatpush1.msra.mxu0 %v168
    %2363 = vmatprep.subr.mxu0 0.0
    %2364 = vmatpush1.msra.mxu0 0.0
    %2365 = vmatprep.subr.mxu0 0.0
    %2366 = vmatpush1.msra.mxu0 0.0
    %2367 = vmatprep.subr.mxu0 0.0
    %2368 = vmatpush1.msra.mxu0 0.0
    %2369 = vmatprep.subr.mxu0 0.0
    %2370 = vmatpush1.msra.mxu0 0.0
    %2371 = vmatprep.subr.mxu0 0.0
    %2372 = vmatpush1.msra.mxu0 0.0
    %2373 = vmatprep.subr.mxu0 0.0
    %2374 = vmatpush1.msra.mxu0 0.0
    %2375 = vmatprep.subr.mxu0 0.0
    %2376 = vmatpush1.msra.mxu0 0.0
    %2377 = vmatprep.subr.mxu0 0.0
    %2378 = vmatpush1.msra.mxu0 0.0
    %2379 = vmatprep.subr.mxu0 0.0
    %2380 = vmatpush1.msra.mxu0 0.0
    %2381 = vmatprep.subr.mxu0 0.0
    %2382 = vmatpush1.msra.mxu0 0.0
    %2383 = vmatprep.subr.mxu0 0.0
    %2384 = vmatpush1.msra.mxu0 0.0
    %2385 = vmatprep.subr.mxu0 0.0
    %2386 = vmatpush1.msra.mxu0 0.0
    %2387 = vmatprep.subr.mxu0 0.0
    %2388 = vmatpush1.msra.mxu0 0.0
    %2389 = vmatprep.subr.mxu0 0.0
    %2390 = vmatpush1.msra.mxu0 0.0
    %2391 = vmatprep.subr.mxu0 0.0
    %2392 = vmatpush1.msra.mxu0 0.0
    %2393 = vmatprep.subr.mxu0 0.0
    %2394 = vmatpush1.msra.mxu0 0.0
    %2395 = vmatprep.subr.mxu0 0.0
    %2396 = vmatpush1.msra.mxu0 0.0
    %2397 = vmatprep.subr.mxu0 0.0
    %2398 = vmatpush1.msra.mxu0 0.0
    %2399 = vmatprep.subr.mxu0 0.0
    %2400 = vmatpush1.msra.mxu0 0.0
    %2401 = vmatprep.subr.mxu0 0.0
    %2402 = vmatpush1.msra.mxu0 0.0
    %2403 = vmatprep.subr.mxu0 0.0
    %2404 = vmatpush1.msra.mxu0 0.0
    %2405 = vmatprep.subr.mxu0 0.0
    %2406 = vmatpush1.msra.mxu0 0.0
    %2407 = vmatprep.subr.mxu0 0.0
    %2408 = vmatpush1.msra.mxu0 0.0
    %2409 = vmatprep.subr.mxu0 0.0
    %2410 = vmatpush1.msra.mxu0 0.0
    %2411 = vmatprep.subr.mxu0 0.0
    %2412 = vmatpush1.msra.mxu0 0.0
    %2413 = vmatprep.subr.mxu0 0.0
    %2414 = vmatpush1.msra.mxu0 0.0
    %2415 = vmatprep.subr.mxu0 0.0
    %2416 = vmatpush1.msra.mxu0 0.0
    %2417 = vmatprep.subr.mxu0 0.0
    %2418 = vmatpush1.msra.mxu0 0.0
    %2419 = vmatprep.mubr.f32.mxu0 0.0
    %2420 = vmatmul.mubr.f32.gmra.mrb[0].mxu0 %v2353
    %v2421 = vpop.f32.mrb[0].mxu0
    %v2422 = vadd.f32 %v2350, %v2421
    %v2423 = vpop.f32.mrb[0].mxu0
    %2424 = vdwg.mxu0
    %v2425 = vadd.f32 %v2422, %v191
    %v2426 = vxor.u32 %v2425, 2147483648
    %v2427 = vmul.f32 %v2426, 1.442695
    %v2428 = vpow.pop %v2427
    %v2429 = vadd.f32 %v2428, 1.0
    %v2430 = vrcp.pop %v2429
    %v2431 = vmul.f32 1.0, %v2430
    %v2432 = vtanh.pop %v2425
    %2434 = vrot.lane.b32.xlu0 %v2279, 32
    %v2435 = vpop.permute.xlu0 %2434
    %v2437 = vmul.f32 %v2431, %v2435
    %2439 = vrot.lane.b32.xlu0 %v2432, 32
    %v2440 = vpop.permute.xlu0 %2439
    %v2442 = vmul.f32 %v2431, %v2440
    %2444 = vrot.lane.b32.xlu0 %v2442, 32
    %v2445 = vpop.permute.xlu0 %2444
    %v2447 = vadd.f32 %v2437, %v2445
    %v2448 = vtanh.pop %v2447
    %2450 = vrot.lane.b32.xlu0 %v2448, 32
    %v2451 = vpop.permute.xlu0 %2450
    %v2453 = vmul.f32 %v2431, %v2451
    %2455 = vrot.lane.b32.xlu0 %v2453, 64
    %v2456 = vpop.permute.xlu0 %2455
    %2458 = vst.msk [vmem:[%s396] sm:$0x3] %vm153, %v2456
    %2460 = vrot.lane.b32.xlu0 %v2447, 96
    %v2461 = vpop.permute.xlu0 %2460
    %2463 = vst.msk [vmem:[%s398] sm:$0x3] %vm153, %v2461
    %v2464 = vsel %vm210, %v2456, 0
    %2466 = vmatprep.subr.mxu0 0.0
    %2467 = vmatpush1.msra.mxu0 %v195
    %2468 = vmatprep.subr.mxu0 0.0
    %2469 = vmatpush1.msra.mxu0 %v196
    %2470 = vmatprep.subr.mxu0 0.0
    %2471 = vmatpush1.msra.mxu0 %v197
    %2472 = vmatprep.subr.mxu0 0.0
    %2473 = vmatpush1.msra.mxu0 %v198
    %2474 = vmatprep.subr.mxu0 0.0
    %2475 = vmatpush1.msra.mxu0 0.0
    %2476 = vmatprep.subr.mxu0 0.0
    %2477 = vmatpush1.msra.mxu0 0.0
    %2478 = vmatprep.subr.mxu0 0.0
    %2479 = vmatpush1.msra.mxu0 0.0
    %2480 = vmatprep.subr.mxu0 0.0
    %2481 = vmatpush1.msra.mxu0 0.0
    %2482 = vmatprep.subr.mxu0 0.0
    %2483 = vmatpush1.msra.mxu0 0.0
    %2484 = vmatprep.subr.mxu0 0.0
    %2485 = vmatpush1.msra.mxu0 0.0
    %2486 = vmatprep.subr.mxu0 0.0
    %2487 = vmatpush1.msra.mxu0 0.0
    %2488 = vmatprep.subr.mxu0 0.0
    %2489 = vmatpush1.msra.mxu0 0.0
    %2490 = vmatprep.subr.mxu0 0.0
    %2491 = vmatpush1.msra.mxu0 0.0
    %2492 = vmatprep.subr.mxu0 0.0
    %2493 = vmatpush1.msra.mxu0 0.0
    %2494 = vmatprep.subr.mxu0 0.0
    %2495 = vmatpush1.msra.mxu0 0.0
    %2496 = vmatprep.subr.mxu0 0.0
    %2497 = vmatpush1.msra.mxu0 0.0
    %2498 = vmatprep.subr.mxu0 0.0
    %2499 = vmatpush1.msra.mxu0 0.0
    %2500 = vmatprep.subr.mxu0 0.0
    %2501 = vmatpush1.msra.mxu0 0.0
    %2502 = vmatprep.subr.mxu0 0.0
    %2503 = vmatpush1.msra.mxu0 0.0
    %2504 = vmatprep.subr.mxu0 0.0
    %2505 = vmatpush1.msra.mxu0 0.0
    %2506 = vmatprep.subr.mxu0 0.0
    %2507 = vmatpush1.msra.mxu0 0.0
    %2508 = vmatprep.subr.mxu0 0.0
    %2509 = vmatpush1.msra.mxu0 0.0
    %2510 = vmatprep.subr.mxu0 0.0
    %2511 = vmatpush1.msra.mxu0 0.0
    %2512 = vmatprep.subr.mxu0 0.0
    %2513 = vmatpush1.msra.mxu0 0.0
    %2514 = vmatprep.subr.mxu0 0.0
    %2515 = vmatpush1.msra.mxu0 0.0
    %2516 = vmatprep.subr.mxu0 0.0
    %2517 = vmatpush1.msra.mxu0 0.0
    %2518 = vmatprep.subr.mxu0 0.0
    %2519 = vmatpush1.msra.mxu0 0.0
    %2520 = vmatprep.subr.mxu0 0.0
    %2521 = vmatpush1.msra.mxu0 0.0
    %2522 = vmatprep.subr.mxu0 0.0
    %2523 = vmatpush1.msra.mxu0 0.0
    %2524 = vmatprep.subr.mxu0 0.0
    %2525 = vmatpush1.msra.mxu0 0.0
    %2526 = vmatprep.subr.mxu0 0.0
    %2527 = vmatpush1.msra.mxu0 0.0
    %2528 = vmatprep.subr.mxu0 0.0
    %2529 = vmatpush1.msra.mxu0 0.0
    %2530 = vmatprep.mubr.f32.mxu0 0.0
    %2531 = vmatmul.mubr.f32.gmra.mrb[0].mxu0 %v2464
    %v2532 = vpop.f32.mrb[0].mxu0
    %v2533 = vadd.f32 0.0, %v2532
    %v2534 = vpop.f32.mrb[0].mxu0
    %2535 = vdwg.mxu0
    %v2538 = vunpack.c.l.s4 1966171168
    %v2539 = vunpack.c.0.s8 %v2538
    %v2540 = vlaneseq
    %v2541 = vshrl.u32 %v2540, 7
    %v2542 = vsub.s32 %v2539, %v2541
    %v2543 = vrot.slane %v2533, %v2542
    %v2544 = vcombine.high %v2543, %v2543
    %v2546 = vunpack.c.l.s4 1966171168
    %v2547 = vunpack.c.0.s8 %v2546
    %v2548 = vlaneseq
    %v2549 = vshrl.u32 %v2548, 7
    %v2550 = vsub.s32 %v2547, %v2549
    %v2551 = vrot.slane %v2543, %v2550
    %v2553 = vunpack.c.l.s4 1966171168
    %v2554 = vunpack.c.0.s8 %v2553
    %v2555 = vlaneseq
    %v2556 = vshrl.u32 %v2555, 7
    %v2557 = vsub.s32 %v2554, %v2556
    %v2558 = vrot.slane %v2544, %v2557
    %v2559 = vsel %vm210, %v2551, 0
    %2561 = vmatprep.subr.mxu0 0.0
    %2562 = vmatpush1.xpose.msra.mxu0 %v682
    %2563 = vmatprep.subr.mxu0 0.0
    %2564 = vmatpush1.xpose.msra.mxu0 0.0
    %2565 = vmatprep.subr.mxu0 0.0
    %2566 = vmatpush1.xpose.msra.mxu0 0.0
    %2567 = vmatprep.subr.mxu0 0.0
    %2568 = vmatpush1.xpose.msra.mxu0 0.0
    %2569 = vmatprep.subr.mxu0 0.0
    %2570 = vmatpush1.xpose.msra.mxu0 0.0
    %2571 = vmatprep.subr.mxu0 0.0
    %2572 = vmatpush1.xpose.msra.mxu0 0.0
    %2573 = vmatprep.subr.mxu0 0.0
    %2574 = vmatpush1.xpose.msra.mxu0 0.0
    %2575 = vmatprep.subr.mxu0 0.0
    %2576 = vmatpush1.xpose.msra.mxu0 0.0
    %2577 = vmatprep.subr.mxu0 0.0
    %2578 = vmatpush1.xpose.msra.mxu0 0.0
    %2579 = vmatprep.subr.mxu0 0.0
    %2580 = vmatpush1.xpose.msra.mxu0 0.0
    %2581 = vmatprep.subr.mxu0 0.0
    %2582 = vmatpush1.xpose.msra.mxu0 0.0
    %2583 = vmatprep.subr.mxu0 0.0
    %2584 = vmatpush1.xpose.msra.mxu0 0.0
    %2585 = vmatprep.subr.mxu0 0.0
    %2586 = vmatpush1.xpose.msra.mxu0 0.0
    %2587 = vmatprep.subr.mxu0 0.0
    %2588 = vmatpush1.xpose.msra.mxu0 0.0
    %2589 = vmatprep.subr.mxu0 0.0
    %2590 = vmatpush1.xpose.msra.mxu0 0.0
    %2591 = vmatprep.subr.mxu0 0.0
    %2592 = vmatpush1.xpose.msra.mxu0 0.0
    %2593 = vmatprep.subr.mxu0 0.0
    %2594 = vmatpush1.xpose.msra.mxu0 0.0
    %2595 = vmatprep.subr.mxu0 0.0
    %2596 = vmatpush1.xpose.msra.mxu0 0.0
    %2597 = vmatprep.subr.mxu0 0.0
    %2598 = vmatpush1.xpose.msra.mxu0 0.0
    %2599 = vmatprep.subr.mxu0 0.0
    %2600 = vmatpush1.xpose.msra.mxu0 0.0
    %2601 = vmatprep.subr.mxu0 0.0
    %2602 = vmatpush1.xpose.msra.mxu0 0.0
    %2603 = vmatprep.subr.mxu0 0.0
    %2604 = vmatpush1.xpose.msra.mxu0 0.0
    %2605 = vmatprep.subr.mxu0 0.0
    %2606 = vmatpush1.xpose.msra.mxu0 0.0
    %2607 = vmatprep.subr.mxu0 0.0
    %2608 = vmatpush1.xpose.msra.mxu0 0.0
    %2609 = vmatprep.subr.mxu0 0.0
    %2610 = vmatpush1.xpose.msra.mxu0 0.0
    %2611 = vmatprep.subr.mxu0 0.0
    %2612 = vmatpush1.xpose.msra.mxu0 0.0
    %2613 = vmatprep.subr.mxu0 0.0
    %2614 = vmatpush1.xpose.msra.mxu0 0.0
    %2615 = vmatprep.subr.mxu0 0.0
    %2616 = vmatpush1.xpose.msra.mxu0 0.0
    %2617 = vmatprep.subr.mxu0 0.0
    %2618 = vmatpush1.xpose.msra.mxu0 0.0
    %2619 = vmatprep.subr.mxu0 0.0
    %2620 = vmatpush1.xpose.msra.mxu0 0.0
    %2621 = vmatprep.subr.mxu0 0.0
    %2622 = vmatpush1.xpose.msra.mxu0 0.0
    %2623 = vmatprep.subr.mxu0 0.0
    %2624 = vmatpush1.xpose.msra.mxu0 0.0
    %2625 = vmatprep.mubr.f32.mxu0 0.0
    %2626 = vmatmul.mubr.f32.gmra.mrb[0].mxu0 %v2559
    %v2627 = vpop.f32.mrb[0].mxu0
    %v2628 = vadd.f32 0.0, %v2627
    %v2629 = vpop.f32.mrb[0].mxu0
    %2630 = vdwg.mxu0
    %v2631 = vsel %vm210, %v2558, 0
    %2633 = vmatprep.subr.mxu0 0.0
    %2634 = vmatpush1.xpose.msra.mxu0 %v757
    %2635 = vmatprep.subr.mxu0 0.0
    %2636 = vmatpush1.xpose.msra.mxu0 0.0
    %2637 = vmatprep.subr.mxu0 0.0
    %2638 = vmatpush1.xpose.msra.mxu0 0.0
    %2639 = vmatprep.subr.mxu0 0.0
    %2640 = vmatpush1.xpose.msra.mxu0 0.0
    %2641 = vmatprep.subr.mxu0 0.0
    %2642 = vmatpush1.xpose.msra.mxu0 0.0
    %2643 = vmatprep.subr.mxu0 0.0
    %2644 = vmatpush1.xpose.msra.mxu0 0.0
    %2645 = vmatprep.subr.mxu0 0.0
    %2646 = vmatpush1.xpose.msra.mxu0 0.0
    %2647 = vmatprep.subr.mxu0 0.0
    %2648 = vmatpush1.xpose.msra.mxu0 0.0
    %2649 = vmatprep.subr.mxu0 0.0
    %2650 = vmatpush1.xpose.msra.mxu0 0.0
    %2651 = vmatprep.subr.mxu0 0.0
    %2652 = vmatpush1.xpose.msra.mxu0 0.0
    %2653 = vmatprep.subr.mxu0 0.0
    %2654 = vmatpush1.xpose.msra.mxu0 0.0
    %2655 = vmatprep.subr.mxu0 0.0
    %2656 = vmatpush1.xpose.msra.mxu0 0.0
    %2657 = vmatprep.subr.mxu0 0.0
    %2658 = vmatpush1.xpose.msra.mxu0 0.0
    %2659 = vmatprep.subr.mxu0 0.0
    %2660 = vmatpush1.xpose.msra.mxu0 0.0
    %2661 = vmatprep.subr.mxu0 0.0
    %2662 = vmatpush1.xpose.msra.mxu0 0.0
    %2663 = vmatprep.subr.mxu0 0.0
    %2664 = vmatpush1.xpose.msra.mxu0 0.0
    %2665 = vmatprep.subr.mxu0 0.0
    %2666 = vmatpush1.xpose.msra.mxu0 0.0
    %2667 = vmatprep.subr.mxu0 0.0
    %2668 = vmatpush1.xpose.msra.mxu0 0.0
    %2669 = vmatprep.subr.mxu0 0.0
    %2670 = vmatpush1.xpose.msra.mxu0 0.0
    %2671 = vmatprep.subr.mxu0 0.0
    %2672 = vmatpush1.xpose.msra.mxu0 0.0
    %2673 = vmatprep.subr.mxu0 0.0
    %2674 = vmatpush1.xpose.msra.mxu0 0.0
    %2675 = vmatprep.subr.mxu0 0.0
    %2676 = vmatpush1.xpose.msra.mxu0 0.0
    %2677 = vmatprep.subr.mxu0 0.0
    %2678 = vmatpush1.xpose.msra.mxu0 0.0
    %2679 = vmatprep.subr.mxu0 0.0
    %2680 = vmatpush1.xpose.msra.mxu0 0.0
    %2681 = vmatprep.subr.mxu0 0.0
    %2682 = vmatpush1.xpose.msra.mxu0 0.0
    %2683 = vmatprep.subr.mxu0 0.0
    %2684 = vmatpush1.xpose.msra.mxu0 0.0
    %2685 = vmatprep.subr.mxu0 0.0
    %2686 = vmatpush1.xpose.msra.mxu0 0.0
    %2687 = vmatprep.subr.mxu0 0.0
    %2688 = vmatpush1.xpose.msra.mxu0 0.0
    %2689 = vmatprep.subr.mxu0 0.0
    %2690 = vmatpush1.xpose.msra.mxu0 0.0
    %2691 = vmatprep.subr.mxu0 0.0
    %2692 = vmatpush1.xpose.msra.mxu0 0.0
    %2693 = vmatprep.subr.mxu0 0.0
    %2694 = vmatpush1.xpose.msra.mxu0 0.0
    %2695 = vmatprep.subr.mxu0 0.0
    %2696 = vmatpush1.xpose.msra.mxu0 0.0
    %2697 = vmatprep.mubr.f32.mxu0 0.0
    %2698 = vmatmul.mubr.f32.gmra.mrb[0].mxu0 %v2631
    %v2699 = vpop.f32.mrb[0].mxu0
    %v2700 = vadd.f32 0.0, %v2699
    %v2701 = vpop.f32.mrb[0].mxu0
    %2702 = vdwg.mxu0
    %v2703 = vsel %vm829, %v2628, -inf
    %2704 = vmax.xlane.f32.xlu0 %v2703
    %v2705 = vpop.xlane.xlu0 %2704
    %v2706 = vsel %vm829, %v2700, -inf
    %2707 = vmax.xlane.f32.xlu0 %v2706
    %v2708 = vpop.xlane.xlu0 %2707
    %v2709 = vsub.f32 %v2628, %v2705
    %v2710 = vsub.f32 %v2700, %v2708
    %v2711 = vmul.f32 %v2709, 1.442695
    %v2712 = vpow.pop %v2711
    %v2713 = vmul.f32 %v2710, 1.442695
    %v2714 = vpow.pop %v2713
    %v2715 = vsel %vm829, %v2712, 0.0
    %2716 = vadd.xlane.f32.xlu0 %v2715
    %v2717 = vpop.xlane.xlu0 %2716
    %v2718 = vsel %vm829, %v2714, 0.0
    %2719 = vadd.xlane.f32.xlu0 %v2718
    %v2720 = vpop.xlane.xlu0 %2719
    %v2721 = vrcp.pop %v2717
    %v2722 = vrcp.pop %v2720
    %v2723 = vmul.f32 %v2712, %v2721
    %v2724 = vmul.f32 %v2714, %v2722
    %v2726 = vsel %vm852, %v2723, 0
    %2728 = vmatprep.subr.mxu0 0.0
    %2729 = vmatpush1.msra.mxu0 %v193
    %2730 = vmatprep.subr.mxu0 0.0
    %2731 = vmatpush1.msra.mxu0 0.0
    %2732 = vmatprep.subr.mxu0 0.0
    %2733 = vmatpush1.msra.mxu0 0.0
    %2734 = vmatprep.subr.mxu0 0.0
    %2735 = vmatpush1.msra.mxu0 0.0
    %2736 = vmatprep.subr.mxu0 0.0
    %2737 = vmatpush1.msra.mxu0 0.0
    %2738 = vmatprep.subr.mxu0 0.0
    %2739 = vmatpush1.msra.mxu0 0.0
    %2740 = vmatprep.subr.mxu0 0.0
    %2741 = vmatpush1.msra.mxu0 0.0
    %2742 = vmatprep.subr.mxu0 0.0
    %2743 = vmatpush1.msra.mxu0 0.0
    %2744 = vmatprep.subr.mxu0 0.0
    %2745 = vmatpush1.msra.mxu0 0.0
    %2746 = vmatprep.subr.mxu0 0.0
    %2747 = vmatpush1.msra.mxu0 0.0
    %2748 = vmatprep.subr.mxu0 0.0
    %2749 = vmatpush1.msra.mxu0 0.0
    %2750 = vmatprep.subr.mxu0 0.0
    %2751 = vmatpush1.msra.mxu0 0.0
    %2752 = vmatprep.subr.mxu0 0.0
    %2753 = vmatpush1.msra.mxu0 0.0
    %2754 = vmatprep.subr.mxu0 0.0
    %2755 = vmatpush1.msra.mxu0 0.0
    %2756 = vmatprep.subr.mxu0 0.0
    %2757 = vmatpush1.msra.mxu0 0.0
    %2758 = vmatprep.subr.mxu0 0.0
    %2759 = vmatpush1.msra.mxu0 0.0
    %2760 = vmatprep.subr.mxu0 0.0
    %2761 = vmatpush1.msra.mxu0 0.0
    %2762 = vmatprep.subr.mxu0 0.0
    %2763 = vmatpush1.msra.mxu0 0.0
    %2764 = vmatprep.subr.mxu0 0.0
    %2765 = vmatpush1.msra.mxu0 0.0
    %2766 = vmatprep.subr.mxu0 0.0
    %2767 = vmatpush1.msra.mxu0 0.0
    %2768 = vmatprep.subr.mxu0 0.0
    %2769 = vmatpush1.msra.mxu0 0.0
    %2770 = vmatprep.subr.mxu0 0.0
    %2771 = vmatpush1.msra.mxu0 0.0
    %2772 = vmatprep.subr.mxu0 0.0
    %2773 = vmatpush1.msra.mxu0 0.0
    %2774 = vmatprep.subr.mxu0 0.0
    %2775 = vmatpush1.msra.mxu0 0.0
    %2776 = vmatprep.subr.mxu0 0.0
    %2777 = vmatpush1.msra.mxu0 0.0
    %2778 = vmatprep.subr.mxu0 0.0
    %2779 = vmatpush1.msra.mxu0 0.0
    %2780 = vmatprep.subr.mxu0 0.0
    %2781 = vmatpush1.msra.mxu0 0.0
    %2782 = vmatprep.subr.mxu0 0.0
    %2783 = vmatpush1.msra.mxu0 0.0
    %2784 = vmatprep.subr.mxu0 0.0
    %2785 = vmatpush1.msra.mxu0 0.0
    %2786 = vmatprep.subr.mxu0 0.0
    %2787 = vmatpush1.msra.mxu0 0.0
    %2788 = vmatprep.subr.mxu0 0.0
    %2789 = vmatpush1.msra.mxu0 0.0
    %2790 = vmatprep.subr.mxu0 0.0
    %2791 = vmatpush1.msra.mxu0 0.0
    %2792 = vmatprep.mubr.f32.mxu0 0.0
    %2793 = vmatmul.mubr.f32.gmra.mrb[0].mxu0 %v2726
    %v2794 = vpop.f32.mrb[0].mxu0
    %v2795 = vadd.f32 0.0, %v2794
    %v2796 = vpop.f32.mrb[0].mxu0
    %2797 = vdwg.mxu0
    %v2799 = vsel %vm852, %v2724, 0
    %2801 = vmatprep.subr.mxu0 0.0
    %2802 = vmatpush1.msra.mxu0 %v194
    %2803 = vmatprep.subr.mxu0 0.0
    %2804 = vmatpush1.msra.mxu0 0.0
    %2805 = vmatprep.subr.mxu0 0.0
    %2806 = vmatpush1.msra.mxu0 0.0
    %2807 = vmatprep.subr.mxu0 0.0
    %2808 = vmatpush1.msra.mxu0 0.0
    %2809 = vmatprep.subr.mxu0 0.0
    %2810 = vmatpush1.msra.mxu0 0.0
    %2811 = vmatprep.subr.mxu0 0.0
    %2812 = vmatpush1.msra.mxu0 0.0
    %2813 = vmatprep.subr.mxu0 0.0
    %2814 = vmatpush1.msra.mxu0 0.0
    %2815 = vmatprep.subr.mxu0 0.0
    %2816 = vmatpush1.msra.mxu0 0.0
    %2817 = vmatprep.subr.mxu0 0.0
    %2818 = vmatpush1.msra.mxu0 0.0
    %2819 = vmatprep.subr.mxu0 0.0
    %2820 = vmatpush1.msra.mxu0 0.0
    %2821 = vmatprep.subr.mxu0 0.0
    %2822 = vmatpush1.msra.mxu0 0.0
    %2823 = vmatprep.subr.mxu0 0.0
    %2824 = vmatpush1.msra.mxu0 0.0
    %2825 = vmatprep.subr.mxu0 0.0
    %2826 = vmatpush1.msra.mxu0 0.0
    %2827 = vmatprep.subr.mxu0 0.0
    %2828 = vmatpush1.msra.mxu0 0.0
    %2829 = vmatprep.subr.mxu0 0.0
    %2830 = vmatpush1.msra.mxu0 0.0
    %2831 = vmatprep.subr.mxu0 0.0
    %2832 = vmatpush1.msra.mxu0 0.0
    %2833 = vmatprep.subr.mxu0 0.0
    %2834 = vmatpush1.msra.mxu0 0.0
    %2835 = vmatprep.subr.mxu0 0.0
    %2836 = vmatpush1.msra.mxu0 0.0
    %2837 = vmatprep.subr.mxu0 0.0
    %2838 = vmatpush1.msra.mxu0 0.0
    %2839 = vmatprep.subr.mxu0 0.0
    %2840 = vmatpush1.msra.mxu0 0.0
    %2841 = vmatprep.subr.mxu0 0.0
    %2842 = vmatpush1.msra.mxu0 0.0
    %2843 = vmatprep.subr.mxu0 0.0
    %2844 = vmatpush1.msra.mxu0 0.0
    %2845 = vmatprep.subr.mxu0 0.0
    %2846 = vmatpush1.msra.mxu0 0.0
    %2847 = vmatprep.subr.mxu0 0.0
    %2848 = vmatpush1.msra.mxu0 0.0
    %2849 = vmatprep.subr.mxu0 0.0
    %2850 = vmatpush1.msra.mxu0 0.0
    %2851 = vmatprep.subr.mxu0 0.0
    %2852 = vmatpush1.msra.mxu0 0.0
    %2853 = vmatprep.subr.mxu0 0.0
    %2854 = vmatpush1.msra.mxu0 0.0
    %2855 = vmatprep.subr.mxu0 0.0
    %2856 = vmatpush1.msra.mxu0 0.0
    %2857 = vmatprep.subr.mxu0 0.0
    %2858 = vmatpush1.msra.mxu0 0.0
    %2859 = vmatprep.subr.mxu0 0.0
    %2860 = vmatpush1.msra.mxu0 0.0
    %2861 = vmatprep.subr.mxu0 0.0
    %2862 = vmatpush1.msra.mxu0 0.0
    %2863 = vmatprep.subr.mxu0 0.0
    %2864 = vmatpush1.msra.mxu0 0.0
    %2865 = vmatprep.mubr.f32.mxu0 0.0
    %2866 = vmatmul.mubr.f32.gmra.mrb[0].mxu0 %v2799
    %v2867 = vpop.f32.mrb[0].mxu0
    %v2868 = vadd.f32 0.0, %v2867
    %v2869 = vpop.f32.mrb[0].mxu0
    %2870 = vdwg.mxu0
    %2871 = vmatprep.subr.mxu0 0.0
    %2872 = vmatpush1.msra.mxu0 %v203
    %2873 = vmatprep.subr.mxu0 0.0
    %2874 = vmatpush1.msra.mxu0 %v204
    %2875 = vmatprep.subr.mxu0 0.0
    %2876 = vmatpush1.msra.mxu0 %v205
    %2877 = vmatprep.subr.mxu0 0.0
    %2878 = vmatpush1.msra.mxu0 %v206
    %2879 = vmatprep.subr.mxu0 0.0
    %2880 = vmatpush1.msra.mxu0 0.0
    %2881 = vmatprep.subr.mxu0 0.0
    %2882 = vmatpush1.msra.mxu0 0.0
    %2883 = vmatprep.subr.mxu0 0.0
    %2884 = vmatpush1.msra.mxu0 0.0
    %2885 = vmatprep.subr.mxu0 0.0
    %2886 = vmatpush1.msra.mxu0 0.0
    %2887 = vmatprep.subr.mxu0 0.0
    %2888 = vmatpush1.msra.mxu0 0.0
    %2889 = vmatprep.subr.mxu0 0.0
    %2890 = vmatpush1.msra.mxu0 0.0
    %2891 = vmatprep.subr.mxu0 0.0
    %2892 = vmatpush1.msra.mxu0 0.0
    %2893 = vmatprep.subr.mxu0 0.0
    %2894 = vmatpush1.msra.mxu0 0.0
    %2895 = vmatprep.subr.mxu0 0.0
    %2896 = vmatpush1.msra.mxu0 0.0
    %2897 = vmatprep.subr.mxu0 0.0
    %2898 = vmatpush1.msra.mxu0 0.0
    %2899 = vmatprep.subr.mxu0 0.0
    %2900 = vmatpush1.msra.mxu0 0.0
    %2901 = vmatprep.subr.mxu0 0.0
    %2902 = vmatpush1.msra.mxu0 0.0
    %2903 = vmatprep.subr.mxu0 0.0
    %2904 = vmatpush1.msra.mxu0 0.0
    %2905 = vmatprep.subr.mxu0 0.0
    %2906 = vmatpush1.msra.mxu0 0.0
    %2907 = vmatprep.subr.mxu0 0.0
    %2908 = vmatpush1.msra.mxu0 0.0
    %2909 = vmatprep.subr.mxu0 0.0
    %2910 = vmatpush1.msra.mxu0 0.0
    %2911 = vmatprep.subr.mxu0 0.0
    %2912 = vmatpush1.msra.mxu0 0.0
    %2913 = vmatprep.subr.mxu0 0.0
    %2914 = vmatpush1.msra.mxu0 0.0
    %2915 = vmatprep.subr.mxu0 0.0
    %2916 = vmatpush1.msra.mxu0 0.0
    %2917 = vmatprep.subr.mxu0 0.0
    %2918 = vmatpush1.msra.mxu0 0.0
    %2919 = vmatprep.subr.mxu0 0.0
    %2920 = vmatpush1.msra.mxu0 0.0
    %2921 = vmatprep.subr.mxu0 0.0
    %2922 = vmatpush1.msra.mxu0 0.0
    %2923 = vmatprep.subr.mxu0 0.0
    %2924 = vmatpush1.msra.mxu0 0.0
    %2925 = vmatprep.subr.mxu0 0.0
    %2926 = vmatpush1.msra.mxu0 0.0
    %2927 = vmatprep.subr.mxu0 0.0
    %2928 = vmatpush1.msra.mxu0 0.0
    %2929 = vmatprep.subr.mxu0 0.0
    %2930 = vmatpush1.msra.mxu0 0.0
    %2931 = vmatprep.subr.mxu0 0.0
    %2932 = vmatpush1.msra.mxu0 0.0
    %2933 = vmatprep.subr.mxu0 0.0
    %2934 = vmatpush1.msra.mxu0 0.0
    %2935 = vmatprep.mubr.f32.mxu0 0.0
    %2936 = vmatmul.mubr.f32.gmra.mrb[0].mxu0 %v2464
    %v2937 = vpop.f32.mrb[0].mxu0
    %v2938 = vadd.f32 0.0, %v2937
    %v2939 = vpop.f32.mrb[0].mxu0
    %2940 = vdwg.mxu0
    %v2943 = vrot.slane %v2868, 7
    %v2944 = vsel %vm1072, %v2943, %v2795
    %v2945 = vsel %vm210, %v2944, 0
    %2947 = vmatprep.subr.mxu0 0.0
    %2948 = vmatpush1.msra.mxu0 %v199
    %2949 = vmatprep.subr.mxu0 0.0
    %2950 = vmatpush1.msra.mxu0 %v200
    %2951 = vmatprep.subr.mxu0 0.0
    %2952 = vmatpush1.msra.mxu0 %v201
    %2953 = vmatprep.subr.mxu0 0.0
    %2954 = vmatpush1.msra.mxu0 %v202
    %2955 = vmatprep.subr.mxu0 0.0
    %2956 = vmatpush1.msra.mxu0 0.0
    %2957 = vmatprep.subr.mxu0 0.0
    %2958 = vmatpush1.msra.mxu0 0.0
    %2959 = vmatprep.subr.mxu0 0.0
    %2960 = vmatpush1.msra.mxu0 0.0
    %2961 = vmatprep.subr.mxu0 0.0
    %2962 = vmatpush1.msra.mxu0 0.0
    %2963 = vmatprep.subr.mxu0 0.0
    %2964 = vmatpush1.msra.mxu0 0.0
    %2965 = vmatprep.subr.mxu0 0.0
    %2966 = vmatpush1.msra.mxu0 0.0
    %2967 = vmatprep.subr.mxu0 0.0
    %2968 = vmatpush1.msra.mxu0 0.0
    %2969 = vmatprep.subr.mxu0 0.0
    %2970 = vmatpush1.msra.mxu0 0.0
    %2971 = vmatprep.subr.mxu0 0.0
    %2972 = vmatpush1.msra.mxu0 0.0
    %2973 = vmatprep.subr.mxu0 0.0
    %2974 = vmatpush1.msra.mxu0 0.0
    %2975 = vmatprep.subr.mxu0 0.0
    %2976 = vmatpush1.msra.mxu0 0.0
    %2977 = vmatprep.subr.mxu0 0.0
    %2978 = vmatpush1.msra.mxu0 0.0
    %2979 = vmatprep.subr.mxu0 0.0
    %2980 = vmatpush1.msra.mxu0 0.0
    %2981 = vmatprep.subr.mxu0 0.0
    %2982 = vmatpush1.msra.mxu0 0.0
    %2983 = vmatprep.subr.mxu0 0.0
    %2984 = vmatpush1.msra.mxu0 0.0
    %2985 = vmatprep.subr.mxu0 0.0
    %2986 = vmatpush1.msra.mxu0 0.0
    %2987 = vmatprep.subr.mxu0 0.0
    %2988 = vmatpush1.msra.mxu0 0.0
    %2989 = vmatprep.subr.mxu0 0.0
    %2990 = vmatpush1.msra.mxu0 0.0
    %2991 = vmatprep.subr.mxu0 0.0
    %2992 = vmatpush1.msra.mxu0 0.0
    %2993 = vmatprep.subr.mxu0 0.0
    %2994 = vmatpush1.msra.mxu0 0.0
    %2995 = vmatprep.subr.mxu0 0.0
    %2996 = vmatpush1.msra.mxu0 0.0
    %2997 = vmatprep.subr.mxu0 0.0
    %2998 = vmatpush1.msra.mxu0 0.0
    %2999 = vmatprep.subr.mxu0 0.0
    %3000 = vmatpush1.msra.mxu0 0.0
    %3001 = vmatprep.subr.mxu0 0.0
    %3002 = vmatpush1.msra.mxu0 0.0
    %3003 = vmatprep.subr.mxu0 0.0
    %3004 = vmatpush1.msra.mxu0 0.0
    %3005 = vmatprep.subr.mxu0 0.0
    %3006 = vmatpush1.msra.mxu0 0.0
    %3007 = vmatprep.subr.mxu0 0.0
    %3008 = vmatpush1.msra.mxu0 0.0
    %3009 = vmatprep.subr.mxu0 0.0
    %3010 = vmatpush1.msra.mxu0 0.0
    %3011 = vmatprep.mubr.f32.mxu0 0.0
    %3012 = vmatmul.mubr.f32.gmra.mrb[0].mxu0 %v2945
    %v3013 = vpop.f32.mrb[0].mxu0
    %v3014 = vadd.f32 %v2938, %v3013
    %v3015 = vpop.f32.mrb[0].mxu0
    %3016 = vdwg.mxu0
    %v3017 = vtanh.pop %v3014
    %s3018 = scalar_lea.vmem [#allocation18], 4
    %3019 = vst.msk [vmem:[%s3018] sm:$0x3] %vm153, %v3017
    %v3020 = vrot.slane %v2724, 7
    %v3021 = vsel %vm1072, %v3020, %v2723
    %s3023 = scalar_lea.vmem [#allocation19], 4
    %3024 = vst.msk [vmem:[%s3023] sm:$0x3] %vm1151, %v3021
    %s3025 = scalar_lea.vmem [#allocation4], 6
    %v3026 = vld [vmem:[%s3025] sm:$0x3]
    %v3027 = vld [vmem:[#allocation2] sm:$0x3]
    %v3028 = vld [vmem:[#allocation3] sm:$0x3]
    %v3030 = vsel %vm210, %v3027, 0
    %3032 = vmatprep.subr.mxu0 0.0
    %3033 = vmatpush1.msra.mxu0 %v169
    %3034 = vmatprep.subr.mxu0 0.0
    %3035 = vmatpush1.msra.mxu0 %v170
    %3036 = vmatprep.subr.mxu0 0.0
    %3037 = vmatpush1.msra.mxu0 %v171
    %3038 = vmatprep.subr.mxu0 0.0
    %3039 = vmatpush1.msra.mxu0 %v172
    %3040 = vmatprep.subr.mxu0 0.0
    %3041 = vmatpush1.msra.mxu0 0.0
    %3042 = vmatprep.subr.mxu0 0.0
    %3043 = vmatpush1.msra.mxu0 0.0
    %3044 = vmatprep.subr.mxu0 0.0
    %3045 = vmatpush1.msra.mxu0 0.0
    %3046 = vmatprep.subr.mxu0 0.0
    %3047 = vmatpush1.msra.mxu0 0.0
    %3048 = vmatprep.subr.mxu0 0.0
    %3049 = vmatpush1.msra.mxu0 0.0
    %3050 = vmatprep.subr.mxu0 0.0
    %3051 = vmatpush1.msra.mxu0 0.0
    %3052 = vmatprep.subr.mxu0 0.0
    %3053 = vmatpush1.msra.mxu0 0.0
    %3054 = vmatprep.subr.mxu0 0.0
    %3055 = vmatpush1.msra.mxu0 0.0
    %3056 = vmatprep.subr.mxu0 0.0
    %3057 = vmatpush1.msra.mxu0 0.0
    %3058 = vmatprep.subr.mxu0 0.0
    %3059 = vmatpush1.msra.mxu0 0.0
    %3060 = vmatprep.subr.mxu0 0.0
    %3061 = vmatpush1.msra.mxu0 0.0
    %3062 = vmatprep.subr.mxu0 0.0
    %3063 = vmatpush1.msra.mxu0 0.0
    %3064 = vmatprep.subr.mxu0 0.0
    %3065 = vmatpush1.msra.mxu0 0.0
    %3066 = vmatprep.subr.mxu0 0.0
    %3067 = vmatpush1.msra.mxu0 0.0
    %3068 = vmatprep.subr.mxu0 0.0
    %3069 = vmatpush1.msra.mxu0 0.0
    %3070 = vmatprep.subr.mxu0 0.0
    %3071 = vmatpush1.msra.mxu0 0.0
    %3072 = vmatprep.subr.mxu0 0.0
    %3073 = vmatpush1.msra.mxu0 0.0
    %3074 = vmatprep.subr.mxu0 0.0
    %3075 = vmatpush1.msra.mxu0 0.0
    %3076 = vmatprep.subr.mxu0 0.0
    %3077 = vmatpush1.msra.mxu0 0.0
    %3078 = vmatprep.subr.mxu0 0.0
    %3079 = vmatpush1.msra.mxu0 0.0
    %3080 = vmatprep.subr.mxu0 0.0
    %3081 = vmatpush1.msra.mxu0 0.0
    %3082 = vmatprep.subr.mxu0 0.0
    %3083 = vmatpush1.msra.mxu0 0.0
    %3084 = vmatprep.subr.mxu0 0.0
    %3085 = vmatpush1.msra.mxu0 0.0
    %3086 = vmatprep.subr.mxu0 0.0
    %3087 = vmatpush1.msra.mxu0 0.0
    %3088 = vmatprep.subr.mxu0 0.0
    %3089 = vmatpush1.msra.mxu0 0.0
    %3090 = vmatprep.subr.mxu0 0.0
    %3091 = vmatpush1.msra.mxu0 0.0
    %3092 = vmatprep.subr.mxu0 0.0
    %3093 = vmatpush1.msra.mxu0 0.0
    %3094 = vmatprep.subr.mxu0 0.0
    %3095 = vmatpush1.msra.mxu0 0.0
    %3096 = vmatprep.mubr.f32.mxu0 0.0
    %3097 = vmatmul.mubr.f32.gmra.mrb[0].mxu0 %v3030
    %v3098 = vpop.f32.mrb[0].mxu0
    %v3099 = vadd.f32 0.0, %v3098
    %v3100 = vpop.f32.mrb[0].mxu0
    %3101 = vdwg.mxu0
    %v3103 = vsel %vm210, %v3026, 0
    %3105 = vmatprep.subr.mxu0 0.0
    %3106 = vmatpush1.msra.mxu0 %v160
    %3107 = vmatprep.subr.mxu0 0.0
    %3108 = vmatpush1.msra.mxu0 %v161
    %3109 = vmatprep.subr.mxu0 0.0
    %3110 = vmatpush1.msra.mxu0 %v162
    %3111 = vmatprep.subr.mxu0 0.0
    %3112 = vmatpush1.msra.mxu0 %v163
    %3113 = vmatprep.subr.mxu0 0.0
    %3114 = vmatpush1.msra.mxu0 0.0
    %3115 = vmatprep.subr.mxu0 0.0
    %3116 = vmatpush1.msra.mxu0 0.0
    %3117 = vmatprep.subr.mxu0 0.0
    %3118 = vmatpush1.msra.mxu0 0.0
    %3119 = vmatprep.subr.mxu0 0.0
    %3120 = vmatpush1.msra.mxu0 0.0
    %3121 = vmatprep.subr.mxu0 0.0
    %3122 = vmatpush1.msra.mxu0 0.0
    %3123 = vmatprep.subr.mxu0 0.0
    %3124 = vmatpush1.msra.mxu0 0.0
    %3125 = vmatprep.subr.mxu0 0.0
    %3126 = vmatpush1.msra.mxu0 0.0
    %3127 = vmatprep.subr.mxu0 0.0
    %3128 = vmatpush1.msra.mxu0 0.0
    %3129 = vmatprep.subr.mxu0 0.0
    %3130 = vmatpush1.msra.mxu0 0.0
    %3131 = vmatprep.subr.mxu0 0.0
    %3132 = vmatpush1.msra.mxu0 0.0
    %3133 = vmatprep.subr.mxu0 0.0
    %3134 = vmatpush1.msra.mxu0 0.0
    %3135 = vmatprep.subr.mxu0 0.0
    %3136 = vmatpush1.msra.mxu0 0.0
    %3137 = vmatprep.subr.mxu0 0.0
    %3138 = vmatpush1.msra.mxu0 0.0
    %3139 = vmatprep.subr.mxu0 0.0
    %3140 = vmatpush1.msra.mxu0 0.0
    %3141 = vmatprep.subr.mxu0 0.0
    %3142 = vmatpush1.msra.mxu0 0.0
    %3143 = vmatprep.subr.mxu0 0.0
    %3144 = vmatpush1.msra.mxu0 0.0
    %3145 = vmatprep.subr.mxu0 0.0
    %3146 = vmatpush1.msra.mxu0 0.0
    %3147 = vmatprep.subr.mxu0 0.0
    %3148 = vmatpush1.msra.mxu0 0.0
    %3149 = vmatprep.subr.mxu0 0.0
    %3150 = vmatpush1.msra.mxu0 0.0
    %3151 = vmatprep.subr.mxu0 0.0
    %3152 = vmatpush1.msra.mxu0 0.0
    %3153 = vmatprep.subr.mxu0 0.0
    %3154 = vmatpush1.msra.mxu0 0.0
    %3155 = vmatprep.subr.mxu0 0.0
    %3156 = vmatpush1.msra.mxu0 0.0
    %3157 = vmatprep.subr.mxu0 0.0
    %3158 = vmatpush1.msra.mxu0 0.0
    %3159 = vmatprep.subr.mxu0 0.0
    %3160 = vmatpush1.msra.mxu0 0.0
    %3161 = vmatprep.subr.mxu0 0.0
    %3162 = vmatpush1.msra.mxu0 0.0
    %3163 = vmatprep.subr.mxu0 0.0
    %3164 = vmatpush1.msra.mxu0 0.0
    %3165 = vmatprep.subr.mxu0 0.0
    %3166 = vmatpush1.msra.mxu0 0.0
    %3167 = vmatprep.subr.mxu0 0.0
    %3168 = vmatpush1.msra.mxu0 0.0
    %3169 = vmatprep.mubr.f32.mxu0 0.0
    %3170 = vmatmul.mubr.f32.gmra.mrb[0].mxu0 %v3103
    %v3171 = vpop.f32.mrb[0].mxu0
    %v3172 = vadd.f32 %v3099, %v3171
    %v3173 = vpop.f32.mrb[0].mxu0
    %3174 = vdwg.mxu0
    %v3175 = vadd.f32 %v3172, %v183
    %v3176 = vxor.u32 %v3175, 2147483648
    %v3177 = vmul.f32 %v3176, 1.442695
    %v3178 = vpow.pop %v3177
    %v3179 = vadd.f32 %v3178, 1.0
    %v3180 = vrcp.pop %v3179
    %v3181 = vmul.f32 1.0, %v3180
    %v3182 = vtanh.pop %v3175
    %3184 = vrot.lane.b32.xlu0 %v3028, 32
    %v3185 = vpop.permute.xlu0 %3184
    %v3187 = vmul.f32 %v3181, %v3185
    %3189 = vrot.lane.b32.xlu0 %v3182, 32
    %v3190 = vpop.permute.xlu0 %3189
    %v3192 = vmul.f32 %v3181, %v3190
    %3194 = vrot.lane.b32.xlu0 %v3192, 32
    %v3195 = vpop.permute.xlu0 %3194
    %v3197 = vadd.f32 %v3187, %v3195
    %v3198 = vtanh.pop %v3197
    %3200 = vrot.lane.b32.xlu0 %v3198, 32
    %v3201 = vpop.permute.xlu0 %3200
    %v3203 = vmul.f32 %v3181, %v3201
    %3205 = vrot.lane.b32.xlu0 %v3203, 64
    %v3206 = vpop.permute.xlu0 %3205
    %3208 = vst.msk [vmem:[#allocation2] sm:$0x3] %vm153, %v3206
    %3210 = vrot.lane.b32.xlu0 %v3197, 96
    %v3211 = vpop.permute.xlu0 %3210
    %3213 = vst.msk [vmem:[#allocation3] sm:$0x3] %vm153, %v3211
    %v3214 = vld [vmem:[%s396] sm:$0x3]
    %v3215 = vld [vmem:[%s398] sm:$0x3]
    %v3217 = vsel %vm210, %v3214, 0
    %3219 = vmatprep.subr.mxu0 0.0
    %3220 = vmatpush1.msra.mxu0 %v174
    %3221 = vmatprep.subr.mxu0 0.0
    %3222 = vmatpush1.msra.mxu0 %v175
    %3223 = vmatprep.subr.mxu0 0.0
    %3224 = vmatpush1.msra.mxu0 %v176
    %3225 = vmatprep.subr.mxu0 0.0
    %3226 = vmatpush1.msra.mxu0 %v177
    %3227 = vmatprep.subr.mxu0 0.0
    %3228 = vmatpush1.msra.mxu0 0.0
    %3229 = vmatprep.subr.mxu0 0.0
    %3230 = vmatpush1.msra.mxu0 0.0
    %3231 = vmatprep.subr.mxu0 0.0
    %3232 = vmatpush1.msra.mxu0 0.0
    %3233 = vmatprep.subr.mxu0 0.0
    %3234 = vmatpush1.msra.mxu0 0.0
    %3235 = vmatprep.subr.mxu0 0.0
    %3236 = vmatpush1.msra.mxu0 0.0
    %3237 = vmatprep.subr.mxu0 0.0
    %3238 = vmatpush1.msra.mxu0 0.0
    %3239 = vmatprep.subr.mxu0 0.0
    %3240 = vmatpush1.msra.mxu0 0.0
    %3241 = vmatprep.subr.mxu0 0.0
    %3242 = vmatpush1.msra.mxu0 0.0
    %3243 = vmatprep.subr.mxu0 0.0
    %3244 = vmatpush1.msra.mxu0 0.0
    %3245 = vmatprep.subr.mxu0 0.0
    %3246 = vmatpush1.msra.mxu0 0.0
    %3247 = vmatprep.subr.mxu0 0.0
    %3248 = vmatpush1.msra.mxu0 0.0
    %3249 = vmatprep.subr.mxu0 0.0
    %3250 = vmatpush1.msra.mxu0 0.0
    %3251 = vmatprep.subr.mxu0 0.0
    %3252 = vmatpush1.msra.mxu0 0.0
    %3253 = vmatprep.subr.mxu0 0.0
    %3254 = vmatpush1.msra.mxu0 0.0
    %3255 = vmatprep.subr.mxu0 0.0
    %3256 = vmatpush1.msra.mxu0 0.0
    %3257 = vmatprep.subr.mxu0 0.0
    %3258 = vmatpush1.msra.mxu0 0.0
    %3259 = vmatprep.subr.mxu0 0.0
    %3260 = vmatpush1.msra.mxu0 0.0
    %3261 = vmatprep.subr.mxu0 0.0
    %3262 = vmatpush1.msra.mxu0 0.0
    %3263 = vmatprep.subr.mxu0 0.0
    %3264 = vmatpush1.msra.mxu0 0.0
    %3265 = vmatprep.subr.mxu0 0.0
    %3266 = vmatpush1.msra.mxu0 0.0
    %3267 = vmatprep.subr.mxu0 0.0
    %3268 = vmatpush1.msra.mxu0 0.0
    %3269 = vmatprep.subr.mxu0 0.0
    %3270 = vmatpush1.msra.mxu0 0.0
    %3271 = vmatprep.subr.mxu0 0.0
    %3272 = vmatpush1.msra.mxu0 0.0
    %3273 = vmatprep.subr.mxu0 0.0
    %3274 = vmatpush1.msra.mxu0 0.0
    %3275 = vmatprep.subr.mxu0 0.0
    %3276 = vmatpush1.msra.mxu0 0.0
    %3277 = vmatprep.subr.mxu0 0.0
    %3278 = vmatpush1.msra.mxu0 0.0
    %3279 = vmatprep.subr.mxu0 0.0
    %3280 = vmatpush1.msra.mxu0 0.0
    %3281 = vmatprep.subr.mxu0 0.0
    %3282 = vmatpush1.msra.mxu0 0.0
    %3283 = vmatprep.mubr.f32.mxu0 0.0
    %3284 = vmatmul.mubr.f32.gmra.mrb[0].mxu0 %v3217
    %v3285 = vpop.f32.mrb[0].mxu0
    %v3286 = vadd.f32 0.0, %v3285
    %v3287 = vpop.f32.mrb[0].mxu0
    %3288 = vdwg.mxu0
    %v3289 = vsel %vm210, %v3206, 0
    %3291 = vmatprep.subr.mxu0 0.0
    %3292 = vmatpush1.msra.mxu0 %v165
    %3293 = vmatprep.subr.mxu0 0.0
    %3294 = vmatpush1.msra.mxu0 %v166
    %3295 = vmatprep.subr.mxu0 0.0
    %3296 = vmatpush1.msra.mxu0 %v167
    %3297 = vmatprep.subr.mxu0 0.0
    %3298 = vmatpush1.msra.mxu0 %v168
    %3299 = vmatprep.subr.mxu0 0.0
    %3300 = vmatpush1.msra.mxu0 0.0
    %3301 = vmatprep.subr.mxu0 0.0
    %3302 = vmatpush1.msra.mxu0 0.0
    %3303 = vmatprep.subr.mxu0 0.0
    %3304 = vmatpush1.msra.mxu0 0.0
    %3305 = vmatprep.subr.mxu0 0.0
    %3306 = vmatpush1.msra.mxu0 0.0
    %3307 = vmatprep.subr.mxu0 0.0
    %3308 = vmatpush1.msra.mxu0 0.0
    %3309 = vmatprep.subr.mxu0 0.0
    %3310 = vmatpush1.msra.mxu0 0.0
    %3311 = vmatprep.subr.mxu0 0.0
    %3312 = vmatpush1.msra.mxu0 0.0
    %3313 = vmatprep.subr.mxu0 0.0
    %3314 = vmatpush1.msra.mxu0 0.0
    %3315 = vmatprep.subr.mxu0 0.0
    %3316 = vmatpush1.msra.mxu0 0.0
    %3317 = vmatprep.subr.mxu0 0.0
    %3318 = vmatpush1.msra.mxu0 0.0
    %3319 = vmatprep.subr.mxu0 0.0
    %3320 = vmatpush1.msra.mxu0 0.0
    %3321 = vmatprep.subr.mxu0 0.0
    %3322 = vmatpush1.msra.mxu0 0.0
    %3323 = vmatprep.subr.mxu0 0.0
    %3324 = vmatpush1.msra.mxu0 0.0
    %3325 = vmatprep.subr.mxu0 0.0
    %3326 = vmatpush1.msra.mxu0 0.0
    %3327 = vmatprep.subr.mxu0 0.0
    %3328 = vmatpush1.msra.mxu0 0.0
    %3329 = vmatprep.subr.mxu0 0.0
    %3330 = vmatpush1.msra.mxu0 0.0
    %3331 = vmatprep.subr.mxu0 0.0
    %3332 = vmatpush1.msra.mxu0 0.0
    %3333 = vmatprep.subr.mxu0 0.0
    %3334 = vmatpush1.msra.mxu0 0.0
    %3335 = vmatprep.subr.mxu0 0.0
    %3336 = vmatpush1.msra.mxu0 0.0
    %3337 = vmatprep.subr.mxu0 0.0
    %3338 = vmatpush1.msra.mxu0 0.0
    %3339 = vmatprep.subr.mxu0 0.0
    %3340 = vmatpush1.msra.mxu0 0.0
    %3341 = vmatprep.subr.mxu0 0.0
    %3342 = vmatpush1.msra.mxu0 0.0
    %3343 = vmatprep.subr.mxu0 0.0
    %3344 = vmatpush1.msra.mxu0 0.0
    %3345 = vmatprep.subr.mxu0 0.0
    %3346 = vmatpush1.msra.mxu0 0.0
    %3347 = vmatprep.subr.mxu0 0.0
    %3348 = vmatpush1.msra.mxu0 0.0
    %3349 = vmatprep.subr.mxu0 0.0
    %3350 = vmatpush1.msra.mxu0 0.0
    %3351 = vmatprep.subr.mxu0 0.0
    %3352 = vmatpush1.msra.mxu0 0.0
    %3353 = vmatprep.subr.mxu0 0.0
    %3354 = vmatpush1.msra.mxu0 0.0
    %3355 = vmatprep.mubr.f32.mxu0 0.0
    %3356 = vmatmul.mubr.f32.gmra.mrb[0].mxu0 %v3289
    %v3357 = vpop.f32.mrb[0].mxu0
    %v3358 = vadd.f32 %v3286, %v3357
    %v3359 = vpop.f32.mrb[0].mxu0
    %3360 = vdwg.mxu0
    %v3361 = vadd.f32 %v3358, %v191
    %v3362 = vxor.u32 %v3361, 2147483648
    %v3363 = vmul.f32 %v3362, 1.442695
    %v3364 = vpow.pop %v3363
    %v3365 = vadd.f32 %v3364, 1.0
    %v3366 = vrcp.pop %v3365
    %v3367 = vmul.f32 1.0, %v3366
    %v3368 = vtanh.pop %v3361
    %3370 = vrot.lane.b32.xlu0 %v3215, 32
    %v3371 = vpop.permute.xlu0 %3370
    %v3373 = vmul.f32 %v3367, %v3371
    %3375 = vrot.lane.b32.xlu0 %v3368, 32
    %v3376 = vpop.permute.xlu0 %3375
    %v3378 = vmul.f32 %v3367, %v3376
    %3380 = vrot.lane.b32.xlu0 %v3378, 32
    %v3381 = vpop.permute.xlu0 %3380
    %v3383 = vadd.f32 %v3373, %v3381
    %v3384 = vtanh.pop %v3383
    %3386 = vrot.lane.b32.xlu0 %v3384, 32
    %v3387 = vpop.permute.xlu0 %3386
    %v3389 = vmul.f32 %v3367, %v3387
    %3391 = vrot.lane.b32.xlu0 %v3389, 64
    %v3392 = vpop.permute.xlu0 %3391
    %3394 = vst.msk [vmem:[%s396] sm:$0x3] %vm153, %v3392
    %3396 = vrot.lane.b32.xlu0 %v3383, 96
    %v3397 = vpop.permute.xlu0 %3396
    %3399 = vst.msk [vmem:[%s398] sm:$0x3] %vm153, %v3397
    %v3400 = vsel %vm210, %v3392, 0
    %3402 = vmatprep.subr.mxu0 0.0
    %3403 = vmatpush1.msra.mxu0 %v195
    %3404 = vmatprep.subr.mxu0 0.0
    %3405 = vmatpush1.msra.mxu0 %v196
    %3406 = vmatprep.subr.mxu0 0.0
    %3407 = vmatpush1.msra.mxu0 %v197
    %3408 = vmatprep.subr.mxu0 0.0
    %3409 = vmatpush1.msra.mxu0 %v198
    %3410 = vmatprep.subr.mxu0 0.0
    %3411 = vmatpush1.msra.mxu0 0.0
    %3412 = vmatprep.subr.mxu0 0.0
    %3413 = vmatpush1.msra.mxu0 0.0
    %3414 = vmatprep.subr.mxu0 0.0
    %3415 = vmatpush1.msra.mxu0 0.0
    %3416 = vmatprep.subr.mxu0 0.0
    %3417 = vmatpush1.msra.mxu0 0.0
    %3418 = vmatprep.subr.mxu0 0.0
    %3419 = vmatpush1.msra.mxu0 0.0
    %3420 = vmatprep.subr.mxu0 0.0
    %3421 = vmatpush1.msra.mxu0 0.0
    %3422 = vmatprep.subr.mxu0 0.0
    %3423 = vmatpush1.msra.mxu0 0.0
    %3424 = vmatprep.subr.mxu0 0.0
    %3425 = vmatpush1.msra.mxu0 0.0
    %3426 = vmatprep.subr.mxu0 0.0
    %3427 = vmatpush1.msra.mxu0 0.0
    %3428 = vmatprep.subr.mxu0 0.0
    %3429 = vmatpush1.msra.mxu0 0.0
    %3430 = vmatprep.subr.mxu0 0.0
    %3431 = vmatpush1.msra.mxu0 0.0
    %3432 = vmatprep.subr.mxu0 0.0
    %3433 = vmatpush1.msra.mxu0 0.0
    %3434 = vmatprep.subr.mxu0 0.0
    %3435 = vmatpush1.msra.mxu0 0.0
    %3436 = vmatprep.subr.mxu0 0.0
    %3437 = vmatpush1.msra.mxu0 0.0
    %3438 = vmatprep.subr.mxu0 0.0
    %3439 = vmatpush1.msra.mxu0 0.0
    %3440 = vmatprep.subr.mxu0 0.0
    %3441 = vmatpush1.msra.mxu0 0.0
    %3442 = vmatprep.subr.mxu0 0.0
    %3443 = vmatpush1.msra.mxu0 0.0
    %3444 = vmatprep.subr.mxu0 0.0
    %3445 = vmatpush1.msra.mxu0 0.0
    %3446 = vmatprep.subr.mxu0 0.0
    %3447 = vmatpush1.msra.mxu0 0.0
    %3448 = vmatprep.subr.mxu0 0.0
    %3449 = vmatpush1.msra.mxu0 0.0
    %3450 = vmatprep.subr.mxu0 0.0
    %3451 = vmatpush1.msra.mxu0 0.0
    %3452 = vmatprep.subr.mxu0 0.0
    %3453 = vmatpush1.msra.mxu0 0.0
    %3454 = vmatprep.subr.mxu0 0.0
    %3455 = vmatpush1.msra.mxu0 0.0
    %3456 = vmatprep.subr.mxu0 0.0
    %3457 = vmatpush1.msra.mxu0 0.0
    %3458 = vmatprep.subr.mxu0 0.0
    %3459 = vmatpush1.msra.mxu0 0.0
    %3460 = vmatprep.subr.mxu0 0.0
    %3461 = vmatpush1.msra.mxu0 0.0
    %3462 = vmatprep.subr.mxu0 0.0
    %3463 = vmatpush1.msra.mxu0 0.0
    %3464 = vmatprep.subr.mxu0 0.0
    %3465 = vmatpush1.msra.mxu0 0.0
    %3466 = vmatprep.mubr.f32.mxu0 0.0
    %3467 = vmatmul.mubr.f32.gmra.mrb[0].mxu0 %v3400
    %v3468 = vpop.f32.mrb[0].mxu0
    %v3469 = vadd.f32 0.0, %v3468
    %v3470 = vpop.f32.mrb[0].mxu0
    %3471 = vdwg.mxu0
    %v3474 = vunpack.c.l.s4 1966171168
    %v3475 = vunpack.c.0.s8 %v3474
    %v3476 = vlaneseq
    %v3477 = vshrl.u32 %v3476, 7
    %v3478 = vsub.s32 %v3475, %v3477
    %v3479 = vrot.slane %v3469, %v3478
    %v3480 = vcombine.high %v3479, %v3479
    %v3482 = vunpack.c.l.s4 1966171168
    %v3483 = vunpack.c.0.s8 %v3482
    %v3484 = vlaneseq
    %v3485 = vshrl.u32 %v3484, 7
    %v3486 = vsub.s32 %v3483, %v3485
    %v3487 = vrot.slane %v3479, %v3486
    %v3489 = vunpack.c.l.s4 1966171168
    %v3490 = vunpack.c.0.s8 %v3489
    %v3491 = vlaneseq
    %v3492 = vshrl.u32 %v3491, 7
    %v3493 = vsub.s32 %v3490, %v3492
    %v3494 = vrot.slane %v3480, %v3493
    %v3495 = vsel %vm210, %v3487, 0
    %3497 = vmatprep.subr.mxu0 0.0
    %3498 = vmatpush1.xpose.msra.mxu0 %v682
    %3499 = vmatprep.subr.mxu0 0.0
    %3500 = vmatpush1.xpose.msra.mxu0 0.0
    %3501 = vmatprep.subr.mxu0 0.0
    %3502 = vmatpush1.xpose.msra.mxu0 0.0
    %3503 = vmatprep.subr.mxu0 0.0
    %3504 = vmatpush1.xpose.msra.mxu0 0.0
    %3505 = vmatprep.subr.mxu0 0.0
    %3506 = vmatpush1.xpose.msra.mxu0 0.0
    %3507 = vmatprep.subr.mxu0 0.0
    %3508 = vmatpush1.xpose.msra.mxu0 0.0
    %3509 = vmatprep.subr.mxu0 0.0
    %3510 = vmatpush1.xpose.msra.mxu0 0.0
    %3511 = vmatprep.subr.mxu0 0.0
    %3512 = vmatpush1.xpose.msra.mxu0 0.0
    %3513 = vmatprep.subr.mxu0 0.0
    %3514 = vmatpush1.xpose.msra.mxu0 0.0
    %3515 = vmatprep.subr.mxu0 0.0
    %3516 = vmatpush1.xpose.msra.mxu0 0.0
    %3517 = vmatprep.subr.mxu0 0.0
    %3518 = vmatpush1.xpose.msra.mxu0 0.0
    %3519 = vmatprep.subr.mxu0 0.0
    %3520 = vmatpush1.xpose.msra.mxu0 0.0
    %3521 = vmatprep.subr.mxu0 0.0
    %3522 = vmatpush1.xpose.msra.mxu0 0.0
    %3523 = vmatprep.subr.mxu0 0.0
    %3524 = vmatpush1.xpose.msra.mxu0 0.0
    %3525 = vmatprep.subr.mxu0 0.0
    %3526 = vmatpush1.xpose.msra.mxu0 0.0
    %3527 = vmatprep.subr.mxu0 0.0
    %3528 = vmatpush1.xpose.msra.mxu0 0.0
    %3529 = vmatprep.subr.mxu0 0.0
    %3530 = vmatpush1.xpose.msra.mxu0 0.0
    %3531 = vmatprep.subr.mxu0 0.0
    %3532 = vmatpush1.xpose.msra.mxu0 0.0
    %3533 = vmatprep.subr.mxu0 0.0
    %3534 = vmatpush1.xpose.msra.mxu0 0.0
    %3535 = vmatprep.subr.mxu0 0.0
    %3536 = vmatpush1.xpose.msra.mxu0 0.0
    %3537 = vmatprep.subr.mxu0 0.0
    %3538 = vmatpush1.xpose.msra.mxu0 0.0
    %3539 = vmatprep.subr.mxu0 0.0
    %3540 = vmatpush1.xpose.msra.mxu0 0.0
    %3541 = vmatprep.subr.mxu0 0.0
    %3542 = vmatpush1.xpose.msra.mxu0 0.0
    %3543 = vmatprep.subr.mxu0 0.0
    %3544 = vmatpush1.xpose.msra.mxu0 0.0
    %3545 = vmatprep.subr.mxu0 0.0
    %3546 = vmatpush1.xpose.msra.mxu0 0.0
    %3547 = vmatprep.subr.mxu0 0.0
    %3548 = vmatpush1.xpose.msra.mxu0 0.0
    %3549 = vmatprep.subr.mxu0 0.0
    %3550 = vmatpush1.xpose.msra.mxu0 0.0
    %3551 = vmatprep.subr.mxu0 0.0
    %3552 = vmatpush1.xpose.msra.mxu0 0.0
    %3553 = vmatprep.subr.mxu0 0.0
    %3554 = vmatpush1.xpose.msra.mxu0 0.0
    %3555 = vmatprep.subr.mxu0 0.0
    %3556 = vmatpush1.xpose.msra.mxu0 0.0
    %3557 = vmatprep.subr.mxu0 0.0
    %3558 = vmatpush1.xpose.msra.mxu0 0.0
    %3559 = vmatprep.subr.mxu0 0.0
    %3560 = vmatpush1.xpose.msra.mxu0 0.0
    %3561 = vmatprep.mubr.f32.mxu0 0.0
    %3562 = vmatmul.mubr.f32.gmra.mrb[0].mxu0 %v3495
    %v3563 = vpop.f32.mrb[0].mxu0
    %v3564 = vadd.f32 0.0, %v3563
    %v3565 = vpop.f32.mrb[0].mxu0
    %3566 = vdwg.mxu0
    %v3567 = vsel %vm210, %v3494, 0
    %3569 = vmatprep.subr.mxu0 0.0
    %3570 = vmatpush1.xpose.msra.mxu0 %v757
    %3571 = vmatprep.subr.mxu0 0.0
    %3572 = vmatpush1.xpose.msra.mxu0 0.0
    %3573 = vmatprep.subr.mxu0 0.0
    %3574 = vmatpush1.xpose.msra.mxu0 0.0
    %3575 = vmatprep.subr.mxu0 0.0
    %3576 = vmatpush1.xpose.msra.mxu0 0.0
    %3577 = vmatprep.subr.mxu0 0.0
    %3578 = vmatpush1.xpose.msra.mxu0 0.0
    %3579 = vmatprep.subr.mxu0 0.0
    %3580 = vmatpush1.xpose.msra.mxu0 0.0
    %3581 = vmatprep.subr.mxu0 0.0
    %3582 = vmatpush1.xpose.msra.mxu0 0.0
    %3583 = vmatprep.subr.mxu0 0.0
    %3584 = vmatpush1.xpose.msra.mxu0 0.0
    %3585 = vmatprep.subr.mxu0 0.0
    %3586 = vmatpush1.xpose.msra.mxu0 0.0
    %3587 = vmatprep.subr.mxu0 0.0
    %3588 = vmatpush1.xpose.msra.mxu0 0.0
    %3589 = vmatprep.subr.mxu0 0.0
    %3590 = vmatpush1.xpose.msra.mxu0 0.0
    %3591 = vmatprep.subr.mxu0 0.0
    %3592 = vmatpush1.xpose.msra.mxu0 0.0
    %3593 = vmatprep.subr.mxu0 0.0
    %3594 = vmatpush1.xpose.msra.mxu0 0.0
    %3595 = vmatprep.subr.mxu0 0.0
    %3596 = vmatpush1.xpose.msra.mxu0 0.0
    %3597 = vmatprep.subr.mxu0 0.0
    %3598 = vmatpush1.xpose.msra.mxu0 0.0
    %3599 = vmatprep.subr.mxu0 0.0
    %3600 = vmatpush1.xpose.msra.mxu0 0.0
    %3601 = vmatprep.subr.mxu0 0.0
    %3602 = vmatpush1.xpose.msra.mxu0 0.0
    %3603 = vmatprep.subr.mxu0 0.0
    %3604 = vmatpush1.xpose.msra.mxu0 0.0
    %3605 = vmatprep.subr.mxu0 0.0
    %3606 = vmatpush1.xpose.msra.mxu0 0.0
    %3607 = vmatprep.subr.mxu0 0.0
    %3608 = vmatpush1.xpose.msra.mxu0 0.0
    %3609 = vmatprep.subr.mxu0 0.0
    %3610 = vmatpush1.xpose.msra.mxu0 0.0
    %3611 = vmatprep.subr.mxu0 0.0
    %3612 = vmatpush1.xpose.msra.mxu0 0.0
    %3613 = vmatprep.subr.mxu0 0.0
    %3614 = vmatpush1.xpose.msra.mxu0 0.0
    %3615 = vmatprep.subr.mxu0 0.0
    %3616 = vmatpush1.xpose.msra.mxu0 0.0
    %3617 = vmatprep.subr.mxu0 0.0
    %3618 = vmatpush1.xpose.msra.mxu0 0.0
    %3619 = vmatprep.subr.mxu0 0.0
    %3620 = vmatpush1.xpose.msra.mxu0 0.0
    %3621 = vmatprep.subr.mxu0 0.0
    %3622 = vmatpush1.xpose.msra.mxu0 0.0
    %3623 = vmatprep.subr.mxu0 0.0
    %3624 = vmatpush1.xpose.msra.mxu0 0.0
    %3625 = vmatprep.subr.mxu0 0.0
    %3626 = vmatpush1.xpose.msra.mxu0 0.0
    %3627 = vmatprep.subr.mxu0 0.0
    %3628 = vmatpush1.xpose.msra.mxu0 0.0
    %3629 = vmatprep.subr.mxu0 0.0
    %3630 = vmatpush1.xpose.msra.mxu0 0.0
    %3631 = vmatprep.subr.mxu0 0.0
    %3632 = vmatpush1.xpose.msra.mxu0 0.0
    %3633 = vmatprep.mubr.f32.mxu0 0.0
    %3634 = vmatmul.mubr.f32.gmra.mrb[0].mxu0 %v3567
    %v3635 = vpop.f32.mrb[0].mxu0
    %v3636 = vadd.f32 0.0, %v3635
    %v3637 = vpop.f32.mrb[0].mxu0
    %3638 = vdwg.mxu0
    %v3639 = vsel %vm829, %v3564, -inf
    %3640 = vmax.xlane.f32.xlu0 %v3639
    %v3641 = vpop.xlane.xlu0 %3640
    %v3642 = vsel %vm829, %v3636, -inf
    %3643 = vmax.xlane.f32.xlu0 %v3642
    %v3644 = vpop.xlane.xlu0 %3643
    %v3645 = vsub.f32 %v3564, %v3641
    %v3646 = vsub.f32 %v3636, %v3644
    %v3647 = vmul.f32 %v3645, 1.442695
    %v3648 = vpow.pop %v3647
    %v3649 = vmul.f32 %v3646, 1.442695
    %v3650 = vpow.pop %v3649
    %v3651 = vsel %vm829, %v3648, 0.0
    %3652 = vadd.xlane.f32.xlu0 %v3651
    %v3653 = vpop.xlane.xlu0 %3652
    %v3654 = vsel %vm829, %v3650, 0.0
    %3655 = vadd.xlane.f32.xlu0 %v3654
    %v3656 = vpop.xlane.xlu0 %3655
    %v3657 = vrcp.pop %v3653
    %v3658 = vrcp.pop %v3656
    %v3659 = vmul.f32 %v3648, %v3657
    %v3660 = vmul.f32 %v3650, %v3658
    %v3662 = vsel %vm852, %v3659, 0
    %3664 = vmatprep.subr.mxu0 0.0
    %3665 = vmatpush1.msra.mxu0 %v193
    %3666 = vmatprep.subr.mxu0 0.0
    %3667 = vmatpush1.msra.mxu0 0.0
    %3668 = vmatprep.subr.mxu0 0.0
    %3669 = vmatpush1.msra.mxu0 0.0
    %3670 = vmatprep.subr.mxu0 0.0
    %3671 = vmatpush1.msra.mxu0 0.0
    %3672 = vmatprep.subr.mxu0 0.0
    %3673 = vmatpush1.msra.mxu0 0.0
    %3674 = vmatprep.subr.mxu0 0.0
    %3675 = vmatpush1.msra.mxu0 0.0
    %3676 = vmatprep.subr.mxu0 0.0
    %3677 = vmatpush1.msra.mxu0 0.0
    %3678 = vmatprep.subr.mxu0 0.0
    %3679 = vmatpush1.msra.mxu0 0.0
    %3680 = vmatprep.subr.mxu0 0.0
    %3681 = vmatpush1.msra.mxu0 0.0
    %3682 = vmatprep.subr.mxu0 0.0
    %3683 = vmatpush1.msra.mxu0 0.0
    %3684 = vmatprep.subr.mxu0 0.0
    %3685 = vmatpush1.msra.mxu0 0.0
    %3686 = vmatprep.subr.mxu0 0.0
    %3687 = vmatpush1.msra.mxu0 0.0
    %3688 = vmatprep.subr.mxu0 0.0
    %3689 = vmatpush1.msra.mxu0 0.0
    %3690 = vmatprep.subr.mxu0 0.0
    %3691 = vmatpush1.msra.mxu0 0.0
    %3692 = vmatprep.subr.mxu0 0.0
    %3693 = vmatpush1.msra.mxu0 0.0
    %3694 = vmatprep.subr.mxu0 0.0
    %3695 = vmatpush1.msra.mxu0 0.0
    %3696 = vmatprep.subr.mxu0 0.0
    %3697 = vmatpush1.msra.mxu0 0.0
    %3698 = vmatprep.subr.mxu0 0.0
    %3699 = vmatpush1.msra.mxu0 0.0
    %3700 = vmatprep.subr.mxu0 0.0
    %3701 = vmatpush1.msra.mxu0 0.0
    %3702 = vmatprep.subr.mxu0 0.0
    %3703 = vmatpush1.msra.mxu0 0.0
    %3704 = vmatprep.subr.mxu0 0.0
    %3705 = vmatpush1.msra.mxu0 0.0
    %3706 = vmatprep.subr.mxu0 0.0
    %3707 = vmatpush1.msra.mxu0 0.0
    %3708 = vmatprep.subr.mxu0 0.0
    %3709 = vmatpush1.msra.mxu0 0.0
    %3710 = vmatprep.subr.mxu0 0.0
    %3711 = vmatpush1.msra.mxu0 0.0
    %3712 = vmatprep.subr.mxu0 0.0
    %3713 = vmatpush1.msra.mxu0 0.0
    %3714 = vmatprep.subr.mxu0 0.0
    %3715 = vmatpush1.msra.mxu0 0.0
    %3716 = vmatprep.subr.mxu0 0.0
    %3717 = vmatpush1.msra.mxu0 0.0
    %3718 = vmatprep.subr.mxu0 0.0
    %3719 = vmatpush1.msra.mxu0 0.0
    %3720 = vmatprep.subr.mxu0 0.0
    %3721 = vmatpush1.msra.mxu0 0.0
    %3722 = vmatprep.subr.mxu0 0.0
    %3723 = vmatpush1.msra.mxu0 0.0
    %3724 = vmatprep.subr.mxu0 0.0
    %3725 = vmatpush1.msra.mxu0 0.0
    %3726 = vmatprep.subr.mxu0 0.0
    %3727 = vmatpush1.msra.mxu0 0.0
    %3728 = vmatprep.mubr.f32.mxu0 0.0
    %3729 = vmatmul.mubr.f32.gmra.mrb[0].mxu0 %v3662
    %v3730 = vpop.f32.mrb[0].mxu0
    %v3731 = vadd.f32 0.0, %v3730
    %v3732 = vpop.f32.mrb[0].mxu0
    %3733 = vdwg.mxu0
    %v3735 = vsel %vm852, %v3660, 0
    %3737 = vmatprep.subr.mxu0 0.0
    %3738 = vmatpush1.msra.mxu0 %v194
    %3739 = vmatprep.subr.mxu0 0.0
    %3740 = vmatpush1.msra.mxu0 0.0
    %3741 = vmatprep.subr.mxu0 0.0
    %3742 = vmatpush1.msra.mxu0 0.0
    %3743 = vmatprep.subr.mxu0 0.0
    %3744 = vmatpush1.msra.mxu0 0.0
    %3745 = vmatprep.subr.mxu0 0.0
    %3746 = vmatpush1.msra.mxu0 0.0
    %3747 = vmatprep.subr.mxu0 0.0
    %3748 = vmatpush1.msra.mxu0 0.0
    %3749 = vmatprep.subr.mxu0 0.0
    %3750 = vmatpush1.msra.mxu0 0.0
    %3751 = vmatprep.subr.mxu0 0.0
    %3752 = vmatpush1.msra.mxu0 0.0
    %3753 = vmatprep.subr.mxu0 0.0
    %3754 = vmatpush1.msra.mxu0 0.0
    %3755 = vmatprep.subr.mxu0 0.0
    %3756 = vmatpush1.msra.mxu0 0.0
    %3757 = vmatprep.subr.mxu0 0.0
    %3758 = vmatpush1.msra.mxu0 0.0
    %3759 = vmatprep.subr.mxu0 0.0
    %3760 = vmatpush1.msra.mxu0 0.0
    %3761 = vmatprep.subr.mxu0 0.0
    %3762 = vmatpush1.msra.mxu0 0.0
    %3763 = vmatprep.subr.mxu0 0.0
    %3764 = vmatpush1.msra.mxu0 0.0
    %3765 = vmatprep.subr.mxu0 0.0
    %3766 = vmatpush1.msra.mxu0 0.0
    %3767 = vmatprep.subr.mxu0 0.0
    %3768 = vmatpush1.msra.mxu0 0.0
    %3769 = vmatprep.subr.mxu0 0.0
    %3770 = vmatpush1.msra.mxu0 0.0
    %3771 = vmatprep.subr.mxu0 0.0
    %3772 = vmatpush1.msra.mxu0 0.0
    %3773 = vmatprep.subr.mxu0 0.0
    %3774 = vmatpush1.msra.mxu0 0.0
    %3775 = vmatprep.subr.mxu0 0.0
    %3776 = vmatpush1.msra.mxu0 0.0
    %3777 = vmatprep.subr.mxu0 0.0
    %3778 = vmatpush1.msra.mxu0 0.0
    %3779 = vmatprep.subr.mxu0 0.0
    %3780 = vmatpush1.msra.mxu0 0.0
    %3781 = vmatprep.subr.mxu0 0.0
    %3782 = vmatpush1.msra.mxu0 0.0
    %3783 = vmatprep.subr.mxu0 0.0
    %3784 = vmatpush1.msra.mxu0 0.0
    %3785 = vmatprep.subr.mxu0 0.0
    %3786 = vmatpush1.msra.mxu0 0.0
    %3787 = vmatprep.subr.mxu0 0.0
    %3788 = vmatpush1.msra.mxu0 0.0
    %3789 = vmatprep.subr.mxu0 0.0
    %3790 = vmatpush1.msra.mxu0 0.0
    %3791 = vmatprep.subr.mxu0 0.0
    %3792 = vmatpush1.msra.mxu0 0.0
    %3793 = vmatprep.subr.mxu0 0.0
    %3794 = vmatpush1.msra.mxu0 0.0
    %3795 = vmatprep.subr.mxu0 0.0
    %3796 = vmatpush1.msra.mxu0 0.0
    %3797 = vmatprep.subr.mxu0 0.0
    %3798 = vmatpush1.msra.mxu0 0.0
    %3799 = vmatprep.subr.mxu0 0.0
    %3800 = vmatpush1.msra.mxu0 0.0
    %3801 = vmatprep.mubr.f32.mxu0 0.0
    %3802 = vmatmul.mubr.f32.gmra.mrb[0].mxu0 %v3735
    %v3803 = vpop.f32.mrb[0].mxu0
    %v3804 = vadd.f32 0.0, %v3803
    %v3805 = vpop.f32.mrb[0].mxu0
    %3806 = vdwg.mxu0
    %3807 = vmatprep.subr.mxu0 0.0
    %3808 = vmatpush1.msra.mxu0 %v203
    %3809 = vmatprep.subr.mxu0 0.0
    %3810 = vmatpush1.msra.mxu0 %v204
    %3811 = vmatprep.subr.mxu0 0.0
    %3812 = vmatpush1.msra.mxu0 %v205
    %3813 = vmatprep.subr.mxu0 0.0
    %3814 = vmatpush1.msra.mxu0 %v206
    %3815 = vmatprep.subr.mxu0 0.0
    %3816 = vmatpush1.msra.mxu0 0.0
    %3817 = vmatprep.subr.mxu0 0.0
    %3818 = vmatpush1.msra.mxu0 0.0
    %3819 = vmatprep.subr.mxu0 0.0
    %3820 = vmatpush1.msra.mxu0 0.0
    %3821 = vmatprep.subr.mxu0 0.0
    %3822 = vmatpush1.msra.mxu0 0.0
    %3823 = vmatprep.subr.mxu0 0.0
    %3824 = vmatpush1.msra.mxu0 0.0
    %3825 = vmatprep.subr.mxu0 0.0
    %3826 = vmatpush1.msra.mxu0 0.0
    %3827 = vmatprep.subr.mxu0 0.0
    %3828 = vmatpush1.msra.mxu0 0.0
    %3829 = vmatprep.subr.mxu0 0.0
    %3830 = vmatpush1.msra.mxu0 0.0
    %3831 = vmatprep.subr.mxu0 0.0
    %3832 = vmatpush1.msra.mxu0 0.0
    %3833 = vmatprep.subr.mxu0 0.0
    %3834 = vmatpush1.msra.mxu0 0.0
    %3835 = vmatprep.subr.mxu0 0.0
    %3836 = vmatpush1.msra.mxu0 0.0
    %3837 = vmatprep.subr.mxu0 0.0
    %3838 = vmatpush1.msra.mxu0 0.0
    %3839 = vmatprep.subr.mxu0 0.0
    %3840 = vmatpush1.msra.mxu0 0.0
    %3841 = vmatprep.subr.mxu0 0.0
    %3842 = vmatpush1.msra.mxu0 0.0
    %3843 = vmatprep.subr.mxu0 0.0
    %3844 = vmatpush1.msra.mxu0 0.0
    %3845 = vmatprep.subr.mxu0 0.0
    %3846 = vmatpush1.msra.mxu0 0.0
    %3847 = vmatprep.subr.mxu0 0.0
    %3848 = vmatpush1.msra.mxu0 0.0
    %3849 = vmatprep.subr.mxu0 0.0
    %3850 = vmatpush1.msra.mxu0 0.0
    %3851 = vmatprep.subr.mxu0 0.0
    %3852 = vmatpush1.msra.mxu0 0.0
    %3853 = vmatprep.subr.mxu0 0.0
    %3854 = vmatpush1.msra.mxu0 0.0
    %3855 = vmatprep.subr.mxu0 0.0
    %3856 = vmatpush1.msra.mxu0 0.0
    %3857 = vmatprep.subr.mxu0 0.0
    %3858 = vmatpush1.msra.mxu0 0.0
    %3859 = vmatprep.subr.mxu0 0.0
    %3860 = vmatpush1.msra.mxu0 0.0
    %3861 = vmatprep.subr.mxu0 0.0
    %3862 = vmatpush1.msra.mxu0 0.0
    %3863 = vmatprep.subr.mxu0 0.0
    %3864 = vmatpush1.msra.mxu0 0.0
    %3865 = vmatprep.subr.mxu0 0.0
    %3866 = vmatpush1.msra.mxu0 0.0
    %3867 = vmatprep.subr.mxu0 0.0
    %3868 = vmatpush1.msra.mxu0 0.0
    %3869 = vmatprep.subr.mxu0 0.0
    %3870 = vmatpush1.msra.mxu0 0.0
    %3871 = vmatprep.mubr.f32.mxu0 0.0
    %3872 = vmatmul.mubr.f32.gmra.mrb[0].mxu0 %v3400
    %v3873 = vpop.f32.mrb[0].mxu0
    %v3874 = vadd.f32 0.0, %v3873
    %v3875 = vpop.f32.mrb[0].mxu0
    %3876 = vdwg.mxu0
    %v3879 = vrot.slane %v3804, 7
    %v3880 = vsel %vm1072, %v3879, %v3731
    %v3881 = vsel %vm210, %v3880, 0
    %3883 = vmatprep.subr.mxu0 0.0
    %3884 = vmatpush1.msra.mxu0 %v199
    %3885 = vmatprep.subr.mxu0 0.0
    %3886 = vmatpush1.msra.mxu0 %v200
    %3887 = vmatprep.subr.mxu0 0.0
    %3888 = vmatpush1.msra.mxu0 %v201
    %3889 = vmatprep.subr.mxu0 0.0
    %3890 = vmatpush1.msra.mxu0 %v202
    %3891 = vmatprep.subr.mxu0 0.0
    %3892 = vmatpush1.msra.mxu0 0.0
    %3893 = vmatprep.subr.mxu0 0.0
    %3894 = vmatpush1.msra.mxu0 0.0
    %3895 = vmatprep.subr.mxu0 0.0
    %3896 = vmatpush1.msra.mxu0 0.0
    %3897 = vmatprep.subr.mxu0 0.0
    %3898 = vmatpush1.msra.mxu0 0.0
    %3899 = vmatprep.subr.mxu0 0.0
    %3900 = vmatpush1.msra.mxu0 0.0
    %3901 = vmatprep.subr.mxu0 0.0
    %3902 = vmatpush1.msra.mxu0 0.0
    %3903 = vmatprep.subr.mxu0 0.0
    %3904 = vmatpush1.msra.mxu0 0.0
    %3905 = vmatprep.subr.mxu0 0.0
    %3906 = vmatpush1.msra.mxu0 0.0
    %3907 = vmatprep.subr.mxu0 0.0
    %3908 = vmatpush1.msra.mxu0 0.0
    %3909 = vmatprep.subr.mxu0 0.0
    %3910 = vmatpush1.msra.mxu0 0.0
    %3911 = vmatprep.subr.mxu0 0.0
    %3912 = vmatpush1.msra.mxu0 0.0
    %3913 = vmatprep.subr.mxu0 0.0
    %3914 = vmatpush1.msra.mxu0 0.0
    %3915 = vmatprep.subr.mxu0 0.0
    %3916 = vmatpush1.msra.mxu0 0.0
    %3917 = vmatprep.subr.mxu0 0.0
    %3918 = vmatpush1.msra.mxu0 0.0
    %3919 = vmatprep.subr.mxu0 0.0
    %3920 = vmatpush1.msra.mxu0 0.0
    %3921 = vmatprep.subr.mxu0 0.0
    %3922 = vmatpush1.msra.mxu0 0.0
    %3923 = vmatprep.subr.mxu0 0.0
    %3924 = vmatpush1.msra.mxu0 0.0
    %3925 = vmatprep.subr.mxu0 0.0
    %3926 = vmatpush1.msra.mxu0 0.0
    %3927 = vmatprep.subr.mxu0 0.0
    %3928 = vmatpush1.msra.mxu0 0.0
    %3929 = vmatprep.subr.mxu0 0.0
    %3930 = vmatpush1.msra.mxu0 0.0
    %3931 = vmatprep.subr.mxu0 0.0
    %3932 = vmatpush1.msra.mxu0 0.0
    %3933 = vmatprep.subr.mxu0 0.0
    %3934 = vmatpush1.msra.mxu0 0.0
    %3935 = vmatprep.subr.mxu0 0.0
    %3936 = vmatpush1.msra.mxu0 0.0
    %3937 = vmatprep.subr.mxu0 0.0
    %3938 = vmatpush1.msra.mxu0 0.0
    %3939 = vmatprep.subr.mxu0 0.0
    %3940 = vmatpush1.msra.mxu0 0.0
    %3941 = vmatprep.subr.mxu0 0.0
    %3942 = vmatpush1.msra.mxu0 0.0
    %3943 = vmatprep.subr.mxu0 0.0
    %3944 = vmatpush1.msra.mxu0 0.0
    %3945 = vmatprep.subr.mxu0 0.0
    %3946 = vmatpush1.msra.mxu0 0.0
    %3947 = vmatprep.mubr.f32.mxu0 0.0
    %3948 = vmatmul.mubr.f32.gmra.mrb[0].mxu0 %v3881
    %v3949 = vpop.f32.mrb[0].mxu0
    %v3950 = vadd.f32 %v3874, %v3949
    %v3951 = vpop.f32.mrb[0].mxu0
    %3952 = vdwg.mxu0
    %v3953 = vtanh.pop %v3950
    %s3954 = scalar_lea.vmem [#allocation18], 6
    %3955 = vst.msk [vmem:[%s3954] sm:$0x3] %vm153, %v3953
    %v3956 = vrot.slane %v3660, 7
    %v3957 = vsel %vm1072, %v3956, %v3659
    %s3959 = scalar_lea.vmem [#allocation19], 6
    %3960 = vst.msk [vmem:[%s3959] sm:$0x3] %vm1151, %v3957
    %s3961 = scalar_lea.vmem [#allocation4], 8
    %v3962 = vld [vmem:[%s3961] sm:$0x3]
    %v3963 = vld [vmem:[#allocation2] sm:$0x3]
    %v3964 = vld [vmem:[#allocation3] sm:$0x3]
    %v3966 = vsel %vm210, %v3963, 0
    %3968 = vmatprep.subr.mxu0 0.0
    %3969 = vmatpush1.msra.mxu0 %v169
    %3970 = vmatprep.subr.mxu0 0.0
    %3971 = vmatpush1.msra.mxu0 %v170
    %3972 = vmatprep.subr.mxu0 0.0
    %3973 = vmatpush1.msra.mxu0 %v171
    %3974 = vmatprep.subr.mxu0 0.0
    %3975 = vmatpush1.msra.mxu0 %v172
    %3976 = vmatprep.subr.mxu0 0.0
    %3977 = vmatpush1.msra.mxu0 0.0
    %3978 = vmatprep.subr.mxu0 0.0
    %3979 = vmatpush1.msra.mxu0 0.0
    %3980 = vmatprep.subr.mxu0 0.0
    %3981 = vmatpush1.msra.mxu0 0.0
    %3982 = vmatprep.subr.mxu0 0.0
    %3983 = vmatpush1.msra.mxu0 0.0
    %3984 = vmatprep.subr.mxu0 0.0
    %3985 = vmatpush1.msra.mxu0 0.0
    %3986 = vmatprep.subr.mxu0 0.0
    %3987 = vmatpush1.msra.mxu0 0.0
    %3988 = vmatprep.subr.mxu0 0.0
    %3989 = vmatpush1.msra.mxu0 0.0
    %3990 = vmatprep.subr.mxu0 0.0
    %3991 = vmatpush1.msra.mxu0 0.0
    %3992 = vmatprep.subr.mxu0 0.0
    %3993 = vmatpush1.msra.mxu0 0.0
    %3994 = vmatprep.subr.mxu0 0.0
    %3995 = vmatpush1.msra.mxu0 0.0
    %3996 = vmatprep.subr.mxu0 0.0
    %3997 = vmatpush1.msra.mxu0 0.0
    %3998 = vmatprep.subr.mxu0 0.0
    %3999 = vmatpush1.msra.mxu0 0.0
    %4000 = vmatprep.subr.mxu0 0.0
    %4001 = vmatpush1.msra.mxu0 0.0
    %4002 = vmatprep.subr.mxu0 0.0
    %4003 = vmatpush1.msra.mxu0 0.0
    %4004 = vmatprep.subr.mxu0 0.0
    %4005 = vmatpush1.msra.mxu0 0.0
    %4006 = vmatprep.subr.mxu0 0.0
    %4007 = vmatpush1.msra.mxu0 0.0
    %4008 = vmatprep.subr.mxu0 0.0
    %4009 = vmatpush1.msra.mxu0 0.0
    %4010 = vmatprep.subr.mxu0 0.0
    %4011 = vmatpush1.msra.mxu0 0.0
    %4012 = vmatprep.subr.mxu0 0.0
    %4013 = vmatpush1.msra.mxu0 0.0
    %4014 = vmatprep.subr.mxu0 0.0
    %4015 = vmatpush1.msra.mxu0 0.0
    %4016 = vmatprep.subr.mxu0 0.0
    %4017 = vmatpush1.msra.mxu0 0.0
    %4018 = vmatprep.subr.mxu0 0.0
    %4019 = vmatpush1.msra.mxu0 0.0
    %4020 = vmatprep.subr.mxu0 0.0
    %4021 = vmatpush1.msra.mxu0 0.0
    %4022 = vmatprep.subr.mxu0 0.0
    %4023 = vmatpush1.msra.mxu0 0.0
    %4024 = vmatprep.subr.mxu0 0.0
    %4025 = vmatpush1.msra.mxu0 0.0
    %4026 = vmatprep.subr.mxu0 0.0
    %4027 = vmatpush1.msra.mxu0 0.0
    %4028 = vmatprep.subr.mxu0 0.0
    %4029 = vmatpush1.msra.mxu0 0.0
    %4030 = vmatprep.subr.mxu0 0.0
    %4031 = vmatpush1.msra.mxu0 0.0
    %4032 = vmatprep.mubr.f32.mxu0 0.0
    %4033 = vmatmul.mubr.f32.gmra.mrb[0].mxu0 %v3966
    %v4034 = vpop.f32.mrb[0].mxu0
    %v4035 = vadd.f32 0.0, %v4034
    %v4036 = vpop.f32.mrb[0].mxu0
    %4037 = vdwg.mxu0
    %v4039 = vsel %vm210, %v3962, 0
    %4041 = vmatprep.subr.mxu0 0.0
    %4042 = vmatpush1.msra.mxu0 %v160
    %4043 = vmatprep.subr.mxu0 0.0
    %4044 = vmatpush1.msra.mxu0 %v161
    %4045 = vmatprep.subr.mxu0 0.0
    %4046 = vmatpush1.msra.mxu0 %v162
    %4047 = vmatprep.subr.mxu0 0.0
    %4048 = vmatpush1.msra.mxu0 %v163
    %4049 = vmatprep.subr.mxu0 0.0
    %4050 = vmatpush1.msra.mxu0 0.0
    %4051 = vmatprep.subr.mxu0 0.0
    %4052 = vmatpush1.msra.mxu0 0.0
    %4053 = vmatprep.subr.mxu0 0.0
    %4054 = vmatpush1.msra.mxu0 0.0
    %4055 = vmatprep.subr.mxu0 0.0
    %4056 = vmatpush1.msra.mxu0 0.0
    %4057 = vmatprep.subr.mxu0 0.0
    %4058 = vmatpush1.msra.mxu0 0.0
    %4059 = vmatprep.subr.mxu0 0.0
    %4060 = vmatpush1.msra.mxu0 0.0
    %4061 = vmatprep.subr.mxu0 0.0
    %4062 = vmatpush1.msra.mxu0 0.0
    %4063 = vmatprep.subr.mxu0 0.0
    %4064 = vmatpush1.msra.mxu0 0.0
    %4065 = vmatprep.subr.mxu0 0.0
    %4066 = vmatpush1.msra.mxu0 0.0
    %4067 = vmatprep.subr.mxu0 0.0
    %4068 = vmatpush1.msra.mxu0 0.0
    %4069 = vmatprep.subr.mxu0 0.0
    %4070 = vmatpush1.msra.mxu0 0.0
    %4071 = vmatprep.subr.mxu0 0.0
    %4072 = vmatpush1.msra.mxu0 0.0
    %4073 = vmatprep.subr.mxu0 0.0
    %4074 = vmatpush1.msra.mxu0 0.0
    %4075 = vmatprep.subr.mxu0 0.0
    %4076 = vmatpush1.msra.mxu0 0.0
    %4077 = vmatprep.subr.mxu0 0.0
    %4078 = vmatpush1.msra.mxu0 0.0
    %4079 = vmatprep.subr.mxu0 0.0
    %4080 = vmatpush1.msra.mxu0 0.0
    %4081 = vmatprep.subr.mxu0 0.0
    %4082 = vmatpush1.msra.mxu0 0.0
    %4083 = vmatprep.subr.mxu0 0.0
    %4084 = vmatpush1.msra.mxu0 0.0
    %4085 = vmatprep.subr.mxu0 0.0
    %4086 = vmatpush1.msra.mxu0 0.0
    %4087 = vmatprep.subr.mxu0 0.0
    %4088 = vmatpush1.msra.mxu0 0.0
    %4089 = vmatprep.subr.mxu0 0.0
    %4090 = vmatpush1.msra.mxu0 0.0
    %4091 = vmatprep.subr.mxu0 0.0
    %4092 = vmatpush1.msra.mxu0 0.0
    %4093 = vmatprep.subr.mxu0 0.0
    %4094 = vmatpush1.msra.mxu0 0.0
    %4095 = vmatprep.subr.mxu0 0.0
    %4096 = vmatpush1.msra.mxu0 0.0
    %4097 = vmatprep.subr.mxu0 0.0
    %4098 = vmatpush1.msra.mxu0 0.0
    %4099 = vmatprep.subr.mxu0 0.0
    %4100 = vmatpush1.msra.mxu0 0.0
    %4101 = vmatprep.subr.mxu0 0.0
    %4102 = vmatpush1.msra.mxu0 0.0
    %4103 = vmatprep.subr.mxu0 0.0
    %4104 = vmatpush1.msra.mxu0 0.0
    %4105 = vmatprep.mubr.f32.mxu0 0.0
    %4106 = vmatmul.mubr.f32.gmra.mrb[0].mxu0 %v4039
    %v4107 = vpop.f32.mrb[0].mxu0
    %v4108 = vadd.f32 %v4035, %v4107
    %v4109 = vpop.f32.mrb[0].mxu0
    %4110 = vdwg.mxu0
    %v4111 = vadd.f32 %v4108, %v183
    %v4112 = vxor.u32 %v4111, 2147483648
    %v4113 = vmul.f32 %v4112, 1.442695
    %v4114 = vpow.pop %v4113
    %v4115 = vadd.f32 %v4114, 1.0
    %v4116 = vrcp.pop %v4115
    %v4117 = vmul.f32 1.0, %v4116
    %v4118 = vtanh.pop %v4111
    %4120 = vrot.lane.b32.xlu0 %v3964, 32
    %v4121 = vpop.permute.xlu0 %4120
    %v4123 = vmul.f32 %v4117, %v4121
    %4125 = vrot.lane.b32.xlu0 %v4118, 32
    %v4126 = vpop.permute.xlu0 %4125
    %v4128 = vmul.f32 %v4117, %v4126
    %4130 = vrot.lane.b32.xlu0 %v4128, 32
    %v4131 = vpop.permute.xlu0 %4130
    %v4133 = vadd.f32 %v4123, %v4131
    %v4134 = vtanh.pop %v4133
    %4136 = vrot.lane.b32.xlu0 %v4134, 32
    %v4137 = vpop.permute.xlu0 %4136
    %v4139 = vmul.f32 %v4117, %v4137
    %4141 = vrot.lane.b32.xlu0 %v4139, 64
    %v4142 = vpop.permute.xlu0 %4141
    %4144 = vst.msk [vmem:[#allocation2] sm:$0x3] %vm153, %v4142
    %4146 = vrot.lane.b32.xlu0 %v4133, 96
    %v4147 = vpop.permute.xlu0 %4146
    %4149 = vst.msk [vmem:[#allocation3] sm:$0x3] %vm153, %v4147
    %v4150 = vld [vmem:[%s396] sm:$0x3]
    %v4151 = vld [vmem:[%s398] sm:$0x3]
    %v4153 = vsel %vm210, %v4150, 0
    %4155 = vmatprep.subr.mxu0 0.0
    %4156 = vmatpush1.msra.mxu0 %v174
    %4157 = vmatprep.subr.mxu0 0.0
    %4158 = vmatpush1.msra.mxu0 %v175
    %4159 = vmatprep.subr.mxu0 0.0
    %4160 = vmatpush1.msra.mxu0 %v176
    %4161 = vmatprep.subr.mxu0 0.0
    %4162 = vmatpush1.msra.mxu0 %v177
    %4163 = vmatprep.subr.mxu0 0.0
    %4164 = vmatpush1.msra.mxu0 0.0
    %4165 = vmatprep.subr.mxu0 0.0
    %4166 = vmatpush1.msra.mxu0 0.0
    %4167 = vmatprep.subr.mxu0 0.0
    %4168 = vmatpush1.msra.mxu0 0.0
    %4169 = vmatprep.subr.mxu0 0.0
    %4170 = vmatpush1.msra.mxu0 0.0
    %4171 = vmatprep.subr.mxu0 0.0
    %4172 = vmatpush1.msra.mxu0 0.0
    %4173 = vmatprep.subr.mxu0 0.0
    %4174 = vmatpush1.msra.mxu0 0.0
    %4175 = vmatprep.subr.mxu0 0.0
    %4176 = vmatpush1.msra.mxu0 0.0
    %4177 = vmatprep.subr.mxu0 0.0
    %4178 = vmatpush1.msra.mxu0 0.0
    %4179 = vmatprep.subr.mxu0 0.0
    %4180 = vmatpush1.msra.mxu0 0.0
    %4181 = vmatprep.subr.mxu0 0.0
    %4182 = vmatpush1.msra.mxu0 0.0
    %4183 = vmatprep.subr.mxu0 0.0
    %4184 = vmatpush1.msra.mxu0 0.0
    %4185 = vmatprep.subr.mxu0 0.0
    %4186 = vmatpush1.msra.mxu0 0.0
    %4187 = vmatprep.subr.mxu0 0.0
    %4188 = vmatpush1.msra.mxu0 0.0
    %4189 = vmatprep.subr.mxu0 0.0
    %4190 = vmatpush1.msra.mxu0 0.0
    %4191 = vmatprep.subr.mxu0 0.0
    %4192 = vmatpush1.msra.mxu0 0.0
    %4193 = vmatprep.subr.mxu0 0.0
    %4194 = vmatpush1.msra.mxu0 0.0
    %4195 = vmatprep.subr.mxu0 0.0
    %4196 = vmatpush1.msra.mxu0 0.0
    %4197 = vmatprep.subr.mxu0 0.0
    %4198 = vmatpush1.msra.mxu0 0.0
    %4199 = vmatprep.subr.mxu0 0.0
    %4200 = vmatpush1.msra.mxu0 0.0
    %4201 = vmatprep.subr.mxu0 0.0
    %4202 = vmatpush1.msra.mxu0 0.0
    %4203 = vmatprep.subr.mxu0 0.0
    %4204 = vmatpush1.msra.mxu0 0.0
    %4205 = vmatprep.subr.mxu0 0.0
    %4206 = vmatpush1.msra.mxu0 0.0
    %4207 = vmatprep.subr.mxu0 0.0
    %4208 = vmatpush1.msra.mxu0 0.0
    %4209 = vmatprep.subr.mxu0 0.0
    %4210 = vmatpush1.msra.mxu0 0.0
    %4211 = vmatprep.subr.mxu0 0.0
    %4212 = vmatpush1.msra.mxu0 0.0
    %4213 = vmatprep.subr.mxu0 0.0
    %4214 = vmatpush1.msra.mxu0 0.0
    %4215 = vmatprep.subr.mxu0 0.0
    %4216 = vmatpush1.msra.mxu0 0.0
    %4217 = vmatprep.subr.mxu0 0.0
    %4218 = vmatpush1.msra.mxu0 0.0
    %4219 = vmatprep.mubr.f32.mxu0 0.0
    %4220 = vmatmul.mubr.f32.gmra.mrb[0].mxu0 %v4153
    %v4221 = vpop.f32.mrb[0].mxu0
    %v4222 = vadd.f32 0.0, %v4221
    %v4223 = vpop.f32.mrb[0].mxu0
    %4224 = vdwg.mxu0
    %v4225 = vsel %vm210, %v4142, 0
    %4227 = vmatprep.subr.mxu0 0.0
    %4228 = vmatpush1.msra.mxu0 %v165
    %4229 = vmatprep.subr.mxu0 0.0
    %4230 = vmatpush1.msra.mxu0 %v166
    %4231 = vmatprep.subr.mxu0 0.0
    %4232 = vmatpush1.msra.mxu0 %v167
    %4233 = vmatprep.subr.mxu0 0.0
    %4234 = vmatpush1.msra.mxu0 %v168
    %4235 = vmatprep.subr.mxu0 0.0
    %4236 = vmatpush1.msra.mxu0 0.0
    %4237 = vmatprep.subr.mxu0 0.0
    %4238 = vmatpush1.msra.mxu0 0.0
    %4239 = vmatprep.subr.mxu0 0.0
    %4240 = vmatpush1.msra.mxu0 0.0
    %4241 = vmatprep.subr.mxu0 0.0
    %4242 = vmatpush1.msra.mxu0 0.0
    %4243 = vmatprep.subr.mxu0 0.0
    %4244 = vmatpush1.msra.mxu0 0.0
    %4245 = vmatprep.subr.mxu0 0.0
    %4246 = vmatpush1.msra.mxu0 0.0
    %4247 = vmatprep.subr.mxu0 0.0
    %4248 = vmatpush1.msra.mxu0 0.0
    %4249 = vmatprep.subr.mxu0 0.0
    %4250 = vmatpush1.msra.mxu0 0.0
    %4251 = vmatprep.subr.mxu0 0.0
    %4252 = vmatpush1.msra.mxu0 0.0
    %4253 = vmatprep.subr.mxu0 0.0
    %4254 = vmatpush1.msra.mxu0 0.0
    %4255 = vmatprep.subr.mxu0 0.0
    %4256 = vmatpush1.msra.mxu0 0.0
    %4257 = vmatprep.subr.mxu0 0.0
    %4258 = vmatpush1.msra.mxu0 0.0
    %4259 = vmatprep.subr.mxu0 0.0
    %4260 = vmatpush1.msra.mxu0 0.0
    %4261 = vmatprep.subr.mxu0 0.0
    %4262 = vmatpush1.msra.mxu0 0.0
    %4263 = vmatprep.subr.mxu0 0.0
    %4264 = vmatpush1.msra.mxu0 0.0
    %4265 = vmatprep.subr.mxu0 0.0
    %4266 = vmatpush1.msra.mxu0 0.0
    %4267 = vmatprep.subr.mxu0 0.0
    %4268 = vmatpush1.msra.mxu0 0.0
    %4269 = vmatprep.subr.mxu0 0.0
    %4270 = vmatpush1.msra.mxu0 0.0
    %4271 = vmatprep.subr.mxu0 0.0
    %4272 = vmatpush1.msra.mxu0 0.0
    %4273 = vmatprep.subr.mxu0 0.0
    %4274 = vmatpush1.msra.mxu0 0.0
    %4275 = vmatprep.subr.mxu0 0.0
    %4276 = vmatpush1.msra.mxu0 0.0
    %4277 = vmatprep.subr.mxu0 0.0
    %4278 = vmatpush1.msra.mxu0 0.0
    %4279 = vmatprep.subr.mxu0 0.0
    %4280 = vmatpush1.msra.mxu0 0.0
    %4281 = vmatprep.subr.mxu0 0.0
    %4282 = vmatpush1.msra.mxu0 0.0
    %4283 = vmatprep.subr.mxu0 0.0
    %4284 = vmatpush1.msra.mxu0 0.0
    %4285 = vmatprep.subr.mxu0 0.0
    %4286 = vmatpush1.msra.mxu0 0.0
    %4287 = vmatprep.subr.mxu0 0.0
    %4288 = vmatpush1.msra.mxu0 0.0
    %4289 = vmatprep.subr.mxu0 0.0
    %4290 = vmatpush1.msra.mxu0 0.0
    %4291 = vmatprep.mubr.f32.mxu0 0.0
    %4292 = vmatmul.mubr.f32.gmra.mrb[0].mxu0 %v4225
    %v4293 = vpop.f32.mrb[0].mxu0
    %v4294 = vadd.f32 %v4222, %v4293
    %v4295 = vpop.f32.mrb[0].mxu0
    %4296 = vdwg.mxu0
    %v4297 = vadd.f32 %v4294, %v191
    %v4298 = vxor.u32 %v4297, 2147483648
    %v4299 = vmul.f32 %v4298, 1.442695
    %v4300 = vpow.pop %v4299
    %v4301 = vadd.f32 %v4300, 1.0
    %v4302 = vrcp.pop %v4301
    %v4303 = vmul.f32 1.0, %v4302
    %v4304 = vtanh.pop %v4297
    %4306 = vrot.lane.b32.xlu0 %v4151, 32
    %v4307 = vpop.permute.xlu0 %4306
    %v4309 = vmul.f32 %v4303, %v4307
    %4311 = vrot.lane.b32.xlu0 %v4304, 32
    %v4312 = vpop.permute.xlu0 %4311
    %v4314 = vmul.f32 %v4303, %v4312
    %4316 = vrot.lane.b32.xlu0 %v4314, 32
    %v4317 = vpop.permute.xlu0 %4316
    %v4319 = vadd.f32 %v4309, %v4317
    %v4320 = vtanh.pop %v4319
    %4322 = vrot.lane.b32.xlu0 %v4320, 32
    %v4323 = vpop.permute.xlu0 %4322
    %v4325 = vmul.f32 %v4303, %v4323
    %4327 = vrot.lane.b32.xlu0 %v4325, 64
    %v4328 = vpop.permute.xlu0 %4327
    %4330 = vst.msk [vmem:[%s396] sm:$0x3] %vm153, %v4328
    %4332 = vrot.lane.b32.xlu0 %v4319, 96
    %v4333 = vpop.permute.xlu0 %4332
    %4335 = vst.msk [vmem:[%s398] sm:$0x3] %vm153, %v4333
    %v4336 = vsel %vm210, %v4328, 0
    %4338 = vmatprep.subr.mxu0 0.0
    %4339 = vmatpush1.msra.mxu0 %v195
    %4340 = vmatprep.subr.mxu0 0.0
    %4341 = vmatpush1.msra.mxu0 %v196
    %4342 = vmatprep.subr.mxu0 0.0
    %4343 = vmatpush1.msra.mxu0 %v197
    %4344 = vmatprep.subr.mxu0 0.0
    %4345 = vmatpush1.msra.mxu0 %v198
    %4346 = vmatprep.subr.mxu0 0.0
    %4347 = vmatpush1.msra.mxu0 0.0
    %4348 = vmatprep.subr.mxu0 0.0
    %4349 = vmatpush1.msra.mxu0 0.0
    %4350 = vmatprep.subr.mxu0 0.0
    %4351 = vmatpush1.msra.mxu0 0.0
    %4352 = vmatprep.subr.mxu0 0.0
    %4353 = vmatpush1.msra.mxu0 0.0
    %4354 = vmatprep.subr.mxu0 0.0
    %4355 = vmatpush1.msra.mxu0 0.0
    %4356 = vmatprep.subr.mxu0 0.0
    %4357 = vmatpush1.msra.mxu0 0.0
    %4358 = vmatprep.subr.mxu0 0.0
    %4359 = vmatpush1.msra.mxu0 0.0
    %4360 = vmatprep.subr.mxu0 0.0
    %4361 = vmatpush1.msra.mxu0 0.0
    %4362 = vmatprep.subr.mxu0 0.0
    %4363 = vmatpush1.msra.mxu0 0.0
    %4364 = vmatprep.subr.mxu0 0.0
    %4365 = vmatpush1.msra.mxu0 0.0
    %4366 = vmatprep.subr.mxu0 0.0
    %4367 = vmatpush1.msra.mxu0 0.0
    %4368 = vmatprep.subr.mxu0 0.0
    %4369 = vmatpush1.msra.mxu0 0.0
    %4370 = vmatprep.subr.mxu0 0.0
    %4371 = vmatpush1.msra.mxu0 0.0
    %4372 = vmatprep.subr.mxu0 0.0
    %4373 = vmatpush1.msra.mxu0 0.0
    %4374 = vmatprep.subr.mxu0 0.0
    %4375 = vmatpush1.msra.mxu0 0.0
    %4376 = vmatprep.subr.mxu0 0.0
    %4377 = vmatpush1.msra.mxu0 0.0
    %4378 = vmatprep.subr.mxu0 0.0
    %4379 = vmatpush1.msra.mxu0 0.0
    %4380 = vmatprep.subr.mxu0 0.0
    %4381 = vmatpush1.msra.mxu0 0.0
    %4382 = vmatprep.subr.mxu0 0.0
    %4383 = vmatpush1.msra.mxu0 0.0
    %4384 = vmatprep.subr.mxu0 0.0
    %4385 = vmatpush1.msra.mxu0 0.0
    %4386 = vmatprep.subr.mxu0 0.0
    %4387 = vmatpush1.msra.mxu0 0.0
    %4388 = vmatprep.subr.mxu0 0.0
    %4389 = vmatpush1.msra.mxu0 0.0
    %4390 = vmatprep.subr.mxu0 0.0
    %4391 = vmatpush1.msra.mxu0 0.0
    %4392 = vmatprep.subr.mxu0 0.0
    %4393 = vmatpush1.msra.mxu0 0.0
    %4394 = vmatprep.subr.mxu0 0.0
    %4395 = vmatpush1.msra.mxu0 0.0
    %4396 = vmatprep.subr.mxu0 0.0
    %4397 = vmatpush1.msra.mxu0 0.0
    %4398 = vmatprep.subr.mxu0 0.0
    %4399 = vmatpush1.msra.mxu0 0.0
    %4400 = vmatprep.subr.mxu0 0.0
    %4401 = vmatpush1.msra.mxu0 0.0
    %4402 = vmatprep.mubr.f32.mxu0 0.0
    %4403 = vmatmul.mubr.f32.gmra.mrb[0].mxu0 %v4336
    %v4404 = vpop.f32.mrb[0].mxu0
    %v4405 = vadd.f32 0.0, %v4404
    %v4406 = vpop.f32.mrb[0].mxu0
    %4407 = vdwg.mxu0
    %v4410 = vunpack.c.l.s4 1966171168
    %v4411 = vunpack.c.0.s8 %v4410
    %v4412 = vlaneseq
    %v4413 = vshrl.u32 %v4412, 7
    %v4414 = vsub.s32 %v4411, %v4413
    %v4415 = vrot.slane %v4405, %v4414
    %v4416 = vcombine.high %v4415, %v4415
    %v4418 = vunpack.c.l.s4 1966171168
    %v4419 = vunpack.c.0.s8 %v4418
    %v4420 = vlaneseq
    %v4421 = vshrl.u32 %v4420, 7
    %v4422 = vsub.s32 %v4419, %v4421
    %v4423 = vrot.slane %v4415, %v4422
    %v4425 = vunpack.c.l.s4 1966171168
    %v4426 = vunpack.c.0.s8 %v4425
    %v4427 = vlaneseq
    %v4428 = vshrl.u32 %v4427, 7
    %v4429 = vsub.s32 %v4426, %v4428
    %v4430 = vrot.slane %v4416, %v4429
    %v4431 = vsel %vm210, %v4423, 0
    %4433 = vmatprep.subr.mxu0 0.0
    %4434 = vmatpush1.xpose.msra.mxu0 %v682
    %4435 = vmatprep.subr.mxu0 0.0
    %4436 = vmatpush1.xpose.msra.mxu0 0.0
    %4437 = vmatprep.subr.mxu0 0.0
    %4438 = vmatpush1.xpose.msra.mxu0 0.0
    %4439 = vmatprep.subr.mxu0 0.0
    %4440 = vmatpush1.xpose.msra.mxu0 0.0
    %4441 = vmatprep.subr.mxu0 0.0
    %4442 = vmatpush1.xpose.msra.mxu0 0.0
    %4443 = vmatprep.subr.mxu0 0.0
    %4444 = vmatpush1.xpose.msra.mxu0 0.0
    %4445 = vmatprep.subr.mxu0 0.0
    %4446 = vmatpush1.xpose.msra.mxu0 0.0
    %4447 = vmatprep.subr.mxu0 0.0
    %4448 = vmatpush1.xpose.msra.mxu0 0.0
    %4449 = vmatprep.subr.mxu0 0.0
    %4450 = vmatpush1.xpose.msra.mxu0 0.0
    %4451 = vmatprep.subr.mxu0 0.0
    %4452 = vmatpush1.xpose.msra.mxu0 0.0
    %4453 = vmatprep.subr.mxu0 0.0
    %4454 = vmatpush1.xpose.msra.mxu0 0.0
    %4455 = vmatprep.subr.mxu0 0.0
    %4456 = vmatpush1.xpose.msra.mxu0 0.0
    %4457 = vmatprep.subr.mxu0 0.0
    %4458 = vmatpush1.xpose.msra.mxu0 0.0
    %4459 = vmatprep.subr.mxu0 0.0
    %4460 = vmatpush1.xpose.msra.mxu0 0.0
    %4461 = vmatprep.subr.mxu0 0.0
    %4462 = vmatpush1.xpose.msra.mxu0 0.0
    %4463 = vmatprep.subr.mxu0 0.0
    %4464 = vmatpush1.xpose.msra.mxu0 0.0
    %4465 = vmatprep.subr.mxu0 0.0
    %4466 = vmatpush1.xpose.msra.mxu0 0.0
    %4467 = vmatprep.subr.mxu0 0.0
    %4468 = vmatpush1.xpose.msra.mxu0 0.0
    %4469 = vmatprep.subr.mxu0 0.0
    %4470 = vmatpush1.xpose.msra.mxu0 0.0
    %4471 = vmatprep.subr.mxu0 0.0
    %4472 = vmatpush1.xpose.msra.mxu0 0.0
    %4473 = vmatprep.subr.mxu0 0.0
    %4474 = vmatpush1.xpose.msra.mxu0 0.0
    %4475 = vmatprep.subr.mxu0 0.0
    %4476 = vmatpush1.xpose.msra.mxu0 0.0
    %4477 = vmatprep.subr.mxu0 0.0
    %4478 = vmatpush1.xpose.msra.mxu0 0.0
    %4479 = vmatprep.subr.mxu0 0.0
    %4480 = vmatpush1.xpose.msra.mxu0 0.0
    %4481 = vmatprep.subr.mxu0 0.0
    %4482 = vmatpush1.xpose.msra.mxu0 0.0
    %4483 = vmatprep.subr.mxu0 0.0
    %4484 = vmatpush1.xpose.msra.mxu0 0.0
    %4485 = vmatprep.subr.mxu0 0.0
    %4486 = vmatpush1.xpose.msra.mxu0 0.0
    %4487 = vmatprep.subr.mxu0 0.0
    %4488 = vmatpush1.xpose.msra.mxu0 0.0
    %4489 = vmatprep.subr.mxu0 0.0
    %4490 = vmatpush1.xpose.msra.mxu0 0.0
    %4491 = vmatprep.subr.mxu0 0.0
    %4492 = vmatpush1.xpose.msra.mxu0 0.0
    %4493 = vmatprep.subr.mxu0 0.0
    %4494 = vmatpush1.xpose.msra.mxu0 0.0
    %4495 = vmatprep.subr.mxu0 0.0
    %4496 = vmatpush1.xpose.msra.mxu0 0.0
    %4497 = vmatprep.mubr.f32.mxu0 0.0
    %4498 = vmatmul.mubr.f32.gmra.mrb[0].mxu0 %v4431
    %v4499 = vpop.f32.mrb[0].mxu0
    %v4500 = vadd.f32 0.0, %v4499
    %v4501 = vpop.f32.mrb[0].mxu0
    %4502 = vdwg.mxu0
    %v4503 = vsel %vm210, %v4430, 0
    %4505 = vmatprep.subr.mxu0 0.0
    %4506 = vmatpush1.xpose.msra.mxu0 %v757
    %4507 = vmatprep.subr.mxu0 0.0
    %4508 = vmatpush1.xpose.msra.mxu0 0.0
    %4509 = vmatprep.subr.mxu0 0.0
    %4510 = vmatpush1.xpose.msra.mxu0 0.0
    %4511 = vmatprep.subr.mxu0 0.0
    %4512 = vmatpush1.xpose.msra.mxu0 0.0
    %4513 = vmatprep.subr.mxu0 0.0
    %4514 = vmatpush1.xpose.msra.mxu0 0.0
    %4515 = vmatprep.subr.mxu0 0.0
    %4516 = vmatpush1.xpose.msra.mxu0 0.0
    %4517 = vmatprep.subr.mxu0 0.0
    %4518 = vmatpush1.xpose.msra.mxu0 0.0
    %4519 = vmatprep.subr.mxu0 0.0
    %4520 = vmatpush1.xpose.msra.mxu0 0.0
    %4521 = vmatprep.subr.mxu0 0.0
    %4522 = vmatpush1.xpose.msra.mxu0 0.0
    %4523 = vmatprep.subr.mxu0 0.0
    %4524 = vmatpush1.xpose.msra.mxu0 0.0
    %4525 = vmatprep.subr.mxu0 0.0
    %4526 = vmatpush1.xpose.msra.mxu0 0.0
    %4527 = vmatprep.subr.mxu0 0.0
    %4528 = vmatpush1.xpose.msra.mxu0 0.0
    %4529 = vmatprep.subr.mxu0 0.0
    %4530 = vmatpush1.xpose.msra.mxu0 0.0
    %4531 = vmatprep.subr.mxu0 0.0
    %4532 = vmatpush1.xpose.msra.mxu0 0.0
    %4533 = vmatprep.subr.mxu0 0.0
    %4534 = vmatpush1.xpose.msra.mxu0 0.0
    %4535 = vmatprep.subr.mxu0 0.0
    %4536 = vmatpush1.xpose.msra.mxu0 0.0
    %4537 = vmatprep.subr.mxu0 0.0
    %4538 = vmatpush1.xpose.msra.mxu0 0.0
    %4539 = vmatprep.subr.mxu0 0.0
    %4540 = vmatpush1.xpose.msra.mxu0 0.0
    %4541 = vmatprep.subr.mxu0 0.0
    %4542 = vmatpush1.xpose.msra.mxu0 0.0
    %4543 = vmatprep.subr.mxu0 0.0
    %4544 = vmatpush1.xpose.msra.mxu0 0.0
    %4545 = vmatprep.subr.mxu0 0.0
    %4546 = vmatpush1.xpose.msra.mxu0 0.0
    %4547 = vmatprep.subr.mxu0 0.0
    %4548 = vmatpush1.xpose.msra.mxu0 0.0
    %4549 = vmatprep.subr.mxu0 0.0
    %4550 = vmatpush1.xpose.msra.mxu0 0.0
    %4551 = vmatprep.subr.mxu0 0.0
    %4552 = vmatpush1.xpose.msra.mxu0 0.0
    %4553 = vmatprep.subr.mxu0 0.0
    %4554 = vmatpush1.xpose.msra.mxu0 0.0
    %4555 = vmatprep.subr.mxu0 0.0
    %4556 = vmatpush1.xpose.msra.mxu0 0.0
    %4557 = vmatprep.subr.mxu0 0.0
    %4558 = vmatpush1.xpose.msra.mxu0 0.0
    %4559 = vmatprep.subr.mxu0 0.0
    %4560 = vmatpush1.xpose.msra.mxu0 0.0
    %4561 = vmatprep.subr.mxu0 0.0
    %4562 = vmatpush1.xpose.msra.mxu0 0.0
    %4563 = vmatprep.subr.mxu0 0.0
    %4564 = vmatpush1.xpose.msra.mxu0 0.0
    %4565 = vmatprep.subr.mxu0 0.0
    %4566 = vmatpush1.xpose.msra.mxu0 0.0
    %4567 = vmatprep.subr.mxu0 0.0
    %4568 = vmatpush1.xpose.msra.mxu0 0.0
    %4569 = vmatprep.mubr.f32.mxu0 0.0
    %4570 = vmatmul.mubr.f32.gmra.mrb[0].mxu0 %v4503
    %v4571 = vpop.f32.mrb[0].mxu0
    %v4572 = vadd.f32 0.0, %v4571
    %v4573 = vpop.f32.mrb[0].mxu0
    %4574 = vdwg.mxu0
    %v4575 = vsel %vm829, %v4500, -inf
    %4576 = vmax.xlane.f32.xlu0 %v4575
    %v4577 = vpop.xlane.xlu0 %4576
    %v4578 = vsel %vm829, %v4572, -inf
    %4579 = vmax.xlane.f32.xlu0 %v4578
    %v4580 = vpop.xlane.xlu0 %4579
    %v4581 = vsub.f32 %v4500, %v4577
    %v4582 = vsub.f32 %v4572, %v4580
    %v4583 = vmul.f32 %v4581, 1.442695
    %v4584 = vpow.pop %v4583
    %v4585 = vmul.f32 %v4582, 1.442695
    %v4586 = vpow.pop %v4585
    %v4587 = vsel %vm829, %v4584, 0.0
    %4588 = vadd.xlane.f32.xlu0 %v4587
    %v4589 = vpop.xlane.xlu0 %4588
    %v4590 = vsel %vm829, %v4586, 0.0
    %4591 = vadd.xlane.f32.xlu0 %v4590
    %v4592 = vpop.xlane.xlu0 %4591
    %v4593 = vrcp.pop %v4589
    %v4594 = vrcp.pop %v4592
    %v4595 = vmul.f32 %v4584, %v4593
    %v4596 = vmul.f32 %v4586, %v4594
    %v4598 = vsel %vm852, %v4595, 0
    %4600 = vmatprep.subr.mxu0 0.0
    %4601 = vmatpush1.msra.mxu0 %v193
    %4602 = vmatprep.subr.mxu0 0.0
    %4603 = vmatpush1.msra.mxu0 0.0
    %4604 = vmatprep.subr.mxu0 0.0
    %4605 = vmatpush1.msra.mxu0 0.0
    %4606 = vmatprep.subr.mxu0 0.0
    %4607 = vmatpush1.msra.mxu0 0.0
    %4608 = vmatprep.subr.mxu0 0.0
    %4609 = vmatpush1.msra.mxu0 0.0
    %4610 = vmatprep.subr.mxu0 0.0
    %4611 = vmatpush1.msra.mxu0 0.0
    %4612 = vmatprep.subr.mxu0 0.0
    %4613 = vmatpush1.msra.mxu0 0.0
    %4614 = vmatprep.subr.mxu0 0.0
    %4615 = vmatpush1.msra.mxu0 0.0
    %4616 = vmatprep.subr.mxu0 0.0
    %4617 = vmatpush1.msra.mxu0 0.0
    %4618 = vmatprep.subr.mxu0 0.0
    %4619 = vmatpush1.msra.mxu0 0.0
    %4620 = vmatprep.subr.mxu0 0.0
    %4621 = vmatpush1.msra.mxu0 0.0
    %4622 = vmatprep.subr.mxu0 0.0
    %4623 = vmatpush1.msra.mxu0 0.0
    %4624 = vmatprep.subr.mxu0 0.0
    %4625 = vmatpush1.msra.mxu0 0.0
    %4626 = vmatprep.subr.mxu0 0.0
    %4627 = vmatpush1.msra.mxu0 0.0
    %4628 = vmatprep.subr.mxu0 0.0
    %4629 = vmatpush1.msra.mxu0 0.0
    %4630 = vmatprep.subr.mxu0 0.0
    %4631 = vmatpush1.msra.mxu0 0.0
    %4632 = vmatprep.subr.mxu0 0.0
    %4633 = vmatpush1.msra.mxu0 0.0
    %4634 = vmatprep.subr.mxu0 0.0
    %4635 = vmatpush1.msra.mxu0 0.0
    %4636 = vmatprep.subr.mxu0 0.0
    %4637 = vmatpush1.msra.mxu0 0.0
    %4638 = vmatprep.subr.mxu0 0.0
    %4639 = vmatpush1.msra.mxu0 0.0
    %4640 = vmatprep.subr.mxu0 0.0
    %4641 = vmatpush1.msra.mxu0 0.0
    %4642 = vmatprep.subr.mxu0 0.0
    %4643 = vmatpush1.msra.mxu0 0.0
    %4644 = vmatprep.subr.mxu0 0.0
    %4645 = vmatpush1.msra.mxu0 0.0
    %4646 = vmatprep.subr.mxu0 0.0
    %4647 = vmatpush1.msra.mxu0 0.0
    %4648 = vmatprep.subr.mxu0 0.0
    %4649 = vmatpush1.msra.mxu0 0.0
    %4650 = vmatprep.subr.mxu0 0.0
    %4651 = vmatpush1.msra.mxu0 0.0
    %4652 = vmatprep.subr.mxu0 0.0
    %4653 = vmatpush1.msra.mxu0 0.0
    %4654 = vmatprep.subr.mxu0 0.0
    %4655 = vmatpush1.msra.mxu0 0.0
    %4656 = vmatprep.subr.mxu0 0.0
    %4657 = vmatpush1.msra.mxu0 0.0
    %4658 = vmatprep.subr.mxu0 0.0
    %4659 = vmatpush1.msra.mxu0 0.0
    %4660 = vmatprep.subr.mxu0 0.0
    %4661 = vmatpush1.msra.mxu0 0.0
    %4662 = vmatprep.subr.mxu0 0.0
    %4663 = vmatpush1.msra.mxu0 0.0
    %4664 = vmatprep.mubr.f32.mxu0 0.0
    %4665 = vmatmul.mubr.f32.gmra.mrb[0].mxu0 %v4598
    %v4666 = vpop.f32.mrb[0].mxu0
    %v4667 = vadd.f32 0.0, %v4666
    %v4668 = vpop.f32.mrb[0].mxu0
    %4669 = vdwg.mxu0
    %v4671 = vsel %vm852, %v4596, 0
    %4673 = vmatprep.subr.mxu0 0.0
    %4674 = vmatpush1.msra.mxu0 %v194
    %4675 = vmatprep.subr.mxu0 0.0
    %4676 = vmatpush1.msra.mxu0 0.0
    %4677 = vmatprep.subr.mxu0 0.0
    %4678 = vmatpush1.msra.mxu0 0.0
    %4679 = vmatprep.subr.mxu0 0.0
    %4680 = vmatpush1.msra.mxu0 0.0
    %4681 = vmatprep.subr.mxu0 0.0
    %4682 = vmatpush1.msra.mxu0 0.0
    %4683 = vmatprep.subr.mxu0 0.0
    %4684 = vmatpush1.msra.mxu0 0.0
    %4685 = vmatprep.subr.mxu0 0.0
    %4686 = vmatpush1.msra.mxu0 0.0
    %4687 = vmatprep.subr.mxu0 0.0
    %4688 = vmatpush1.msra.mxu0 0.0
    %4689 = vmatprep.subr.mxu0 0.0
    %4690 = vmatpush1.msra.mxu0 0.0
    %4691 = vmatprep.subr.mxu0 0.0
    %4692 = vmatpush1.msra.mxu0 0.0
    %4693 = vmatprep.subr.mxu0 0.0
    %4694 = vmatpush1.msra.mxu0 0.0
    %4695 = vmatprep.subr.mxu0 0.0
    %4696 = vmatpush1.msra.mxu0 0.0
    %4697 = vmatprep.subr.mxu0 0.0
    %4698 = vmatpush1.msra.mxu0 0.0
    %4699 = vmatprep.subr.mxu0 0.0
    %4700 = vmatpush1.msra.mxu0 0.0
    %4701 = vmatprep.subr.mxu0 0.0
    %4702 = vmatpush1.msra.mxu0 0.0
    %4703 = vmatprep.subr.mxu0 0.0
    %4704 = vmatpush1.msra.mxu0 0.0
    %4705 = vmatprep.subr.mxu0 0.0
    %4706 = vmatpush1.msra.mxu0 0.0
    %4707 = vmatprep.subr.mxu0 0.0
    %4708 = vmatpush1.msra.mxu0 0.0
    %4709 = vmatprep.subr.mxu0 0.0
    %4710 = vmatpush1.msra.mxu0 0.0
    %4711 = vmatprep.subr.mxu0 0.0
    %4712 = vmatpush1.msra.mxu0 0.0
    %4713 = vmatprep.subr.mxu0 0.0
    %4714 = vmatpush1.msra.mxu0 0.0
    %4715 = vmatprep.subr.mxu0 0.0
    %4716 = vmatpush1.msra.mxu0 0.0
    %4717 = vmatprep.subr.mxu0 0.0
    %4718 = vmatpush1.msra.mxu0 0.0
    %4719 = vmatprep.subr.mxu0 0.0
    %4720 = vmatpush1.msra.mxu0 0.0
    %4721 = vmatprep.subr.mxu0 0.0
    %4722 = vmatpush1.msra.mxu0 0.0
    %4723 = vmatprep.subr.mxu0 0.0
    %4724 = vmatpush1.msra.mxu0 0.0
    %4725 = vmatprep.subr.mxu0 0.0
    %4726 = vmatpush1.msra.mxu0 0.0
    %4727 = vmatprep.subr.mxu0 0.0
    %4728 = vmatpush1.msra.mxu0 0.0
    %4729 = vmatprep.subr.mxu0 0.0
    %4730 = vmatpush1.msra.mxu0 0.0
    %4731 = vmatprep.subr.mxu0 0.0
    %4732 = vmatpush1.msra.mxu0 0.0
    %4733 = vmatprep.subr.mxu0 0.0
    %4734 = vmatpush1.msra.mxu0 0.0
    %4735 = vmatprep.subr.mxu0 0.0
    %4736 = vmatpush1.msra.mxu0 0.0
    %4737 = vmatprep.mubr.f32.mxu0 0.0
    %4738 = vmatmul.mubr.f32.gmra.mrb[0].mxu0 %v4671
    %v4739 = vpop.f32.mrb[0].mxu0
    %v4740 = vadd.f32 0.0, %v4739
    %v4741 = vpop.f32.mrb[0].mxu0
    %4742 = vdwg.mxu0
    %4743 = vmatprep.subr.mxu0 0.0
    %4744 = vmatpush1.msra.mxu0 %v203
    %4745 = vmatprep.subr.mxu0 0.0
    %4746 = vmatpush1.msra.mxu0 %v204
    %4747 = vmatprep.subr.mxu0 0.0
    %4748 = vmatpush1.msra.mxu0 %v205
    %4749 = vmatprep.subr.mxu0 0.0
    %4750 = vmatpush1.msra.mxu0 %v206
    %4751 = vmatprep.subr.mxu0 0.0
    %4752 = vmatpush1.msra.mxu0 0.0
    %4753 = vmatprep.subr.mxu0 0.0
    %4754 = vmatpush1.msra.mxu0 0.0
    %4755 = vmatprep.subr.mxu0 0.0
    %4756 = vmatpush1.msra.mxu0 0.0
    %4757 = vmatprep.subr.mxu0 0.0
    %4758 = vmatpush1.msra.mxu0 0.0
    %4759 = vmatprep.subr.mxu0 0.0
    %4760 = vmatpush1.msra.mxu0 0.0
    %4761 = vmatprep.subr.mxu0 0.0
    %4762 = vmatpush1.msra.mxu0 0.0
    %4763 = vmatprep.subr.mxu0 0.0
    %4764 = vmatpush1.msra.mxu0 0.0
    %4765 = vmatprep.subr.mxu0 0.0
    %4766 = vmatpush1.msra.mxu0 0.0
    %4767 = vmatprep.subr.mxu0 0.0
    %4768 = vmatpush1.msra.mxu0 0.0
    %4769 = vmatprep.subr.mxu0 0.0
    %4770 = vmatpush1.msra.mxu0 0.0
    %4771 = vmatprep.subr.mxu0 0.0
    %4772 = vmatpush1.msra.mxu0 0.0
    %4773 = vmatprep.subr.mxu0 0.0
    %4774 = vmatpush1.msra.mxu0 0.0
    %4775 = vmatprep.subr.mxu0 0.0
    %4776 = vmatpush1.msra.mxu0 0.0
    %4777 = vmatprep.subr.mxu0 0.0
    %4778 = vmatpush1.msra.mxu0 0.0
    %4779 = vmatprep.subr.mxu0 0.0
    %4780 = vmatpush1.msra.mxu0 0.0
    %4781 = vmatprep.subr.mxu0 0.0
    %4782 = vmatpush1.msra.mxu0 0.0
    %4783 = vmatprep.subr.mxu0 0.0
    %4784 = vmatpush1.msra.mxu0 0.0
    %4785 = vmatprep.subr.mxu0 0.0
    %4786 = vmatpush1.msra.mxu0 0.0
    %4787 = vmatprep.subr.mxu0 0.0
    %4788 = vmatpush1.msra.mxu0 0.0
    %4789 = vmatprep.subr.mxu0 0.0
    %4790 = vmatpush1.msra.mxu0 0.0
    %4791 = vmatprep.subr.mxu0 0.0
    %4792 = vmatpush1.msra.mxu0 0.0
    %4793 = vmatprep.subr.mxu0 0.0
    %4794 = vmatpush1.msra.mxu0 0.0
    %4795 = vmatprep.subr.mxu0 0.0
    %4796 = vmatpush1.msra.mxu0 0.0
    %4797 = vmatprep.subr.mxu0 0.0
    %4798 = vmatpush1.msra.mxu0 0.0
    %4799 = vmatprep.subr.mxu0 0.0
    %4800 = vmatpush1.msra.mxu0 0.0
    %4801 = vmatprep.subr.mxu0 0.0
    %4802 = vmatpush1.msra.mxu0 0.0
    %4803 = vmatprep.subr.mxu0 0.0
    %4804 = vmatpush1.msra.mxu0 0.0
    %4805 = vmatprep.subr.mxu0 0.0
    %4806 = vmatpush1.msra.mxu0 0.0
    %4807 = vmatprep.mubr.f32.mxu0 0.0
    %4808 = vmatmul.mubr.f32.gmra.mrb[0].mxu0 %v4336
    %v4809 = vpop.f32.mrb[0].mxu0
    %v4810 = vadd.f32 0.0, %v4809
    %v4811 = vpop.f32.mrb[0].mxu0
    %4812 = vdwg.mxu0
    %v4815 = vrot.slane %v4740, 7
    %v4816 = vsel %vm1072, %v4815, %v4667
    %v4817 = vsel %vm210, %v4816, 0
    %4819 = vmatprep.subr.mxu0 0.0
    %4820 = vmatpush1.msra.mxu0 %v199
    %4821 = vmatprep.subr.mxu0 0.0
    %4822 = vmatpush1.msra.mxu0 %v200
    %4823 = vmatprep.subr.mxu0 0.0
    %4824 = vmatpush1.msra.mxu0 %v201
    %4825 = vmatprep.subr.mxu0 0.0
    %4826 = vmatpush1.msra.mxu0 %v202
    %4827 = vmatprep.subr.mxu0 0.0
    %4828 = vmatpush1.msra.mxu0 0.0
    %4829 = vmatprep.subr.mxu0 0.0
    %4830 = vmatpush1.msra.mxu0 0.0
    %4831 = vmatprep.subr.mxu0 0.0
    %4832 = vmatpush1.msra.mxu0 0.0
    %4833 = vmatprep.subr.mxu0 0.0
    %4834 = vmatpush1.msra.mxu0 0.0
    %4835 = vmatprep.subr.mxu0 0.0
    %4836 = vmatpush1.msra.mxu0 0.0
    %4837 = vmatprep.subr.mxu0 0.0
    %4838 = vmatpush1.msra.mxu0 0.0
    %4839 = vmatprep.subr.mxu0 0.0
    %4840 = vmatpush1.msra.mxu0 0.0
    %4841 = vmatprep.subr.mxu0 0.0
    %4842 = vmatpush1.msra.mxu0 0.0
    %4843 = vmatprep.subr.mxu0 0.0
    %4844 = vmatpush1.msra.mxu0 0.0
    %4845 = vmatprep.subr.mxu0 0.0
    %4846 = vmatpush1.msra.mxu0 0.0
    %4847 = vmatprep.subr.mxu0 0.0
    %4848 = vmatpush1.msra.mxu0 0.0
    %4849 = vmatprep.subr.mxu0 0.0
    %4850 = vmatpush1.msra.mxu0 0.0
    %4851 = vmatprep.subr.mxu0 0.0
    %4852 = vmatpush1.msra.mxu0 0.0
    %4853 = vmatprep.subr.mxu0 0.0
    %4854 = vmatpush1.msra.mxu0 0.0
    %4855 = vmatprep.subr.mxu0 0.0
    %4856 = vmatpush1.msra.mxu0 0.0
    %4857 = vmatprep.subr.mxu0 0.0
    %4858 = vmatpush1.msra.mxu0 0.0
    %4859 = vmatprep.subr.mxu0 0.0
    %4860 = vmatpush1.msra.mxu0 0.0
    %4861 = vmatprep.subr.mxu0 0.0
    %4862 = vmatpush1.msra.mxu0 0.0
    %4863 = vmatprep.subr.mxu0 0.0
    %4864 = vmatpush1.msra.mxu0 0.0
    %4865 = vmatprep.subr.mxu0 0.0
    %4866 = vmatpush1.msra.mxu0 0.0
    %4867 = vmatprep.subr.mxu0 0.0
    %4868 = vmatpush1.msra.mxu0 0.0
    %4869 = vmatprep.subr.mxu0 0.0
    %4870 = vmatpush1.msra.mxu0 0.0
    %4871 = vmatprep.subr.mxu0 0.0
    %4872 = vmatpush1.msra.mxu0 0.0
    %4873 = vmatprep.subr.mxu0 0.0
    %4874 = vmatpush1.msra.mxu0 0.0
    %4875 = vmatprep.subr.mxu0 0.0
    %4876 = vmatpush1.msra.mxu0 0.0
    %4877 = vmatprep.subr.mxu0 0.0
    %4878 = vmatpush1.msra.mxu0 0.0
    %4879 = vmatprep.subr.mxu0 0.0
    %4880 = vmatpush1.msra.mxu0 0.0
    %4881 = vmatprep.subr.mxu0 0.0
    %4882 = vmatpush1.msra.mxu0 0.0
    %4883 = vmatprep.mubr.f32.mxu0 0.0
    %4884 = vmatmul.mubr.f32.gmra.mrb[0].mxu0 %v4817
    %v4885 = vpop.f32.mrb[0].mxu0
    %v4886 = vadd.f32 %v4810, %v4885
    %v4887 = vpop.f32.mrb[0].mxu0
    %4888 = vdwg.mxu0
    %v4889 = vtanh.pop %v4886
    %s4890 = scalar_lea.vmem [#allocation18], 8
    %4891 = vst.msk [vmem:[%s4890] sm:$0x3] %vm153, %v4889
    %v4892 = vrot.slane %v4596, 7
    %v4893 = vsel %vm1072, %v4892, %v4595
    %s4895 = scalar_lea.vmem [#allocation19], 8
    %4896 = vst.msk [vmem:[%s4895] sm:$0x3] %vm1151, %v4893
    %s4897 = scalar_lea.vmem [#allocation4], 10
    %v4898 = vld [vmem:[%s4897] sm:$0x3]
    %v4899 = vld [vmem:[#allocation2] sm:$0x3]
    %v4900 = vld [vmem:[#allocation3] sm:$0x3]
    %v4902 = vsel %vm210, %v4899, 0
    %4904 = vmatprep.subr.mxu0 0.0
    %4905 = vmatpush1.msra.mxu0 %v169
    %4906 = vmatprep.subr.mxu0 0.0
    %4907 = vmatpush1.msra.mxu0 %v170
    %4908 = vmatprep.subr.mxu0 0.0
    %4909 = vmatpush1.msra.mxu0 %v171
    %4910 = vmatprep.subr.mxu0 0.0
    %4911 = vmatpush1.msra.mxu0 %v172
    %4912 = vmatprep.subr.mxu0 0.0
    %4913 = vmatpush1.msra.mxu0 0.0
    %4914 = vmatprep.subr.mxu0 0.0
    %4915 = vmatpush1.msra.mxu0 0.0
    %4916 = vmatprep.subr.mxu0 0.0
    %4917 = vmatpush1.msra.mxu0 0.0
    %4918 = vmatprep.subr.mxu0 0.0
    %4919 = vmatpush1.msra.mxu0 0.0
    %4920 = vmatprep.subr.mxu0 0.0
    %4921 = vmatpush1.msra.mxu0 0.0
    %4922 = vmatprep.subr.mxu0 0.0
    %4923 = vmatpush1.msra.mxu0 0.0
    %4924 = vmatprep.subr.mxu0 0.0
    %4925 = vmatpush1.msra.mxu0 0.0
    %4926 = vmatprep.subr.mxu0 0.0
    %4927 = vmatpush1.msra.mxu0 0.0
    %4928 = vmatprep.subr.mxu0 0.0
    %4929 = vmatpush1.msra.mxu0 0.0
    %4930 = vmatprep.subr.mxu0 0.0
    %4931 = vmatpush1.msra.mxu0 0.0
    %4932 = vmatprep.subr.mxu0 0.0
    %4933 = vmatpush1.msra.mxu0 0.0
    %4934 = vmatprep.subr.mxu0 0.0
    %4935 = vmatpush1.msra.mxu0 0.0
    %4936 = vmatprep.subr.mxu0 0.0
    %4937 = vmatpush1.msra.mxu0 0.0
    %4938 = vmatprep.subr.mxu0 0.0
    %4939 = vmatpush1.msra.mxu0 0.0
    %4940 = vmatprep.subr.mxu0 0.0
    %4941 = vmatpush1.msra.mxu0 0.0
    %4942 = vmatprep.subr.mxu0 0.0
    %4943 = vmatpush1.msra.mxu0 0.0
    %4944 = vmatprep.subr.mxu0 0.0
    %4945 = vmatpush1.msra.mxu0 0.0
    %4946 = vmatprep.subr.mxu0 0.0
    %4947 = vmatpush1.msra.mxu0 0.0
    %4948 = vmatprep.subr.mxu0 0.0
    %4949 = vmatpush1.msra.mxu0 0.0
    %4950 = vmatprep.subr.mxu0 0.0
    %4951 = vmatpush1.msra.mxu0 0.0
    %4952 = vmatprep.subr.mxu0 0.0
    %4953 = vmatpush1.msra.mxu0 0.0
    %4954 = vmatprep.subr.mxu0 0.0
    %4955 = vmatpush1.msra.mxu0 0.0
    %4956 = vmatprep.subr.mxu0 0.0
    %4957 = vmatpush1.msra.mxu0 0.0
    %4958 = vmatprep.subr.mxu0 0.0
    %4959 = vmatpush1.msra.mxu0 0.0
    %4960 = vmatprep.subr.mxu0 0.0
    %4961 = vmatpush1.msra.mxu0 0.0
    %4962 = vmatprep.subr.mxu0 0.0
    %4963 = vmatpush1.msra.mxu0 0.0
    %4964 = vmatprep.subr.mxu0 0.0
    %4965 = vmatpush1.msra.mxu0 0.0
    %4966 = vmatprep.subr.mxu0 0.0
    %4967 = vmatpush1.msra.mxu0 0.0
    %4968 = vmatprep.mubr.f32.mxu0 0.0
    %4969 = vmatmul.mubr.f32.gmra.mrb[0].mxu0 %v4902
    %v4970 = vpop.f32.mrb[0].mxu0
    %v4971 = vadd.f32 0.0, %v4970
    %v4972 = vpop.f32.mrb[0].mxu0
    %4973 = vdwg.mxu0
    %v4975 = vsel %vm210, %v4898, 0
    %4977 = vmatprep.subr.mxu0 0.0
    %4978 = vmatpush1.msra.mxu0 %v160
    %4979 = vmatprep.subr.mxu0 0.0
    %4980 = vmatpush1.msra.mxu0 %v161
    %4981 = vmatprep.subr.mxu0 0.0
    %4982 = vmatpush1.msra.mxu0 %v162
    %4983 = vmatprep.subr.mxu0 0.0
    %4984 = vmatpush1.msra.mxu0 %v163
    %4985 = vmatprep.subr.mxu0 0.0
    %4986 = vmatpush1.msra.mxu0 0.0
    %4987 = vmatprep.subr.mxu0 0.0
    %4988 = vmatpush1.msra.mxu0 0.0
    %4989 = vmatprep.subr.mxu0 0.0
    %4990 = vmatpush1.msra.mxu0 0.0
    %4991 = vmatprep.subr.mxu0 0.0
    %4992 = vmatpush1.msra.mxu0 0.0
    %4993 = vmatprep.subr.mxu0 0.0
    %4994 = vmatpush1.msra.mxu0 0.0
    %4995 = vmatprep.subr.mxu0 0.0
    %4996 = vmatpush1.msra.mxu0 0.0
    %4997 = vmatprep.subr.mxu0 0.0
    %4998 = vmatpush1.msra.mxu0 0.0
    %4999 = vmatprep.subr.mxu0 0.0
    %5000 = vmatpush1.msra.mxu0 0.0
    %5001 = vmatprep.subr.mxu0 0.0
    %5002 = vmatpush1.msra.mxu0 0.0
    %5003 = vmatprep.subr.mxu0 0.0
    %5004 = vmatpush1.msra.mxu0 0.0
    %5005 = vmatprep.subr.mxu0 0.0
    %5006 = vmatpush1.msra.mxu0 0.0
    %5007 = vmatprep.subr.mxu0 0.0
    %5008 = vmatpush1.msra.mxu0 0.0
    %5009 = vmatprep.subr.mxu0 0.0
    %5010 = vmatpush1.msra.mxu0 0.0
    %5011 = vmatprep.subr.mxu0 0.0
    %5012 = vmatpush1.msra.mxu0 0.0
    %5013 = vmatprep.subr.mxu0 0.0
    %5014 = vmatpush1.msra.mxu0 0.0
    %5015 = vmatprep.subr.mxu0 0.0
    %5016 = vmatpush1.msra.mxu0 0.0
    %5017 = vmatprep.subr.mxu0 0.0
    %5018 = vmatpush1.msra.mxu0 0.0
    %5019 = vmatprep.subr.mxu0 0.0
    %5020 = vmatpush1.msra.mxu0 0.0
    %5021 = vmatprep.subr.mxu0 0.0
    %5022 = vmatpush1.msra.mxu0 0.0
    %5023 = vmatprep.subr.mxu0 0.0
    %5024 = vmatpush1.msra.mxu0 0.0
    %5025 = vmatprep.subr.mxu0 0.0
    %5026 = vmatpush1.msra.mxu0 0.0
    %5027 = vmatprep.subr.mxu0 0.0
    %5028 = vmatpush1.msra.mxu0 0.0
    %5029 = vmatprep.subr.mxu0 0.0
    %5030 = vmatpush1.msra.mxu0 0.0
    %5031 = vmatprep.subr.mxu0 0.0
    %5032 = vmatpush1.msra.mxu0 0.0
    %5033 = vmatprep.subr.mxu0 0.0
    %5034 = vmatpush1.msra.mxu0 0.0
    %5035 = vmatprep.subr.mxu0 0.0
    %5036 = vmatpush1.msra.mxu0 0.0
    %5037 = vmatprep.subr.mxu0 0.0
    %5038 = vmatpush1.msra.mxu0 0.0
    %5039 = vmatprep.subr.mxu0 0.0
    %5040 = vmatpush1.msra.mxu0 0.0
    %5041 = vmatprep.mubr.f32.mxu0 0.0
    %5042 = vmatmul.mubr.f32.gmra.mrb[0].mxu0 %v4975
    %v5043 = vpop.f32.mrb[0].mxu0
    %v5044 = vadd.f32 %v4971, %v5043
    %v5045 = vpop.f32.mrb[0].mxu0
    %5046 = vdwg.mxu0
    %v5047 = vadd.f32 %v5044, %v183
    %v5048 = vxor.u32 %v5047, 2147483648
    %v5049 = vmul.f32 %v5048, 1.442695
    %v5050 = vpow.pop %v5049
    %v5051 = vadd.f32 %v5050, 1.0
    %v5052 = vrcp.pop %v5051
    %v5053 = vmul.f32 1.0, %v5052
    %v5054 = vtanh.pop %v5047
    %5056 = vrot.lane.b32.xlu0 %v4900, 32
    %v5057 = vpop.permute.xlu0 %5056
    %v5059 = vmul.f32 %v5053, %v5057
    %5061 = vrot.lane.b32.xlu0 %v5054, 32
    %v5062 = vpop.permute.xlu0 %5061
    %v5064 = vmul.f32 %v5053, %v5062
    %5066 = vrot.lane.b32.xlu0 %v5064, 32
    %v5067 = vpop.permute.xlu0 %5066
    %v5069 = vadd.f32 %v5059, %v5067
    %v5070 = vtanh.pop %v5069
    %5072 = vrot.lane.b32.xlu0 %v5070, 32
    %v5073 = vpop.permute.xlu0 %5072
    %v5075 = vmul.f32 %v5053, %v5073
    %5077 = vrot.lane.b32.xlu0 %v5075, 64
    %v5078 = vpop.permute.xlu0 %5077
    %5080 = vst.msk [vmem:[#allocation2] sm:$0x3] %vm153, %v5078
    %5082 = vrot.lane.b32.xlu0 %v5069, 96
    %v5083 = vpop.permute.xlu0 %5082
    %5085 = vst.msk [vmem:[#allocation3] sm:$0x3] %vm153, %v5083
    %v5086 = vld [vmem:[%s396] sm:$0x3]
    %v5087 = vld [vmem:[%s398] sm:$0x3]
    %v5089 = vsel %vm210, %v5086, 0
    %5091 = vmatprep.subr.mxu0 0.0
    %5092 = vmatpush1.msra.mxu0 %v174
    %5093 = vmatprep.subr.mxu0 0.0
    %5094 = vmatpush1.msra.mxu0 %v175
    %5095 = vmatprep.subr.mxu0 0.0
    %5096 = vmatpush1.msra.mxu0 %v176
    %5097 = vmatprep.subr.mxu0 0.0
    %5098 = vmatpush1.msra.mxu0 %v177
    %5099 = vmatprep.subr.mxu0 0.0
    %5100 = vmatpush1.msra.mxu0 0.0
    %5101 = vmatprep.subr.mxu0 0.0
    %5102 = vmatpush1.msra.mxu0 0.0
    %5103 = vmatprep.subr.mxu0 0.0
    %5104 = vmatpush1.msra.mxu0 0.0
    %5105 = vmatprep.subr.mxu0 0.0
    %5106 = vmatpush1.msra.mxu0 0.0
    %5107 = vmatprep.subr.mxu0 0.0
    %5108 = vmatpush1.msra.mxu0 0.0
    %5109 = vmatprep.subr.mxu0 0.0
    %5110 = vmatpush1.msra.mxu0 0.0
    %5111 = vmatprep.subr.mxu0 0.0
    %5112 = vmatpush1.msra.mxu0 0.0
    %5113 = vmatprep.subr.mxu0 0.0
    %5114 = vmatpush1.msra.mxu0 0.0
    %5115 = vmatprep.subr.mxu0 0.0
    %5116 = vmatpush1.msra.mxu0 0.0
    %5117 = vmatprep.subr.mxu0 0.0
    %5118 = vmatpush1.msra.mxu0 0.0
    %5119 = vmatprep.subr.mxu0 0.0
    %5120 = vmatpush1.msra.mxu0 0.0
    %5121 = vmatprep.subr.mxu0 0.0
    %5122 = vmatpush1.msra.mxu0 0.0
    %5123 = vmatprep.subr.mxu0 0.0
    %5124 = vmatpush1.msra.mxu0 0.0
    %5125 = vmatprep.subr.mxu0 0.0
    %5126 = vmatpush1.msra.mxu0 0.0
    %5127 = vmatprep.subr.mxu0 0.0
    %5128 = vmatpush1.msra.mxu0 0.0
    %5129 = vmatprep.subr.mxu0 0.0
    %5130 = vmatpush1.msra.mxu0 0.0
    %5131 = vmatprep.subr.mxu0 0.0
    %5132 = vmatpush1.msra.mxu0 0.0
    %5133 = vmatprep.subr.mxu0 0.0
    %5134 = vmatpush1.msra.mxu0 0.0
    %5135 = vmatprep.subr.mxu0 0.0
    %5136 = vmatpush1.msra.mxu0 0.0
    %5137 = vmatprep.subr.mxu0 0.0
    %5138 = vmatpush1.msra.mxu0 0.0
    %5139 = vmatprep.subr.mxu0 0.0
    %5140 = vmatpush1.msra.mxu0 0.0
    %5141 = vmatprep.subr.mxu0 0.0
    %5142 = vmatpush1.msra.mxu0 0.0
    %5143 = vmatprep.subr.mxu0 0.0
    %5144 = vmatpush1.msra.mxu0 0.0
    %5145 = vmatprep.subr.mxu0 0.0
    %5146 = vmatpush1.msra.mxu0 0.0
    %5147 = vmatprep.subr.mxu0 0.0
    %5148 = vmatpush1.msra.mxu0 0.0
    %5149 = vmatprep.subr.mxu0 0.0
    %5150 = vmatpush1.msra.mxu0 0.0
    %5151 = vmatprep.subr.mxu0 0.0
    %5152 = vmatpush1.msra.mxu0 0.0
    %5153 = vmatprep.subr.mxu0 0.0
    %5154 = vmatpush1.msra.mxu0 0.0
    %5155 = vmatprep.mubr.f32.mxu0 0.0
    %5156 = vmatmul.mubr.f32.gmra.mrb[0].mxu0 %v5089
    %v5157 = vpop.f32.mrb[0].mxu0
    %v5158 = vadd.f32 0.0, %v5157
    %v5159 = vpop.f32.mrb[0].mxu0
    %5160 = vdwg.mxu0
    %v5161 = vsel %vm210, %v5078, 0
    %5163 = vmatprep.subr.mxu0 0.0
    %5164 = vmatpush1.msra.mxu0 %v165
    %5165 = vmatprep.subr.mxu0 0.0
    %5166 = vmatpush1.msra.mxu0 %v166
    %5167 = vmatprep.subr.mxu0 0.0
    %5168 = vmatpush1.msra.mxu0 %v167
    %5169 = vmatprep.subr.mxu0 0.0
    %5170 = vmatpush1.msra.mxu0 %v168
    %5171 = vmatprep.subr.mxu0 0.0
    %5172 = vmatpush1.msra.mxu0 0.0
    %5173 = vmatprep.subr.mxu0 0.0
    %5174 = vmatpush1.msra.mxu0 0.0
    %5175 = vmatprep.subr.mxu0 0.0
    %5176 = vmatpush1.msra.mxu0 0.0
    %5177 = vmatprep.subr.mxu0 0.0
    %5178 = vmatpush1.msra.mxu0 0.0
    %5179 = vmatprep.subr.mxu0 0.0
    %5180 = vmatpush1.msra.mxu0 0.0
    %5181 = vmatprep.subr.mxu0 0.0
    %5182 = vmatpush1.msra.mxu0 0.0
    %5183 = vmatprep.subr.mxu0 0.0
    %5184 = vmatpush1.msra.mxu0 0.0
    %5185 = vmatprep.subr.mxu0 0.0
    %5186 = vmatpush1.msra.mxu0 0.0
    %5187 = vmatprep.subr.mxu0 0.0
    %5188 = vmatpush1.msra.mxu0 0.0
    %5189 = vmatprep.subr.mxu0 0.0
    %5190 = vmatpush1.msra.mxu0 0.0
    %5191 = vmatprep.subr.mxu0 0.0
    %5192 = vmatpush1.msra.mxu0 0.0
    %5193 = vmatprep.subr.mxu0 0.0
    %5194 = vmatpush1.msra.mxu0 0.0
    %5195 = vmatprep.subr.mxu0 0.0
    %5196 = vmatpush1.msra.mxu0 0.0
    %5197 = vmatprep.subr.mxu0 0.0
    %5198 = vmatpush1.msra.mxu0 0.0
    %5199 = vmatprep.subr.mxu0 0.0
    %5200 = vmatpush1.msra.mxu0 0.0
    %5201 = vmatprep.subr.mxu0 0.0
    %5202 = vmatpush1.msra.mxu0 0.0
    %5203 = vmatprep.subr.mxu0 0.0
    %5204 = vmatpush1.msra.mxu0 0.0
    %5205 = vmatprep.subr.mxu0 0.0
    %5206 = vmatpush1.msra.mxu0 0.0
    %5207 = vmatprep.subr.mxu0 0.0
    %5208 = vmatpush1.msra.mxu0 0.0
    %5209 = vmatprep.subr.mxu0 0.0
    %5210 = vmatpush1.msra.mxu0 0.0
    %5211 = vmatprep.subr.mxu0 0.0
    %5212 = vmatpush1.msra.mxu0 0.0
    %5213 = vmatprep.subr.mxu0 0.0
    %5214 = vmatpush1.msra.mxu0 0.0
    %5215 = vmatprep.subr.mxu0 0.0
    %5216 = vmatpush1.msra.mxu0 0.0
    %5217 = vmatprep.subr.mxu0 0.0
    %5218 = vmatpush1.msra.mxu0 0.0
    %5219 = vmatprep.subr.mxu0 0.0
    %5220 = vmatpush1.msra.mxu0 0.0
    %5221 = vmatprep.subr.mxu0 0.0
    %5222 = vmatpush1.msra.mxu0 0.0
    %5223 = vmatprep.subr.mxu0 0.0
    %5224 = vmatpush1.msra.mxu0 0.0
    %5225 = vmatprep.subr.mxu0 0.0
    %5226 = vmatpush1.msra.mxu0 0.0
    %5227 = vmatprep.mubr.f32.mxu0 0.0
    %5228 = vmatmul.mubr.f32.gmra.mrb[0].mxu0 %v5161
    %v5229 = vpop.f32.mrb[0].mxu0
    %v5230 = vadd.f32 %v5158, %v5229
    %v5231 = vpop.f32.mrb[0].mxu0
    %5232 = vdwg.mxu0
    %v5233 = vadd.f32 %v5230, %v191
    %v5234 = vxor.u32 %v5233, 2147483648
    %v5235 = vmul.f32 %v5234, 1.442695
    %v5236 = vpow.pop %v5235
    %v5237 = vadd.f32 %v5236, 1.0
    %v5238 = vrcp.pop %v5237
    %v5239 = vmul.f32 1.0, %v5238
    %v5240 = vtanh.pop %v5233
    %5242 = vrot.lane.b32.xlu0 %v5087, 32
    %v5243 = vpop.permute.xlu0 %5242
    %v5245 = vmul.f32 %v5239, %v5243
    %5247 = vrot.lane.b32.xlu0 %v5240, 32
    %v5248 = vpop.permute.xlu0 %5247
    %v5250 = vmul.f32 %v5239, %v5248
    %5252 = vrot.lane.b32.xlu0 %v5250, 32
    %v5253 = vpop.permute.xlu0 %5252
    %v5255 = vadd.f32 %v5245, %v5253
    %v5256 = vtanh.pop %v5255
    %5258 = vrot.lane.b32.xlu0 %v5256, 32
    %v5259 = vpop.permute.xlu0 %5258
    %v5261 = vmul.f32 %v5239, %v5259
    %5263 = vrot.lane.b32.xlu0 %v5261, 64
    %v5264 = vpop.permute.xlu0 %5263
    %5266 = vst.msk [vmem:[%s396] sm:$0x3] %vm153, %v5264
    %5268 = vrot.lane.b32.xlu0 %v5255, 96
    %v5269 = vpop.permute.xlu0 %5268
    %5271 = vst.msk [vmem:[%s398] sm:$0x3] %vm153, %v5269
    %v5272 = vsel %vm210, %v5264, 0
    %5274 = vmatprep.subr.mxu0 0.0
    %5275 = vmatpush1.msra.mxu0 %v195
    %5276 = vmatprep.subr.mxu0 0.0
    %5277 = vmatpush1.msra.mxu0 %v196
    %5278 = vmatprep.subr.mxu0 0.0
    %5279 = vmatpush1.msra.mxu0 %v197
    %5280 = vmatprep.subr.mxu0 0.0
    %5281 = vmatpush1.msra.mxu0 %v198
    %5282 = vmatprep.subr.mxu0 0.0
    %5283 = vmatpush1.msra.mxu0 0.0
    %5284 = vmatprep.subr.mxu0 0.0
    %5285 = vmatpush1.msra.mxu0 0.0
    %5286 = vmatprep.subr.mxu0 0.0
    %5287 = vmatpush1.msra.mxu0 0.0
    %5288 = vmatprep.subr.mxu0 0.0
    %5289 = vmatpush1.msra.mxu0 0.0
    %5290 = vmatprep.subr.mxu0 0.0
    %5291 = vmatpush1.msra.mxu0 0.0
    %5292 = vmatprep.subr.mxu0 0.0
    %5293 = vmatpush1.msra.mxu0 0.0
    %5294 = vmatprep.subr.mxu0 0.0
    %5295 = vmatpush1.msra.mxu0 0.0
    %5296 = vmatprep.subr.mxu0 0.0
    %5297 = vmatpush1.msra.mxu0 0.0
    %5298 = vmatprep.subr.mxu0 0.0
    %5299 = vmatpush1.msra.mxu0 0.0
    %5300 = vmatprep.subr.mxu0 0.0
    %5301 = vmatpush1.msra.mxu0 0.0
    %5302 = vmatprep.subr.mxu0 0.0
    %5303 = vmatpush1.msra.mxu0 0.0
    %5304 = vmatprep.subr.mxu0 0.0
    %5305 = vmatpush1.msra.mxu0 0.0
    %5306 = vmatprep.subr.mxu0 0.0
    %5307 = vmatpush1.msra.mxu0 0.0
    %5308 = vmatprep.subr.mxu0 0.0
    %5309 = vmatpush1.msra.mxu0 0.0
    %5310 = vmatprep.subr.mxu0 0.0
    %5311 = vmatpush1.msra.mxu0 0.0
    %5312 = vmatprep.subr.mxu0 0.0
    %5313 = vmatpush1.msra.mxu0 0.0
    %5314 = vmatprep.subr.mxu0 0.0
    %5315 = vmatpush1.msra.mxu0 0.0
    %5316 = vmatprep.subr.mxu0 0.0
    %5317 = vmatpush1.msra.mxu0 0.0
    %5318 = vmatprep.subr.mxu0 0.0
    %5319 = vmatpush1.msra.mxu0 0.0
    %5320 = vmatprep.subr.mxu0 0.0
    %5321 = vmatpush1.msra.mxu0 0.0
    %5322 = vmatprep.subr.mxu0 0.0
    %5323 = vmatpush1.msra.mxu0 0.0
    %5324 = vmatprep.subr.mxu0 0.0
    %5325 = vmatpush1.msra.mxu0 0.0
    %5326 = vmatprep.subr.mxu0 0.0
    %5327 = vmatpush1.msra.mxu0 0.0
    %5328 = vmatprep.subr.mxu0 0.0
    %5329 = vmatpush1.msra.mxu0 0.0
    %5330 = vmatprep.subr.mxu0 0.0
    %5331 = vmatpush1.msra.mxu0 0.0
    %5332 = vmatprep.subr.mxu0 0.0
    %5333 = vmatpush1.msra.mxu0 0.0
    %5334 = vmatprep.subr.mxu0 0.0
    %5335 = vmatpush1.msra.mxu0 0.0
    %5336 = vmatprep.subr.mxu0 0.0
    %5337 = vmatpush1.msra.mxu0 0.0
    %5338 = vmatprep.mubr.f32.mxu0 0.0
    %5339 = vmatmul.mubr.f32.gmra.mrb[0].mxu0 %v5272
    %v5340 = vpop.f32.mrb[0].mxu0
    %v5341 = vadd.f32 0.0, %v5340
    %v5342 = vpop.f32.mrb[0].mxu0
    %5343 = vdwg.mxu0
    %v5346 = vunpack.c.l.s4 1966171168
    %v5347 = vunpack.c.0.s8 %v5346
    %v5348 = vlaneseq
    %v5349 = vshrl.u32 %v5348, 7
    %v5350 = vsub.s32 %v5347, %v5349
    %v5351 = vrot.slane %v5341, %v5350
    %v5352 = vcombine.high %v5351, %v5351
    %v5354 = vunpack.c.l.s4 1966171168
    %v5355 = vunpack.c.0.s8 %v5354
    %v5356 = vlaneseq
    %v5357 = vshrl.u32 %v5356, 7
    %v5358 = vsub.s32 %v5355, %v5357
    %v5359 = vrot.slane %v5351, %v5358
    %v5361 = vunpack.c.l.s4 1966171168
    %v5362 = vunpack.c.0.s8 %v5361
    %v5363 = vlaneseq
    %v5364 = vshrl.u32 %v5363, 7
    %v5365 = vsub.s32 %v5362, %v5364
    %v5366 = vrot.slane %v5352, %v5365
    %v5367 = vsel %vm210, %v5359, 0
    %5369 = vmatprep.subr.mxu0 0.0
    %5370 = vmatpush1.xpose.msra.mxu0 %v682
    %5371 = vmatprep.subr.mxu0 0.0
    %5372 = vmatpush1.xpose.msra.mxu0 0.0
    %5373 = vmatprep.subr.mxu0 0.0
    %5374 = vmatpush1.xpose.msra.mxu0 0.0
    %5375 = vmatprep.subr.mxu0 0.0
    %5376 = vmatpush1.xpose.msra.mxu0 0.0
    %5377 = vmatprep.subr.mxu0 0.0
    %5378 = vmatpush1.xpose.msra.mxu0 0.0
    %5379 = vmatprep.subr.mxu0 0.0
    %5380 = vmatpush1.xpose.msra.mxu0 0.0
    %5381 = vmatprep.subr.mxu0 0.0
    %5382 = vmatpush1.xpose.msra.mxu0 0.0
    %5383 = vmatprep.subr.mxu0 0.0
    %5384 = vmatpush1.xpose.msra.mxu0 0.0
    %5385 = vmatprep.subr.mxu0 0.0
    %5386 = vmatpush1.xpose.msra.mxu0 0.0
    %5387 = vmatprep.subr.mxu0 0.0
    %5388 = vmatpush1.xpose.msra.mxu0 0.0
    %5389 = vmatprep.subr.mxu0 0.0
    %5390 = vmatpush1.xpose.msra.mxu0 0.0
    %5391 = vmatprep.subr.mxu0 0.0
    %5392 = vmatpush1.xpose.msra.mxu0 0.0
    %5393 = vmatprep.subr.mxu0 0.0
    %5394 = vmatpush1.xpose.msra.mxu0 0.0
    %5395 = vmatprep.subr.mxu0 0.0
    %5396 = vmatpush1.xpose.msra.mxu0 0.0
    %5397 = vmatprep.subr.mxu0 0.0
    %5398 = vmatpush1.xpose.msra.mxu0 0.0
    %5399 = vmatprep.subr.mxu0 0.0
    %5400 = vmatpush1.xpose.msra.mxu0 0.0
    %5401 = vmatprep.subr.mxu0 0.0
    %5402 = vmatpush1.xpose.msra.mxu0 0.0
    %5403 = vmatprep.subr.mxu0 0.0
    %5404 = vmatpush1.xpose.msra.mxu0 0.0
    %5405 = vmatprep.subr.mxu0 0.0
    %5406 = vmatpush1.xpose.msra.mxu0 0.0
    %5407 = vmatprep.subr.mxu0 0.0
    %5408 = vmatpush1.xpose.msra.mxu0 0.0
    %5409 = vmatprep.subr.mxu0 0.0
    %5410 = vmatpush1.xpose.msra.mxu0 0.0
    %5411 = vmatprep.subr.mxu0 0.0
    %5412 = vmatpush1.xpose.msra.mxu0 0.0
    %5413 = vmatprep.subr.mxu0 0.0
    %5414 = vmatpush1.xpose.msra.mxu0 0.0
    %5415 = vmatprep.subr.mxu0 0.0
    %5416 = vmatpush1.xpose.msra.mxu0 0.0
    %5417 = vmatprep.subr.mxu0 0.0
    %5418 = vmatpush1.xpose.msra.mxu0 0.0
    %5419 = vmatprep.subr.mxu0 0.0
    %5420 = vmatpush1.xpose.msra.mxu0 0.0
    %5421 = vmatprep.subr.mxu0 0.0
    %5422 = vmatpush1.xpose.msra.mxu0 0.0
    %5423 = vmatprep.subr.mxu0 0.0
    %5424 = vmatpush1.xpose.msra.mxu0 0.0
    %5425 = vmatprep.subr.mxu0 0.0
    %5426 = vmatpush1.xpose.msra.mxu0 0.0
    %5427 = vmatprep.subr.mxu0 0.0
    %5428 = vmatpush1.xpose.msra.mxu0 0.0
    %5429 = vmatprep.subr.mxu0 0.0
    %5430 = vmatpush1.xpose.msra.mxu0 0.0
    %5431 = vmatprep.subr.mxu0 0.0
    %5432 = vmatpush1.xpose.msra.mxu0 0.0
    %5433 = vmatprep.mubr.f32.mxu0 0.0
    %5434 = vmatmul.mubr.f32.gmra.mrb[0].mxu0 %v5367
    %v5435 = vpop.f32.mrb[0].mxu0
    %v5436 = vadd.f32 0.0, %v5435
    %v5437 = vpop.f32.mrb[0].mxu0
    %5438 = vdwg.mxu0
    %v5439 = vsel %vm210, %v5366, 0
    %5441 = vmatprep.subr.mxu0 0.0
    %5442 = vmatpush1.xpose.msra.mxu0 %v757
    %5443 = vmatprep.subr.mxu0 0.0
    %5444 = vmatpush1.xpose.msra.mxu0 0.0
    %5445 = vmatprep.subr.mxu0 0.0
    %5446 = vmatpush1.xpose.msra.mxu0 0.0
    %5447 = vmatprep.subr.mxu0 0.0
    %5448 = vmatpush1.xpose.msra.mxu0 0.0
    %5449 = vmatprep.subr.mxu0 0.0
    %5450 = vmatpush1.xpose.msra.mxu0 0.0
    %5451 = vmatprep.subr.mxu0 0.0
    %5452 = vmatpush1.xpose.msra.mxu0 0.0
    %5453 = vmatprep.subr.mxu0 0.0
    %5454 = vmatpush1.xpose.msra.mxu0 0.0
    %5455 = vmatprep.subr.mxu0 0.0
    %5456 = vmatpush1.xpose.msra.mxu0 0.0
    %5457 = vmatprep.subr.mxu0 0.0
    %5458 = vmatpush1.xpose.msra.mxu0 0.0
    %5459 = vmatprep.subr.mxu0 0.0
    %5460 = vmatpush1.xpose.msra.mxu0 0.0
    %5461 = vmatprep.subr.mxu0 0.0
    %5462 = vmatpush1.xpose.msra.mxu0 0.0
    %5463 = vmatprep.subr.mxu0 0.0
    %5464 = vmatpush1.xpose.msra.mxu0 0.0
    %5465 = vmatprep.subr.mxu0 0.0
    %5466 = vmatpush1.xpose.msra.mxu0 0.0
    %5467 = vmatprep.subr.mxu0 0.0
    %5468 = vmatpush1.xpose.msra.mxu0 0.0
    %5469 = vmatprep.subr.mxu0 0.0
    %5470 = vmatpush1.xpose.msra.mxu0 0.0
    %5471 = vmatprep.subr.mxu0 0.0
    %5472 = vmatpush1.xpose.msra.mxu0 0.0
    %5473 = vmatprep.subr.mxu0 0.0
    %5474 = vmatpush1.xpose.msra.mxu0 0.0
    %5475 = vmatprep.subr.mxu0 0.0
    %5476 = vmatpush1.xpose.msra.mxu0 0.0
    %5477 = vmatprep.subr.mxu0 0.0
    %5478 = vmatpush1.xpose.msra.mxu0 0.0
    %5479 = vmatprep.subr.mxu0 0.0
    %5480 = vmatpush1.xpose.msra.mxu0 0.0
    %5481 = vmatprep.subr.mxu0 0.0
    %5482 = vmatpush1.xpose.msra.mxu0 0.0
    %5483 = vmatprep.subr.mxu0 0.0
    %5484 = vmatpush1.xpose.msra.mxu0 0.0
    %5485 = vmatprep.subr.mxu0 0.0
    %5486 = vmatpush1.xpose.msra.mxu0 0.0
    %5487 = vmatprep.subr.mxu0 0.0
    %5488 = vmatpush1.xpose.msra.mxu0 0.0
    %5489 = vmatprep.subr.mxu0 0.0
    %5490 = vmatpush1.xpose.msra.mxu0 0.0
    %5491 = vmatprep.subr.mxu0 0.0
    %5492 = vmatpush1.xpose.msra.mxu0 0.0
    %5493 = vmatprep.subr.mxu0 0.0
    %5494 = vmatpush1.xpose.msra.mxu0 0.0
    %5495 = vmatprep.subr.mxu0 0.0
    %5496 = vmatpush1.xpose.msra.mxu0 0.0
    %5497 = vmatprep.subr.mxu0 0.0
    %5498 = vmatpush1.xpose.msra.mxu0 0.0
    %5499 = vmatprep.subr.mxu0 0.0
    %5500 = vmatpush1.xpose.msra.mxu0 0.0
    %5501 = vmatprep.subr.mxu0 0.0
    %5502 = vmatpush1.xpose.msra.mxu0 0.0
    %5503 = vmatprep.subr.mxu0 0.0
    %5504 = vmatpush1.xpose.msra.mxu0 0.0
    %5505 = vmatprep.mubr.f32.mxu0 0.0
    %5506 = vmatmul.mubr.f32.gmra.mrb[0].mxu0 %v5439
    %v5507 = vpop.f32.mrb[0].mxu0
    %v5508 = vadd.f32 0.0, %v5507
    %v5509 = vpop.f32.mrb[0].mxu0
    %5510 = vdwg.mxu0
    %v5511 = vsel %vm829, %v5436, -inf
    %5512 = vmax.xlane.f32.xlu0 %v5511
    %v5513 = vpop.xlane.xlu0 %5512
    %v5514 = vsel %vm829, %v5508, -inf
    %5515 = vmax.xlane.f32.xlu0 %v5514
    %v5516 = vpop.xlane.xlu0 %5515
    %v5517 = vsub.f32 %v5436, %v5513
    %v5518 = vsub.f32 %v5508, %v5516
    %v5519 = vmul.f32 %v5517, 1.442695
    %v5520 = vpow.pop %v5519
    %v5521 = vmul.f32 %v5518, 1.442695
    %v5522 = vpow.pop %v5521
    %v5523 = vsel %vm829, %v5520, 0.0
    %5524 = vadd.xlane.f32.xlu0 %v5523
    %v5525 = vpop.xlane.xlu0 %5524
    %v5526 = vsel %vm829, %v5522, 0.0
    %5527 = vadd.xlane.f32.xlu0 %v5526
    %v5528 = vpop.xlane.xlu0 %5527
    %v5529 = vrcp.pop %v5525
    %v5530 = vrcp.pop %v5528
    %v5531 = vmul.f32 %v5520, %v5529
    %v5532 = vmul.f32 %v5522, %v5530
    %v5534 = vsel %vm852, %v5531, 0
    %5536 = vmatprep.subr.mxu0 0.0
    %5537 = vmatpush1.msra.mxu0 %v193
    %5538 = vmatprep.subr.mxu0 0.0
    %5539 = vmatpush1.msra.mxu0 0.0
    %5540 = vmatprep.subr.mxu0 0.0
    %5541 = vmatpush1.msra.mxu0 0.0
    %5542 = vmatprep.subr.mxu0 0.0
    %5543 = vmatpush1.msra.mxu0 0.0
    %5544 = vmatprep.subr.mxu0 0.0
    %5545 = vmatpush1.msra.mxu0 0.0
    %5546 = vmatprep.subr.mxu0 0.0
    %5547 = vmatpush1.msra.mxu0 0.0
    %5548 = vmatprep.subr.mxu0 0.0
    %5549 = vmatpush1.msra.mxu0 0.0
    %5550 = vmatprep.subr.mxu0 0.0
    %5551 = vmatpush1.msra.mxu0 0.0
    %5552 = vmatprep.subr.mxu0 0.0
    %5553 = vmatpush1.msra.mxu0 0.0
    %5554 = vmatprep.subr.mxu0 0.0
    %5555 = vmatpush1.msra.mxu0 0.0
    %5556 = vmatprep.subr.mxu0 0.0
    %5557 = vmatpush1.msra.mxu0 0.0
    %5558 = vmatprep.subr.mxu0 0.0
    %5559 = vmatpush1.msra.mxu0 0.0
    %5560 = vmatprep.subr.mxu0 0.0
    %5561 = vmatpush1.msra.mxu0 0.0
    %5562 = vmatprep.subr.mxu0 0.0
    %5563 = vmatpush1.msra.mxu0 0.0
    %5564 = vmatprep.subr.mxu0 0.0
    %5565 = vmatpush1.msra.mxu0 0.0
    %5566 = vmatprep.subr.mxu0 0.0
    %5567 = vmatpush1.msra.mxu0 0.0
    %5568 = vmatprep.subr.mxu0 0.0
    %5569 = vmatpush1.msra.mxu0 0.0
    %5570 = vmatprep.subr.mxu0 0.0
    %5571 = vmatpush1.msra.mxu0 0.0
    %5572 = vmatprep.subr.mxu0 0.0
    %5573 = vmatpush1.msra.mxu0 0.0
    %5574 = vmatprep.subr.mxu0 0.0
    %5575 = vmatpush1.msra.mxu0 0.0
    %5576 = vmatprep.subr.mxu0 0.0
    %5577 = vmatpush1.msra.mxu0 0.0
    %5578 = vmatprep.subr.mxu0 0.0
    %5579 = vmatpush1.msra.mxu0 0.0
    %5580 = vmatprep.subr.mxu0 0.0
    %5581 = vmatpush1.msra.mxu0 0.0
    %5582 = vmatprep.subr.mxu0 0.0
    %5583 = vmatpush1.msra.mxu0 0.0
    %5584 = vmatprep.subr.mxu0 0.0
    %5585 = vmatpush1.msra.mxu0 0.0
    %5586 = vmatprep.subr.mxu0 0.0
    %5587 = vmatpush1.msra.mxu0 0.0
    %5588 = vmatprep.subr.mxu0 0.0
    %5589 = vmatpush1.msra.mxu0 0.0
    %5590 = vmatprep.subr.mxu0 0.0
    %5591 = vmatpush1.msra.mxu0 0.0
    %5592 = vmatprep.subr.mxu0 0.0
    %5593 = vmatpush1.msra.mxu0 0.0
    %5594 = vmatprep.subr.mxu0 0.0
    %5595 = vmatpush1.msra.mxu0 0.0
    %5596 = vmatprep.subr.mxu0 0.0
    %5597 = vmatpush1.msra.mxu0 0.0
    %5598 = vmatprep.subr.mxu0 0.0
    %5599 = vmatpush1.msra.mxu0 0.0
    %5600 = vmatprep.mubr.f32.mxu0 0.0
    %5601 = vmatmul.mubr.f32.gmra.mrb[0].mxu0 %v5534
    %v5602 = vpop.f32.mrb[0].mxu0
    %v5603 = vadd.f32 0.0, %v5602
    %v5604 = vpop.f32.mrb[0].mxu0
    %5605 = vdwg.mxu0
    %v5607 = vsel %vm852, %v5532, 0
    %5609 = vmatprep.subr.mxu0 0.0
    %5610 = vmatpush1.msra.mxu0 %v194
    %5611 = vmatprep.subr.mxu0 0.0
    %5612 = vmatpush1.msra.mxu0 0.0
    %5613 = vmatprep.subr.mxu0 0.0
    %5614 = vmatpush1.msra.mxu0 0.0
    %5615 = vmatprep.subr.mxu0 0.0
    %5616 = vmatpush1.msra.mxu0 0.0
    %5617 = vmatprep.subr.mxu0 0.0
    %5618 = vmatpush1.msra.mxu0 0.0
    %5619 = vmatprep.subr.mxu0 0.0
    %5620 = vmatpush1.msra.mxu0 0.0
    %5621 = vmatprep.subr.mxu0 0.0
    %5622 = vmatpush1.msra.mxu0 0.0
    %5623 = vmatprep.subr.mxu0 0.0
    %5624 = vmatpush1.msra.mxu0 0.0
    %5625 = vmatprep.subr.mxu0 0.0
    %5626 = vmatpush1.msra.mxu0 0.0
    %5627 = vmatprep.subr.mxu0 0.0
    %5628 = vmatpush1.msra.mxu0 0.0
    %5629 = vmatprep.subr.mxu0 0.0
    %5630 = vmatpush1.msra.mxu0 0.0
    %5631 = vmatprep.subr.mxu0 0.0
    %5632 = vmatpush1.msra.mxu0 0.0
    %5633 = vmatprep.subr.mxu0 0.0
    %5634 = vmatpush1.msra.mxu0 0.0
    %5635 = vmatprep.subr.mxu0 0.0
    %5636 = vmatpush1.msra.mxu0 0.0
    %5637 = vmatprep.subr.mxu0 0.0
    %5638 = vmatpush1.msra.mxu0 0.0
    %5639 = vmatprep.subr.mxu0 0.0
    %5640 = vmatpush1.msra.mxu0 0.0
    %5641 = vmatprep.subr.mxu0 0.0
    %5642 = vmatpush1.msra.mxu0 0.0
    %5643 = vmatprep.subr.mxu0 0.0
    %5644 = vmatpush1.msra.mxu0 0.0
    %5645 = vmatprep.subr.mxu0 0.0
    %5646 = vmatpush1.msra.mxu0 0.0
    %5647 = vmatprep.subr.mxu0 0.0
    %5648 = vmatpush1.msra.mxu0 0.0
    %5649 = vmatprep.subr.mxu0 0.0
    %5650 = vmatpush1.msra.mxu0 0.0
    %5651 = vmatprep.subr.mxu0 0.0
    %5652 = vmatpush1.msra.mxu0 0.0
    %5653 = vmatprep.subr.mxu0 0.0
    %5654 = vmatpush1.msra.mxu0 0.0
    %5655 = vmatprep.subr.mxu0 0.0
    %5656 = vmatpush1.msra.mxu0 0.0
    %5657 = vmatprep.subr.mxu0 0.0
    %5658 = vmatpush1.msra.mxu0 0.0
    %5659 = vmatprep.subr.mxu0 0.0
    %5660 = vmatpush1.msra.mxu0 0.0
    %5661 = vmatprep.subr.mxu0 0.0
    %5662 = vmatpush1.msra.mxu0 0.0
    %5663 = vmatprep.subr.mxu0 0.0
    %5664 = vmatpush1.msra.mxu0 0.0
    %5665 = vmatprep.subr.mxu0 0.0
    %5666 = vmatpush1.msra.mxu0 0.0
    %5667 = vmatprep.subr.mxu0 0.0
    %5668 = vmatpush1.msra.mxu0 0.0
    %5669 = vmatprep.subr.mxu0 0.0
    %5670 = vmatpush1.msra.mxu0 0.0
    %5671 = vmatprep.subr.mxu0 0.0
    %5672 = vmatpush1.msra.mxu0 0.0
    %5673 = vmatprep.mubr.f32.mxu0 0.0
    %5674 = vmatmul.mubr.f32.gmra.mrb[0].mxu0 %v5607
    %v5675 = vpop.f32.mrb[0].mxu0
    %v5676 = vadd.f32 0.0, %v5675
    %v5677 = vpop.f32.mrb[0].mxu0
    %5678 = vdwg.mxu0
    %5679 = vmatprep.subr.mxu0 0.0
    %5680 = vmatpush1.msra.mxu0 %v203
    %5681 = vmatprep.subr.mxu0 0.0
    %5682 = vmatpush1.msra.mxu0 %v204
    %5683 = vmatprep.subr.mxu0 0.0
    %5684 = vmatpush1.msra.mxu0 %v205
    %5685 = vmatprep.subr.mxu0 0.0
    %5686 = vmatpush1.msra.mxu0 %v206
    %5687 = vmatprep.subr.mxu0 0.0
    %5688 = vmatpush1.msra.mxu0 0.0
    %5689 = vmatprep.subr.mxu0 0.0
    %5690 = vmatpush1.msra.mxu0 0.0
    %5691 = vmatprep.subr.mxu0 0.0
    %5692 = vmatpush1.msra.mxu0 0.0
    %5693 = vmatprep.subr.mxu0 0.0
    %5694 = vmatpush1.msra.mxu0 0.0
    %5695 = vmatprep.subr.mxu0 0.0
    %5696 = vmatpush1.msra.mxu0 0.0
    %5697 = vmatprep.subr.mxu0 0.0
    %5698 = vmatpush1.msra.mxu0 0.0
    %5699 = vmatprep.subr.mxu0 0.0
    %5700 = vmatpush1.msra.mxu0 0.0
    %5701 = vmatprep.subr.mxu0 0.0
    %5702 = vmatpush1.msra.mxu0 0.0
    %5703 = vmatprep.subr.mxu0 0.0
    %5704 = vmatpush1.msra.mxu0 0.0
    %5705 = vmatprep.subr.mxu0 0.0
    %5706 = vmatpush1.msra.mxu0 0.0
    %5707 = vmatprep.subr.mxu0 0.0
    %5708 = vmatpush1.msra.mxu0 0.0
    %5709 = vmatprep.subr.mxu0 0.0
    %5710 = vmatpush1.msra.mxu0 0.0
    %5711 = vmatprep.subr.mxu0 0.0
    %5712 = vmatpush1.msra.mxu0 0.0
    %5713 = vmatprep.subr.mxu0 0.0
    %5714 = vmatpush1.msra.mxu0 0.0
    %5715 = vmatprep.subr.mxu0 0.0
    %5716 = vmatpush1.msra.mxu0 0.0
    %5717 = vmatprep.subr.mxu0 0.0
    %5718 = vmatpush1.msra.mxu0 0.0
    %5719 = vmatprep.subr.mxu0 0.0
    %5720 = vmatpush1.msra.mxu0 0.0
    %5721 = vmatprep.subr.mxu0 0.0
    %5722 = vmatpush1.msra.mxu0 0.0
    %5723 = vmatprep.subr.mxu0 0.0
    %5724 = vmatpush1.msra.mxu0 0.0
    %5725 = vmatprep.subr.mxu0 0.0
    %5726 = vmatpush1.msra.mxu0 0.0
    %5727 = vmatprep.subr.mxu0 0.0
    %5728 = vmatpush1.msra.mxu0 0.0
    %5729 = vmatprep.subr.mxu0 0.0
    %5730 = vmatpush1.msra.mxu0 0.0
    %5731 = vmatprep.subr.mxu0 0.0
    %5732 = vmatpush1.msra.mxu0 0.0
    %5733 = vmatprep.subr.mxu0 0.0
    %5734 = vmatpush1.msra.mxu0 0.0
    %5735 = vmatprep.subr.mxu0 0.0
    %5736 = vmatpush1.msra.mxu0 0.0
    %5737 = vmatprep.subr.mxu0 0.0
    %5738 = vmatpush1.msra.mxu0 0.0
    %5739 = vmatprep.subr.mxu0 0.0
    %5740 = vmatpush1.msra.mxu0 0.0
    %5741 = vmatprep.subr.mxu0 0.0
    %5742 = vmatpush1.msra.mxu0 0.0
    %5743 = vmatprep.mubr.f32.mxu0 0.0
    %5744 = vmatmul.mubr.f32.gmra.mrb[0].mxu0 %v5272
    %v5745 = vpop.f32.mrb[0].mxu0
    %v5746 = vadd.f32 0.0, %v5745
    %v5747 = vpop.f32.mrb[0].mxu0
    %5748 = vdwg.mxu0
    %v5751 = vrot.slane %v5676, 7
    %v5752 = vsel %vm1072, %v5751, %v5603
    %v5753 = vsel %vm210, %v5752, 0
    %5755 = vmatprep.subr.mxu0 0.0
    %5756 = vmatpush1.msra.mxu0 %v199
    %5757 = vmatprep.subr.mxu0 0.0
    %5758 = vmatpush1.msra.mxu0 %v200
    %5759 = vmatprep.subr.mxu0 0.0
    %5760 = vmatpush1.msra.mxu0 %v201
    %5761 = vmatprep.subr.mxu0 0.0
    %5762 = vmatpush1.msra.mxu0 %v202
    %5763 = vmatprep.subr.mxu0 0.0
    %5764 = vmatpush1.msra.mxu0 0.0
    %5765 = vmatprep.subr.mxu0 0.0
    %5766 = vmatpush1.msra.mxu0 0.0
    %5767 = vmatprep.subr.mxu0 0.0
    %5768 = vmatpush1.msra.mxu0 0.0
    %5769 = vmatprep.subr.mxu0 0.0
    %5770 = vmatpush1.msra.mxu0 0.0
    %5771 = vmatprep.subr.mxu0 0.0
    %5772 = vmatpush1.msra.mxu0 0.0
    %5773 = vmatprep.subr.mxu0 0.0
    %5774 = vmatpush1.msra.mxu0 0.0
    %5775 = vmatprep.subr.mxu0 0.0
    %5776 = vmatpush1.msra.mxu0 0.0
    %5777 = vmatprep.subr.mxu0 0.0
    %5778 = vmatpush1.msra.mxu0 0.0
    %5779 = vmatprep.subr.mxu0 0.0
    %5780 = vmatpush1.msra.mxu0 0.0
    %5781 = vmatprep.subr.mxu0 0.0
    %5782 = vmatpush1.msra.mxu0 0.0
    %5783 = vmatprep.subr.mxu0 0.0
    %5784 = vmatpush1.msra.mxu0 0.0
    %5785 = vmatprep.subr.mxu0 0.0
    %5786 = vmatpush1.msra.mxu0 0.0
    %5787 = vmatprep.subr.mxu0 0.0
    %5788 = vmatpush1.msra.mxu0 0.0
    %5789 = vmatprep.subr.mxu0 0.0
    %5790 = vmatpush1.msra.mxu0 0.0
    %5791 = vmatprep.subr.mxu0 0.0
    %5792 = vmatpush1.msra.mxu0 0.0
    %5793 = vmatprep.subr.mxu0 0.0
    %5794 = vmatpush1.msra.mxu0 0.0
    %5795 = vmatprep.subr.mxu0 0.0
    %5796 = vmatpush1.msra.mxu0 0.0
    %5797 = vmatprep.subr.mxu0 0.0
    %5798 = vmatpush1.msra.mxu0 0.0
    %5799 = vmatprep.subr.mxu0 0.0
    %5800 = vmatpush1.msra.mxu0 0.0
    %5801 = vmatprep.subr.mxu0 0.0
    %5802 = vmatpush1.msra.mxu0 0.0
    %5803 = vmatprep.subr.mxu0 0.0
    %5804 = vmatpush1.msra.mxu0 0.0
    %5805 = vmatprep.subr.mxu0 0.0
    %5806 = vmatpush1.msra.mxu0 0.0
    %5807 = vmatprep.subr.mxu0 0.0
    %5808 = vmatpush1.msra.mxu0 0.0
    %5809 = vmatprep.subr.mxu0 0.0
    %5810 = vmatpush1.msra.mxu0 0.0
    %5811 = vmatprep.subr.mxu0 0.0
    %5812 = vmatpush1.msra.mxu0 0.0
    %5813 = vmatprep.subr.mxu0 0.0
    %5814 = vmatpush1.msra.mxu0 0.0
    %5815 = vmatprep.subr.mxu0 0.0
    %5816 = vmatpush1.msra.mxu0 0.0
    %5817 = vmatprep.subr.mxu0 0.0
    %5818 = vmatpush1.msra.mxu0 0.0
    %5819 = vmatprep.mubr.f32.mxu0 0.0
    %5820 = vmatmul.mubr.f32.gmra.mrb[0].mxu0 %v5753
    %v5821 = vpop.f32.mrb[0].mxu0
    %v5822 = vadd.f32 %v5746, %v5821
    %v5823 = vpop.f32.mrb[0].mxu0
    %5824 = vdwg.mxu0
    %v5825 = vtanh.pop %v5822
    %s5826 = scalar_lea.vmem [#allocation18], 10
    %5827 = vst.msk [vmem:[%s5826] sm:$0x3] %vm153, %v5825
    %v5828 = vrot.slane %v5532, 7
    %v5829 = vsel %vm1072, %v5828, %v5531
    %s5831 = scalar_lea.vmem [#allocation19], 10
    %5832 = vst.msk [vmem:[%s5831] sm:$0x3] %vm1151, %v5829
    %v5833 = vld [vmem:[#allocation2] sm:$0x3]
    %v5834 = vld [vmem:[#allocation2 + $0x2] sm:$0x3]
    %5835 = vst.msk [vmem:[#allocation21] sm:$0x3] %vm153, %v5833
    %5836 = vst.msk [vmem:[#allocation21 + $0x2] sm:$0x3] %vm153, %v5834
    %v5837 = vld [vmem:[#allocation3] sm:$0x3]
    %v5838 = vld [vmem:[#allocation3 + $0x2] sm:$0x3]
    %5839 = vst.msk [vmem:[#allocation22] sm:$0x3] %vm153, %v5837
    %5840 = vst.msk [vmem:[#allocation22 + $0x2] sm:$0x3] %vm153, %v5838
    // Predicated region
    $region74: #{tpu_custom_call.1} parent=1 // pred_check
      _
    $region75: #{tpu_custom_call.1} parent=1 // pred_check_branch
      %5842 = sbr.rel (0) target = $region77
    $region76: #{tpu_custom_call.1} parent=1 // pred_region
      %s5844 = ssub.s32 192, 192
      %5845 = vsyncadd [#allocation6], %s5844
      %s5846 = sshll.u32 [#allocation18], 4
      %s5847 = int_to_ptr.vmem [resolvable:$true] %s5846
      %5852 = dma.vmem_to_hbm [thread:$0]  %s5847, 192, %s10, [#allocation6], 32, 32, 2
    $region77: #{tpu_custom_call.1} parent=1 // pred_fallthru
      _
    // Predicated region
    $region78: #{tpu_custom_call.1} parent=1 // pred_check
      _
    $region79: #{tpu_custom_call.1} parent=1 // pred_check_branch
      %5854 = sbr.rel (0) target = $region81
    $region80: #{tpu_custom_call.1} parent=1 // pred_region
      %s5856 = ssub.s32 192, 192
      %5857 = vsyncadd [#allocation20], %s5856
      %s5858 = sshll.u32 [#allocation19], 4
      %s5859 = int_to_ptr.vmem [resolvable:$true] %s5858
      %5864 = dma.vmem_to_hbm [thread:$0]  %s5859, 192, %s11, [#allocation20], 32, 32, 2
    $region81: #{tpu_custom_call.1} parent=1 // pred_fallthru
      _
    // Predicated region
    $region82: #{tpu_custom_call.1} parent=1 // pred_check
      _
    $region83: #{tpu_custom_call.1} parent=1 // pred_check_branch
      %5866 = sbr.rel (0) target = $region85
    $region84: #{tpu_custom_call.1} parent=1 // pred_region
      %s5868 = ssub.s32 64, 64
      %5869 = vsyncadd [#allocation20], %s5868
      %s5870 = sshll.u32 [#allocation21], 4
      %s5871 = int_to_ptr.vmem [resolvable:$true] %s5870
      %5876 = dma.vmem_to_hbm [thread:$0]  %s5871, 64, %s12, [#allocation20], 32, 32, 2
    $region85: #{tpu_custom_call.1} parent=1 // pred_fallthru
      _
    // Predicated region
    $region86: #{tpu_custom_call.1} parent=1 // pred_check
      _
    $region87: #{tpu_custom_call.1} parent=1 // pred_check_branch
      %5878 = sbr.rel (0) target = $region89
    $region88: #{tpu_custom_call.1} parent=1 // pred_region
      %s5880 = ssub.s32 64, 64
      %5881 = vsyncadd [#allocation23], %s5880
      %s5882 = sshll.u32 [#allocation22], 4
      %s5883 = int_to_ptr.vmem [resolvable:$true] %s5882
      %5888 = dma.vmem_to_hbm [thread:$0]  %s5883, 64, %s13, [#allocation23], 32, 32, 2
    $region89: #{tpu_custom_call.1} parent=1 // pred_fallthru
      _
    // Predicated region
    $region90: #{tpu_custom_call.1} parent=1 // pred_check
      _
    $region91: #{tpu_custom_call.1} parent=1 // pred_check_branch
      %5890 = sbr.rel (0) target = $region93
    $region92: #{tpu_custom_call.1} parent=1 // pred_region
      %5891 = dma.done [#allocation6], 192
    $region93: #{tpu_custom_call.1} parent=1 // pred_fallthru
      _
    // Predicated region
    $region94: #{tpu_custom_call.1} parent=1 // pred_check
      _
    $region95: #{tpu_custom_call.1} parent=1 // pred_check_branch
      %5893 = sbr.rel (0) target = $region97
    $region96: #{tpu_custom_call.1} parent=1 // pred_region
      %5894 = dma.done [#allocation20], 192
    $region97: #{tpu_custom_call.1} parent=1 // pred_fallthru
      _
    // Predicated region
    $region98: #{tpu_custom_call.1} parent=1 // pred_check
      _
    $region99: #{tpu_custom_call.1} parent=1 // pred_check_branch
      %5896 = sbr.rel (0) target = $region101
    $region100: #{tpu_custom_call.1} parent=1 // pred_region
      %5897 = dma.done [#allocation20], 64
    $region101: #{tpu_custom_call.1} parent=1 // pred_fallthru
      _
    // Predicated region
    $region102: #{tpu_custom_call.1} parent=1 // pred_check
      _
    $region103: #{tpu_custom_call.1} parent=1 // pred_check_branch
      %5899 = sbr.rel (0) target = $region105
    $region104: #{tpu_custom_call.1} parent=1 // pred_region
      %5900 = dma.done [#allocation23], 64
    $region105: #{tpu_custom_call.1} parent=1 // pred_fallthru
      _
    %5901 = vsyncpa [#allocation5], 1
    %5902 = vsyncpa [#allocation8], 1
    %5903 = vsyncpa [#allocation11], 1
    %5904 = vsyncpa [#allocation14], 1
    %5905 = vsyncpa [#allocation17], 1
    %5906 = vsyncpa [#allocation6], 1
    %5907 = vsyncpa [#allocation20], 1
    %5908 = vsyncpa [#allocation23], 1

</llo_original>
